<compile_context>
chip_gen: v7x
topology: tpu7x:2x2x1
jax: 0.10.0
libtpu: 0.0.40
codegen_flags: <defaults>
</compile_context>

<pallas_src>
import functools
import jax
import jax.numpy as jnp
from jax.experimental import pallas as pl
from jax.experimental.pallas import tpu as pltpu

MXU_DTYPE = jnp.bfloat16   # matmul-operand dtype; accumulation is always f32


# ----------------------------------------------------------------------------
# Fused whole-network kernel (one batch element per grid step)
# ----------------------------------------------------------------------------
def _make_kernel(nbr_cell, nbr_filters, H, W, mxu_dt):
    K = 3

    def im2col(pad_ref, h, w, cin):
        """(h+2, w+2, cin) zero-padded VMEM scratch -> (h*w, 9*cin) patch matrix."""
        xp = pad_ref[...]
        cols = []
        for dy in range(K):
            for dx in range(K):
                cols.append(xp[dy:dy + h, dx:dx + w, :].reshape(h * w, cin))
        return jnp.concatenate(cols, axis=-1)

    def conv3x3_acc(pad_ref, w_ref, h, w, cin):
        patches = im2col(pad_ref, h, w, cin).astype(mxu_dt)
        return jnp.dot(patches, w_ref[...], preferred_element_type=jnp.float32)

    def kernel(*refs):
        it = iter(refs)
        x_ref = next(it)
        enc = [(next(it), next(it)) for _ in range(nbr_cell)]
        bott_w, bott_b = next(it), next(it)
        dec = [tuple(next(it) for _ in range(6)) for _ in range(nbr_cell)]
        fin_w, fin_b = next(it), next(it)
        o_ref = next(it)
        inp_pad = next(it)
        skip_pads, pool_pads = [], []
        for _ in range(nbr_cell):
            skip_pads.append(next(it))
            pool_pads.append(next(it))
        up_pads = [next(it) for _ in range(nbr_cell)]

        # Zero the padded scratches (their 1-pixel halos must be 0 every grid step).
        for r in [inp_pad] + skip_pads + pool_pads + up_pads:
            r[...] = jnp.zeros_like(r)

        # Stage the input image into its padded scratch.
        inp_pad[1:H + 1, 1:W + 1, :] = x_ref[...][0]

        # ---------------- Encoder path (conv + ReLU + fused 2x2 maxpool) ----------------
        cur_pad = inp_pad
        h, w, cin = H, W, 1
        for i in range(nbr_cell):
            cout = 2 ** (nbr_filters + i)
            w_ref, b_ref = enc[i]
            acc = conv3x3_acc(cur_pad, w_ref, h, w, cin) + b_ref[...]
            acc = jnp.maximum(acc, 0.0)                          # (h*w, cout) f32
            skip_pads[i][1:h + 1, 1:w + 1, :] = acc.reshape(h, w, cout)
            a4 = acc.reshape(h // 2, 2, w // 2, 2, cout)
            m = jnp.maximum(jnp.maximum(a4[:, 0, :, 0, :], a4[:, 0, :, 1, :]),
                            jnp.maximum(a4[:, 1, :, 0, :], a4[:, 1, :, 1, :]))
            pool_pads[i][1:h // 2 + 1, 1:w // 2 + 1, :] = m
            cur_pad = pool_pads[i]
            h, w, cin = h // 2, w // 2, cout

        # ---------------- Bottleneck ----------------
        cur = jnp.maximum(conv3x3_acc(cur_pad, bott_w, h, w, cin) + bott_b[...], 0.0)

        # ---------------- Decoder path ----------------
        for j in range(nbr_cell):
            upw, upb, wup, wskip, b_ref, s_ref = dec[j]
            L = nbr_cell - 1 - j
            C = 2 ** (nbr_filters + L)
            # 1x1 up-projection (2C -> C); no ReLU (matches reference interpretation)
            proj = jnp.dot(cur.astype(mxu_dt), upw[...],
                           preferred_element_type=jnp.float32) + upb[...]
            # exact nearest-neighbour 2x upsample as a 0/1 matmul (kept in f32)
            ups = jnp.dot(s_ref[...], proj, preferred_element_type=jnp.float32)
            h2, w2 = 2 * h, 2 * w
            up_pads[j][1:h2 + 1, 1:w2 + 1, :] = ups.reshape(h2, w2, C)
            # split-weight 3x3 conv over {upsampled branch, skip branch}: concat never built
            acc = (conv3x3_acc(up_pads[j], wup, h2, w2, C)
                   + conv3x3_acc(skip_pads[L], wskip, h2, w2, C)
                   + b_ref[...])
            cur = jnp.maximum(acc, 0.0)                          # (h2*w2, C)
            h, w = h2, w2

        # ---------------- Final 1x1 conv (-> 1 channel) ----------------
        out = jnp.dot(cur.astype(mxu_dt), fin_w[...],
                      preferred_element_type=jnp.float32) + fin_b[...]
        o_ref[...] = out.reshape(1, H, W, 1).astype(o_ref.dtype)

    return kernel


# ----------------------------------------------------------------------------
# Wrapper: parameter packing + pallas_call
# ----------------------------------------------------------------------------
def _upsample_matrix(h, w):
    """(4hw, hw) 0/1 matrix: output pixel (y,x) selects source (y//2, x//2)."""
    rows = jnp.arange(4 * h * w)
    src = (rows // (2 * w)) // 2 * w + (rows % (2 * w)) // 2
    return (src[:, None] == jnp.arange(h * w)[None, :]).astype(jnp.float32)


def model_forward(params, x_nchw, nbr_cell, nbr_filters):
    N, c0, H, W = x_nchw.shape
    assert c0 == 1 and H % (2 ** nbr_cell) == 0 and W % (2 ** nbr_cell) == 0
    x = jnp.transpose(x_nchw, (0, 2, 3, 1))          # NCHW -> NHWC  (N, H, W, 1)
    mxu = MXU_DTYPE

    flat = []                                        # weight / aux operands after x
    cin = 1
    for i in range(nbr_cell):
        cout = 2 ** (nbr_filters + i)
        p = params["enc"][i]
        flat += [p["w"].reshape(9 * cin, cout).astype(mxu), p["b"].reshape(1, cout)]
        cin = cout
    cb = 2 ** (nbr_filters + nbr_cell)
    pb = params["bottleneck"]
    flat += [pb["w"].reshape(9 * cin, cb).astype(mxu), pb["b"].reshape(1, cb)]
    for j in range(nbr_cell):
        L = nbr_cell - 1 - j
        C = 2 ** (nbr_filters + L)
        p = params["dec"][j]
        w = p["w"]                                   # (3, 3, 2C, C)
        flat += [p["up_w"].reshape(2 * C, C).astype(mxu),
                 p["up_b"].reshape(1, C),
                 w[:, :, :C, :].reshape(9 * C, C).astype(mxu),   # upsampled-branch half
                 w[:, :, C:, :].reshape(9 * C, C).astype(mxu),   # skip-branch half
                 p["b"].reshape(1, C),
                 _upsample_matrix(H >> (nbr_cell - j), W >> (nbr_cell - j))]
    pf = params["final"]
    flat += [pf["w"].reshape(2 ** nbr_filters, 1).astype(mxu), pf["b"].reshape(1, 1)]

    in_specs = [pl.BlockSpec((1, H, W, 1), lambda n: (n, 0, 0, 0))]
    in_specs += [pl.BlockSpec(a.shape, lambda n, _nd=a.ndim: (0,) * _nd) for a in flat]

    scratch = [pltpu.VMEM((H + 2, W + 2, 1), jnp.float32)]                      # padded input
    for i in range(nbr_cell):
        hi, wi, ci = H >> i, W >> i, 2 ** (nbr_filters + i)
        scratch.append(pltpu.VMEM((hi + 2, wi + 2, ci), jnp.float32))            # padded skip
        scratch.append(pltpu.VMEM((hi // 2 + 2, wi // 2 + 2, ci), jnp.float32))  # padded pooled
    for j in range(nbr_cell):
        L = nbr_cell - 1 - j
        hL, wL, cL = H >> L, W >> L, 2 ** (nbr_filters + L)
        scratch.append(pltpu.VMEM((hL + 2, wL + 2, cL), jnp.float32))            # padded upsample

    kernel = _make_kernel(nbr_cell, nbr_filters, H, W, mxu)

    out = pl.pallas_call(
        kernel,
        out_shape=jax.ShapeDtypeStruct((N, H, W, 1), jnp.float32),
        grid=(N,),
        in_specs=in_specs,
        out_specs=pl.BlockSpec((1, H, W, 1), lambda n: (n, 0, 0, 0)),
        scratch_shapes=scratch,
        compiler_params=pltpu.CompilerParams(dimension_semantics=("parallel",)),
    )(x, *flat)
    return jnp.transpose(out, (0, 3, 1, 2))          # NHWC -> NCHW


# ----------------------------------------------------------------------------
# Parameter construction (deterministic, xavier_uniform like the torch module)
# ----------------------------------------------------------------------------
def xavier_uniform(key, shape):
    k1, k2, c_in, c_out = shape
    fan_in, fan_out = c_in * k1 * k2, c_out * k1 * k2
    bound = (6.0 / (fan_in + fan_out)) ** 0.5
    return jax.random.uniform(key, shape, jnp.float32, -bound, bound)


def make_params(key, nbr_cell, nbr_filters):
    params = {"enc": [], "dec": []}
    keys = iter(jax.random.split(key, 64))

    c_in, c_out = 1, 2 ** nbr_filters
    for _ in range(nbr_cell):
        params["enc"].append(dict(w=xavier_uniform(next(keys), (3, 3, c_in, c_out)),
                                  b=jnp.zeros((c_out,), jnp.float32)))
        c_in, c_out = c_out, c_out * 2

    params["bottleneck"] = dict(w=xavier_uniform(next(keys), (3, 3, c_in, c_out)),
                                b=jnp.zeros((c_out,), jnp.float32))

    for _ in range(nbr_cell):
        params["dec"].append(dict(
            up_w=xavier_uniform(next(keys), (1, 1, 2 * c_in, c_in)),
            up_b=jnp.zeros((c_in,), jnp.float32),
            w=xavier_uniform(next(keys), (3, 3, 2 * c_in, c_in)),
            b=jnp.zeros((c_in,), jnp.float32)))
        c_in, c_out = c_in // 2, c_out // 2

    params["final"] = dict(w=xavier_uniform(next(keys), (1, 1, 2 ** nbr_filters, 1)),
                           b=jnp.zeros((1,), jnp.float32))
    return params


# ----------------------------------------------------------------------------
if __name__ == "__main__":
    # config[-2] = nbr_cell, config[-1] = nbr_filters
    nbr_cell = 2
    nbr_filters = 3

    key = jax.random.PRNGKey(0)
    kp, kx = jax.random.split(key)
    params = make_params(kp, nbr_cell, nbr_filters)

    # Input like torch: NCHW, single channel
    x = jax.random.normal(kx, (2, 1, 16, 16), jnp.float32)

    fwd = jax.jit(functools.partial(model_forward,
                                    nbr_cell=nbr_cell, nbr_filters=nbr_filters))
    out = jax.block_until_ready(fwd(params, x))
    assert out.shape == (2, 1, 16, 16), out.shape
    print("KERNEL_OK")
</pallas_src>

<mosaic_0001>
module attributes {stable_mosaic.version = 11 : i64} {
  func.func @kernel(%arg0: i32, %arg1: memref<1x16x16x1xf32, #tpu.memory_space<vmem>>, %arg2: memref<9x8xbf16, #tpu.memory_space<vmem>>, %arg3: memref<1x8xf32, #tpu.memory_space<vmem>>, %arg4: memref<72x16xbf16, #tpu.memory_space<vmem>>, %arg5: memref<1x16xf32, #tpu.memory_space<vmem>>, %arg6: memref<144x32xbf16, #tpu.memory_space<vmem>>, %arg7: memref<1x32xf32, #tpu.memory_space<vmem>>, %arg8: memref<32x16xbf16, #tpu.memory_space<vmem>>, %arg9: memref<1x16xf32, #tpu.memory_space<vmem>>, %arg10: memref<144x16xbf16, #tpu.memory_space<vmem>>, %arg11: memref<144x16xbf16, #tpu.memory_space<vmem>>, %arg12: memref<1x16xf32, #tpu.memory_space<vmem>>, %arg13: memref<64x16xf32, #tpu.memory_space<vmem>>, %arg14: memref<16x8xbf16, #tpu.memory_space<vmem>>, %arg15: memref<1x8xf32, #tpu.memory_space<vmem>>, %arg16: memref<72x8xbf16, #tpu.memory_space<vmem>>, %arg17: memref<72x8xbf16, #tpu.memory_space<vmem>>, %arg18: memref<1x8xf32, #tpu.memory_space<vmem>>, %arg19: memref<256x64xf32, #tpu.memory_space<vmem>>, %arg20: memref<8x1xbf16, #tpu.memory_space<vmem>>, %arg21: memref<1x1xf32, #tpu.memory_space<vmem>>, %arg22: memref<1x16x16x1xf32, #tpu.memory_space<vmem>>, %arg23: memref<18x18x1xf32, #tpu.memory_space<vmem>>, %arg24: memref<18x18x8xf32, #tpu.memory_space<vmem>>, %arg25: memref<10x10x8xf32, #tpu.memory_space<vmem>>, %arg26: memref<10x10x16xf32, #tpu.memory_space<vmem>>, %arg27: memref<6x6x16xf32, #tpu.memory_space<vmem>>, %arg28: memref<10x10x16xf32, #tpu.memory_space<vmem>>, %arg29: memref<18x18x8xf32, #tpu.memory_space<vmem>>) attributes {dimension_semantics = [#tpu.dimension_semantics<parallel>], iteration_bounds = array<i64: 2>, scalar_prefetch = 0 : i64, scratch_operands = 7 : i64, tpu.core_type = #tpu.core_type<tc>, window_params = [{transform_indices = @transform_0, window_bounds = array<i64: 1, 16, 16, 1>}, {pipeline_mode = #tpu.pipeline_mode<synchronous>, transform_indices = @transform_1, window_bounds = array<i64: 9, 8>}, {pipeline_mode = #tpu.pipeline_mode<synchronous>, transform_indices = @transform_2, window_bounds = array<i64: 1, 8>}, {pipeline_mode = #tpu.pipeline_mode<synchronous>, transform_indices = @transform_3, window_bounds = array<i64: 72, 16>}, {pipeline_mode = #tpu.pipeline_mode<synchronous>, transform_indices = @transform_4, window_bounds = array<i64: 1, 16>}, {pipeline_mode = #tpu.pipeline_mode<synchronous>, transform_indices = @transform_5, window_bounds = array<i64: 144, 32>}, {pipeline_mode = #tpu.pipeline_mode<synchronous>, transform_indices = @transform_6, window_bounds = array<i64: 1, 32>}, {pipeline_mode = #tpu.pipeline_mode<synchronous>, transform_indices = @transform_7, window_bounds = array<i64: 32, 16>}, {pipeline_mode = #tpu.pipeline_mode<synchronous>, transform_indices = @transform_8, window_bounds = array<i64: 1, 16>}, {pipeline_mode = #tpu.pipeline_mode<synchronous>, transform_indices = @transform_9, window_bounds = array<i64: 144, 16>}, {pipeline_mode = #tpu.pipeline_mode<synchronous>, transform_indices = @transform_10, window_bounds = array<i64: 144, 16>}, {pipeline_mode = #tpu.pipeline_mode<synchronous>, transform_indices = @transform_11, window_bounds = array<i64: 1, 16>}, {pipeline_mode = #tpu.pipeline_mode<synchronous>, transform_indices = @transform_12, window_bounds = array<i64: 64, 16>}, {pipeline_mode = #tpu.pipeline_mode<synchronous>, transform_indices = @transform_13, window_bounds = array<i64: 16, 8>}, {pipeline_mode = #tpu.pipeline_mode<synchronous>, transform_indices = @transform_14, window_bounds = array<i64: 1, 8>}, {pipeline_mode = #tpu.pipeline_mode<synchronous>, transform_indices = @transform_15, window_bounds = array<i64: 72, 8>}, {pipeline_mode = #tpu.pipeline_mode<synchronous>, transform_indices = @transform_16, window_bounds = array<i64: 72, 8>}, {pipeline_mode = #tpu.pipeline_mode<synchronous>, transform_indices = @transform_17, window_bounds = array<i64: 1, 8>}, {pipeline_mode = #tpu.pipeline_mode<synchronous>, transform_indices = @transform_18, window_bounds = array<i64: 256, 64>}, {pipeline_mode = #tpu.pipeline_mode<synchronous>, transform_indices = @transform_19, window_bounds = array<i64: 8, 1>}, {pipeline_mode = #tpu.pipeline_mode<synchronous>, transform_indices = @transform_20, window_bounds = array<i64: 1, 1>}, {transform_indices = @transform_21, window_bounds = array<i64: 1, 16, 16, 1>}]} {
    %cst = arith.constant 0.000000e+00 : f32
    %0 = vector.broadcast %cst : f32 to vector<18x18x1xf32>
    %c0 = arith.constant 0 : index
    %c0_0 = arith.constant 0 : index
    %c0_1 = arith.constant 0 : index
    %1 = vector.load %arg23[%c0, %c0_0, %c0_1] : memref<18x18x1xf32, #tpu.memory_space<vmem>>, vector<18x18x1xf32>
    tpu.vector_store %arg23[%c0, %c0_0, %c0_1], %0 {strides = array<i32>} : memref<18x18x1xf32, #tpu.memory_space<vmem>>, vector<18x18x1xf32>,
    %cst_2 = arith.constant 0.000000e+00 : f32
    %2 = vector.broadcast %cst_2 : f32 to vector<18x18x8xf32>
    %c0_3 = arith.constant 0 : index
    %c0_4 = arith.constant 0 : index
    %c0_5 = arith.constant 0 : index
    %3 = vector.load %arg24[%c0_3, %c0_4, %c0_5] : memref<18x18x8xf32, #tpu.memory_space<vmem>>, vector<18x18x8xf32>
    tpu.vector_store %arg24[%c0_3, %c0_4, %c0_5], %2 {strides = array<i32>} : memref<18x18x8xf32, #tpu.memory_space<vmem>>, vector<18x18x8xf32>,
    %cst_6 = arith.constant 0.000000e+00 : f32
    %4 = vector.broadcast %cst_6 : f32 to vector<10x10x16xf32>
    %c0_7 = arith.constant 0 : index
    %c0_8 = arith.constant 0 : index
    %c0_9 = arith.constant 0 : index
    %5 = vector.load %arg26[%c0_7, %c0_8, %c0_9] : memref<10x10x16xf32, #tpu.memory_space<vmem>>, vector<10x10x16xf32>
    tpu.vector_store %arg26[%c0_7, %c0_8, %c0_9], %4 {strides = array<i32>} : memref<10x10x16xf32, #tpu.memory_space<vmem>>, vector<10x10x16xf32>,
    %cst_10 = arith.constant 0.000000e+00 : f32
    %6 = vector.broadcast %cst_10 : f32 to vector<10x10x8xf32>
    %c0_11 = arith.constant 0 : index
    %c0_12 = arith.constant 0 : index
    %c0_13 = arith.constant 0 : index
    %7 = vector.load %arg25[%c0_11, %c0_12, %c0_13] : memref<10x10x8xf32, #tpu.memory_space<vmem>>, vector<10x10x8xf32>
    tpu.vector_store %arg25[%c0_11, %c0_12, %c0_13], %6 {strides = array<i32>} : memref<10x10x8xf32, #tpu.memory_space<vmem>>, vector<10x10x8xf32>,
    %cst_14 = arith.constant 0.000000e+00 : f32
    %8 = vector.broadcast %cst_14 : f32 to vector<6x6x16xf32>
    %c0_15 = arith.constant 0 : index
    %c0_16 = arith.constant 0 : index
    %c0_17 = arith.constant 0 : index
    %9 = vector.load %arg27[%c0_15, %c0_16, %c0_17] : memref<6x6x16xf32, #tpu.memory_space<vmem>>, vector<6x6x16xf32>
    tpu.vector_store %arg27[%c0_15, %c0_16, %c0_17], %8 {strides = array<i32>} : memref<6x6x16xf32, #tpu.memory_space<vmem>>, vector<6x6x16xf32>,
    %cst_18 = arith.constant 0.000000e+00 : f32
    %10 = vector.broadcast %cst_18 : f32 to vector<10x10x16xf32>
    %c0_19 = arith.constant 0 : index
    %c0_20 = arith.constant 0 : index
    %c0_21 = arith.constant 0 : index
    %11 = vector.load %arg28[%c0_19, %c0_20, %c0_21] : memref<10x10x16xf32, #tpu.memory_space<vmem>>, vector<10x10x16xf32>
    tpu.vector_store %arg28[%c0_19, %c0_20, %c0_21], %10 {strides = array<i32>} : memref<10x10x16xf32, #tpu.memory_space<vmem>>, vector<10x10x16xf32>,
    %cst_22 = arith.constant 0.000000e+00 : f32
    %12 = vector.broadcast %cst_22 : f32 to vector<18x18x8xf32>
    %c0_23 = arith.constant 0 : index
    %c0_24 = arith.constant 0 : index
    %c0_25 = arith.constant 0 : index
    %13 = vector.load %arg29[%c0_23, %c0_24, %c0_25] : memref<18x18x8xf32, #tpu.memory_space<vmem>>, vector<18x18x8xf32>
    tpu.vector_store %arg29[%c0_23, %c0_24, %c0_25], %12 {strides = array<i32>} : memref<18x18x8xf32, #tpu.memory_space<vmem>>, vector<18x18x8xf32>,
    %c0_26 = arith.constant 0 : index
    %c0_27 = arith.constant 0 : index
    %c0_28 = arith.constant 0 : index
    %c0_29 = arith.constant 0 : index
    %14 = vector.load %arg1[%c0_26, %c0_27, %c0_28, %c0_29] : memref<1x16x16x1xf32, #tpu.memory_space<vmem>>, vector<1x16x16x1xf32>
    %15 = vector.shape_cast %14 : vector<1x16x16x1xf32> to vector<16x16x1xf32>
    %c1 = arith.constant 1 : index
    %c1_30 = arith.constant 1 : index
    %c0_31 = arith.constant 0 : index
    %16 = vector.load %arg23[%c1, %c1_30, %c0_31] : memref<18x18x1xf32, #tpu.memory_space<vmem>>, vector<16x16x1xf32>
    tpu.vector_store %arg23[%c1, %c1_30, %c0_31], %15 {strides = array<i32>} : memref<18x18x1xf32, #tpu.memory_space<vmem>>, vector<16x16x1xf32>,
    %c0_32 = arith.constant 0 : index
    %c0_33 = arith.constant 0 : index
    %c0_34 = arith.constant 0 : index
    %17 = vector.load %arg23[%c0_32, %c0_33, %c0_34] : memref<18x18x1xf32, #tpu.memory_space<vmem>>, vector<18x18x1xf32>
    %18 = vector.extract_strided_slice %17 {offsets = [0, 0, 0], sizes = [16, 16, 1], strides = [1, 1, 1]} : vector<18x18x1xf32> to vector<16x16x1xf32>
    %19 = vector.shape_cast %18 : vector<16x16x1xf32> to vector<256x1xf32>
    %20 = vector.extract_strided_slice %17 {offsets = [0, 1, 0], sizes = [16, 16, 1], strides = [1, 1, 1]} : vector<18x18x1xf32> to vector<16x16x1xf32>
    %21 = vector.shape_cast %20 : vector<16x16x1xf32> to vector<256x1xf32>
    %22 = vector.extract_strided_slice %17 {offsets = [0, 2, 0], sizes = [16, 16, 1], strides = [1, 1, 1]} : vector<18x18x1xf32> to vector<16x16x1xf32>
    %23 = vector.shape_cast %22 : vector<16x16x1xf32> to vector<256x1xf32>
    %24 = vector.extract_strided_slice %17 {offsets = [1, 0, 0], sizes = [16, 16, 1], strides = [1, 1, 1]} : vector<18x18x1xf32> to vector<16x16x1xf32>
    %25 = vector.shape_cast %24 : vector<16x16x1xf32> to vector<256x1xf32>
    %26 = vector.extract_strided_slice %17 {offsets = [1, 1, 0], sizes = [16, 16, 1], strides = [1, 1, 1]} : vector<18x18x1xf32> to vector<16x16x1xf32>
    %27 = vector.shape_cast %26 : vector<16x16x1xf32> to vector<256x1xf32>
    %28 = vector.extract_strided_slice %17 {offsets = [1, 2, 0], sizes = [16, 16, 1], strides = [1, 1, 1]} : vector<18x18x1xf32> to vector<16x16x1xf32>
    %29 = vector.shape_cast %28 : vector<16x16x1xf32> to vector<256x1xf32>
    %30 = vector.extract_strided_slice %17 {offsets = [2, 0, 0], sizes = [16, 16, 1], strides = [1, 1, 1]} : vector<18x18x1xf32> to vector<16x16x1xf32>
    %31 = vector.shape_cast %30 : vector<16x16x1xf32> to vector<256x1xf32>
    %32 = vector.extract_strided_slice %17 {offsets = [2, 1, 0], sizes = [16, 16, 1], strides = [1, 1, 1]} : vector<18x18x1xf32> to vector<16x16x1xf32>
    %33 = vector.shape_cast %32 : vector<16x16x1xf32> to vector<256x1xf32>
    %34 = vector.extract_strided_slice %17 {offsets = [2, 2, 0], sizes = [16, 16, 1], strides = [1, 1, 1]} : vector<18x18x1xf32> to vector<16x16x1xf32>
    %35 = vector.shape_cast %34 : vector<16x16x1xf32> to vector<256x1xf32>
    %36 = tpu.concatenate %19, %21, %23, %25, %27, %29, %31, %33, %35 in 1 : vector<256x1xf32>, vector<256x1xf32>, vector<256x1xf32>, vector<256x1xf32>, vector<256x1xf32>, vector<256x1xf32>, vector<256x1xf32>, vector<256x1xf32>, vector<256x1xf32> -> vector<256x9xf32>
    %37 = arith.truncf %36 : vector<256x9xf32> to vector<256x9xbf16>
    %c0_35 = arith.constant 0 : index
    %c0_36 = arith.constant 0 : index
    %38 = vector.load %arg2[%c0_35, %c0_36] : memref<9x8xbf16, #tpu.memory_space<vmem>>, vector<9x8xbf16>
    %cst_37 = arith.constant dense<0.000000e+00> : vector<256x8xf32>
    %39 = tpu.matmul %37, %38, %cst_37 {dimension_numbers = #tpu.dot_dimension_numbers<[1], [0], [0], [1], [0, 0, 1, 1], [], []>} : vector<256x9xbf16>, vector<9x8xbf16>, vector<256x8xf32> -> vector<256x8xf32>
    %c0_38 = arith.constant 0 : index
    %c0_39 = arith.constant 0 : index
    %40 = vector.load %arg3[%c0_38, %c0_39] : memref<1x8xf32, #tpu.memory_space<vmem>>, vector<1x8xf32>
    %41 = vector.broadcast %40 : vector<1x8xf32> to vector<256x8xf32>
    %42 = arith.addf %39, %41 : vector<256x8xf32>
    %cst_40 = arith.constant 0.000000e+00 : f32
    %43 = vector.broadcast %cst_40 : f32 to vector<256x8xf32>
    %44 = arith.maximumf %42, %43 : vector<256x8xf32>
    %45 = vector.shape_cast %44 : vector<256x8xf32> to vector<16x16x8xf32>
    %c1_41 = arith.constant 1 : index
    %c1_42 = arith.constant 1 : index
    %c0_43 = arith.constant 0 : index
    %46 = vector.load %arg24[%c1_41, %c1_42, %c0_43] : memref<18x18x8xf32, #tpu.memory_space<vmem>>, vector<16x16x8xf32>
    tpu.vector_store %arg24[%c1_41, %c1_42, %c0_43], %45 {strides = array<i32>} : memref<18x18x8xf32, #tpu.memory_space<vmem>>, vector<16x16x8xf32>,
    %47 = vector.shape_cast %44 : vector<256x8xf32> to vector<8x2x8x2x8xf32>
    %48 = vector.extract_strided_slice %47 {offsets = [0, 0, 0, 0, 0], sizes = [8, 1, 8, 1, 8], strides = [1, 1, 1, 1, 1]} : vector<8x2x8x2x8xf32> to vector<8x1x8x1x8xf32>
    %49 = vector.shape_cast %48 : vector<8x1x8x1x8xf32> to vector<8x8x8xf32>
    %50 = vector.extract_strided_slice %47 {offsets = [0, 0, 0, 1, 0], sizes = [8, 1, 8, 1, 8], strides = [1, 1, 1, 1, 1]} : vector<8x2x8x2x8xf32> to vector<8x1x8x1x8xf32>
    %51 = vector.shape_cast %50 : vector<8x1x8x1x8xf32> to vector<8x8x8xf32>
    %52 = arith.maximumf %49, %51 : vector<8x8x8xf32>
    %53 = vector.extract_strided_slice %47 {offsets = [0, 1, 0, 0, 0], sizes = [8, 1, 8, 1, 8], strides = [1, 1, 1, 1, 1]} : vector<8x2x8x2x8xf32> to vector<8x1x8x1x8xf32>
    %54 = vector.shape_cast %53 : vector<8x1x8x1x8xf32> to vector<8x8x8xf32>
    %55 = vector.extract_strided_slice %47 {offsets = [0, 1, 0, 1, 0], sizes = [8, 1, 8, 1, 8], strides = [1, 1, 1, 1, 1]} : vector<8x2x8x2x8xf32> to vector<8x1x8x1x8xf32>
    %56 = vector.shape_cast %55 : vector<8x1x8x1x8xf32> to vector<8x8x8xf32>
    %57 = arith.maximumf %54, %56 : vector<8x8x8xf32>
    %58 = arith.maximumf %52, %57 : vector<8x8x8xf32>
    %c1_44 = arith.constant 1 : index
    %c1_45 = arith.constant 1 : index
    %c0_46 = arith.constant 0 : index
    %59 = vector.load %arg25[%c1_44, %c1_45, %c0_46] : memref<10x10x8xf32, #tpu.memory_space<vmem>>, vector<8x8x8xf32>
    tpu.vector_store %arg25[%c1_44, %c1_45, %c0_46], %58 {strides = array<i32>} : memref<10x10x8xf32, #tpu.memory_space<vmem>>, vector<8x8x8xf32>,
    %c0_47 = arith.constant 0 : index
    %c0_48 = arith.constant 0 : index
    %c0_49 = arith.constant 0 : index
    %60 = vector.load %arg25[%c0_47, %c0_48, %c0_49] : memref<10x10x8xf32, #tpu.memory_space<vmem>>, vector<10x10x8xf32>
    %61 = vector.extract_strided_slice %60 {offsets = [0, 0, 0], sizes = [8, 8, 8], strides = [1, 1, 1]} : vector<10x10x8xf32> to vector<8x8x8xf32>
    %62 = vector.shape_cast %61 : vector<8x8x8xf32> to vector<64x8xf32>
    %63 = vector.extract_strided_slice %60 {offsets = [0, 1, 0], sizes = [8, 8, 8], strides = [1, 1, 1]} : vector<10x10x8xf32> to vector<8x8x8xf32>
    %64 = vector.shape_cast %63 : vector<8x8x8xf32> to vector<64x8xf32>
    %65 = vector.extract_strided_slice %60 {offsets = [0, 2, 0], sizes = [8, 8, 8], strides = [1, 1, 1]} : vector<10x10x8xf32> to vector<8x8x8xf32>
    %66 = vector.shape_cast %65 : vector<8x8x8xf32> to vector<64x8xf32>
    %67 = vector.extract_strided_slice %60 {offsets = [1, 0, 0], sizes = [8, 8, 8], strides = [1, 1, 1]} : vector<10x10x8xf32> to vector<8x8x8xf32>
    %68 = vector.shape_cast %67 : vector<8x8x8xf32> to vector<64x8xf32>
    %69 = vector.extract_strided_slice %60 {offsets = [1, 1, 0], sizes = [8, 8, 8], strides = [1, 1, 1]} : vector<10x10x8xf32> to vector<8x8x8xf32>
    %70 = vector.shape_cast %69 : vector<8x8x8xf32> to vector<64x8xf32>
    %71 = vector.extract_strided_slice %60 {offsets = [1, 2, 0], sizes = [8, 8, 8], strides = [1, 1, 1]} : vector<10x10x8xf32> to vector<8x8x8xf32>
    %72 = vector.shape_cast %71 : vector<8x8x8xf32> to vector<64x8xf32>
    %73 = vector.extract_strided_slice %60 {offsets = [2, 0, 0], sizes = [8, 8, 8], strides = [1, 1, 1]} : vector<10x10x8xf32> to vector<8x8x8xf32>
    %74 = vector.shape_cast %73 : vector<8x8x8xf32> to vector<64x8xf32>
    %75 = vector.extract_strided_slice %60 {offsets = [2, 1, 0], sizes = [8, 8, 8], strides = [1, 1, 1]} : vector<10x10x8xf32> to vector<8x8x8xf32>
    %76 = vector.shape_cast %75 : vector<8x8x8xf32> to vector<64x8xf32>
    %77 = vector.extract_strided_slice %60 {offsets = [2, 2, 0], sizes = [8, 8, 8], strides = [1, 1, 1]} : vector<10x10x8xf32> to vector<8x8x8xf32>
    %78 = vector.shape_cast %77 : vector<8x8x8xf32> to vector<64x8xf32>
    %79 = tpu.concatenate %62, %64, %66, %68, %70, %72, %74, %76, %78 in 1 : vector<64x8xf32>, vector<64x8xf32>, vector<64x8xf32>, vector<64x8xf32>, vector<64x8xf32>, vector<64x8xf32>, vector<64x8xf32>, vector<64x8xf32>, vector<64x8xf32> -> vector<64x72xf32>
    %80 = arith.truncf %79 : vector<64x72xf32> to vector<64x72xbf16>
    %c0_50 = arith.constant 0 : index
    %c0_51 = arith.constant 0 : index
    %81 = vector.load %arg4[%c0_50, %c0_51] : memref<72x16xbf16, #tpu.memory_space<vmem>>, vector<72x16xbf16>
    %cst_52 = arith.constant dense<0.000000e+00> : vector<64x16xf32>
    %82 = tpu.matmul %80, %81, %cst_52 {dimension_numbers = #tpu.dot_dimension_numbers<[1], [0], [0], [1], [0, 0, 1, 1], [], []>} : vector<64x72xbf16>, vector<72x16xbf16>, vector<64x16xf32> -> vector<64x16xf32>
    %c0_53 = arith.constant 0 : index
    %c0_54 = arith.constant 0 : index
    %83 = vector.load %arg5[%c0_53, %c0_54] : memref<1x16xf32, #tpu.memory_space<vmem>>, vector<1x16xf32>
    %84 = vector.broadcast %83 : vector<1x16xf32> to vector<64x16xf32>
    %85 = arith.addf %82, %84 : vector<64x16xf32>
    %cst_55 = arith.constant 0.000000e+00 : f32
    %86 = vector.broadcast %cst_55 : f32 to vector<64x16xf32>
    %87 = arith.maximumf %85, %86 : vector<64x16xf32>
    %88 = vector.shape_cast %87 : vector<64x16xf32> to vector<8x8x16xf32>
    %c1_56 = arith.constant 1 : index
    %c1_57 = arith.constant 1 : index
    %c0_58 = arith.constant 0 : index
    %89 = vector.load %arg26[%c1_56, %c1_57, %c0_58] : memref<10x10x16xf32, #tpu.memory_space<vmem>>, vector<8x8x16xf32>
    tpu.vector_store %arg26[%c1_56, %c1_57, %c0_58], %88 {strides = array<i32>} : memref<10x10x16xf32, #tpu.memory_space<vmem>>, vector<8x8x16xf32>,
    %90 = vector.shape_cast %87 : vector<64x16xf32> to vector<4x2x4x2x16xf32>
    %91 = vector.extract_strided_slice %90 {offsets = [0, 0, 0, 0, 0], sizes = [4, 1, 4, 1, 16], strides = [1, 1, 1, 1, 1]} : vector<4x2x4x2x16xf32> to vector<4x1x4x1x16xf32>
    %92 = vector.shape_cast %91 : vector<4x1x4x1x16xf32> to vector<4x4x16xf32>
    %93 = vector.extract_strided_slice %90 {offsets = [0, 0, 0, 1, 0], sizes = [4, 1, 4, 1, 16], strides = [1, 1, 1, 1, 1]} : vector<4x2x4x2x16xf32> to vector<4x1x4x1x16xf32>
    %94 = vector.shape_cast %93 : vector<4x1x4x1x16xf32> to vector<4x4x16xf32>
    %95 = arith.maximumf %92, %94 : vector<4x4x16xf32>
    %96 = vector.extract_strided_slice %90 {offsets = [0, 1, 0, 0, 0], sizes = [4, 1, 4, 1, 16], strides = [1, 1, 1, 1, 1]} : vector<4x2x4x2x16xf32> to vector<4x1x4x1x16xf32>
    %97 = vector.shape_cast %96 : vector<4x1x4x1x16xf32> to vector<4x4x16xf32>
    %98 = vector.extract_strided_slice %90 {offsets = [0, 1, 0, 1, 0], sizes = [4, 1, 4, 1, 16], strides = [1, 1, 1, 1, 1]} : vector<4x2x4x2x16xf32> to vector<4x1x4x1x16xf32>
    %99 = vector.shape_cast %98 : vector<4x1x4x1x16xf32> to vector<4x4x16xf32>
    %100 = arith.maximumf %97, %99 : vector<4x4x16xf32>
    %101 = arith.maximumf %95, %100 : vector<4x4x16xf32>
    %c1_59 = arith.constant 1 : index
    %c1_60 = arith.constant 1 : index
    %c0_61 = arith.constant 0 : index
    %102 = vector.load %arg27[%c1_59, %c1_60, %c0_61] : memref<6x6x16xf32, #tpu.memory_space<vmem>>, vector<4x4x16xf32>
    tpu.vector_store %arg27[%c1_59, %c1_60, %c0_61], %101 {strides = array<i32>} : memref<6x6x16xf32, #tpu.memory_space<vmem>>, vector<4x4x16xf32>,
    %c0_62 = arith.constant 0 : index
    %c0_63 = arith.constant 0 : index
    %c0_64 = arith.constant 0 : index
    %103 = vector.load %arg27[%c0_62, %c0_63, %c0_64] : memref<6x6x16xf32, #tpu.memory_space<vmem>>, vector<6x6x16xf32>
    %104 = vector.extract_strided_slice %103 {offsets = [0, 0, 0], sizes = [4, 4, 16], strides = [1, 1, 1]} : vector<6x6x16xf32> to vector<4x4x16xf32>
    %105 = vector.shape_cast %104 : vector<4x4x16xf32> to vector<16x16xf32>
    %106 = vector.extract_strided_slice %103 {offsets = [0, 1, 0], sizes = [4, 4, 16], strides = [1, 1, 1]} : vector<6x6x16xf32> to vector<4x4x16xf32>
    %107 = vector.shape_cast %106 : vector<4x4x16xf32> to vector<16x16xf32>
    %108 = vector.extract_strided_slice %103 {offsets = [0, 2, 0], sizes = [4, 4, 16], strides = [1, 1, 1]} : vector<6x6x16xf32> to vector<4x4x16xf32>
    %109 = vector.shape_cast %108 : vector<4x4x16xf32> to vector<16x16xf32>
    %110 = vector.extract_strided_slice %103 {offsets = [1, 0, 0], sizes = [4, 4, 16], strides = [1, 1, 1]} : vector<6x6x16xf32> to vector<4x4x16xf32>
    %111 = vector.shape_cast %110 : vector<4x4x16xf32> to vector<16x16xf32>
    %112 = vector.extract_strided_slice %103 {offsets = [1, 1, 0], sizes = [4, 4, 16], strides = [1, 1, 1]} : vector<6x6x16xf32> to vector<4x4x16xf32>
    %113 = vector.shape_cast %112 : vector<4x4x16xf32> to vector<16x16xf32>
    %114 = vector.extract_strided_slice %103 {offsets = [1, 2, 0], sizes = [4, 4, 16], strides = [1, 1, 1]} : vector<6x6x16xf32> to vector<4x4x16xf32>
    %115 = vector.shape_cast %114 : vector<4x4x16xf32> to vector<16x16xf32>
    %116 = vector.extract_strided_slice %103 {offsets = [2, 0, 0], sizes = [4, 4, 16], strides = [1, 1, 1]} : vector<6x6x16xf32> to vector<4x4x16xf32>
    %117 = vector.shape_cast %116 : vector<4x4x16xf32> to vector<16x16xf32>
    %118 = vector.extract_strided_slice %103 {offsets = [2, 1, 0], sizes = [4, 4, 16], strides = [1, 1, 1]} : vector<6x6x16xf32> to vector<4x4x16xf32>
    %119 = vector.shape_cast %118 : vector<4x4x16xf32> to vector<16x16xf32>
    %120 = vector.extract_strided_slice %103 {offsets = [2, 2, 0], sizes = [4, 4, 16], strides = [1, 1, 1]} : vector<6x6x16xf32> to vector<4x4x16xf32>
    %121 = vector.shape_cast %120 : vector<4x4x16xf32> to vector<16x16xf32>
    %122 = tpu.concatenate %105, %107, %109, %111, %113, %115, %117, %119, %121 in 1 : vector<16x16xf32>, vector<16x16xf32>, vector<16x16xf32>, vector<16x16xf32>, vector<16x16xf32>, vector<16x16xf32>, vector<16x16xf32>, vector<16x16xf32>, vector<16x16xf32> -> vector<16x144xf32>
    %123 = arith.truncf %122 : vector<16x144xf32> to vector<16x144xbf16>
    %c0_65 = arith.constant 0 : index
    %c0_66 = arith.constant 0 : index
    %124 = vector.load %arg6[%c0_65, %c0_66] : memref<144x32xbf16, #tpu.memory_space<vmem>>, vector<144x32xbf16>
    %cst_67 = arith.constant dense<0.000000e+00> : vector<16x32xf32>
    %125 = tpu.matmul %123, %124, %cst_67 {dimension_numbers = #tpu.dot_dimension_numbers<[1], [0], [0], [1], [0, 0, 1, 1], [], []>} : vector<16x144xbf16>, vector<144x32xbf16>, vector<16x32xf32> -> vector<16x32xf32>
    %c0_68 = arith.constant 0 : index
    %c0_69 = arith.constant 0 : index
    %126 = vector.load %arg7[%c0_68, %c0_69] : memref<1x32xf32, #tpu.memory_space<vmem>>, vector<1x32xf32>
    %127 = vector.broadcast %126 : vector<1x32xf32> to vector<16x32xf32>
    %128 = arith.addf %125, %127 : vector<16x32xf32>
    %cst_70 = arith.constant 0.000000e+00 : f32
    %129 = vector.broadcast %cst_70 : f32 to vector<16x32xf32>
    %130 = arith.maximumf %128, %129 : vector<16x32xf32>
    %131 = arith.truncf %130 : vector<16x32xf32> to vector<16x32xbf16>
    %c0_71 = arith.constant 0 : index
    %c0_72 = arith.constant 0 : index
    %132 = vector.load %arg8[%c0_71, %c0_72] : memref<32x16xbf16, #tpu.memory_space<vmem>>, vector<32x16xbf16>
    %cst_73 = arith.constant dense<0.000000e+00> : vector<16x16xf32>
    %133 = tpu.matmul %131, %132, %cst_73 {dimension_numbers = #tpu.dot_dimension_numbers<[1], [0], [0], [1], [0, 0, 1, 1], [], []>} : vector<16x32xbf16>, vector<32x16xbf16>, vector<16x16xf32> -> vector<16x16xf32>
    %c0_74 = arith.constant 0 : index
    %c0_75 = arith.constant 0 : index
    %134 = vector.load %arg9[%c0_74, %c0_75] : memref<1x16xf32, #tpu.memory_space<vmem>>, vector<1x16xf32>
    %135 = vector.broadcast %134 : vector<1x16xf32> to vector<16x16xf32>
    %136 = arith.addf %133, %135 : vector<16x16xf32>
    %c0_76 = arith.constant 0 : index
    %c0_77 = arith.constant 0 : index
    %137 = vector.load %arg13[%c0_76, %c0_77] : memref<64x16xf32, #tpu.memory_space<vmem>>, vector<64x16xf32>
    %cst_78 = arith.constant dense<0.000000e+00> : vector<64x16xf32>
    %138 = tpu.matmul %137, %136, %cst_78 {dimension_numbers = #tpu.dot_dimension_numbers<[1], [0], [0], [1], [0, 0, 1, 1], [], []>} : vector<64x16xf32>, vector<16x16xf32>, vector<64x16xf32> -> vector<64x16xf32>
    %139 = vector.shape_cast %138 : vector<64x16xf32> to vector<8x8x16xf32>
    %c1_79 = arith.constant 1 : index
    %c1_80 = arith.constant 1 : index
    %c0_81 = arith.constant 0 : index
    %140 = vector.load %arg28[%c1_79, %c1_80, %c0_81] : memref<10x10x16xf32, #tpu.memory_space<vmem>>, vector<8x8x16xf32>
    tpu.vector_store %arg28[%c1_79, %c1_80, %c0_81], %139 {strides = array<i32>} : memref<10x10x16xf32, #tpu.memory_space<vmem>>, vector<8x8x16xf32>,
    %c0_82 = arith.constant 0 : index
    %c0_83 = arith.constant 0 : index
    %c0_84 = arith.constant 0 : index
    %141 = vector.load %arg28[%c0_82, %c0_83, %c0_84] : memref<10x10x16xf32, #tpu.memory_space<vmem>>, vector<10x10x16xf32>
    %142 = vector.extract_strided_slice %141 {offsets = [0, 0, 0], sizes = [8, 8, 16], strides = [1, 1, 1]} : vector<10x10x16xf32> to vector<8x8x16xf32>
    %143 = vector.shape_cast %142 : vector<8x8x16xf32> to vector<64x16xf32>
    %144 = vector.extract_strided_slice %141 {offsets = [0, 1, 0], sizes = [8, 8, 16], strides = [1, 1, 1]} : vector<10x10x16xf32> to vector<8x8x16xf32>
    %145 = vector.shape_cast %144 : vector<8x8x16xf32> to vector<64x16xf32>
    %146 = vector.extract_strided_slice %141 {offsets = [0, 2, 0], sizes = [8, 8, 16], strides = [1, 1, 1]} : vector<10x10x16xf32> to vector<8x8x16xf32>
    %147 = vector.shape_cast %146 : vector<8x8x16xf32> to vector<64x16xf32>
    %148 = vector.extract_strided_slice %141 {offsets = [1, 0, 0], sizes = [8, 8, 16], strides = [1, 1, 1]} : vector<10x10x16xf32> to vector<8x8x16xf32>
    %149 = vector.shape_cast %148 : vector<8x8x16xf32> to vector<64x16xf32>
    %150 = vector.extract_strided_slice %141 {offsets = [1, 1, 0], sizes = [8, 8, 16], strides = [1, 1, 1]} : vector<10x10x16xf32> to vector<8x8x16xf32>
    %151 = vector.shape_cast %150 : vector<8x8x16xf32> to vector<64x16xf32>
    %152 = vector.extract_strided_slice %141 {offsets = [1, 2, 0], sizes = [8, 8, 16], strides = [1, 1, 1]} : vector<10x10x16xf32> to vector<8x8x16xf32>
    %153 = vector.shape_cast %152 : vector<8x8x16xf32> to vector<64x16xf32>
    %154 = vector.extract_strided_slice %141 {offsets = [2, 0, 0], sizes = [8, 8, 16], strides = [1, 1, 1]} : vector<10x10x16xf32> to vector<8x8x16xf32>
    %155 = vector.shape_cast %154 : vector<8x8x16xf32> to vector<64x16xf32>
    %156 = vector.extract_strided_slice %141 {offsets = [2, 1, 0], sizes = [8, 8, 16], strides = [1, 1, 1]} : vector<10x10x16xf32> to vector<8x8x16xf32>
    %157 = vector.shape_cast %156 : vector<8x8x16xf32> to vector<64x16xf32>
    %158 = vector.extract_strided_slice %141 {offsets = [2, 2, 0], sizes = [8, 8, 16], strides = [1, 1, 1]} : vector<10x10x16xf32> to vector<8x8x16xf32>
    %159 = vector.shape_cast %158 : vector<8x8x16xf32> to vector<64x16xf32>
    %160 = tpu.concatenate %143, %145, %147, %149, %151, %153, %155, %157, %159 in 1 : vector<64x16xf32>, vector<64x16xf32>, vector<64x16xf32>, vector<64x16xf32>, vector<64x16xf32>, vector<64x16xf32>, vector<64x16xf32>, vector<64x16xf32>, vector<64x16xf32> -> vector<64x144xf32>
    %161 = arith.truncf %160 : vector<64x144xf32> to vector<64x144xbf16>
    %c0_85 = arith.constant 0 : index
    %c0_86 = arith.constant 0 : index
    %162 = vector.load %arg10[%c0_85, %c0_86] : memref<144x16xbf16, #tpu.memory_space<vmem>>, vector<144x16xbf16>
    %cst_87 = arith.constant dense<0.000000e+00> : vector<64x16xf32>
    %163 = tpu.matmul %161, %162, %cst_87 {dimension_numbers = #tpu.dot_dimension_numbers<[1], [0], [0], [1], [0, 0, 1, 1], [], []>} : vector<64x144xbf16>, vector<144x16xbf16>, vector<64x16xf32> -> vector<64x16xf32>
    %c0_88 = arith.constant 0 : index
    %c0_89 = arith.constant 0 : index
    %c0_90 = arith.constant 0 : index
    %164 = vector.load %arg26[%c0_88, %c0_89, %c0_90] : memref<10x10x16xf32, #tpu.memory_space<vmem>>, vector<10x10x16xf32>
    %165 = vector.extract_strided_slice %164 {offsets = [0, 0, 0], sizes = [8, 8, 16], strides = [1, 1, 1]} : vector<10x10x16xf32> to vector<8x8x16xf32>
    %166 = vector.shape_cast %165 : vector<8x8x16xf32> to vector<64x16xf32>
    %167 = vector.extract_strided_slice %164 {offsets = [0, 1, 0], sizes = [8, 8, 16], strides = [1, 1, 1]} : vector<10x10x16xf32> to vector<8x8x16xf32>
    %168 = vector.shape_cast %167 : vector<8x8x16xf32> to vector<64x16xf32>
    %169 = vector.extract_strided_slice %164 {offsets = [0, 2, 0], sizes = [8, 8, 16], strides = [1, 1, 1]} : vector<10x10x16xf32> to vector<8x8x16xf32>
    %170 = vector.shape_cast %169 : vector<8x8x16xf32> to vector<64x16xf32>
    %171 = vector.extract_strided_slice %164 {offsets = [1, 0, 0], sizes = [8, 8, 16], strides = [1, 1, 1]} : vector<10x10x16xf32> to vector<8x8x16xf32>
    %172 = vector.shape_cast %171 : vector<8x8x16xf32> to vector<64x16xf32>
    %173 = vector.extract_strided_slice %164 {offsets = [1, 1, 0], sizes = [8, 8, 16], strides = [1, 1, 1]} : vector<10x10x16xf32> to vector<8x8x16xf32>
    %174 = vector.shape_cast %173 : vector<8x8x16xf32> to vector<64x16xf32>
    %175 = vector.extract_strided_slice %164 {offsets = [1, 2, 0], sizes = [8, 8, 16], strides = [1, 1, 1]} : vector<10x10x16xf32> to vector<8x8x16xf32>
    %176 = vector.shape_cast %175 : vector<8x8x16xf32> to vector<64x16xf32>
    %177 = vector.extract_strided_slice %164 {offsets = [2, 0, 0], sizes = [8, 8, 16], strides = [1, 1, 1]} : vector<10x10x16xf32> to vector<8x8x16xf32>
    %178 = vector.shape_cast %177 : vector<8x8x16xf32> to vector<64x16xf32>
    %179 = vector.extract_strided_slice %164 {offsets = [2, 1, 0], sizes = [8, 8, 16], strides = [1, 1, 1]} : vector<10x10x16xf32> to vector<8x8x16xf32>
    %180 = vector.shape_cast %179 : vector<8x8x16xf32> to vector<64x16xf32>
    %181 = vector.extract_strided_slice %164 {offsets = [2, 2, 0], sizes = [8, 8, 16], strides = [1, 1, 1]} : vector<10x10x16xf32> to vector<8x8x16xf32>
    %182 = vector.shape_cast %181 : vector<8x8x16xf32> to vector<64x16xf32>
    %183 = tpu.concatenate %166, %168, %170, %172, %174, %176, %178, %180, %182 in 1 : vector<64x16xf32>, vector<64x16xf32>, vector<64x16xf32>, vector<64x16xf32>, vector<64x16xf32>, vector<64x16xf32>, vector<64x16xf32>, vector<64x16xf32>, vector<64x16xf32> -> vector<64x144xf32>
    %184 = arith.truncf %183 : vector<64x144xf32> to vector<64x144xbf16>
    %c0_91 = arith.constant 0 : index
    %c0_92 = arith.constant 0 : index
    %185 = vector.load %arg11[%c0_91, %c0_92] : memref<144x16xbf16, #tpu.memory_space<vmem>>, vector<144x16xbf16>
    %cst_93 = arith.constant dense<0.000000e+00> : vector<64x16xf32>
    %186 = tpu.matmul %184, %185, %cst_93 {dimension_numbers = #tpu.dot_dimension_numbers<[1], [0], [0], [1], [0, 0, 1, 1], [], []>} : vector<64x144xbf16>, vector<144x16xbf16>, vector<64x16xf32> -> vector<64x16xf32>
    %187 = arith.addf %163, %186 : vector<64x16xf32>
    %c0_94 = arith.constant 0 : index
    %c0_95 = arith.constant 0 : index
    %188 = vector.load %arg12[%c0_94, %c0_95] : memref<1x16xf32, #tpu.memory_space<vmem>>, vector<1x16xf32>
    %189 = vector.broadcast %188 : vector<1x16xf32> to vector<64x16xf32>
    %190 = arith.addf %187, %189 : vector<64x16xf32>
    %cst_96 = arith.constant 0.000000e+00 : f32
    %191 = vector.broadcast %cst_96 : f32 to vector<64x16xf32>
    %192 = arith.maximumf %190, %191 : vector<64x16xf32>
    %193 = arith.truncf %192 : vector<64x16xf32> to vector<64x16xbf16>
    %c0_97 = arith.constant 0 : index
    %c0_98 = arith.constant 0 : index
    %194 = vector.load %arg14[%c0_97, %c0_98] : memref<16x8xbf16, #tpu.memory_space<vmem>>, vector<16x8xbf16>
    %cst_99 = arith.constant dense<0.000000e+00> : vector<64x8xf32>
    %195 = tpu.matmul %193, %194, %cst_99 {dimension_numbers = #tpu.dot_dimension_numbers<[1], [0], [0], [1], [0, 0, 1, 1], [], []>} : vector<64x16xbf16>, vector<16x8xbf16>, vector<64x8xf32> -> vector<64x8xf32>
    %c0_100 = arith.constant 0 : index
    %c0_101 = arith.constant 0 : index
    %196 = vector.load %arg15[%c0_100, %c0_101] : memref<1x8xf32, #tpu.memory_space<vmem>>, vector<1x8xf32>
    %197 = vector.broadcast %196 : vector<1x8xf32> to vector<64x8xf32>
    %198 = arith.addf %195, %197 : vector<64x8xf32>
    %c0_102 = arith.constant 0 : index
    %c0_103 = arith.constant 0 : index
    %199 = vector.load %arg19[%c0_102, %c0_103] : memref<256x64xf32, #tpu.memory_space<vmem>>, vector<256x64xf32>
    %cst_104 = arith.constant dense<0.000000e+00> : vector<256x8xf32>
    %200 = tpu.matmul %199, %198, %cst_104 {dimension_numbers = #tpu.dot_dimension_numbers<[1], [0], [0], [1], [0, 0, 1, 1], [], []>} : vector<256x64xf32>, vector<64x8xf32>, vector<256x8xf32> -> vector<256x8xf32>
    %201 = vector.shape_cast %200 : vector<256x8xf32> to vector<16x16x8xf32>
    %c1_105 = arith.constant 1 : index
    %c1_106 = arith.constant 1 : index
    %c0_107 = arith.constant 0 : index
    %202 = vector.load %arg29[%c1_105, %c1_106, %c0_107] : memref<18x18x8xf32, #tpu.memory_space<vmem>>, vector<16x16x8xf32>
    tpu.vector_store %arg29[%c1_105, %c1_106, %c0_107], %201 {strides = array<i32>} : memref<18x18x8xf32, #tpu.memory_space<vmem>>, vector<16x16x8xf32>,
    %c0_108 = arith.constant 0 : index
    %c0_109 = arith.constant 0 : index
    %c0_110 = arith.constant 0 : index
    %203 = vector.load %arg29[%c0_108, %c0_109, %c0_110] : memref<18x18x8xf32, #tpu.memory_space<vmem>>, vector<18x18x8xf32>
    %204 = vector.extract_strided_slice %203 {offsets = [0, 0, 0], sizes = [16, 16, 8], strides = [1, 1, 1]} : vector<18x18x8xf32> to vector<16x16x8xf32>
    %205 = vector.shape_cast %204 : vector<16x16x8xf32> to vector<256x8xf32>
    %206 = vector.extract_strided_slice %203 {offsets = [0, 1, 0], sizes = [16, 16, 8], strides = [1, 1, 1]} : vector<18x18x8xf32> to vector<16x16x8xf32>
    %207 = vector.shape_cast %206 : vector<16x16x8xf32> to vector<256x8xf32>
    %208 = vector.extract_strided_slice %203 {offsets = [0, 2, 0], sizes = [16, 16, 8], strides = [1, 1, 1]} : vector<18x18x8xf32> to vector<16x16x8xf32>
    %209 = vector.shape_cast %208 : vector<16x16x8xf32> to vector<256x8xf32>
    %210 = vector.extract_strided_slice %203 {offsets = [1, 0, 0], sizes = [16, 16, 8], strides = [1, 1, 1]} : vector<18x18x8xf32> to vector<16x16x8xf32>
    %211 = vector.shape_cast %210 : vector<16x16x8xf32> to vector<256x8xf32>
    %212 = vector.extract_strided_slice %203 {offsets = [1, 1, 0], sizes = [16, 16, 8], strides = [1, 1, 1]} : vector<18x18x8xf32> to vector<16x16x8xf32>
    %213 = vector.shape_cast %212 : vector<16x16x8xf32> to vector<256x8xf32>
    %214 = vector.extract_strided_slice %203 {offsets = [1, 2, 0], sizes = [16, 16, 8], strides = [1, 1, 1]} : vector<18x18x8xf32> to vector<16x16x8xf32>
    %215 = vector.shape_cast %214 : vector<16x16x8xf32> to vector<256x8xf32>
    %216 = vector.extract_strided_slice %203 {offsets = [2, 0, 0], sizes = [16, 16, 8], strides = [1, 1, 1]} : vector<18x18x8xf32> to vector<16x16x8xf32>
    %217 = vector.shape_cast %216 : vector<16x16x8xf32> to vector<256x8xf32>
    %218 = vector.extract_strided_slice %203 {offsets = [2, 1, 0], sizes = [16, 16, 8], strides = [1, 1, 1]} : vector<18x18x8xf32> to vector<16x16x8xf32>
    %219 = vector.shape_cast %218 : vector<16x16x8xf32> to vector<256x8xf32>
    %220 = vector.extract_strided_slice %203 {offsets = [2, 2, 0], sizes = [16, 16, 8], strides = [1, 1, 1]} : vector<18x18x8xf32> to vector<16x16x8xf32>
    %221 = vector.shape_cast %220 : vector<16x16x8xf32> to vector<256x8xf32>
    %222 = tpu.concatenate %205, %207, %209, %211, %213, %215, %217, %219, %221 in 1 : vector<256x8xf32>, vector<256x8xf32>, vector<256x8xf32>, vector<256x8xf32>, vector<256x8xf32>, vector<256x8xf32>, vector<256x8xf32>, vector<256x8xf32>, vector<256x8xf32> -> vector<256x72xf32>
    %223 = arith.truncf %222 : vector<256x72xf32> to vector<256x72xbf16>
    %c0_111 = arith.constant 0 : index
    %c0_112 = arith.constant 0 : index
    %224 = vector.load %arg16[%c0_111, %c0_112] : memref<72x8xbf16, #tpu.memory_space<vmem>>, vector<72x8xbf16>
    %cst_113 = arith.constant dense<0.000000e+00> : vector<256x8xf32>
    %225 = tpu.matmul %223, %224, %cst_113 {dimension_numbers = #tpu.dot_dimension_numbers<[1], [0], [0], [1], [0, 0, 1, 1], [], []>} : vector<256x72xbf16>, vector<72x8xbf16>, vector<256x8xf32> -> vector<256x8xf32>
    %c0_114 = arith.constant 0 : index
    %c0_115 = arith.constant 0 : index
    %c0_116 = arith.constant 0 : index
    %226 = vector.load %arg24[%c0_114, %c0_115, %c0_116] : memref<18x18x8xf32, #tpu.memory_space<vmem>>, vector<18x18x8xf32>
    %227 = vector.extract_strided_slice %226 {offsets = [0, 0, 0], sizes = [16, 16, 8], strides = [1, 1, 1]} : vector<18x18x8xf32> to vector<16x16x8xf32>
    %228 = vector.shape_cast %227 : vector<16x16x8xf32> to vector<256x8xf32>
    %229 = vector.extract_strided_slice %226 {offsets = [0, 1, 0], sizes = [16, 16, 8], strides = [1, 1, 1]} : vector<18x18x8xf32> to vector<16x16x8xf32>
    %230 = vector.shape_cast %229 : vector<16x16x8xf32> to vector<256x8xf32>
    %231 = vector.extract_strided_slice %226 {offsets = [0, 2, 0], sizes = [16, 16, 8], strides = [1, 1, 1]} : vector<18x18x8xf32> to vector<16x16x8xf32>
    %232 = vector.shape_cast %231 : vector<16x16x8xf32> to vector<256x8xf32>
    %233 = vector.extract_strided_slice %226 {offsets = [1, 0, 0], sizes = [16, 16, 8], strides = [1, 1, 1]} : vector<18x18x8xf32> to vector<16x16x8xf32>
    %234 = vector.shape_cast %233 : vector<16x16x8xf32> to vector<256x8xf32>
    %235 = vector.extract_strided_slice %226 {offsets = [1, 1, 0], sizes = [16, 16, 8], strides = [1, 1, 1]} : vector<18x18x8xf32> to vector<16x16x8xf32>
    %236 = vector.shape_cast %235 : vector<16x16x8xf32> to vector<256x8xf32>
    %237 = vector.extract_strided_slice %226 {offsets = [1, 2, 0], sizes = [16, 16, 8], strides = [1, 1, 1]} : vector<18x18x8xf32> to vector<16x16x8xf32>
    %238 = vector.shape_cast %237 : vector<16x16x8xf32> to vector<256x8xf32>
    %239 = vector.extract_strided_slice %226 {offsets = [2, 0, 0], sizes = [16, 16, 8], strides = [1, 1, 1]} : vector<18x18x8xf32> to vector<16x16x8xf32>
    %240 = vector.shape_cast %239 : vector<16x16x8xf32> to vector<256x8xf32>
    %241 = vector.extract_strided_slice %226 {offsets = [2, 1, 0], sizes = [16, 16, 8], strides = [1, 1, 1]} : vector<18x18x8xf32> to vector<16x16x8xf32>
    %242 = vector.shape_cast %241 : vector<16x16x8xf32> to vector<256x8xf32>
    %243 = vector.extract_strided_slice %226 {offsets = [2, 2, 0], sizes = [16, 16, 8], strides = [1, 1, 1]} : vector<18x18x8xf32> to vector<16x16x8xf32>
    %244 = vector.shape_cast %243 : vector<16x16x8xf32> to vector<256x8xf32>
    %245 = tpu.concatenate %228, %230, %232, %234, %236, %238, %240, %242, %244 in 1 : vector<256x8xf32>, vector<256x8xf32>, vector<256x8xf32>, vector<256x8xf32>, vector<256x8xf32>, vector<256x8xf32>, vector<256x8xf32>, vector<256x8xf32>, vector<256x8xf32> -> vector<256x72xf32>
    %246 = arith.truncf %245 : vector<256x72xf32> to vector<256x72xbf16>
    %c0_117 = arith.constant 0 : index
    %c0_118 = arith.constant 0 : index
    %247 = vector.load %arg17[%c0_117, %c0_118] : memref<72x8xbf16, #tpu.memory_space<vmem>>, vector<72x8xbf16>
    %cst_119 = arith.constant dense<0.000000e+00> : vector<256x8xf32>
    %248 = tpu.matmul %246, %247, %cst_119 {dimension_numbers = #tpu.dot_dimension_numbers<[1], [0], [0], [1], [0, 0, 1, 1], [], []>} : vector<256x72xbf16>, vector<72x8xbf16>, vector<256x8xf32> -> vector<256x8xf32>
    %249 = arith.addf %225, %248 : vector<256x8xf32>
    %c0_120 = arith.constant 0 : index
    %c0_121 = arith.constant 0 : index
    %250 = vector.load %arg18[%c0_120, %c0_121] : memref<1x8xf32, #tpu.memory_space<vmem>>, vector<1x8xf32>
    %251 = vector.broadcast %250 : vector<1x8xf32> to vector<256x8xf32>
    %252 = arith.addf %249, %251 : vector<256x8xf32>
    %cst_122 = arith.constant 0.000000e+00 : f32
    %253 = vector.broadcast %cst_122 : f32 to vector<256x8xf32>
    %254 = arith.maximumf %252, %253 : vector<256x8xf32>
    %255 = arith.truncf %254 : vector<256x8xf32> to vector<256x8xbf16>
    %c0_123 = arith.constant 0 : index
    %c0_124 = arith.constant 0 : index
    %256 = vector.load %arg20[%c0_123, %c0_124] : memref<8x1xbf16, #tpu.memory_space<vmem>>, vector<8x1xbf16>
    %cst_125 = arith.constant dense<0.000000e+00> : vector<256x1xf32>
    %257 = tpu.matmul %255, %256, %cst_125 {dimension_numbers = #tpu.dot_dimension_numbers<[1], [0], [0], [1], [0, 0, 1, 1], [], []>} : vector<256x8xbf16>, vector<8x1xbf16>, vector<256x1xf32> -> vector<256x1xf32>
    %c0_126 = arith.constant 0 : index
    %c0_127 = arith.constant 0 : index
    %258 = vector.load %arg21[%c0_126, %c0_127] : memref<1x1xf32, #tpu.memory_space<vmem>>, vector<1x1xf32>
    %259 = vector.broadcast %258 : vector<1x1xf32> to vector<256x1xf32>
    %260 = arith.addf %257, %259 : vector<256x1xf32>
    %261 = vector.shape_cast %260 : vector<256x1xf32> to vector<1x16x16x1xf32>
    %c0_128 = arith.constant 0 : index
    %c0_129 = arith.constant 0 : index
    %c0_130 = arith.constant 0 : index
    %c0_131 = arith.constant 0 : index
    %262 = vector.load %arg22[%c0_128, %c0_129, %c0_130, %c0_131] : memref<1x16x16x1xf32, #tpu.memory_space<vmem>>, vector<1x16x16x1xf32>
    tpu.vector_store %arg22[%c0_128, %c0_129, %c0_130, %c0_131], %261 {strides = array<i32>} : memref<1x16x16x1xf32, #tpu.memory_space<vmem>>, vector<1x16x16x1xf32>,
    return
  }
  func.func @transform_0(%arg0: i32) -> (i32, i32, i32, i32) {
    %c0_i32 = arith.constant 0 : i32
    %c0_i32_0 = arith.constant 0 : i32
    %c0_i32_1 = arith.constant 0 : i32
    %c0_i32_2 = arith.constant 0 : i32
    return %arg0, %c0_i32, %c0_i32_0, %c0_i32_1 : i32, i32, i32, i32
  }
  func.func @transform_1(%arg0: i32) -> (i32, i32) {
    %c0_i32 = arith.constant 0 : i32
    %c0_i32_0 = arith.constant 0 : i32
    %c0_i32_1 = arith.constant 0 : i32
    return %c0_i32, %c0_i32_0 : i32, i32
  }
  func.func @transform_2(%arg0: i32) -> (i32, i32) {
    %c0_i32 = arith.constant 0 : i32
    %c0_i32_0 = arith.constant 0 : i32
    %c0_i32_1 = arith.constant 0 : i32
    return %c0_i32, %c0_i32_0 : i32, i32
  }
  func.func @transform_3(%arg0: i32) -> (i32, i32) {
    %c0_i32 = arith.constant 0 : i32
    %c0_i32_0 = arith.constant 0 : i32
    %c0_i32_1 = arith.constant 0 : i32
    return %c0_i32, %c0_i32_0 : i32, i32
  }
  func.func @transform_4(%arg0: i32) -> (i32, i32) {
    %c0_i32 = arith.constant 0 : i32
    %c0_i32_0 = arith.constant 0 : i32
    %c0_i32_1 = arith.constant 0 : i32
    return %c0_i32, %c0_i32_0 : i32, i32
  }
  func.func @transform_5(%arg0: i32) -> (i32, i32) {
    %c0_i32 = arith.constant 0 : i32
    %c0_i32_0 = arith.constant 0 : i32
    %c0_i32_1 = arith.constant 0 : i32
    return %c0_i32, %c0_i32_0 : i32, i32
  }
  func.func @transform_6(%arg0: i32) -> (i32, i32) {
    %c0_i32 = arith.constant 0 : i32
    %c0_i32_0 = arith.constant 0 : i32
    %c0_i32_1 = arith.constant 0 : i32
    return %c0_i32, %c0_i32_0 : i32, i32
  }
  func.func @transform_7(%arg0: i32) -> (i32, i32) {
    %c0_i32 = arith.constant 0 : i32
    %c0_i32_0 = arith.constant 0 : i32
    %c0_i32_1 = arith.constant 0 : i32
    return %c0_i32, %c0_i32_0 : i32, i32
  }
  func.func @transform_8(%arg0: i32) -> (i32, i32) {
    %c0_i32 = arith.constant 0 : i32
    %c0_i32_0 = arith.constant 0 : i32
    %c0_i32_1 = arith.constant 0 : i32
    return %c0_i32, %c0_i32_0 : i32, i32
  }
  func.func @transform_9(%arg0: i32) -> (i32, i32) {
    %c0_i32 = arith.constant 0 : i32
    %c0_i32_0 = arith.constant 0 : i32
    %c0_i32_1 = arith.constant 0 : i32
    return %c0_i32, %c0_i32_0 : i32, i32
  }
  func.func @transform_10(%arg0: i32) -> (i32, i32) {
    %c0_i32 = arith.constant 0 : i32
    %c0_i32_0 = arith.constant 0 : i32
    %c0_i32_1 = arith.constant 0 : i32
    return %c0_i32, %c0_i32_0 : i32, i32
  }
  func.func @transform_11(%arg0: i32) -> (i32, i32) {
    %c0_i32 = arith.constant 0 : i32
    %c0_i32_0 = arith.constant 0 : i32
    %c0_i32_1 = arith.constant 0 : i32
    return %c0_i32, %c0_i32_0 : i32, i32
  }
  func.func @transform_12(%arg0: i32) -> (i32, i32) {
    %c0_i32 = arith.constant 0 : i32
    %c0_i32_0 = arith.constant 0 : i32
    %c0_i32_1 = arith.constant 0 : i32
    return %c0_i32, %c0_i32_0 : i32, i32
  }
  func.func @transform_13(%arg0: i32) -> (i32, i32) {
    %c0_i32 = arith.constant 0 : i32
    %c0_i32_0 = arith.constant 0 : i32
    %c0_i32_1 = arith.constant 0 : i32
    return %c0_i32, %c0_i32_0 : i32, i32
  }
  func.func @transform_14(%arg0: i32) -> (i32, i32) {
    %c0_i32 = arith.constant 0 : i32
    %c0_i32_0 = arith.constant 0 : i32
    %c0_i32_1 = arith.constant 0 : i32
    return %c0_i32, %c0_i32_0 : i32, i32
  }
  func.func @transform_15(%arg0: i32) -> (i32, i32) {
    %c0_i32 = arith.constant 0 : i32
    %c0_i32_0 = arith.constant 0 : i32
    %c0_i32_1 = arith.constant 0 : i32
    return %c0_i32, %c0_i32_0 : i32, i32
  }
  func.func @transform_16(%arg0: i32) -> (i32, i32) {
    %c0_i32 = arith.constant 0 : i32
    %c0_i32_0 = arith.constant 0 : i32
    %c0_i32_1 = arith.constant 0 : i32
    return %c0_i32, %c0_i32_0 : i32, i32
  }
  func.func @transform_17(%arg0: i32) -> (i32, i32) {
    %c0_i32 = arith.constant 0 : i32
    %c0_i32_0 = arith.constant 0 : i32
    %c0_i32_1 = arith.constant 0 : i32
    return %c0_i32, %c0_i32_0 : i32, i32
  }
  func.func @transform_18(%arg0: i32) -> (i32, i32) {
    %c0_i32 = arith.constant 0 : i32
    %c0_i32_0 = arith.constant 0 : i32
    %c0_i32_1 = arith.constant 0 : i32
    return %c0_i32, %c0_i32_0 : i32, i32
  }
  func.func @transform_19(%arg0: i32) -> (i32, i32) {
    %c0_i32 = arith.constant 0 : i32
    %c0_i32_0 = arith.constant 0 : i32
    %c0_i32_1 = arith.constant 0 : i32
    return %c0_i32, %c0_i32_0 : i32, i32
  }
  func.func @transform_20(%arg0: i32) -> (i32, i32) {
    %c0_i32 = arith.constant 0 : i32
    %c0_i32_0 = arith.constant 0 : i32
    %c0_i32_1 = arith.constant 0 : i32
    return %c0_i32, %c0_i32_0 : i32, i32
  }
  func.func @transform_21(%arg0: i32) -> (i32, i32, i32, i32) {
    %c0_i32 = arith.constant 0 : i32
    %c0_i32_0 = arith.constant 0 : i32
    %c0_i32_1 = arith.constant 0 : i32
    %c0_i32_2 = arith.constant 0 : i32
    return %arg0, %c0_i32, %c0_i32_0, %c0_i32_1 : i32, i32, i32, i32
  }
}

</mosaic_0001>

<llo_original>
// kernel: model_forward.1
$region0: #{model_forward.1}
  #allocation0 [shape = 'u32[]', space=smem, size = 0x4, offset = 0x4, fixed_abs, tag = 'smem constant byte address 0x4 - core index']
  #allocation1 [shape = 'u32[144,128]{1,0:T(1,128)}', space=vmem, size = 0x12000, scoped, tag = 'internal scratch']
  #allocation2 [shape = 'f32[18,18,1]{2,1,0:T(8,128)}', space=vmem, size = 0x36000, scoped, tag = 'scratch operand']
  #allocation3 [shape = 'f32[18,18,8]{2,1,0:T(8,128)}', space=vmem, size = 0x36000, scoped, tag = 'scratch operand']
  #allocation4 [shape = 'f32[10,10,8]{2,1,0:T(8,128)}', space=vmem, size = 0x14000, scoped, tag = 'scratch operand']
  #allocation5 [shape = 'f32[10,10,16]{2,1,0:T(8,128)}', space=vmem, size = 0x14000, scoped, tag = 'scratch operand']
  #allocation6 [shape = 'f32[6,6,16]{2,1,0:T(8,128)}', space=vmem, size = 0x6000, scoped, tag = 'scratch operand']
  #allocation7 [shape = 'f32[10,10,16]{2,1,0:T(8,128)}', space=vmem, size = 0x14000, scoped, tag = 'scratch operand']
  #allocation8 [shape = 'f32[18,18,8]{2,1,0:T(8,128)}', space=vmem, size = 0x36000, scoped, tag = 'scratch operand']
  #allocation9 [shape = 'f32[1,1]{1,0:T(1,128)S(1)}', space=vmem, size = 0x200, scoped, tag = 'scoped memory for model_forward.1']
  %s0 = inlined_call_operand.vmem [shape: f32[2,16,16,1], index: 0, kind: input, shape index: {}]
  %s1 = inlined_call_operand.vmem [shape: bf16[9,8], index: 1, kind: input, shape index: {}]
  %s2 = inlined_call_operand.vmem [shape: f32[1,8], index: 2, kind: input, shape index: {}]
  %s3 = inlined_call_operand.vmem [shape: bf16[72,16], index: 3, kind: input, shape index: {}]
  %s4 = inlined_call_operand.vmem [shape: f32[1,16], index: 4, kind: input, shape index: {}]
  %s5 = inlined_call_operand.vmem [shape: bf16[144,32], index: 5, kind: input, shape index: {}]
  %s6 = inlined_call_operand.vmem [shape: f32[1,32], index: 6, kind: input, shape index: {}]
  %s7 = inlined_call_operand.vmem [shape: bf16[32,16], index: 7, kind: input, shape index: {}]
  %s8 = inlined_call_operand.vmem [shape: f32[1,16], index: 8, kind: input, shape index: {}]
  %s9 = inlined_call_operand.vmem [shape: bf16[144,16], index: 9, kind: input, shape index: {}]
  %s10 = inlined_call_operand.vmem [shape: bf16[144,16], index: 10, kind: input, shape index: {}]
  %s11 = inlined_call_operand.vmem [shape: f32[1,16], index: 11, kind: input, shape index: {}]
  %s12 = inlined_call_operand.vmem [shape: f32[64,16], index: 12, kind: input, shape index: {}]
  %s13 = inlined_call_operand.vmem [shape: bf16[16,8], index: 13, kind: input, shape index: {}]
  %s14 = inlined_call_operand.vmem [shape: f32[1,8], index: 14, kind: input, shape index: {}]
  %s15 = inlined_call_operand.vmem [shape: bf16[72,8], index: 15, kind: input, shape index: {}]
  %s16 = inlined_call_operand.vmem [shape: bf16[72,8], index: 16, kind: input, shape index: {}]
  %s17 = inlined_call_operand.vmem [shape: f32[1,8], index: 17, kind: input, shape index: {}]
  %s18 = inlined_call_operand.vmem [shape: f32[256,64], index: 18, kind: input, shape index: {}]
  %s19 = inlined_call_operand.vmem [shape: bf16[8,1], index: 19, kind: input, shape index: {}]
  %s20 = inlined_call_operand.<no memory space> [shape: f32[1,1], index: 20, kind: input, shape index: {}]
  %s21 = inlined_call_operand.vmem [shape: f32[2,16,16,1], index: 21, kind: output, shape index: {}]
  %s22 = sld [smem:[#allocation0]]
  $region117: #{model_forward.1} parent=0
    _
  %s24 = ssub.s32 1, %s22
  %s25 = scalar_select 0, %s24, %s22
  %v26 = vstv %s20
  %27 = vst [vmem:[#allocation9] sm:$0x1] %v26
  loop: start=0, step=1, limit=4
  $region2: #{model_forward.1} parent=0 // loop_pre_header
    _
  $region3: #{model_forward.1} parent=0 // loop_header
    %s29 = sphi 0, %s33
    %p30 = scmp.ge.s32.totalorder %s29, 4
    %s39 = sphi 0, %s41
    %s42 = sphi 0, %s39
    %s43 = sphi 0, %s42
    %s59 = sphi 0, %s43
    %s63 = sphi 0, %s63
    %s65 = sphi 0, %s63
    %s66 = sphi 0, %s65
    %s80 = sphi 0, %s66
    %s84 = sphi 0, %s84
    %s86 = sphi 0, %s84
    %s87 = sphi 0, %s86
    %s101 = sphi 0, %s87
    %s105 = sphi 0, %s105
    %s107 = sphi 0, %s105
    %s108 = sphi 0, %s107
    %s122 = sphi 0, %s108
    %s126 = sphi 0, %s126
    %s128 = sphi 0, %s126
    %s129 = sphi 0, %s128
    %s143 = sphi 0, %s129
    %s147 = sphi 0, %s147
    %s149 = sphi 0, %s147
    %s150 = sphi 0, %s149
    %s164 = sphi 0, %s150
    %s168 = sphi 0, %s168
    %s170 = sphi 0, %s168
    %s171 = sphi 0, %s170
    %s185 = sphi 0, %s171
    %s189 = sphi 0, %s189
    %s191 = sphi 0, %s189
    %s192 = sphi 0, %s191
    %s206 = sphi 0, %s192
    %s210 = sphi 0, %s210
    %s212 = sphi 0, %s210
    %s213 = sphi 0, %s212
    %s227 = sphi 0, %s213
    %s231 = sphi 0, %s231
    %s233 = sphi 0, %s231
    %s234 = sphi 0, %s233
    %s248 = sphi 0, %s234
    %s252 = sphi 0, %s252
    %s254 = sphi 0, %s252
    %s255 = sphi 0, %s254
    %s269 = sphi 0, %s255
    %s273 = sphi 0, %s273
    %s275 = sphi 0, %s273
    %s276 = sphi 0, %s275
    %s290 = sphi 0, %s276
    %s294 = sphi 0, %s294
    %s296 = sphi 0, %s294
    %s297 = sphi 0, %s296
    %s311 = sphi 0, %s297
    %s315 = sphi 0, %s315
    %s317 = sphi 0, %s315
    %s318 = sphi 0, %s317
    %s332 = sphi 0, %s318
    %s336 = sphi 0, %s336
    %s338 = sphi 0, %s336
    %s339 = sphi 0, %s338
    %s353 = sphi 0, %s339
    %s357 = sphi 0, %s357
    %s359 = sphi 0, %s357
    %s360 = sphi 0, %s359
    %s374 = sphi 0, %s360
    %s378 = sphi 0, %s378
    %s380 = sphi 0, %s378
    %s381 = sphi 0, %s380
    %s395 = sphi 0, %s381
    %s399 = sphi 0, %s399
    %s401 = sphi 0, %s399
    %s402 = sphi 0, %s401
    %s416 = sphi 0, %s402
    %s420 = sphi 0, %s420
    %s422 = sphi 0, %s420
    %s423 = sphi 0, %s422
    %s437 = sphi 0, %s423
    %s441 = sphi 0, %s441
    %s443 = sphi 0, %s441
    %s444 = sphi 0, %s443
    %s458 = sphi 0, %s444
    %s462 = sphi 0, %s462
    %s464 = sphi 0, %s462
    %s465 = sphi 0, %s464
    %s479 = sphi 0, %s465
    %s485 = sphi 0, %s487
    %s488 = sphi 0, %s485
    %s489 = sphi 0, %s488
    %s505 = sphi 0, %s489
  $region4: #{model_forward.1} parent=0 // loop_header_branch
    %32 = sbr.rel (%p30) target = $region8
  $region5: #{model_forward.1} parent=0 // loop_body
    %s34 = ssub.s32 %s29, 1
    %s35 = ssub.s32 %s29, 2
    %s36 = sadd.s32 %s29, 1
    %s37 = ssub.s32 %s29, %s36
    %p38 = scmp.eq.s32.totalorder %s37, 0
    %s40 = sadd.s32 %s39, 1
    %s41 = scalar_select %p38, %s39, %s40
    %p44 = pneg %p38
    %p45 = scmp.eq.s32.totalorder %s29, 1
    %p46 = por %p44, %p45
    %p47 = scmp.ne.s32.totalorder %s39, %s42
    %p48 = scmp.eq.s32.totalorder %s29, 0
    %p49 = por %p47, %p48
    %p50 = scmp.ne.s32.totalorder %s39, %s42
    %p51 = scmp.eq.s32.totalorder %s34, 1
    %p52 = por %p50, %p51
    %p53 = scmp.ne.s32.totalorder %s42, %s43
    %p54 = scmp.eq.s32.totalorder %s34, 0
    %p55 = por %p53, %p54
    %p56 = scmp.ne.s32.totalorder %s42, %s43
    %p57 = scmp.eq.s32.totalorder %s35, 1
    %p58 = por %p56, %p57
    %p60 = scmp.ne.s32.totalorder %s43, %s59
    %p61 = scmp.eq.s32.totalorder %s35, 0
    %p62 = por %p60, %p61
    %s64 = sadd.s32 %s63, 1
    %p67 = scmp.eq.s32.totalorder %s29, 1
    %p68 = scmp.ne.s32.totalorder %s63, %s65
    %p69 = scmp.eq.s32.totalorder %s29, 0
    %p70 = por %p68, %p69
    %p71 = scmp.ne.s32.totalorder %s63, %s65
    %p72 = scmp.eq.s32.totalorder %s34, 1
    %p73 = por %p71, %p72
    %p74 = scmp.ne.s32.totalorder %s65, %s66
    %p75 = scmp.eq.s32.totalorder %s34, 0
    %p76 = por %p74, %p75
    %p77 = scmp.ne.s32.totalorder %s65, %s66
    %p78 = scmp.eq.s32.totalorder %s35, 1
    %p79 = por %p77, %p78
    %p81 = scmp.ne.s32.totalorder %s66, %s80
    %p82 = scmp.eq.s32.totalorder %s35, 0
    %p83 = por %p81, %p82
    %s85 = sadd.s32 %s84, 1
    %p88 = scmp.eq.s32.totalorder %s29, 1
    %p89 = scmp.ne.s32.totalorder %s84, %s86
    %p90 = scmp.eq.s32.totalorder %s29, 0
    %p91 = por %p89, %p90
    %p92 = scmp.ne.s32.totalorder %s84, %s86
    %p93 = scmp.eq.s32.totalorder %s34, 1
    %p94 = por %p92, %p93
    %p95 = scmp.ne.s32.totalorder %s86, %s87
    %p96 = scmp.eq.s32.totalorder %s34, 0
    %p97 = por %p95, %p96
    %p98 = scmp.ne.s32.totalorder %s86, %s87
    %p99 = scmp.eq.s32.totalorder %s35, 1
    %p100 = por %p98, %p99
    %p102 = scmp.ne.s32.totalorder %s87, %s101
    %p103 = scmp.eq.s32.totalorder %s35, 0
    %p104 = por %p102, %p103
    %s106 = sadd.s32 %s105, 1
    %p109 = scmp.eq.s32.totalorder %s29, 1
    %p110 = scmp.ne.s32.totalorder %s105, %s107
    %p111 = scmp.eq.s32.totalorder %s29, 0
    %p112 = por %p110, %p111
    %p113 = scmp.ne.s32.totalorder %s105, %s107
    %p114 = scmp.eq.s32.totalorder %s34, 1
    %p115 = por %p113, %p114
    %p116 = scmp.ne.s32.totalorder %s107, %s108
    %p117 = scmp.eq.s32.totalorder %s34, 0
    %p118 = por %p116, %p117
    %p119 = scmp.ne.s32.totalorder %s107, %s108
    %p120 = scmp.eq.s32.totalorder %s35, 1
    %p121 = por %p119, %p120
    %p123 = scmp.ne.s32.totalorder %s108, %s122
    %p124 = scmp.eq.s32.totalorder %s35, 0
    %p125 = por %p123, %p124
    %s127 = sadd.s32 %s126, 1
    %p130 = scmp.eq.s32.totalorder %s29, 1
    %p131 = scmp.ne.s32.totalorder %s126, %s128
    %p132 = scmp.eq.s32.totalorder %s29, 0
    %p133 = por %p131, %p132
    %p134 = scmp.ne.s32.totalorder %s126, %s128
    %p135 = scmp.eq.s32.totalorder %s34, 1
    %p136 = por %p134, %p135
    %p137 = scmp.ne.s32.totalorder %s128, %s129
    %p138 = scmp.eq.s32.totalorder %s34, 0
    %p139 = por %p137, %p138
    %p140 = scmp.ne.s32.totalorder %s128, %s129
    %p141 = scmp.eq.s32.totalorder %s35, 1
    %p142 = por %p140, %p141
    %p144 = scmp.ne.s32.totalorder %s129, %s143
    %p145 = scmp.eq.s32.totalorder %s35, 0
    %p146 = por %p144, %p145
    %s148 = sadd.s32 %s147, 1
    %p151 = scmp.eq.s32.totalorder %s29, 1
    %p152 = scmp.ne.s32.totalorder %s147, %s149
    %p153 = scmp.eq.s32.totalorder %s29, 0
    %p154 = por %p152, %p153
    %p155 = scmp.ne.s32.totalorder %s147, %s149
    %p156 = scmp.eq.s32.totalorder %s34, 1
    %p157 = por %p155, %p156
    %p158 = scmp.ne.s32.totalorder %s149, %s150
    %p159 = scmp.eq.s32.totalorder %s34, 0
    %p160 = por %p158, %p159
    %p161 = scmp.ne.s32.totalorder %s149, %s150
    %p162 = scmp.eq.s32.totalorder %s35, 1
    %p163 = por %p161, %p162
    %p165 = scmp.ne.s32.totalorder %s150, %s164
    %p166 = scmp.eq.s32.totalorder %s35, 0
    %p167 = por %p165, %p166
    %s169 = sadd.s32 %s168, 1
    %p172 = scmp.eq.s32.totalorder %s29, 1
    %p173 = scmp.ne.s32.totalorder %s168, %s170
    %p174 = scmp.eq.s32.totalorder %s29, 0
    %p175 = por %p173, %p174
    %p176 = scmp.ne.s32.totalorder %s168, %s170
    %p177 = scmp.eq.s32.totalorder %s34, 1
    %p178 = por %p176, %p177
    %p179 = scmp.ne.s32.totalorder %s170, %s171
    %p180 = scmp.eq.s32.totalorder %s34, 0
    %p181 = por %p179, %p180
    %p182 = scmp.ne.s32.totalorder %s170, %s171
    %p183 = scmp.eq.s32.totalorder %s35, 1
    %p184 = por %p182, %p183
    %p186 = scmp.ne.s32.totalorder %s171, %s185
    %p187 = scmp.eq.s32.totalorder %s35, 0
    %p188 = por %p186, %p187
    %s190 = sadd.s32 %s189, 1
    %p193 = scmp.eq.s32.totalorder %s29, 1
    %p194 = scmp.ne.s32.totalorder %s189, %s191
    %p195 = scmp.eq.s32.totalorder %s29, 0
    %p196 = por %p194, %p195
    %p197 = scmp.ne.s32.totalorder %s189, %s191
    %p198 = scmp.eq.s32.totalorder %s34, 1
    %p199 = por %p197, %p198
    %p200 = scmp.ne.s32.totalorder %s191, %s192
    %p201 = scmp.eq.s32.totalorder %s34, 0
    %p202 = por %p200, %p201
    %p203 = scmp.ne.s32.totalorder %s191, %s192
    %p204 = scmp.eq.s32.totalorder %s35, 1
    %p205 = por %p203, %p204
    %p207 = scmp.ne.s32.totalorder %s192, %s206
    %p208 = scmp.eq.s32.totalorder %s35, 0
    %p209 = por %p207, %p208
    %s211 = sadd.s32 %s210, 1
    %p214 = scmp.eq.s32.totalorder %s29, 1
    %p215 = scmp.ne.s32.totalorder %s210, %s212
    %p216 = scmp.eq.s32.totalorder %s29, 0
    %p217 = por %p215, %p216
    %p218 = scmp.ne.s32.totalorder %s210, %s212
    %p219 = scmp.eq.s32.totalorder %s34, 1
    %p220 = por %p218, %p219
    %p221 = scmp.ne.s32.totalorder %s212, %s213
    %p222 = scmp.eq.s32.totalorder %s34, 0
    %p223 = por %p221, %p222
    %p224 = scmp.ne.s32.totalorder %s212, %s213
    %p225 = scmp.eq.s32.totalorder %s35, 1
    %p226 = por %p224, %p225
    %p228 = scmp.ne.s32.totalorder %s213, %s227
    %p229 = scmp.eq.s32.totalorder %s35, 0
    %p230 = por %p228, %p229
    %s232 = sadd.s32 %s231, 1
    %p235 = scmp.eq.s32.totalorder %s29, 1
    %p236 = scmp.ne.s32.totalorder %s231, %s233
    %p237 = scmp.eq.s32.totalorder %s29, 0
    %p238 = por %p236, %p237
    %p239 = scmp.ne.s32.totalorder %s231, %s233
    %p240 = scmp.eq.s32.totalorder %s34, 1
    %p241 = por %p239, %p240
    %p242 = scmp.ne.s32.totalorder %s233, %s234
    %p243 = scmp.eq.s32.totalorder %s34, 0
    %p244 = por %p242, %p243
    %p245 = scmp.ne.s32.totalorder %s233, %s234
    %p246 = scmp.eq.s32.totalorder %s35, 1
    %p247 = por %p245, %p246
    %p249 = scmp.ne.s32.totalorder %s234, %s248
    %p250 = scmp.eq.s32.totalorder %s35, 0
    %p251 = por %p249, %p250
    %s253 = sadd.s32 %s252, 1
    %p256 = scmp.eq.s32.totalorder %s29, 1
    %p257 = scmp.ne.s32.totalorder %s252, %s254
    %p258 = scmp.eq.s32.totalorder %s29, 0
    %p259 = por %p257, %p258
    %p260 = scmp.ne.s32.totalorder %s252, %s254
    %p261 = scmp.eq.s32.totalorder %s34, 1
    %p262 = por %p260, %p261
    %p263 = scmp.ne.s32.totalorder %s254, %s255
    %p264 = scmp.eq.s32.totalorder %s34, 0
    %p265 = por %p263, %p264
    %p266 = scmp.ne.s32.totalorder %s254, %s255
    %p267 = scmp.eq.s32.totalorder %s35, 1
    %p268 = por %p266, %p267
    %p270 = scmp.ne.s32.totalorder %s255, %s269
    %p271 = scmp.eq.s32.totalorder %s35, 0
    %p272 = por %p270, %p271
    %s274 = sadd.s32 %s273, 1
    %p277 = scmp.eq.s32.totalorder %s29, 1
    %p278 = scmp.ne.s32.totalorder %s273, %s275
    %p279 = scmp.eq.s32.totalorder %s29, 0
    %p280 = por %p278, %p279
    %p281 = scmp.ne.s32.totalorder %s273, %s275
    %p282 = scmp.eq.s32.totalorder %s34, 1
    %p283 = por %p281, %p282
    %p284 = scmp.ne.s32.totalorder %s275, %s276
    %p285 = scmp.eq.s32.totalorder %s34, 0
    %p286 = por %p284, %p285
    %p287 = scmp.ne.s32.totalorder %s275, %s276
    %p288 = scmp.eq.s32.totalorder %s35, 1
    %p289 = por %p287, %p288
    %p291 = scmp.ne.s32.totalorder %s276, %s290
    %p292 = scmp.eq.s32.totalorder %s35, 0
    %p293 = por %p291, %p292
    %s295 = sadd.s32 %s294, 1
    %p298 = scmp.eq.s32.totalorder %s29, 1
    %p299 = scmp.ne.s32.totalorder %s294, %s296
    %p300 = scmp.eq.s32.totalorder %s29, 0
    %p301 = por %p299, %p300
    %p302 = scmp.ne.s32.totalorder %s294, %s296
    %p303 = scmp.eq.s32.totalorder %s34, 1
    %p304 = por %p302, %p303
    %p305 = scmp.ne.s32.totalorder %s296, %s297
    %p306 = scmp.eq.s32.totalorder %s34, 0
    %p307 = por %p305, %p306
    %p308 = scmp.ne.s32.totalorder %s296, %s297
    %p309 = scmp.eq.s32.totalorder %s35, 1
    %p310 = por %p308, %p309
    %p312 = scmp.ne.s32.totalorder %s297, %s311
    %p313 = scmp.eq.s32.totalorder %s35, 0
    %p314 = por %p312, %p313
    %s316 = sadd.s32 %s315, 1
    %p319 = scmp.eq.s32.totalorder %s29, 1
    %p320 = scmp.ne.s32.totalorder %s315, %s317
    %p321 = scmp.eq.s32.totalorder %s29, 0
    %p322 = por %p320, %p321
    %p323 = scmp.ne.s32.totalorder %s315, %s317
    %p324 = scmp.eq.s32.totalorder %s34, 1
    %p325 = por %p323, %p324
    %p326 = scmp.ne.s32.totalorder %s317, %s318
    %p327 = scmp.eq.s32.totalorder %s34, 0
    %p328 = por %p326, %p327
    %p329 = scmp.ne.s32.totalorder %s317, %s318
    %p330 = scmp.eq.s32.totalorder %s35, 1
    %p331 = por %p329, %p330
    %p333 = scmp.ne.s32.totalorder %s318, %s332
    %p334 = scmp.eq.s32.totalorder %s35, 0
    %p335 = por %p333, %p334
    %s337 = sadd.s32 %s336, 1
    %p340 = scmp.eq.s32.totalorder %s29, 1
    %p341 = scmp.ne.s32.totalorder %s336, %s338
    %p342 = scmp.eq.s32.totalorder %s29, 0
    %p343 = por %p341, %p342
    %p344 = scmp.ne.s32.totalorder %s336, %s338
    %p345 = scmp.eq.s32.totalorder %s34, 1
    %p346 = por %p344, %p345
    %p347 = scmp.ne.s32.totalorder %s338, %s339
    %p348 = scmp.eq.s32.totalorder %s34, 0
    %p349 = por %p347, %p348
    %p350 = scmp.ne.s32.totalorder %s338, %s339
    %p351 = scmp.eq.s32.totalorder %s35, 1
    %p352 = por %p350, %p351
    %p354 = scmp.ne.s32.totalorder %s339, %s353
    %p355 = scmp.eq.s32.totalorder %s35, 0
    %p356 = por %p354, %p355
    %s358 = sadd.s32 %s357, 1
    %p361 = scmp.eq.s32.totalorder %s29, 1
    %p362 = scmp.ne.s32.totalorder %s357, %s359
    %p363 = scmp.eq.s32.totalorder %s29, 0
    %p364 = por %p362, %p363
    %p365 = scmp.ne.s32.totalorder %s357, %s359
    %p366 = scmp.eq.s32.totalorder %s34, 1
    %p367 = por %p365, %p366
    %p368 = scmp.ne.s32.totalorder %s359, %s360
    %p369 = scmp.eq.s32.totalorder %s34, 0
    %p370 = por %p368, %p369
    %p371 = scmp.ne.s32.totalorder %s359, %s360
    %p372 = scmp.eq.s32.totalorder %s35, 1
    %p373 = por %p371, %p372
    %p375 = scmp.ne.s32.totalorder %s360, %s374
    %p376 = scmp.eq.s32.totalorder %s35, 0
    %p377 = por %p375, %p376
    %s379 = sadd.s32 %s378, 1
    %p382 = scmp.eq.s32.totalorder %s29, 1
    %p383 = scmp.ne.s32.totalorder %s378, %s380
    %p384 = scmp.eq.s32.totalorder %s29, 0
    %p385 = por %p383, %p384
    %p386 = scmp.ne.s32.totalorder %s378, %s380
    %p387 = scmp.eq.s32.totalorder %s34, 1
    %p388 = por %p386, %p387
    %p389 = scmp.ne.s32.totalorder %s380, %s381
    %p390 = scmp.eq.s32.totalorder %s34, 0
    %p391 = por %p389, %p390
    %p392 = scmp.ne.s32.totalorder %s380, %s381
    %p393 = scmp.eq.s32.totalorder %s35, 1
    %p394 = por %p392, %p393
    %p396 = scmp.ne.s32.totalorder %s381, %s395
    %p397 = scmp.eq.s32.totalorder %s35, 0
    %p398 = por %p396, %p397
    %s400 = sadd.s32 %s399, 1
    %p403 = scmp.eq.s32.totalorder %s29, 1
    %p404 = scmp.ne.s32.totalorder %s399, %s401
    %p405 = scmp.eq.s32.totalorder %s29, 0
    %p406 = por %p404, %p405
    %p407 = scmp.ne.s32.totalorder %s399, %s401
    %p408 = scmp.eq.s32.totalorder %s34, 1
    %p409 = por %p407, %p408
    %p410 = scmp.ne.s32.totalorder %s401, %s402
    %p411 = scmp.eq.s32.totalorder %s34, 0
    %p412 = por %p410, %p411
    %p413 = scmp.ne.s32.totalorder %s401, %s402
    %p414 = scmp.eq.s32.totalorder %s35, 1
    %p415 = por %p413, %p414
    %p417 = scmp.ne.s32.totalorder %s402, %s416
    %p418 = scmp.eq.s32.totalorder %s35, 0
    %p419 = por %p417, %p418
    %s421 = sadd.s32 %s420, 1
    %p424 = scmp.eq.s32.totalorder %s29, 1
    %p425 = scmp.ne.s32.totalorder %s420, %s422
    %p426 = scmp.eq.s32.totalorder %s29, 0
    %p427 = por %p425, %p426
    %p428 = scmp.ne.s32.totalorder %s420, %s422
    %p429 = scmp.eq.s32.totalorder %s34, 1
    %p430 = por %p428, %p429
    %p431 = scmp.ne.s32.totalorder %s422, %s423
    %p432 = scmp.eq.s32.totalorder %s34, 0
    %p433 = por %p431, %p432
    %p434 = scmp.ne.s32.totalorder %s422, %s423
    %p435 = scmp.eq.s32.totalorder %s35, 1
    %p436 = por %p434, %p435
    %p438 = scmp.ne.s32.totalorder %s423, %s437
    %p439 = scmp.eq.s32.totalorder %s35, 0
    %p440 = por %p438, %p439
    %s442 = sadd.s32 %s441, 1
    %p445 = scmp.eq.s32.totalorder %s29, 1
    %p446 = scmp.ne.s32.totalorder %s441, %s443
    %p447 = scmp.eq.s32.totalorder %s29, 0
    %p448 = por %p446, %p447
    %p449 = scmp.ne.s32.totalorder %s441, %s443
    %p450 = scmp.eq.s32.totalorder %s34, 1
    %p451 = por %p449, %p450
    %p452 = scmp.ne.s32.totalorder %s443, %s444
    %p453 = scmp.eq.s32.totalorder %s34, 0
    %p454 = por %p452, %p453
    %p455 = scmp.ne.s32.totalorder %s443, %s444
    %p456 = scmp.eq.s32.totalorder %s35, 1
    %p457 = por %p455, %p456
    %p459 = scmp.ne.s32.totalorder %s444, %s458
    %p460 = scmp.eq.s32.totalorder %s35, 0
    %p461 = por %p459, %p460
    %s463 = sadd.s32 %s462, 1
    %p466 = scmp.eq.s32.totalorder %s29, 1
    %p467 = scmp.ne.s32.totalorder %s462, %s464
    %p468 = scmp.eq.s32.totalorder %s29, 0
    %p469 = por %p467, %p468
    %p470 = scmp.ne.s32.totalorder %s462, %s464
    %p471 = scmp.eq.s32.totalorder %s34, 1
    %p472 = por %p470, %p471
    %p473 = scmp.ne.s32.totalorder %s464, %s465
    %p474 = scmp.eq.s32.totalorder %s34, 0
    %p475 = por %p473, %p474
    %p476 = scmp.ne.s32.totalorder %s464, %s465
    %p477 = scmp.eq.s32.totalorder %s35, 1
    %p478 = por %p476, %p477
    %p480 = scmp.ne.s32.totalorder %s465, %s479
    %p481 = scmp.eq.s32.totalorder %s35, 0
    %p482 = por %p480, %p481
    %s483 = ssub.s32 %s29, %s36
    %p484 = scmp.eq.s32.totalorder %s483, 0
    %s486 = sadd.s32 %s485, 1
    %s487 = scalar_select %p484, %s485, %s486
    %p490 = pneg %p484
    %p491 = scmp.eq.s32.totalorder %s29, 1
    %p492 = por %p490, %p491
    %p493 = scmp.ne.s32.totalorder %s485, %s488
    %p494 = scmp.eq.s32.totalorder %s29, 0
    %p495 = por %p493, %p494
    %p496 = scmp.ne.s32.totalorder %s485, %s488
    %p497 = scmp.eq.s32.totalorder %s34, 1
    %p498 = por %p496, %p497
    %p499 = scmp.ne.s32.totalorder %s488, %s489
    %p500 = scmp.eq.s32.totalorder %s34, 0
    %p501 = por %p499, %p500
    %p502 = scmp.ne.s32.totalorder %s488, %s489
    %p503 = scmp.eq.s32.totalorder %s35, 1
    %p504 = por %p502, %p503
    %p506 = scmp.ne.s32.totalorder %s489, %s505
    %p507 = scmp.eq.s32.totalorder %s35, 0
    %p508 = por %p506, %p507
    %p509 = scmp.le.s32.totalorder 1, %s29
    %p510 = scmp.lt.s32.totalorder %s29, 3
    %p511 = pnand %p509, %p510
    %p512 = pneg %p511
    // Predicated region
    $region9: #{model_forward.1} parent=5 // pred_check
      _
    $region10: #{model_forward.1} parent=5 // pred_check_branch
      %514 = sbr.rel (%p511) target = $region12
    $region11: #{model_forward.1} parent=5 // pred_region
      %s515 = ssub.s32 %s29, 1
      // Predicated region
      $region13: #{model_forward.1} parent=11 // pred_check
        %p516 = pneg %p76
      $region14: #{model_forward.1} parent=11 // pred_check_branch
        %518 = sbr.rel (%p516) target = $region16
      $region15: #{model_forward.1} parent=11 // pred_region
        _
      $region16: #{model_forward.1} parent=11 // pred_fallthru
        _
      // Predicated region
      $region17: #{model_forward.1} parent=11 // pred_check
        %p519 = pneg %p97
      $region18: #{model_forward.1} parent=11 // pred_check_branch
        %521 = sbr.rel (%p519) target = $region20
      $region19: #{model_forward.1} parent=11 // pred_region
        _
      $region20: #{model_forward.1} parent=11 // pred_fallthru
        _
      // Predicated region
      $region21: #{model_forward.1} parent=11 // pred_check
        %p522 = pneg %p118
      $region22: #{model_forward.1} parent=11 // pred_check_branch
        %524 = sbr.rel (%p522) target = $region24
      $region23: #{model_forward.1} parent=11 // pred_region
        _
      $region24: #{model_forward.1} parent=11 // pred_fallthru
        _
      // Predicated region
      $region25: #{model_forward.1} parent=11 // pred_check
        %p525 = pneg %p139
      $region26: #{model_forward.1} parent=11 // pred_check_branch
        %527 = sbr.rel (%p525) target = $region28
      $region27: #{model_forward.1} parent=11 // pred_region
        _
      $region28: #{model_forward.1} parent=11 // pred_fallthru
        _
      // Predicated region
      $region29: #{model_forward.1} parent=11 // pred_check
        %p528 = pneg %p160
      $region30: #{model_forward.1} parent=11 // pred_check_branch
        %530 = sbr.rel (%p528) target = $region32
      $region31: #{model_forward.1} parent=11 // pred_region
        _
      $region32: #{model_forward.1} parent=11 // pred_fallthru
        _
      // Predicated region
      $region33: #{model_forward.1} parent=11 // pred_check
        %p531 = pneg %p181
      $region34: #{model_forward.1} parent=11 // pred_check_branch
        %533 = sbr.rel (%p531) target = $region36
      $region35: #{model_forward.1} parent=11 // pred_region
        _
      $region36: #{model_forward.1} parent=11 // pred_fallthru
        _
      // Predicated region
      $region37: #{model_forward.1} parent=11 // pred_check
        %p534 = pneg %p202
      $region38: #{model_forward.1} parent=11 // pred_check_branch
        %536 = sbr.rel (%p534) target = $region40
      $region39: #{model_forward.1} parent=11 // pred_region
        _
      $region40: #{model_forward.1} parent=11 // pred_fallthru
        _
      // Predicated region
      $region41: #{model_forward.1} parent=11 // pred_check
        %p537 = pneg %p223
      $region42: #{model_forward.1} parent=11 // pred_check_branch
        %539 = sbr.rel (%p537) target = $region44
      $region43: #{model_forward.1} parent=11 // pred_region
        _
      $region44: #{model_forward.1} parent=11 // pred_fallthru
        _
      // Predicated region
      $region45: #{model_forward.1} parent=11 // pred_check
        %p540 = pneg %p244
      $region46: #{model_forward.1} parent=11 // pred_check_branch
        %542 = sbr.rel (%p540) target = $region48
      $region47: #{model_forward.1} parent=11 // pred_region
        _
      $region48: #{model_forward.1} parent=11 // pred_fallthru
        _
      // Predicated region
      $region49: #{model_forward.1} parent=11 // pred_check
        %p543 = pneg %p265
      $region50: #{model_forward.1} parent=11 // pred_check_branch
        %545 = sbr.rel (%p543) target = $region52
      $region51: #{model_forward.1} parent=11 // pred_region
        _
      $region52: #{model_forward.1} parent=11 // pred_fallthru
        _
      // Predicated region
      $region53: #{model_forward.1} parent=11 // pred_check
        %p546 = pneg %p286
      $region54: #{model_forward.1} parent=11 // pred_check_branch
        %548 = sbr.rel (%p546) target = $region56
      $region55: #{model_forward.1} parent=11 // pred_region
        _
      $region56: #{model_forward.1} parent=11 // pred_fallthru
        _
      // Predicated region
      $region57: #{model_forward.1} parent=11 // pred_check
        %p549 = pneg %p307
      $region58: #{model_forward.1} parent=11 // pred_check_branch
        %551 = sbr.rel (%p549) target = $region60
      $region59: #{model_forward.1} parent=11 // pred_region
        _
      $region60: #{model_forward.1} parent=11 // pred_fallthru
        _
      // Predicated region
      $region61: #{model_forward.1} parent=11 // pred_check
        %p552 = pneg %p328
      $region62: #{model_forward.1} parent=11 // pred_check_branch
        %554 = sbr.rel (%p552) target = $region64
      $region63: #{model_forward.1} parent=11 // pred_region
        _
      $region64: #{model_forward.1} parent=11 // pred_fallthru
        _
      // Predicated region
      $region65: #{model_forward.1} parent=11 // pred_check
        %p555 = pneg %p349
      $region66: #{model_forward.1} parent=11 // pred_check_branch
        %557 = sbr.rel (%p555) target = $region68
      $region67: #{model_forward.1} parent=11 // pred_region
        _
      $region68: #{model_forward.1} parent=11 // pred_fallthru
        _
      // Predicated region
      $region69: #{model_forward.1} parent=11 // pred_check
        %p558 = pneg %p370
      $region70: #{model_forward.1} parent=11 // pred_check_branch
        %560 = sbr.rel (%p558) target = $region72
      $region71: #{model_forward.1} parent=11 // pred_region
        _
      $region72: #{model_forward.1} parent=11 // pred_fallthru
        _
      // Predicated region
      $region73: #{model_forward.1} parent=11 // pred_check
        %p561 = pneg %p391
      $region74: #{model_forward.1} parent=11 // pred_check_branch
        %563 = sbr.rel (%p561) target = $region76
      $region75: #{model_forward.1} parent=11 // pred_region
        _
      $region76: #{model_forward.1} parent=11 // pred_fallthru
        _
      // Predicated region
      $region77: #{model_forward.1} parent=11 // pred_check
        %p564 = pneg %p412
      $region78: #{model_forward.1} parent=11 // pred_check_branch
        %566 = sbr.rel (%p564) target = $region80
      $region79: #{model_forward.1} parent=11 // pred_region
        _
      $region80: #{model_forward.1} parent=11 // pred_fallthru
        _
      // Predicated region
      $region81: #{model_forward.1} parent=11 // pred_check
        %p567 = pneg %p433
      $region82: #{model_forward.1} parent=11 // pred_check_branch
        %569 = sbr.rel (%p567) target = $region84
      $region83: #{model_forward.1} parent=11 // pred_region
        _
      $region84: #{model_forward.1} parent=11 // pred_fallthru
        _
      // Predicated region
      $region85: #{model_forward.1} parent=11 // pred_check
        %p570 = pneg %p454
      $region86: #{model_forward.1} parent=11 // pred_check_branch
        %572 = sbr.rel (%p570) target = $region88
      $region87: #{model_forward.1} parent=11 // pred_region
        _
      $region88: #{model_forward.1} parent=11 // pred_fallthru
        _
      // Predicated region
      $region89: #{model_forward.1} parent=11 // pred_check
        %p573 = pneg %p475
      $region90: #{model_forward.1} parent=11 // pred_check_branch
        %575 = sbr.rel (%p573) target = $region92
      $region91: #{model_forward.1} parent=11 // pred_region
        _
      $region92: #{model_forward.1} parent=11 // pred_fallthru
        _
    $region12: #{model_forward.1} parent=5 // pred_fallthru
      _
    %p576 = scmp.lt.s32.totalorder %s29, 2
    // Predicated region
    $region93: #{model_forward.1} parent=5 // pred_check
      %p577 = pneg %p576
    $region94: #{model_forward.1} parent=5 // pred_check_branch
      %579 = sbr.rel (%p577) target = $region96
    $region95: #{model_forward.1} parent=5 // pred_region
      // Predicated region
      $region97: #{model_forward.1} parent=95 // pred_check
        %p580 = pneg %p49
      $region98: #{model_forward.1} parent=95 // pred_check_branch
        %582 = sbr.rel (%p580) target = $region100
      $region99: #{model_forward.1} parent=95 // pred_region
        %p583 = scmp.lt.s32.totalorder %s29, 1
        %s584 = scalar_select %p583, %s29, 1
        %s585 = smul.addr %s584, 32
        %s586 = smul.addr %s585, 8
        %s587 = scalar_lea.vmem %s0, %s586
      $region100: #{model_forward.1} parent=95 // pred_fallthru
        _
    $region96: #{model_forward.1} parent=5 // pred_fallthru
      _
    %p588 = scmp.le.s32.totalorder 1, %s29
    %p589 = scmp.lt.s32.totalorder %s29, 3
    %p590 = pnand %p588, %p589
    %p591 = pneg %p590
    // Predicated region
    $region101: #{model_forward.1} parent=5 // pred_check
      _
    $region102: #{model_forward.1} parent=5 // pred_check_branch
      %593 = sbr.rel (%p590) target = $region104
    $region103: #{model_forward.1} parent=5 // pred_region
      %s594 = ssub.s32 %s29, 1
      %p595 = scmp.lt.s32.totalorder %s34, 1
      %s596 = scalar_select %p595, %s34, 1
      %s597 = smul.addr %s596, 32
      %s598 = smul.addr %s597, 8
      %s599 = scalar_lea.vmem %s0, %s598
      %p600 = pneg %p55
      %p601 = pneg %p52
      %p602 = pneg %p76
      %p603 = pneg %p73
      %p604 = pneg %p97
      %p605 = pneg %p94
      %p606 = pneg %p118
      %p607 = pneg %p115
      %p608 = pneg %p139
      %p609 = pneg %p136
      %p610 = pneg %p160
      %p611 = pneg %p157
      %p612 = pneg %p181
      %p613 = pneg %p178
      %p614 = pneg %p202
      %p615 = pneg %p199
      %p616 = pneg %p223
      %p617 = pneg %p220
      %p618 = pneg %p244
      %p619 = pneg %p241
      %p620 = pneg %p265
      %p621 = pneg %p262
      %p622 = pneg %p286
      %p623 = pneg %p283
      %p624 = pneg %p307
      %p625 = pneg %p304
      %p626 = pneg %p328
      %p627 = pneg %p325
      %p628 = pneg %p349
      %p629 = pneg %p346
      %p630 = pneg %p370
      %p631 = pneg %p367
      %p632 = pneg %p391
      %p633 = pneg %p388
      %p634 = pneg %p412
      %p635 = pneg %p409
      %p636 = pneg %p433
      %p637 = pneg %p430
      %p638 = pneg %p454
      %p639 = pneg %p451
      %p640 = pneg %p475
      %p641 = pneg %p472
      %p642 = pneg %p501
      %p643 = pneg %p498
      %p644 = scmp.lt.s32.totalorder %s34, 1
      %s645 = scalar_select %p644, %s34, 1
      %s646 = smul.addr %s645, 32
      %s647 = smul.addr %s646, 8
      %s648 = scalar_lea.vmem %s21, %s647
      %p649 = scmp.lt.s32.totalorder %s34, 1
      %s650 = scalar_select %p649, %s34, 1
      %s651 = smul.addr %s650, 32
      %s652 = smul.addr %s651, 8
      %s653 = scalar_lea.vmem %s0, %s652
      %p654 = scmp.lt.s32.totalorder %s34, 1
      %s655 = scalar_select %p654, %s34, 1
      %s656 = smul.addr %s655, 32
      %s657 = smul.addr %s656, 8
      %s658 = scalar_lea.vmem %s21, %s657
      %vm660 = vcmask 7168
      %661 = vst.msk [vmem:[#allocation2] sm:$0xff] %vm660, 0.0
      %662 = vst.msk [vmem:[#allocation2 + $0x8] sm:$0xff] %vm660, 0.0
      %vm663 = vcmask 1024
      %664 = vst.msk [vmem:[#allocation2 + $0x10] sm:$0x3] %vm663, 0.0
      %665 = vst.msk [vmem:[#allocation2 + $0x18] sm:$0xff] %vm660, 0.0
      %666 = vst.msk [vmem:[#allocation2 + $0x20] sm:$0xff] %vm660, 0.0
      %667 = vst.msk [vmem:[#allocation2 + $0x28] sm:$0x3] %vm663, 0.0
      %668 = vst.msk [vmem:[#allocation2 + $0x30] sm:$0xff] %vm660, 0.0
      %669 = vst.msk [vmem:[#allocation2 + $0x38] sm:$0xff] %vm660, 0.0
      %670 = vst.msk [vmem:[#allocation2 + $0x40] sm:$0x3] %vm663, 0.0
      %671 = vst.msk [vmem:[#allocation2 + $0x48] sm:$0xff] %vm660, 0.0
      %672 = vst.msk [vmem:[#allocation2 + $0x50] sm:$0xff] %vm660, 0.0
      %673 = vst.msk [vmem:[#allocation2 + $0x58] sm:$0x3] %vm663, 0.0
      %674 = vst.msk [vmem:[#allocation2 + $0x60] sm:$0xff] %vm660, 0.0
      %675 = vst.msk [vmem:[#allocation2 + $0x68] sm:$0xff] %vm660, 0.0
      %676 = vst.msk [vmem:[#allocation2 + $0x70] sm:$0x3] %vm663, 0.0
      %677 = vst.msk [vmem:[#allocation2 + $0x78] sm:$0xff] %vm660, 0.0
      %678 = vst.msk [vmem:[#allocation2 + $0x80] sm:$0xff] %vm660, 0.0
      %679 = vst.msk [vmem:[#allocation2 + $0x88] sm:$0x3] %vm663, 0.0
      %680 = vst.msk [vmem:[#allocation2 + $0x90] sm:$0xff] %vm660, 0.0
      %681 = vst.msk [vmem:[#allocation2 + $0x98] sm:$0xff] %vm660, 0.0
      %682 = vst.msk [vmem:[#allocation2 + $0xa0] sm:$0x3] %vm663, 0.0
      %683 = vst.msk [vmem:[#allocation2 + $0xa8] sm:$0xff] %vm660, 0.0
      %684 = vst.msk [vmem:[#allocation2 + $0xb0] sm:$0xff] %vm660, 0.0
      %685 = vst.msk [vmem:[#allocation2 + $0xb8] sm:$0x3] %vm663, 0.0
      %686 = vst.msk [vmem:[#allocation2 + $0xc0] sm:$0xff] %vm660, 0.0
      %687 = vst.msk [vmem:[#allocation2 + $0xc8] sm:$0xff] %vm660, 0.0
      %688 = vst.msk [vmem:[#allocation2 + $0xd0] sm:$0x3] %vm663, 0.0
      %689 = vst.msk [vmem:[#allocation2 + $0xd8] sm:$0xff] %vm660, 0.0
      %690 = vst.msk [vmem:[#allocation2 + $0xe0] sm:$0xff] %vm660, 0.0
      %691 = vst.msk [vmem:[#allocation2 + $0xe8] sm:$0x3] %vm663, 0.0
      %692 = vst.msk [vmem:[#allocation2 + $0xf0] sm:$0xff] %vm660, 0.0
      %693 = vst.msk [vmem:[#allocation2 + $0xf8] sm:$0xff] %vm660, 0.0
      %694 = vst.msk [vmem:[#allocation2 + $0x100] sm:$0x3] %vm663, 0.0
      %695 = vst.msk [vmem:[#allocation2 + $0x108] sm:$0xff] %vm660, 0.0
      %696 = vst.msk [vmem:[#allocation2 + $0x110] sm:$0xff] %vm660, 0.0
      %697 = vst.msk [vmem:[#allocation2 + $0x118] sm:$0x3] %vm663, 0.0
      %698 = vst.msk [vmem:[#allocation2 + $0x120] sm:$0xff] %vm660, 0.0
      %699 = vst.msk [vmem:[#allocation2 + $0x128] sm:$0xff] %vm660, 0.0
      %700 = vst.msk [vmem:[#allocation2 + $0x130] sm:$0x3] %vm663, 0.0
      %701 = vst.msk [vmem:[#allocation2 + $0x138] sm:$0xff] %vm660, 0.0
      %702 = vst.msk [vmem:[#allocation2 + $0x140] sm:$0xff] %vm660, 0.0
      %703 = vst.msk [vmem:[#allocation2 + $0x148] sm:$0x3] %vm663, 0.0
      %704 = vst.msk [vmem:[#allocation2 + $0x150] sm:$0xff] %vm660, 0.0
      %705 = vst.msk [vmem:[#allocation2 + $0x158] sm:$0xff] %vm660, 0.0
      %706 = vst.msk [vmem:[#allocation2 + $0x160] sm:$0x3] %vm663, 0.0
      %707 = vst.msk [vmem:[#allocation2 + $0x168] sm:$0xff] %vm660, 0.0
      %708 = vst.msk [vmem:[#allocation2 + $0x170] sm:$0xff] %vm660, 0.0
      %709 = vst.msk [vmem:[#allocation2 + $0x178] sm:$0x3] %vm663, 0.0
      %710 = vst.msk [vmem:[#allocation2 + $0x180] sm:$0xff] %vm660, 0.0
      %711 = vst.msk [vmem:[#allocation2 + $0x188] sm:$0xff] %vm660, 0.0
      %712 = vst.msk [vmem:[#allocation2 + $0x190] sm:$0x3] %vm663, 0.0
      %713 = vst.msk [vmem:[#allocation2 + $0x198] sm:$0xff] %vm660, 0.0
      %714 = vst.msk [vmem:[#allocation2 + $0x1a0] sm:$0xff] %vm660, 0.0
      %715 = vst.msk [vmem:[#allocation2 + $0x1a8] sm:$0x3] %vm663, 0.0
      %vm716 = vcmask 64512
      %717 = vst.msk [vmem:[#allocation3] sm:$0xff] %vm716, 0.0
      %718 = vst.msk [vmem:[#allocation3 + $0x8] sm:$0xff] %vm716, 0.0
      %vm719 = vcmask 58368
      %720 = vst.msk [vmem:[#allocation3 + $0x10] sm:$0x3] %vm719, 0.0
      %721 = vst.msk [vmem:[#allocation3 + $0x18] sm:$0xff] %vm716, 0.0
      %722 = vst.msk [vmem:[#allocation3 + $0x20] sm:$0xff] %vm716, 0.0
      %723 = vst.msk [vmem:[#allocation3 + $0x28] sm:$0x3] %vm719, 0.0
      %724 = vst.msk [vmem:[#allocation3 + $0x30] sm:$0xff] %vm716, 0.0
      %725 = vst.msk [vmem:[#allocation3 + $0x38] sm:$0xff] %vm716, 0.0
      %726 = vst.msk [vmem:[#allocation3 + $0x40] sm:$0x3] %vm719, 0.0
      %727 = vst.msk [vmem:[#allocation3 + $0x48] sm:$0xff] %vm716, 0.0
      %728 = vst.msk [vmem:[#allocation3 + $0x50] sm:$0xff] %vm716, 0.0
      %729 = vst.msk [vmem:[#allocation3 + $0x58] sm:$0x3] %vm719, 0.0
      %730 = vst.msk [vmem:[#allocation3 + $0x60] sm:$0xff] %vm716, 0.0
      %731 = vst.msk [vmem:[#allocation3 + $0x68] sm:$0xff] %vm716, 0.0
      %732 = vst.msk [vmem:[#allocation3 + $0x70] sm:$0x3] %vm719, 0.0
      %733 = vst.msk [vmem:[#allocation3 + $0x78] sm:$0xff] %vm716, 0.0
      %734 = vst.msk [vmem:[#allocation3 + $0x80] sm:$0xff] %vm716, 0.0
      %735 = vst.msk [vmem:[#allocation3 + $0x88] sm:$0x3] %vm719, 0.0
      %736 = vst.msk [vmem:[#allocation3 + $0x90] sm:$0xff] %vm716, 0.0
      %737 = vst.msk [vmem:[#allocation3 + $0x98] sm:$0xff] %vm716, 0.0
      %738 = vst.msk [vmem:[#allocation3 + $0xa0] sm:$0x3] %vm719, 0.0
      %739 = vst.msk [vmem:[#allocation3 + $0xa8] sm:$0xff] %vm716, 0.0
      %740 = vst.msk [vmem:[#allocation3 + $0xb0] sm:$0xff] %vm716, 0.0
      %741 = vst.msk [vmem:[#allocation3 + $0xb8] sm:$0x3] %vm719, 0.0
      %742 = vst.msk [vmem:[#allocation3 + $0xc0] sm:$0xff] %vm716, 0.0
      %743 = vst.msk [vmem:[#allocation3 + $0xc8] sm:$0xff] %vm716, 0.0
      %744 = vst.msk [vmem:[#allocation3 + $0xd0] sm:$0x3] %vm719, 0.0
      %745 = vst.msk [vmem:[#allocation3 + $0xd8] sm:$0xff] %vm716, 0.0
      %746 = vst.msk [vmem:[#allocation3 + $0xe0] sm:$0xff] %vm716, 0.0
      %747 = vst.msk [vmem:[#allocation3 + $0xe8] sm:$0x3] %vm719, 0.0
      %748 = vst.msk [vmem:[#allocation3 + $0xf0] sm:$0xff] %vm716, 0.0
      %749 = vst.msk [vmem:[#allocation3 + $0xf8] sm:$0xff] %vm716, 0.0
      %750 = vst.msk [vmem:[#allocation3 + $0x100] sm:$0x3] %vm719, 0.0
      %751 = vst.msk [vmem:[#allocation3 + $0x108] sm:$0xff] %vm716, 0.0
      %752 = vst.msk [vmem:[#allocation3 + $0x110] sm:$0xff] %vm716, 0.0
      %753 = vst.msk [vmem:[#allocation3 + $0x118] sm:$0x3] %vm719, 0.0
      %754 = vst.msk [vmem:[#allocation3 + $0x120] sm:$0xff] %vm716, 0.0
      %755 = vst.msk [vmem:[#allocation3 + $0x128] sm:$0xff] %vm716, 0.0
      %756 = vst.msk [vmem:[#allocation3 + $0x130] sm:$0x3] %vm719, 0.0
      %757 = vst.msk [vmem:[#allocation3 + $0x138] sm:$0xff] %vm716, 0.0
      %758 = vst.msk [vmem:[#allocation3 + $0x140] sm:$0xff] %vm716, 0.0
      %759 = vst.msk [vmem:[#allocation3 + $0x148] sm:$0x3] %vm719, 0.0
      %760 = vst.msk [vmem:[#allocation3 + $0x150] sm:$0xff] %vm716, 0.0
      %761 = vst.msk [vmem:[#allocation3 + $0x158] sm:$0xff] %vm716, 0.0
      %762 = vst.msk [vmem:[#allocation3 + $0x160] sm:$0x3] %vm719, 0.0
      %763 = vst.msk [vmem:[#allocation3 + $0x168] sm:$0xff] %vm716, 0.0
      %764 = vst.msk [vmem:[#allocation3 + $0x170] sm:$0xff] %vm716, 0.0
      %765 = vst.msk [vmem:[#allocation3 + $0x178] sm:$0x3] %vm719, 0.0
      %766 = vst.msk [vmem:[#allocation3 + $0x180] sm:$0xff] %vm716, 0.0
      %767 = vst.msk [vmem:[#allocation3 + $0x188] sm:$0xff] %vm716, 0.0
      %768 = vst.msk [vmem:[#allocation3 + $0x190] sm:$0x3] %vm719, 0.0
      %769 = vst.msk [vmem:[#allocation3 + $0x198] sm:$0xff] %vm716, 0.0
      %770 = vst.msk [vmem:[#allocation3 + $0x1a0] sm:$0xff] %vm716, 0.0
      %771 = vst.msk [vmem:[#allocation3 + $0x1a8] sm:$0x3] %vm719, 0.0
      %vm772 = vcmask 130048
      %773 = vst.msk [vmem:[#allocation5] sm:$0xff] %vm772, 0.0
      %vm774 = vcmask 123904
      %775 = vst.msk [vmem:[#allocation5 + $0x8] sm:$0x3] %vm774, 0.0
      %776 = vst.msk [vmem:[#allocation5 + $0x10] sm:$0xff] %vm772, 0.0
      %777 = vst.msk [vmem:[#allocation5 + $0x18] sm:$0x3] %vm774, 0.0
      %778 = vst.msk [vmem:[#allocation5 + $0x20] sm:$0xff] %vm772, 0.0
      %779 = vst.msk [vmem:[#allocation5 + $0x28] sm:$0x3] %vm774, 0.0
      %780 = vst.msk [vmem:[#allocation5 + $0x30] sm:$0xff] %vm772, 0.0
      %781 = vst.msk [vmem:[#allocation5 + $0x38] sm:$0x3] %vm774, 0.0
      %782 = vst.msk [vmem:[#allocation5 + $0x40] sm:$0xff] %vm772, 0.0
      %783 = vst.msk [vmem:[#allocation5 + $0x48] sm:$0x3] %vm774, 0.0
      %784 = vst.msk [vmem:[#allocation5 + $0x50] sm:$0xff] %vm772, 0.0
      %785 = vst.msk [vmem:[#allocation5 + $0x58] sm:$0x3] %vm774, 0.0
      %786 = vst.msk [vmem:[#allocation5 + $0x60] sm:$0xff] %vm772, 0.0
      %787 = vst.msk [vmem:[#allocation5 + $0x68] sm:$0x3] %vm774, 0.0
      %788 = vst.msk [vmem:[#allocation5 + $0x70] sm:$0xff] %vm772, 0.0
      %789 = vst.msk [vmem:[#allocation5 + $0x78] sm:$0x3] %vm774, 0.0
      %790 = vst.msk [vmem:[#allocation5 + $0x80] sm:$0xff] %vm772, 0.0
      %791 = vst.msk [vmem:[#allocation5 + $0x88] sm:$0x3] %vm774, 0.0
      %792 = vst.msk [vmem:[#allocation5 + $0x90] sm:$0xff] %vm772, 0.0
      %793 = vst.msk [vmem:[#allocation5 + $0x98] sm:$0x3] %vm774, 0.0
      %794 = vst.msk [vmem:[#allocation4] sm:$0xff] %vm716, 0.0
      %795 = vst.msk [vmem:[#allocation4 + $0x8] sm:$0x3] %vm719, 0.0
      %796 = vst.msk [vmem:[#allocation4 + $0x10] sm:$0xff] %vm716, 0.0
      %797 = vst.msk [vmem:[#allocation4 + $0x18] sm:$0x3] %vm719, 0.0
      %798 = vst.msk [vmem:[#allocation4 + $0x20] sm:$0xff] %vm716, 0.0
      %799 = vst.msk [vmem:[#allocation4 + $0x28] sm:$0x3] %vm719, 0.0
      %800 = vst.msk [vmem:[#allocation4 + $0x30] sm:$0xff] %vm716, 0.0
      %801 = vst.msk [vmem:[#allocation4 + $0x38] sm:$0x3] %vm719, 0.0
      %802 = vst.msk [vmem:[#allocation4 + $0x40] sm:$0xff] %vm716, 0.0
      %803 = vst.msk [vmem:[#allocation4 + $0x48] sm:$0x3] %vm719, 0.0
      %804 = vst.msk [vmem:[#allocation4 + $0x50] sm:$0xff] %vm716, 0.0
      %805 = vst.msk [vmem:[#allocation4 + $0x58] sm:$0x3] %vm719, 0.0
      %806 = vst.msk [vmem:[#allocation4 + $0x60] sm:$0xff] %vm716, 0.0
      %807 = vst.msk [vmem:[#allocation4 + $0x68] sm:$0x3] %vm719, 0.0
      %808 = vst.msk [vmem:[#allocation4 + $0x70] sm:$0xff] %vm716, 0.0
      %809 = vst.msk [vmem:[#allocation4 + $0x78] sm:$0x3] %vm719, 0.0
      %810 = vst.msk [vmem:[#allocation4 + $0x80] sm:$0xff] %vm716, 0.0
      %811 = vst.msk [vmem:[#allocation4 + $0x88] sm:$0x3] %vm719, 0.0
      %812 = vst.msk [vmem:[#allocation4 + $0x90] sm:$0xff] %vm716, 0.0
      %813 = vst.msk [vmem:[#allocation4 + $0x98] sm:$0x3] %vm719, 0.0
      %vm814 = vcmask 128000
      %815 = vst.msk [vmem:[#allocation6] sm:$0x3f] %vm814, 0.0
      %816 = vst.msk [vmem:[#allocation6 + $0x8] sm:$0x3f] %vm814, 0.0
      %817 = vst.msk [vmem:[#allocation6 + $0x10] sm:$0x3f] %vm814, 0.0
      %818 = vst.msk [vmem:[#allocation6 + $0x18] sm:$0x3f] %vm814, 0.0
      %819 = vst.msk [vmem:[#allocation6 + $0x20] sm:$0x3f] %vm814, 0.0
      %820 = vst.msk [vmem:[#allocation6 + $0x28] sm:$0x3f] %vm814, 0.0
      %821 = vst.msk [vmem:[#allocation7] sm:$0xff] %vm772, 0.0
      %822 = vst.msk [vmem:[#allocation7 + $0x8] sm:$0x3] %vm774, 0.0
      %823 = vst.msk [vmem:[#allocation7 + $0x10] sm:$0xff] %vm772, 0.0
      %824 = vst.msk [vmem:[#allocation7 + $0x18] sm:$0x3] %vm774, 0.0
      %825 = vst.msk [vmem:[#allocation7 + $0x20] sm:$0xff] %vm772, 0.0
      %826 = vst.msk [vmem:[#allocation7 + $0x28] sm:$0x3] %vm774, 0.0
      %827 = vst.msk [vmem:[#allocation7 + $0x30] sm:$0xff] %vm772, 0.0
      %828 = vst.msk [vmem:[#allocation7 + $0x38] sm:$0x3] %vm774, 0.0
      %829 = vst.msk [vmem:[#allocation7 + $0x40] sm:$0xff] %vm772, 0.0
      %830 = vst.msk [vmem:[#allocation7 + $0x48] sm:$0x3] %vm774, 0.0
      %831 = vst.msk [vmem:[#allocation7 + $0x50] sm:$0xff] %vm772, 0.0
      %832 = vst.msk [vmem:[#allocation7 + $0x58] sm:$0x3] %vm774, 0.0
      %833 = vst.msk [vmem:[#allocation7 + $0x60] sm:$0xff] %vm772, 0.0
      %834 = vst.msk [vmem:[#allocation7 + $0x68] sm:$0x3] %vm774, 0.0
      %835 = vst.msk [vmem:[#allocation7 + $0x70] sm:$0xff] %vm772, 0.0
      %836 = vst.msk [vmem:[#allocation7 + $0x78] sm:$0x3] %vm774, 0.0
      %837 = vst.msk [vmem:[#allocation7 + $0x80] sm:$0xff] %vm772, 0.0
      %838 = vst.msk [vmem:[#allocation7 + $0x88] sm:$0x3] %vm774, 0.0
      %839 = vst.msk [vmem:[#allocation7 + $0x90] sm:$0xff] %vm772, 0.0
      %840 = vst.msk [vmem:[#allocation7 + $0x98] sm:$0x3] %vm774, 0.0
      %841 = vst.msk [vmem:[#allocation8] sm:$0xff] %vm716, 0.0
      %842 = vst.msk [vmem:[#allocation8 + $0x8] sm:$0xff] %vm716, 0.0
      %843 = vst.msk [vmem:[#allocation8 + $0x10] sm:$0x3] %vm719, 0.0
      %844 = vst.msk [vmem:[#allocation8 + $0x18] sm:$0xff] %vm716, 0.0
      %845 = vst.msk [vmem:[#allocation8 + $0x20] sm:$0xff] %vm716, 0.0
      %846 = vst.msk [vmem:[#allocation8 + $0x28] sm:$0x3] %vm719, 0.0
      %847 = vst.msk [vmem:[#allocation8 + $0x30] sm:$0xff] %vm716, 0.0
      %848 = vst.msk [vmem:[#allocation8 + $0x38] sm:$0xff] %vm716, 0.0
      %849 = vst.msk [vmem:[#allocation8 + $0x40] sm:$0x3] %vm719, 0.0
      %850 = vst.msk [vmem:[#allocation8 + $0x48] sm:$0xff] %vm716, 0.0
      %851 = vst.msk [vmem:[#allocation8 + $0x50] sm:$0xff] %vm716, 0.0
      %852 = vst.msk [vmem:[#allocation8 + $0x58] sm:$0x3] %vm719, 0.0
      %853 = vst.msk [vmem:[#allocation8 + $0x60] sm:$0xff] %vm716, 0.0
      %854 = vst.msk [vmem:[#allocation8 + $0x68] sm:$0xff] %vm716, 0.0
      %855 = vst.msk [vmem:[#allocation8 + $0x70] sm:$0x3] %vm719, 0.0
      %856 = vst.msk [vmem:[#allocation8 + $0x78] sm:$0xff] %vm716, 0.0
      %857 = vst.msk [vmem:[#allocation8 + $0x80] sm:$0xff] %vm716, 0.0
      %858 = vst.msk [vmem:[#allocation8 + $0x88] sm:$0x3] %vm719, 0.0
      %859 = vst.msk [vmem:[#allocation8 + $0x90] sm:$0xff] %vm716, 0.0
      %860 = vst.msk [vmem:[#allocation8 + $0x98] sm:$0xff] %vm716, 0.0
      %861 = vst.msk [vmem:[#allocation8 + $0xa0] sm:$0x3] %vm719, 0.0
      %862 = vst.msk [vmem:[#allocation8 + $0xa8] sm:$0xff] %vm716, 0.0
      %863 = vst.msk [vmem:[#allocation8 + $0xb0] sm:$0xff] %vm716, 0.0
      %864 = vst.msk [vmem:[#allocation8 + $0xb8] sm:$0x3] %vm719, 0.0
      %865 = vst.msk [vmem:[#allocation8 + $0xc0] sm:$0xff] %vm716, 0.0
      %866 = vst.msk [vmem:[#allocation8 + $0xc8] sm:$0xff] %vm716, 0.0
      %867 = vst.msk [vmem:[#allocation8 + $0xd0] sm:$0x3] %vm719, 0.0
      %868 = vst.msk [vmem:[#allocation8 + $0xd8] sm:$0xff] %vm716, 0.0
      %869 = vst.msk [vmem:[#allocation8 + $0xe0] sm:$0xff] %vm716, 0.0
      %870 = vst.msk [vmem:[#allocation8 + $0xe8] sm:$0x3] %vm719, 0.0
      %871 = vst.msk [vmem:[#allocation8 + $0xf0] sm:$0xff] %vm716, 0.0
      %872 = vst.msk [vmem:[#allocation8 + $0xf8] sm:$0xff] %vm716, 0.0
      %873 = vst.msk [vmem:[#allocation8 + $0x100] sm:$0x3] %vm719, 0.0
      %874 = vst.msk [vmem:[#allocation8 + $0x108] sm:$0xff] %vm716, 0.0
      %875 = vst.msk [vmem:[#allocation8 + $0x110] sm:$0xff] %vm716, 0.0
      %876 = vst.msk [vmem:[#allocation8 + $0x118] sm:$0x3] %vm719, 0.0
      %877 = vst.msk [vmem:[#allocation8 + $0x120] sm:$0xff] %vm716, 0.0
      %878 = vst.msk [vmem:[#allocation8 + $0x128] sm:$0xff] %vm716, 0.0
      %879 = vst.msk [vmem:[#allocation8 + $0x130] sm:$0x3] %vm719, 0.0
      %880 = vst.msk [vmem:[#allocation8 + $0x138] sm:$0xff] %vm716, 0.0
      %881 = vst.msk [vmem:[#allocation8 + $0x140] sm:$0xff] %vm716, 0.0
      %882 = vst.msk [vmem:[#allocation8 + $0x148] sm:$0x3] %vm719, 0.0
      %883 = vst.msk [vmem:[#allocation8 + $0x150] sm:$0xff] %vm716, 0.0
      %884 = vst.msk [vmem:[#allocation8 + $0x158] sm:$0xff] %vm716, 0.0
      %885 = vst.msk [vmem:[#allocation8 + $0x160] sm:$0x3] %vm719, 0.0
      %886 = vst.msk [vmem:[#allocation8 + $0x168] sm:$0xff] %vm716, 0.0
      %887 = vst.msk [vmem:[#allocation8 + $0x170] sm:$0xff] %vm716, 0.0
      %888 = vst.msk [vmem:[#allocation8 + $0x178] sm:$0x3] %vm719, 0.0
      %889 = vst.msk [vmem:[#allocation8 + $0x180] sm:$0xff] %vm716, 0.0
      %890 = vst.msk [vmem:[#allocation8 + $0x188] sm:$0xff] %vm716, 0.0
      %891 = vst.msk [vmem:[#allocation8 + $0x190] sm:$0x3] %vm719, 0.0
      %892 = vst.msk [vmem:[#allocation8 + $0x198] sm:$0xff] %vm716, 0.0
      %893 = vst.msk [vmem:[#allocation8 + $0x1a0] sm:$0xff] %vm716, 0.0
      %894 = vst.msk [vmem:[#allocation8 + $0x1a8] sm:$0x3] %vm719, 0.0
      %v895 = vld [vmem:[%s653] sm:$0xff]
      %v896 = vld [vmem:[%s653 + $0x8] sm:$0xff]
      %v897 = vld [vmem:[%s653 + $0x10] sm:$0xff]
      %v898 = vld [vmem:[%s653 + $0x18] sm:$0xff]
      %v899 = vld [vmem:[%s653 + $0x20] sm:$0xff]
      %v900 = vld [vmem:[%s653 + $0x28] sm:$0xff]
      %v901 = vld [vmem:[%s653 + $0x30] sm:$0xff]
      %v902 = vld [vmem:[%s653 + $0x38] sm:$0xff]
      %v903 = vld [vmem:[%s653 + $0x40] sm:$0xff]
      %v904 = vld [vmem:[%s653 + $0x48] sm:$0xff]
      %v905 = vld [vmem:[%s653 + $0x50] sm:$0xff]
      %v906 = vld [vmem:[%s653 + $0x58] sm:$0xff]
      %v907 = vld [vmem:[%s653 + $0x60] sm:$0xff]
      %v908 = vld [vmem:[%s653 + $0x68] sm:$0xff]
      %v909 = vld [vmem:[%s653 + $0x70] sm:$0xff]
      %v910 = vld [vmem:[%s653 + $0x78] sm:$0xff]
      %v911 = vld [vmem:[%s653 + $0x80] sm:$0xff]
      %v912 = vld [vmem:[%s653 + $0x88] sm:$0xff]
      %v913 = vld [vmem:[%s653 + $0x90] sm:$0xff]
      %v914 = vld [vmem:[%s653 + $0x98] sm:$0xff]
      %v915 = vld [vmem:[%s653 + $0xa0] sm:$0xff]
      %v916 = vld [vmem:[%s653 + $0xa8] sm:$0xff]
      %v917 = vld [vmem:[%s653 + $0xb0] sm:$0xff]
      %v918 = vld [vmem:[%s653 + $0xb8] sm:$0xff]
      %v919 = vld [vmem:[%s653 + $0xc0] sm:$0xff]
      %v920 = vld [vmem:[%s653 + $0xc8] sm:$0xff]
      %v921 = vld [vmem:[%s653 + $0xd0] sm:$0xff]
      %v922 = vld [vmem:[%s653 + $0xd8] sm:$0xff]
      %v923 = vld [vmem:[%s653 + $0xe0] sm:$0xff]
      %v924 = vld [vmem:[%s653 + $0xe8] sm:$0xff]
      %v925 = vld [vmem:[%s653 + $0xf0] sm:$0xff]
      %v926 = vld [vmem:[%s653 + $0xf8] sm:$0xff]
      %s927 = scalar_lea.vmem [#allocation2], 24
      %928 = vst.msk [vmem:[%s927 + $0x1] sm:$0xff] %vm660, %v895
      %929 = vst.msk [vmem:[%s927 + $0x9] sm:$0xff] %vm660, %v896
      %930 = vst.msk [vmem:[%s927 + $0x19] sm:$0xff] %vm660, %v897
      %931 = vst.msk [vmem:[%s927 + $0x21] sm:$0xff] %vm660, %v898
      %932 = vst.msk [vmem:[%s927 + $0x31] sm:$0xff] %vm660, %v899
      %933 = vst.msk [vmem:[%s927 + $0x39] sm:$0xff] %vm660, %v900
      %934 = vst.msk [vmem:[%s927 + $0x49] sm:$0xff] %vm660, %v901
      %935 = vst.msk [vmem:[%s927 + $0x51] sm:$0xff] %vm660, %v902
      %936 = vst.msk [vmem:[%s927 + $0x61] sm:$0xff] %vm660, %v903
      %937 = vst.msk [vmem:[%s927 + $0x69] sm:$0xff] %vm660, %v904
      %938 = vst.msk [vmem:[%s927 + $0x79] sm:$0xff] %vm660, %v905
      %939 = vst.msk [vmem:[%s927 + $0x81] sm:$0xff] %vm660, %v906
      %940 = vst.msk [vmem:[%s927 + $0x91] sm:$0xff] %vm660, %v907
      %941 = vst.msk [vmem:[%s927 + $0x99] sm:$0xff] %vm660, %v908
      %942 = vst.msk [vmem:[%s927 + $0xa9] sm:$0xff] %vm660, %v909
      %943 = vst.msk [vmem:[%s927 + $0xb1] sm:$0xff] %vm660, %v910
      %944 = vst.msk [vmem:[%s927 + $0xc1] sm:$0xff] %vm660, %v911
      %945 = vst.msk [vmem:[%s927 + $0xc9] sm:$0xff] %vm660, %v912
      %946 = vst.msk [vmem:[%s927 + $0xd9] sm:$0xff] %vm660, %v913
      %947 = vst.msk [vmem:[%s927 + $0xe1] sm:$0xff] %vm660, %v914
      %948 = vst.msk [vmem:[%s927 + $0xf1] sm:$0xff] %vm660, %v915
      %949 = vst.msk [vmem:[%s927 + $0xf9] sm:$0xff] %vm660, %v916
      %950 = vst.msk [vmem:[%s927 + $0x109] sm:$0xff] %vm660, %v917
      %951 = vst.msk [vmem:[%s927 + $0x111] sm:$0xff] %vm660, %v918
      %952 = vst.msk [vmem:[%s927 + $0x121] sm:$0xff] %vm660, %v919
      %953 = vst.msk [vmem:[%s927 + $0x129] sm:$0xff] %vm660, %v920
      %954 = vst.msk [vmem:[%s927 + $0x139] sm:$0xff] %vm660, %v921
      %955 = vst.msk [vmem:[%s927 + $0x141] sm:$0xff] %vm660, %v922
      %956 = vst.msk [vmem:[%s927 + $0x151] sm:$0xff] %vm660, %v923
      %957 = vst.msk [vmem:[%s927 + $0x159] sm:$0xff] %vm660, %v924
      %958 = vst.msk [vmem:[%s927 + $0x169] sm:$0xff] %vm660, %v925
      %959 = vst.msk [vmem:[%s927 + $0x171] sm:$0xff] %vm660, %v926
      %v960 = vld [vmem:[#allocation2] sm:$0xff]
      %v961 = vld [vmem:[#allocation2 + $0x8] sm:$0xff]
      %v962 = vld [vmem:[#allocation2 + $0x10] sm:$0x3]
      %v963 = vld [vmem:[#allocation2 + $0x18] sm:$0xff]
      %v964 = vld [vmem:[#allocation2 + $0x20] sm:$0xff]
      %v965 = vld [vmem:[#allocation2 + $0x28] sm:$0x3]
      %v966 = vld [vmem:[#allocation2 + $0x30] sm:$0xff]
      %v967 = vld [vmem:[#allocation2 + $0x38] sm:$0xff]
      %v968 = vld [vmem:[#allocation2 + $0x40] sm:$0x3]
      %v969 = vld [vmem:[#allocation2 + $0x48] sm:$0xff]
      %v970 = vld [vmem:[#allocation2 + $0x50] sm:$0xff]
      %v971 = vld [vmem:[#allocation2 + $0x58] sm:$0x3]
      %v972 = vld [vmem:[#allocation2 + $0x60] sm:$0xff]
      %v973 = vld [vmem:[#allocation2 + $0x68] sm:$0xff]
      %v974 = vld [vmem:[#allocation2 + $0x70] sm:$0x3]
      %v975 = vld [vmem:[#allocation2 + $0x78] sm:$0xff]
      %v976 = vld [vmem:[#allocation2 + $0x80] sm:$0xff]
      %v977 = vld [vmem:[#allocation2 + $0x88] sm:$0x3]
      %v978 = vld [vmem:[#allocation2 + $0x90] sm:$0xff]
      %v979 = vld [vmem:[#allocation2 + $0x98] sm:$0xff]
      %v980 = vld [vmem:[#allocation2 + $0xa0] sm:$0x3]
      %v981 = vld [vmem:[#allocation2 + $0xa8] sm:$0xff]
      %v982 = vld [vmem:[#allocation2 + $0xb0] sm:$0xff]
      %v983 = vld [vmem:[#allocation2 + $0xb8] sm:$0x3]
      %v984 = vld [vmem:[#allocation2 + $0xc0] sm:$0xff]
      %v985 = vld [vmem:[#allocation2 + $0xc8] sm:$0xff]
      %v986 = vld [vmem:[#allocation2 + $0xd0] sm:$0x3]
      %v987 = vld [vmem:[#allocation2 + $0xd8] sm:$0xff]
      %v988 = vld [vmem:[#allocation2 + $0xe0] sm:$0xff]
      %v989 = vld [vmem:[#allocation2 + $0xe8] sm:$0x3]
      %v990 = vld [vmem:[#allocation2 + $0xf0] sm:$0xff]
      %v991 = vld [vmem:[#allocation2 + $0xf8] sm:$0xff]
      %v992 = vld [vmem:[#allocation2 + $0x100] sm:$0x3]
      %v993 = vld [vmem:[#allocation2 + $0x108] sm:$0xff]
      %v994 = vld [vmem:[#allocation2 + $0x110] sm:$0xff]
      %v995 = vld [vmem:[#allocation2 + $0x118] sm:$0x3]
      %v996 = vld [vmem:[#allocation2 + $0x120] sm:$0xff]
      %v997 = vld [vmem:[#allocation2 + $0x128] sm:$0xff]
      %v998 = vld [vmem:[#allocation2 + $0x130] sm:$0x3]
      %v999 = vld [vmem:[#allocation2 + $0x138] sm:$0xff]
      %v1000 = vld [vmem:[#allocation2 + $0x140] sm:$0xff]
      %v1001 = vld [vmem:[#allocation2 + $0x148] sm:$0x3]
      %v1002 = vld [vmem:[#allocation2 + $0x150] sm:$0xff]
      %v1003 = vld [vmem:[#allocation2 + $0x158] sm:$0xff]
      %v1004 = vld [vmem:[#allocation2 + $0x160] sm:$0x3]
      %v1005 = vld [vmem:[#allocation2 + $0x168] sm:$0xff]
      %v1006 = vld [vmem:[#allocation2 + $0x170] sm:$0xff]
      %v1007 = vld [vmem:[#allocation2 + $0x178] sm:$0x3]
      %v1008 = vld [vmem:[#allocation2 + $0x180] sm:$0xff]
      %v1009 = vld [vmem:[#allocation2 + $0x188] sm:$0xff]
      %v1010 = vld [vmem:[#allocation2 + $0x190] sm:$0x3]
      %v1011 = vld [vmem:[#allocation2 + $0x198] sm:$0xff]
      %v1012 = vld [vmem:[#allocation2 + $0x1a0] sm:$0xff]
      %v1013 = vld [vmem:[#allocation2 + $0x1a8] sm:$0x3]
      %vm1062 = vcmask 1046528
      %v1063 = vrot.slane %v960, 1
      %v1064 = vrot.slane %v961, 1
      %v1065 = vsel %vm1062, %v1063, %v1064
      %v1066 = vrot.slane %v962, 1
      %v1067 = vsel %vm1062, %v1064, %v1066
      %v1068 = vrot.slane %v963, 1
      %v1069 = vrot.slane %v964, 1
      %v1070 = vsel %vm1062, %v1068, %v1069
      %v1071 = vrot.slane %v965, 1
      %v1072 = vsel %vm1062, %v1069, %v1071
      %v1073 = vrot.slane %v966, 1
      %v1074 = vrot.slane %v967, 1
      %v1075 = vsel %vm1062, %v1073, %v1074
      %v1076 = vrot.slane %v968, 1
      %v1077 = vsel %vm1062, %v1074, %v1076
      %v1078 = vrot.slane %v969, 1
      %v1079 = vrot.slane %v970, 1
      %v1080 = vsel %vm1062, %v1078, %v1079
      %v1081 = vrot.slane %v971, 1
      %v1082 = vsel %vm1062, %v1079, %v1081
      %v1083 = vrot.slane %v972, 1
      %v1084 = vrot.slane %v973, 1
      %v1085 = vsel %vm1062, %v1083, %v1084
      %v1086 = vrot.slane %v974, 1
      %v1087 = vsel %vm1062, %v1084, %v1086
      %v1088 = vrot.slane %v975, 1
      %v1089 = vrot.slane %v976, 1
      %v1090 = vsel %vm1062, %v1088, %v1089
      %v1091 = vrot.slane %v977, 1
      %v1092 = vsel %vm1062, %v1089, %v1091
      %v1093 = vrot.slane %v978, 1
      %v1094 = vrot.slane %v979, 1
      %v1095 = vsel %vm1062, %v1093, %v1094
      %v1096 = vrot.slane %v980, 1
      %v1097 = vsel %vm1062, %v1094, %v1096
      %v1098 = vrot.slane %v981, 1
      %v1099 = vrot.slane %v982, 1
      %v1100 = vsel %vm1062, %v1098, %v1099
      %v1101 = vrot.slane %v983, 1
      %v1102 = vsel %vm1062, %v1099, %v1101
      %v1103 = vrot.slane %v984, 1
      %v1104 = vrot.slane %v985, 1
      %v1105 = vsel %vm1062, %v1103, %v1104
      %v1106 = vrot.slane %v986, 1
      %v1107 = vsel %vm1062, %v1104, %v1106
      %v1108 = vrot.slane %v987, 1
      %v1109 = vrot.slane %v988, 1
      %v1110 = vsel %vm1062, %v1108, %v1109
      %v1111 = vrot.slane %v989, 1
      %v1112 = vsel %vm1062, %v1109, %v1111
      %v1113 = vrot.slane %v990, 1
      %v1114 = vrot.slane %v991, 1
      %v1115 = vsel %vm1062, %v1113, %v1114
      %v1116 = vrot.slane %v992, 1
      %v1117 = vsel %vm1062, %v1114, %v1116
      %v1118 = vrot.slane %v993, 1
      %v1119 = vrot.slane %v994, 1
      %v1120 = vsel %vm1062, %v1118, %v1119
      %v1121 = vrot.slane %v995, 1
      %v1122 = vsel %vm1062, %v1119, %v1121
      %v1123 = vrot.slane %v996, 1
      %v1124 = vrot.slane %v997, 1
      %v1125 = vsel %vm1062, %v1123, %v1124
      %v1126 = vrot.slane %v998, 1
      %v1127 = vsel %vm1062, %v1124, %v1126
      %v1128 = vrot.slane %v999, 1
      %v1129 = vrot.slane %v1000, 1
      %v1130 = vsel %vm1062, %v1128, %v1129
      %v1131 = vrot.slane %v1001, 1
      %v1132 = vsel %vm1062, %v1129, %v1131
      %v1133 = vrot.slane %v1002, 1
      %v1134 = vrot.slane %v1003, 1
      %v1135 = vsel %vm1062, %v1133, %v1134
      %v1136 = vrot.slane %v1004, 1
      %v1137 = vsel %vm1062, %v1134, %v1136
      %v1138 = vrot.slane %v1005, 1
      %v1139 = vrot.slane %v1006, 1
      %v1140 = vsel %vm1062, %v1138, %v1139
      %v1141 = vrot.slane %v1007, 1
      %v1142 = vsel %vm1062, %v1139, %v1141
      %vm1143 = vcmask 1045504
      %v1144 = vrot.slane %v960, 2
      %v1145 = vrot.slane %v961, 2
      %v1146 = vsel %vm1143, %v1144, %v1145
      %v1147 = vrot.slane %v962, 2
      %v1148 = vsel %vm1143, %v1145, %v1147
      %v1149 = vrot.slane %v963, 2
      %v1150 = vrot.slane %v964, 2
      %v1151 = vsel %vm1143, %v1149, %v1150
      %v1152 = vrot.slane %v965, 2
      %v1153 = vsel %vm1143, %v1150, %v1152
      %v1154 = vrot.slane %v966, 2
      %v1155 = vrot.slane %v967, 2
      %v1156 = vsel %vm1143, %v1154, %v1155
      %v1157 = vrot.slane %v968, 2
      %v1158 = vsel %vm1143, %v1155, %v1157
      %v1159 = vrot.slane %v969, 2
      %v1160 = vrot.slane %v970, 2
      %v1161 = vsel %vm1143, %v1159, %v1160
      %v1162 = vrot.slane %v971, 2
      %v1163 = vsel %vm1143, %v1160, %v1162
      %v1164 = vrot.slane %v972, 2
      %v1165 = vrot.slane %v973, 2
      %v1166 = vsel %vm1143, %v1164, %v1165
      %v1167 = vrot.slane %v974, 2
      %v1168 = vsel %vm1143, %v1165, %v1167
      %v1169 = vrot.slane %v975, 2
      %v1170 = vrot.slane %v976, 2
      %v1171 = vsel %vm1143, %v1169, %v1170
      %v1172 = vrot.slane %v977, 2
      %v1173 = vsel %vm1143, %v1170, %v1172
      %v1174 = vrot.slane %v978, 2
      %v1175 = vrot.slane %v979, 2
      %v1176 = vsel %vm1143, %v1174, %v1175
      %v1177 = vrot.slane %v980, 2
      %v1178 = vsel %vm1143, %v1175, %v1177
      %v1179 = vrot.slane %v981, 2
      %v1180 = vrot.slane %v982, 2
      %v1181 = vsel %vm1143, %v1179, %v1180
      %v1182 = vrot.slane %v983, 2
      %v1183 = vsel %vm1143, %v1180, %v1182
      %v1184 = vrot.slane %v984, 2
      %v1185 = vrot.slane %v985, 2
      %v1186 = vsel %vm1143, %v1184, %v1185
      %v1187 = vrot.slane %v986, 2
      %v1188 = vsel %vm1143, %v1185, %v1187
      %v1189 = vrot.slane %v987, 2
      %v1190 = vrot.slane %v988, 2
      %v1191 = vsel %vm1143, %v1189, %v1190
      %v1192 = vrot.slane %v989, 2
      %v1193 = vsel %vm1143, %v1190, %v1192
      %v1194 = vrot.slane %v990, 2
      %v1195 = vrot.slane %v991, 2
      %v1196 = vsel %vm1143, %v1194, %v1195
      %v1197 = vrot.slane %v992, 2
      %v1198 = vsel %vm1143, %v1195, %v1197
      %v1199 = vrot.slane %v993, 2
      %v1200 = vrot.slane %v994, 2
      %v1201 = vsel %vm1143, %v1199, %v1200
      %v1202 = vrot.slane %v995, 2
      %v1203 = vsel %vm1143, %v1200, %v1202
      %v1204 = vrot.slane %v996, 2
      %v1205 = vrot.slane %v997, 2
      %v1206 = vsel %vm1143, %v1204, %v1205
      %v1207 = vrot.slane %v998, 2
      %v1208 = vsel %vm1143, %v1205, %v1207
      %v1209 = vrot.slane %v999, 2
      %v1210 = vrot.slane %v1000, 2
      %v1211 = vsel %vm1143, %v1209, %v1210
      %v1212 = vrot.slane %v1001, 2
      %v1213 = vsel %vm1143, %v1210, %v1212
      %v1214 = vrot.slane %v1002, 2
      %v1215 = vrot.slane %v1003, 2
      %v1216 = vsel %vm1143, %v1214, %v1215
      %v1217 = vrot.slane %v1004, 2
      %v1218 = vsel %vm1143, %v1215, %v1217
      %v1219 = vrot.slane %v1005, 2
      %v1220 = vrot.slane %v1006, 2
      %v1221 = vsel %vm1143, %v1219, %v1220
      %v1222 = vrot.slane %v1007, 2
      %v1223 = vsel %vm1143, %v1220, %v1222
      %v1227 = vrot.slane %v1008, 1
      %v1228 = vrot.slane %v1009, 1
      %v1229 = vsel %vm1062, %v1227, %v1228
      %v1230 = vrot.slane %v1010, 1
      %v1231 = vsel %vm1062, %v1228, %v1230
      %v1232 = vrot.slane %v1008, 2
      %v1233 = vrot.slane %v1009, 2
      %v1234 = vsel %vm1143, %v1232, %v1233
      %v1235 = vrot.slane %v1010, 2
      %v1236 = vsel %vm1143, %v1233, %v1235
      %v1240 = vrot.slane %v1011, 1
      %v1241 = vrot.slane %v1012, 1
      %v1242 = vsel %vm1062, %v1240, %v1241
      %v1243 = vrot.slane %v1013, 1
      %v1244 = vsel %vm1062, %v1241, %v1243
      %v1245 = vrot.slane %v1011, 2
      %v1246 = vrot.slane %v1012, 2
      %v1247 = vsel %vm1143, %v1245, %v1246
      %v1248 = vrot.slane %v1013, 2
      %v1249 = vsel %vm1143, %v1246, %v1248
      %1250 = vrot.lane.b32.xlu0 %v1065, 1
      %v1251 = vpop.permute.xlu0 %1250
      %1252 = vrot.lane.b32.xlu0 %v1067, 1
      %v1253 = vpop.permute.xlu0 %1252
      %1254 = vrot.lane.b32.xlu0 %v1070, 1
      %v1255 = vpop.permute.xlu0 %1254
      %1256 = vrot.lane.b32.xlu0 %v1072, 1
      %v1257 = vpop.permute.xlu0 %1256
      %1258 = vrot.lane.b32.xlu0 %v1075, 1
      %v1259 = vpop.permute.xlu0 %1258
      %1260 = vrot.lane.b32.xlu0 %v1077, 1
      %v1261 = vpop.permute.xlu0 %1260
      %1262 = vrot.lane.b32.xlu0 %v1080, 1
      %v1263 = vpop.permute.xlu0 %1262
      %1264 = vrot.lane.b32.xlu0 %v1082, 1
      %v1265 = vpop.permute.xlu0 %1264
      %1266 = vrot.lane.b32.xlu0 %v1085, 1
      %v1267 = vpop.permute.xlu0 %1266
      %1268 = vrot.lane.b32.xlu0 %v1087, 1
      %v1269 = vpop.permute.xlu0 %1268
      %1270 = vrot.lane.b32.xlu0 %v1090, 1
      %v1271 = vpop.permute.xlu0 %1270
      %1272 = vrot.lane.b32.xlu0 %v1092, 1
      %v1273 = vpop.permute.xlu0 %1272
      %1274 = vrot.lane.b32.xlu0 %v1095, 1
      %v1275 = vpop.permute.xlu0 %1274
      %1276 = vrot.lane.b32.xlu0 %v1097, 1
      %v1277 = vpop.permute.xlu0 %1276
      %1278 = vrot.lane.b32.xlu0 %v1100, 1
      %v1279 = vpop.permute.xlu0 %1278
      %1280 = vrot.lane.b32.xlu0 %v1102, 1
      %v1281 = vpop.permute.xlu0 %1280
      %1282 = vrot.lane.b32.xlu0 %v1105, 1
      %v1283 = vpop.permute.xlu0 %1282
      %1284 = vrot.lane.b32.xlu0 %v1107, 1
      %v1285 = vpop.permute.xlu0 %1284
      %1286 = vrot.lane.b32.xlu0 %v1110, 1
      %v1287 = vpop.permute.xlu0 %1286
      %1288 = vrot.lane.b32.xlu0 %v1112, 1
      %v1289 = vpop.permute.xlu0 %1288
      %1290 = vrot.lane.b32.xlu0 %v1115, 1
      %v1291 = vpop.permute.xlu0 %1290
      %1292 = vrot.lane.b32.xlu0 %v1117, 1
      %v1293 = vpop.permute.xlu0 %1292
      %1294 = vrot.lane.b32.xlu0 %v1120, 1
      %v1295 = vpop.permute.xlu0 %1294
      %1296 = vrot.lane.b32.xlu0 %v1122, 1
      %v1297 = vpop.permute.xlu0 %1296
      %1298 = vrot.lane.b32.xlu0 %v1125, 1
      %v1299 = vpop.permute.xlu0 %1298
      %1300 = vrot.lane.b32.xlu0 %v1127, 1
      %v1301 = vpop.permute.xlu0 %1300
      %1302 = vrot.lane.b32.xlu0 %v1130, 1
      %v1303 = vpop.permute.xlu0 %1302
      %1304 = vrot.lane.b32.xlu0 %v1132, 1
      %v1305 = vpop.permute.xlu0 %1304
      %1306 = vrot.lane.b32.xlu0 %v1135, 1
      %v1307 = vpop.permute.xlu0 %1306
      %1308 = vrot.lane.b32.xlu0 %v1137, 1
      %v1309 = vpop.permute.xlu0 %1308
      %1310 = vrot.lane.b32.xlu0 %v1140, 1
      %v1311 = vpop.permute.xlu0 %1310
      %1312 = vrot.lane.b32.xlu0 %v1142, 1
      %v1313 = vpop.permute.xlu0 %1312
      %1346 = vrot.lane.b32.xlu0 %v1146, 2
      %v1347 = vpop.permute.xlu0 %1346
      %1348 = vrot.lane.b32.xlu0 %v1148, 2
      %v1349 = vpop.permute.xlu0 %1348
      %1350 = vrot.lane.b32.xlu0 %v1151, 2
      %v1351 = vpop.permute.xlu0 %1350
      %1352 = vrot.lane.b32.xlu0 %v1153, 2
      %v1353 = vpop.permute.xlu0 %1352
      %1354 = vrot.lane.b32.xlu0 %v1156, 2
      %v1355 = vpop.permute.xlu0 %1354
      %1356 = vrot.lane.b32.xlu0 %v1158, 2
      %v1357 = vpop.permute.xlu0 %1356
      %1358 = vrot.lane.b32.xlu0 %v1161, 2
      %v1359 = vpop.permute.xlu0 %1358
      %1360 = vrot.lane.b32.xlu0 %v1163, 2
      %v1361 = vpop.permute.xlu0 %1360
      %1362 = vrot.lane.b32.xlu0 %v1166, 2
      %v1363 = vpop.permute.xlu0 %1362
      %1364 = vrot.lane.b32.xlu0 %v1168, 2
      %v1365 = vpop.permute.xlu0 %1364
      %1366 = vrot.lane.b32.xlu0 %v1171, 2
      %v1367 = vpop.permute.xlu0 %1366
      %1368 = vrot.lane.b32.xlu0 %v1173, 2
      %v1369 = vpop.permute.xlu0 %1368
      %1370 = vrot.lane.b32.xlu0 %v1176, 2
      %v1371 = vpop.permute.xlu0 %1370
      %1372 = vrot.lane.b32.xlu0 %v1178, 2
      %v1373 = vpop.permute.xlu0 %1372
      %1374 = vrot.lane.b32.xlu0 %v1181, 2
      %v1375 = vpop.permute.xlu0 %1374
      %1376 = vrot.lane.b32.xlu0 %v1183, 2
      %v1377 = vpop.permute.xlu0 %1376
      %1378 = vrot.lane.b32.xlu0 %v1186, 2
      %v1379 = vpop.permute.xlu0 %1378
      %1380 = vrot.lane.b32.xlu0 %v1188, 2
      %v1381 = vpop.permute.xlu0 %1380
      %1382 = vrot.lane.b32.xlu0 %v1191, 2
      %v1383 = vpop.permute.xlu0 %1382
      %1384 = vrot.lane.b32.xlu0 %v1193, 2
      %v1385 = vpop.permute.xlu0 %1384
      %1386 = vrot.lane.b32.xlu0 %v1196, 2
      %v1387 = vpop.permute.xlu0 %1386
      %1388 = vrot.lane.b32.xlu0 %v1198, 2
      %v1389 = vpop.permute.xlu0 %1388
      %1390 = vrot.lane.b32.xlu0 %v1201, 2
      %v1391 = vpop.permute.xlu0 %1390
      %1392 = vrot.lane.b32.xlu0 %v1203, 2
      %v1393 = vpop.permute.xlu0 %1392
      %1394 = vrot.lane.b32.xlu0 %v1206, 2
      %v1395 = vpop.permute.xlu0 %1394
      %1396 = vrot.lane.b32.xlu0 %v1208, 2
      %v1397 = vpop.permute.xlu0 %1396
      %1398 = vrot.lane.b32.xlu0 %v1211, 2
      %v1399 = vpop.permute.xlu0 %1398
      %1400 = vrot.lane.b32.xlu0 %v1213, 2
      %v1401 = vpop.permute.xlu0 %1400
      %1402 = vrot.lane.b32.xlu0 %v1216, 2
      %v1403 = vpop.permute.xlu0 %1402
      %1404 = vrot.lane.b32.xlu0 %v1218, 2
      %v1405 = vpop.permute.xlu0 %1404
      %1406 = vrot.lane.b32.xlu0 %v1221, 2
      %v1407 = vpop.permute.xlu0 %1406
      %1408 = vrot.lane.b32.xlu0 %v1223, 2
      %v1409 = vpop.permute.xlu0 %1408
      %1442 = vrot.lane.b32.xlu0 %v963, 3
      %v1443 = vpop.permute.xlu0 %1442
      %1444 = vrot.lane.b32.xlu0 %v964, 3
      %v1445 = vpop.permute.xlu0 %1444
      %1446 = vrot.lane.b32.xlu0 %v966, 3
      %v1447 = vpop.permute.xlu0 %1446
      %1448 = vrot.lane.b32.xlu0 %v967, 3
      %v1449 = vpop.permute.xlu0 %1448
      %1450 = vrot.lane.b32.xlu0 %v969, 3
      %v1451 = vpop.permute.xlu0 %1450
      %1452 = vrot.lane.b32.xlu0 %v970, 3
      %v1453 = vpop.permute.xlu0 %1452
      %1454 = vrot.lane.b32.xlu0 %v972, 3
      %v1455 = vpop.permute.xlu0 %1454
      %1456 = vrot.lane.b32.xlu0 %v973, 3
      %v1457 = vpop.permute.xlu0 %1456
      %1458 = vrot.lane.b32.xlu0 %v975, 3
      %v1459 = vpop.permute.xlu0 %1458
      %1460 = vrot.lane.b32.xlu0 %v976, 3
      %v1461 = vpop.permute.xlu0 %1460
      %1462 = vrot.lane.b32.xlu0 %v978, 3
      %v1463 = vpop.permute.xlu0 %1462
      %1464 = vrot.lane.b32.xlu0 %v979, 3
      %v1465 = vpop.permute.xlu0 %1464
      %1466 = vrot.lane.b32.xlu0 %v981, 3
      %v1467 = vpop.permute.xlu0 %1466
      %1468 = vrot.lane.b32.xlu0 %v982, 3
      %v1469 = vpop.permute.xlu0 %1468
      %1470 = vrot.lane.b32.xlu0 %v984, 3
      %v1471 = vpop.permute.xlu0 %1470
      %1472 = vrot.lane.b32.xlu0 %v985, 3
      %v1473 = vpop.permute.xlu0 %1472
      %1474 = vrot.lane.b32.xlu0 %v987, 3
      %v1475 = vpop.permute.xlu0 %1474
      %1476 = vrot.lane.b32.xlu0 %v988, 3
      %v1477 = vpop.permute.xlu0 %1476
      %1478 = vrot.lane.b32.xlu0 %v990, 3
      %v1479 = vpop.permute.xlu0 %1478
      %1480 = vrot.lane.b32.xlu0 %v991, 3
      %v1481 = vpop.permute.xlu0 %1480
      %1482 = vrot.lane.b32.xlu0 %v993, 3
      %v1483 = vpop.permute.xlu0 %1482
      %1484 = vrot.lane.b32.xlu0 %v994, 3
      %v1485 = vpop.permute.xlu0 %1484
      %1486 = vrot.lane.b32.xlu0 %v996, 3
      %v1487 = vpop.permute.xlu0 %1486
      %1488 = vrot.lane.b32.xlu0 %v997, 3
      %v1489 = vpop.permute.xlu0 %1488
      %1490 = vrot.lane.b32.xlu0 %v999, 3
      %v1491 = vpop.permute.xlu0 %1490
      %1492 = vrot.lane.b32.xlu0 %v1000, 3
      %v1493 = vpop.permute.xlu0 %1492
      %1494 = vrot.lane.b32.xlu0 %v1002, 3
      %v1495 = vpop.permute.xlu0 %1494
      %1496 = vrot.lane.b32.xlu0 %v1003, 3
      %v1497 = vpop.permute.xlu0 %1496
      %1498 = vrot.lane.b32.xlu0 %v1005, 3
      %v1499 = vpop.permute.xlu0 %1498
      %1500 = vrot.lane.b32.xlu0 %v1006, 3
      %v1501 = vpop.permute.xlu0 %1500
      %1502 = vrot.lane.b32.xlu0 %v1008, 3
      %v1503 = vpop.permute.xlu0 %1502
      %1504 = vrot.lane.b32.xlu0 %v1009, 3
      %v1505 = vpop.permute.xlu0 %1504
      %1538 = vrot.lane.b32.xlu0 %v1070, 4
      %v1539 = vpop.permute.xlu0 %1538
      %1540 = vrot.lane.b32.xlu0 %v1072, 4
      %v1541 = vpop.permute.xlu0 %1540
      %1542 = vrot.lane.b32.xlu0 %v1075, 4
      %v1543 = vpop.permute.xlu0 %1542
      %1544 = vrot.lane.b32.xlu0 %v1077, 4
      %v1545 = vpop.permute.xlu0 %1544
      %1546 = vrot.lane.b32.xlu0 %v1080, 4
      %v1547 = vpop.permute.xlu0 %1546
      %1548 = vrot.lane.b32.xlu0 %v1082, 4
      %v1549 = vpop.permute.xlu0 %1548
      %1550 = vrot.lane.b32.xlu0 %v1085, 4
      %v1551 = vpop.permute.xlu0 %1550
      %1552 = vrot.lane.b32.xlu0 %v1087, 4
      %v1553 = vpop.permute.xlu0 %1552
      %1554 = vrot.lane.b32.xlu0 %v1090, 4
      %v1555 = vpop.permute.xlu0 %1554
      %1556 = vrot.lane.b32.xlu0 %v1092, 4
      %v1557 = vpop.permute.xlu0 %1556
      %1558 = vrot.lane.b32.xlu0 %v1095, 4
      %v1559 = vpop.permute.xlu0 %1558
      %1560 = vrot.lane.b32.xlu0 %v1097, 4
      %v1561 = vpop.permute.xlu0 %1560
      %1562 = vrot.lane.b32.xlu0 %v1100, 4
      %v1563 = vpop.permute.xlu0 %1562
      %1564 = vrot.lane.b32.xlu0 %v1102, 4
      %v1565 = vpop.permute.xlu0 %1564
      %1566 = vrot.lane.b32.xlu0 %v1105, 4
      %v1567 = vpop.permute.xlu0 %1566
      %1568 = vrot.lane.b32.xlu0 %v1107, 4
      %v1569 = vpop.permute.xlu0 %1568
      %1570 = vrot.lane.b32.xlu0 %v1110, 4
      %v1571 = vpop.permute.xlu0 %1570
      %1572 = vrot.lane.b32.xlu0 %v1112, 4
      %v1573 = vpop.permute.xlu0 %1572
      %1574 = vrot.lane.b32.xlu0 %v1115, 4
      %v1575 = vpop.permute.xlu0 %1574
      %1576 = vrot.lane.b32.xlu0 %v1117, 4
      %v1577 = vpop.permute.xlu0 %1576
      %1578 = vrot.lane.b32.xlu0 %v1120, 4
      %v1579 = vpop.permute.xlu0 %1578
      %1580 = vrot.lane.b32.xlu0 %v1122, 4
      %v1581 = vpop.permute.xlu0 %1580
      %1582 = vrot.lane.b32.xlu0 %v1125, 4
      %v1583 = vpop.permute.xlu0 %1582
      %1584 = vrot.lane.b32.xlu0 %v1127, 4
      %v1585 = vpop.permute.xlu0 %1584
      %1586 = vrot.lane.b32.xlu0 %v1130, 4
      %v1587 = vpop.permute.xlu0 %1586
      %1588 = vrot.lane.b32.xlu0 %v1132, 4
      %v1589 = vpop.permute.xlu0 %1588
      %1590 = vrot.lane.b32.xlu0 %v1135, 4
      %v1591 = vpop.permute.xlu0 %1590
      %1592 = vrot.lane.b32.xlu0 %v1137, 4
      %v1593 = vpop.permute.xlu0 %1592
      %1594 = vrot.lane.b32.xlu0 %v1140, 4
      %v1595 = vpop.permute.xlu0 %1594
      %1596 = vrot.lane.b32.xlu0 %v1142, 4
      %v1597 = vpop.permute.xlu0 %1596
      %1598 = vrot.lane.b32.xlu0 %v1229, 4
      %v1599 = vpop.permute.xlu0 %1598
      %1600 = vrot.lane.b32.xlu0 %v1231, 4
      %v1601 = vpop.permute.xlu0 %1600
      %1634 = vrot.lane.b32.xlu0 %v1151, 5
      %v1635 = vpop.permute.xlu0 %1634
      %1636 = vrot.lane.b32.xlu0 %v1153, 5
      %v1637 = vpop.permute.xlu0 %1636
      %1638 = vrot.lane.b32.xlu0 %v1156, 5
      %v1639 = vpop.permute.xlu0 %1638
      %1640 = vrot.lane.b32.xlu0 %v1158, 5
      %v1641 = vpop.permute.xlu0 %1640
      %1642 = vrot.lane.b32.xlu0 %v1161, 5
      %v1643 = vpop.permute.xlu0 %1642
      %1644 = vrot.lane.b32.xlu0 %v1163, 5
      %v1645 = vpop.permute.xlu0 %1644
      %1646 = vrot.lane.b32.xlu0 %v1166, 5
      %v1647 = vpop.permute.xlu0 %1646
      %1648 = vrot.lane.b32.xlu0 %v1168, 5
      %v1649 = vpop.permute.xlu0 %1648
      %1650 = vrot.lane.b32.xlu0 %v1171, 5
      %v1651 = vpop.permute.xlu0 %1650
      %1652 = vrot.lane.b32.xlu0 %v1173, 5
      %v1653 = vpop.permute.xlu0 %1652
      %1654 = vrot.lane.b32.xlu0 %v1176, 5
      %v1655 = vpop.permute.xlu0 %1654
      %1656 = vrot.lane.b32.xlu0 %v1178, 5
      %v1657 = vpop.permute.xlu0 %1656
      %1658 = vrot.lane.b32.xlu0 %v1181, 5
      %v1659 = vpop.permute.xlu0 %1658
      %1660 = vrot.lane.b32.xlu0 %v1183, 5
      %v1661 = vpop.permute.xlu0 %1660
      %1662 = vrot.lane.b32.xlu0 %v1186, 5
      %v1663 = vpop.permute.xlu0 %1662
      %1664 = vrot.lane.b32.xlu0 %v1188, 5
      %v1665 = vpop.permute.xlu0 %1664
      %1666 = vrot.lane.b32.xlu0 %v1191, 5
      %v1667 = vpop.permute.xlu0 %1666
      %1668 = vrot.lane.b32.xlu0 %v1193, 5
      %v1669 = vpop.permute.xlu0 %1668
      %1670 = vrot.lane.b32.xlu0 %v1196, 5
      %v1671 = vpop.permute.xlu0 %1670
      %1672 = vrot.lane.b32.xlu0 %v1198, 5
      %v1673 = vpop.permute.xlu0 %1672
      %1674 = vrot.lane.b32.xlu0 %v1201, 5
      %v1675 = vpop.permute.xlu0 %1674
      %1676 = vrot.lane.b32.xlu0 %v1203, 5
      %v1677 = vpop.permute.xlu0 %1676
      %1678 = vrot.lane.b32.xlu0 %v1206, 5
      %v1679 = vpop.permute.xlu0 %1678
      %1680 = vrot.lane.b32.xlu0 %v1208, 5
      %v1681 = vpop.permute.xlu0 %1680
      %1682 = vrot.lane.b32.xlu0 %v1211, 5
      %v1683 = vpop.permute.xlu0 %1682
      %1684 = vrot.lane.b32.xlu0 %v1213, 5
      %v1685 = vpop.permute.xlu0 %1684
      %1686 = vrot.lane.b32.xlu0 %v1216, 5
      %v1687 = vpop.permute.xlu0 %1686
      %1688 = vrot.lane.b32.xlu0 %v1218, 5
      %v1689 = vpop.permute.xlu0 %1688
      %1690 = vrot.lane.b32.xlu0 %v1221, 5
      %v1691 = vpop.permute.xlu0 %1690
      %1692 = vrot.lane.b32.xlu0 %v1223, 5
      %v1693 = vpop.permute.xlu0 %1692
      %1694 = vrot.lane.b32.xlu0 %v1234, 5
      %v1695 = vpop.permute.xlu0 %1694
      %1696 = vrot.lane.b32.xlu0 %v1236, 5
      %v1697 = vpop.permute.xlu0 %1696
      %1730 = vrot.lane.b32.xlu0 %v966, 6
      %v1731 = vpop.permute.xlu0 %1730
      %1732 = vrot.lane.b32.xlu0 %v967, 6
      %v1733 = vpop.permute.xlu0 %1732
      %1734 = vrot.lane.b32.xlu0 %v969, 6
      %v1735 = vpop.permute.xlu0 %1734
      %1736 = vrot.lane.b32.xlu0 %v970, 6
      %v1737 = vpop.permute.xlu0 %1736
      %1738 = vrot.lane.b32.xlu0 %v972, 6
      %v1739 = vpop.permute.xlu0 %1738
      %1740 = vrot.lane.b32.xlu0 %v973, 6
      %v1741 = vpop.permute.xlu0 %1740
      %1742 = vrot.lane.b32.xlu0 %v975, 6
      %v1743 = vpop.permute.xlu0 %1742
      %1744 = vrot.lane.b32.xlu0 %v976, 6
      %v1745 = vpop.permute.xlu0 %1744
      %1746 = vrot.lane.b32.xlu0 %v978, 6
      %v1747 = vpop.permute.xlu0 %1746
      %1748 = vrot.lane.b32.xlu0 %v979, 6
      %v1749 = vpop.permute.xlu0 %1748
      %1750 = vrot.lane.b32.xlu0 %v981, 6
      %v1751 = vpop.permute.xlu0 %1750
      %1752 = vrot.lane.b32.xlu0 %v982, 6
      %v1753 = vpop.permute.xlu0 %1752
      %1754 = vrot.lane.b32.xlu0 %v984, 6
      %v1755 = vpop.permute.xlu0 %1754
      %1756 = vrot.lane.b32.xlu0 %v985, 6
      %v1757 = vpop.permute.xlu0 %1756
      %1758 = vrot.lane.b32.xlu0 %v987, 6
      %v1759 = vpop.permute.xlu0 %1758
      %1760 = vrot.lane.b32.xlu0 %v988, 6
      %v1761 = vpop.permute.xlu0 %1760
      %1762 = vrot.lane.b32.xlu0 %v990, 6
      %v1763 = vpop.permute.xlu0 %1762
      %1764 = vrot.lane.b32.xlu0 %v991, 6
      %v1765 = vpop.permute.xlu0 %1764
      %1766 = vrot.lane.b32.xlu0 %v993, 6
      %v1767 = vpop.permute.xlu0 %1766
      %1768 = vrot.lane.b32.xlu0 %v994, 6
      %v1769 = vpop.permute.xlu0 %1768
      %1770 = vrot.lane.b32.xlu0 %v996, 6
      %v1771 = vpop.permute.xlu0 %1770
      %1772 = vrot.lane.b32.xlu0 %v997, 6
      %v1773 = vpop.permute.xlu0 %1772
      %1774 = vrot.lane.b32.xlu0 %v999, 6
      %v1775 = vpop.permute.xlu0 %1774
      %1776 = vrot.lane.b32.xlu0 %v1000, 6
      %v1777 = vpop.permute.xlu0 %1776
      %1778 = vrot.lane.b32.xlu0 %v1002, 6
      %v1779 = vpop.permute.xlu0 %1778
      %1780 = vrot.lane.b32.xlu0 %v1003, 6
      %v1781 = vpop.permute.xlu0 %1780
      %1782 = vrot.lane.b32.xlu0 %v1005, 6
      %v1783 = vpop.permute.xlu0 %1782
      %1784 = vrot.lane.b32.xlu0 %v1006, 6
      %v1785 = vpop.permute.xlu0 %1784
      %1786 = vrot.lane.b32.xlu0 %v1008, 6
      %v1787 = vpop.permute.xlu0 %1786
      %1788 = vrot.lane.b32.xlu0 %v1009, 6
      %v1789 = vpop.permute.xlu0 %1788
      %1790 = vrot.lane.b32.xlu0 %v1011, 6
      %v1791 = vpop.permute.xlu0 %1790
      %1792 = vrot.lane.b32.xlu0 %v1012, 6
      %v1793 = vpop.permute.xlu0 %1792
      %1826 = vrot.lane.b32.xlu0 %v1075, 7
      %v1827 = vpop.permute.xlu0 %1826
      %1828 = vrot.lane.b32.xlu0 %v1077, 7
      %v1829 = vpop.permute.xlu0 %1828
      %1830 = vrot.lane.b32.xlu0 %v1080, 7
      %v1831 = vpop.permute.xlu0 %1830
      %1832 = vrot.lane.b32.xlu0 %v1082, 7
      %v1833 = vpop.permute.xlu0 %1832
      %1834 = vrot.lane.b32.xlu0 %v1085, 7
      %v1835 = vpop.permute.xlu0 %1834
      %1836 = vrot.lane.b32.xlu0 %v1087, 7
      %v1837 = vpop.permute.xlu0 %1836
      %1838 = vrot.lane.b32.xlu0 %v1090, 7
      %v1839 = vpop.permute.xlu0 %1838
      %1840 = vrot.lane.b32.xlu0 %v1092, 7
      %v1841 = vpop.permute.xlu0 %1840
      %1842 = vrot.lane.b32.xlu0 %v1095, 7
      %v1843 = vpop.permute.xlu0 %1842
      %1844 = vrot.lane.b32.xlu0 %v1097, 7
      %v1845 = vpop.permute.xlu0 %1844
      %1846 = vrot.lane.b32.xlu0 %v1100, 7
      %v1847 = vpop.permute.xlu0 %1846
      %1848 = vrot.lane.b32.xlu0 %v1102, 7
      %v1849 = vpop.permute.xlu0 %1848
      %1850 = vrot.lane.b32.xlu0 %v1105, 7
      %v1851 = vpop.permute.xlu0 %1850
      %1852 = vrot.lane.b32.xlu0 %v1107, 7
      %v1853 = vpop.permute.xlu0 %1852
      %1854 = vrot.lane.b32.xlu0 %v1110, 7
      %v1855 = vpop.permute.xlu0 %1854
      %1856 = vrot.lane.b32.xlu0 %v1112, 7
      %v1857 = vpop.permute.xlu0 %1856
      %1858 = vrot.lane.b32.xlu0 %v1115, 7
      %v1859 = vpop.permute.xlu0 %1858
      %1860 = vrot.lane.b32.xlu0 %v1117, 7
      %v1861 = vpop.permute.xlu0 %1860
      %1862 = vrot.lane.b32.xlu0 %v1120, 7
      %v1863 = vpop.permute.xlu0 %1862
      %1864 = vrot.lane.b32.xlu0 %v1122, 7
      %v1865 = vpop.permute.xlu0 %1864
      %1866 = vrot.lane.b32.xlu0 %v1125, 7
      %v1867 = vpop.permute.xlu0 %1866
      %1868 = vrot.lane.b32.xlu0 %v1127, 7
      %v1869 = vpop.permute.xlu0 %1868
      %1870 = vrot.lane.b32.xlu0 %v1130, 7
      %v1871 = vpop.permute.xlu0 %1870
      %1872 = vrot.lane.b32.xlu0 %v1132, 7
      %v1873 = vpop.permute.xlu0 %1872
      %1874 = vrot.lane.b32.xlu0 %v1135, 7
      %v1875 = vpop.permute.xlu0 %1874
      %1876 = vrot.lane.b32.xlu0 %v1137, 7
      %v1877 = vpop.permute.xlu0 %1876
      %1878 = vrot.lane.b32.xlu0 %v1140, 7
      %v1879 = vpop.permute.xlu0 %1878
      %1880 = vrot.lane.b32.xlu0 %v1142, 7
      %v1881 = vpop.permute.xlu0 %1880
      %1882 = vrot.lane.b32.xlu0 %v1229, 7
      %v1883 = vpop.permute.xlu0 %1882
      %1884 = vrot.lane.b32.xlu0 %v1231, 7
      %v1885 = vpop.permute.xlu0 %1884
      %1886 = vrot.lane.b32.xlu0 %v1242, 7
      %v1887 = vpop.permute.xlu0 %1886
      %1888 = vrot.lane.b32.xlu0 %v1244, 7
      %v1889 = vpop.permute.xlu0 %1888
      %1922 = vrot.lane.b32.xlu0 %v1156, 8
      %v1923 = vpop.permute.xlu0 %1922
      %1924 = vrot.lane.b32.xlu0 %v1158, 8
      %v1925 = vpop.permute.xlu0 %1924
      %1926 = vrot.lane.b32.xlu0 %v1161, 8
      %v1927 = vpop.permute.xlu0 %1926
      %1928 = vrot.lane.b32.xlu0 %v1163, 8
      %v1929 = vpop.permute.xlu0 %1928
      %1930 = vrot.lane.b32.xlu0 %v1166, 8
      %v1931 = vpop.permute.xlu0 %1930
      %1932 = vrot.lane.b32.xlu0 %v1168, 8
      %v1933 = vpop.permute.xlu0 %1932
      %1934 = vrot.lane.b32.xlu0 %v1171, 8
      %v1935 = vpop.permute.xlu0 %1934
      %1936 = vrot.lane.b32.xlu0 %v1173, 8
      %v1937 = vpop.permute.xlu0 %1936
      %1938 = vrot.lane.b32.xlu0 %v1176, 8
      %v1939 = vpop.permute.xlu0 %1938
      %1940 = vrot.lane.b32.xlu0 %v1178, 8
      %v1941 = vpop.permute.xlu0 %1940
      %1942 = vrot.lane.b32.xlu0 %v1181, 8
      %v1943 = vpop.permute.xlu0 %1942
      %1944 = vrot.lane.b32.xlu0 %v1183, 8
      %v1945 = vpop.permute.xlu0 %1944
      %1946 = vrot.lane.b32.xlu0 %v1186, 8
      %v1947 = vpop.permute.xlu0 %1946
      %1948 = vrot.lane.b32.xlu0 %v1188, 8
      %v1949 = vpop.permute.xlu0 %1948
      %1950 = vrot.lane.b32.xlu0 %v1191, 8
      %v1951 = vpop.permute.xlu0 %1950
      %1952 = vrot.lane.b32.xlu0 %v1193, 8
      %v1953 = vpop.permute.xlu0 %1952
      %1954 = vrot.lane.b32.xlu0 %v1196, 8
      %v1955 = vpop.permute.xlu0 %1954
      %1956 = vrot.lane.b32.xlu0 %v1198, 8
      %v1957 = vpop.permute.xlu0 %1956
      %1958 = vrot.lane.b32.xlu0 %v1201, 8
      %v1959 = vpop.permute.xlu0 %1958
      %1960 = vrot.lane.b32.xlu0 %v1203, 8
      %v1961 = vpop.permute.xlu0 %1960
      %1962 = vrot.lane.b32.xlu0 %v1206, 8
      %v1963 = vpop.permute.xlu0 %1962
      %1964 = vrot.lane.b32.xlu0 %v1208, 8
      %v1965 = vpop.permute.xlu0 %1964
      %1966 = vrot.lane.b32.xlu0 %v1211, 8
      %v1967 = vpop.permute.xlu0 %1966
      %1968 = vrot.lane.b32.xlu0 %v1213, 8
      %v1969 = vpop.permute.xlu0 %1968
      %1970 = vrot.lane.b32.xlu0 %v1216, 8
      %v1971 = vpop.permute.xlu0 %1970
      %1972 = vrot.lane.b32.xlu0 %v1218, 8
      %v1973 = vpop.permute.xlu0 %1972
      %1974 = vrot.lane.b32.xlu0 %v1221, 8
      %v1975 = vpop.permute.xlu0 %1974
      %1976 = vrot.lane.b32.xlu0 %v1223, 8
      %v1977 = vpop.permute.xlu0 %1976
      %1978 = vrot.lane.b32.xlu0 %v1234, 8
      %v1979 = vpop.permute.xlu0 %1978
      %1980 = vrot.lane.b32.xlu0 %v1236, 8
      %v1981 = vpop.permute.xlu0 %1980
      %1982 = vrot.lane.b32.xlu0 %v1247, 8
      %v1983 = vpop.permute.xlu0 %1982
      %1984 = vrot.lane.b32.xlu0 %v1249, 8
      %v1985 = vpop.permute.xlu0 %1984
      %v2018 = vsel %vm660, %v960, %v1251
      %v2019 = vsel %vm660, %v961, %v1253
      %v2020 = vsel %vm660, %v963, %v1255
      %v2021 = vsel %vm660, %v964, %v1257
      %v2022 = vsel %vm660, %v966, %v1259
      %v2023 = vsel %vm660, %v967, %v1261
      %v2024 = vsel %vm660, %v969, %v1263
      %v2025 = vsel %vm660, %v970, %v1265
      %v2026 = vsel %vm660, %v972, %v1267
      %v2027 = vsel %vm660, %v973, %v1269
      %v2028 = vsel %vm660, %v975, %v1271
      %v2029 = vsel %vm660, %v976, %v1273
      %v2030 = vsel %vm660, %v978, %v1275
      %v2031 = vsel %vm660, %v979, %v1277
      %v2032 = vsel %vm660, %v981, %v1279
      %v2033 = vsel %vm660, %v982, %v1281
      %v2034 = vsel %vm660, %v984, %v1283
      %v2035 = vsel %vm660, %v985, %v1285
      %v2036 = vsel %vm660, %v987, %v1287
      %v2037 = vsel %vm660, %v988, %v1289
      %v2038 = vsel %vm660, %v990, %v1291
      %v2039 = vsel %vm660, %v991, %v1293
      %v2040 = vsel %vm660, %v993, %v1295
      %v2041 = vsel %vm660, %v994, %v1297
      %v2042 = vsel %vm660, %v996, %v1299
      %v2043 = vsel %vm660, %v997, %v1301
      %v2044 = vsel %vm660, %v999, %v1303
      %v2045 = vsel %vm660, %v1000, %v1305
      %v2046 = vsel %vm660, %v1002, %v1307
      %v2047 = vsel %vm660, %v1003, %v1309
      %v2048 = vsel %vm660, %v1005, %v1311
      %v2049 = vsel %vm660, %v1006, %v1313
      %vm2050 = vcmask 15360
      %v2051 = vsel %vm2050, %v2018, %v1347
      %v2052 = vsel %vm2050, %v2019, %v1349
      %v2053 = vsel %vm2050, %v2020, %v1351
      %v2054 = vsel %vm2050, %v2021, %v1353
      %v2055 = vsel %vm2050, %v2022, %v1355
      %v2056 = vsel %vm2050, %v2023, %v1357
      %v2057 = vsel %vm2050, %v2024, %v1359
      %v2058 = vsel %vm2050, %v2025, %v1361
      %v2059 = vsel %vm2050, %v2026, %v1363
      %v2060 = vsel %vm2050, %v2027, %v1365
      %v2061 = vsel %vm2050, %v2028, %v1367
      %v2062 = vsel %vm2050, %v2029, %v1369
      %v2063 = vsel %vm2050, %v2030, %v1371
      %v2064 = vsel %vm2050, %v2031, %v1373
      %v2065 = vsel %vm2050, %v2032, %v1375
      %v2066 = vsel %vm2050, %v2033, %v1377
      %v2067 = vsel %vm2050, %v2034, %v1379
      %v2068 = vsel %vm2050, %v2035, %v1381
      %v2069 = vsel %vm2050, %v2036, %v1383
      %v2070 = vsel %vm2050, %v2037, %v1385
      %v2071 = vsel %vm2050, %v2038, %v1387
      %v2072 = vsel %vm2050, %v2039, %v1389
      %v2073 = vsel %vm2050, %v2040, %v1391
      %v2074 = vsel %vm2050, %v2041, %v1393
      %v2075 = vsel %vm2050, %v2042, %v1395
      %v2076 = vsel %vm2050, %v2043, %v1397
      %v2077 = vsel %vm2050, %v2044, %v1399
      %v2078 = vsel %vm2050, %v2045, %v1401
      %v2079 = vsel %vm2050, %v2046, %v1403
      %v2080 = vsel %vm2050, %v2047, %v1405
      %v2081 = vsel %vm2050, %v2048, %v1407
      %v2082 = vsel %vm2050, %v2049, %v1409
      %vm2083 = vcmask 23552
      %v2084 = vsel %vm2083, %v2051, %v1443
      %v2085 = vsel %vm2083, %v2052, %v1445
      %v2086 = vsel %vm2083, %v2053, %v1447
      %v2087 = vsel %vm2083, %v2054, %v1449
      %v2088 = vsel %vm2083, %v2055, %v1451
      %v2089 = vsel %vm2083, %v2056, %v1453
      %v2090 = vsel %vm2083, %v2057, %v1455
      %v2091 = vsel %vm2083, %v2058, %v1457
      %v2092 = vsel %vm2083, %v2059, %v1459
      %v2093 = vsel %vm2083, %v2060, %v1461
      %v2094 = vsel %vm2083, %v2061, %v1463
      %v2095 = vsel %vm2083, %v2062, %v1465
      %v2096 = vsel %vm2083, %v2063, %v1467
      %v2097 = vsel %vm2083, %v2064, %v1469
      %v2098 = vsel %vm2083, %v2065, %v1471
      %v2099 = vsel %vm2083, %v2066, %v1473
      %v2100 = vsel %vm2083, %v2067, %v1475
      %v2101 = vsel %vm2083, %v2068, %v1477
      %v2102 = vsel %vm2083, %v2069, %v1479
      %v2103 = vsel %vm2083, %v2070, %v1481
      %v2104 = vsel %vm2083, %v2071, %v1483
      %v2105 = vsel %vm2083, %v2072, %v1485
      %v2106 = vsel %vm2083, %v2073, %v1487
      %v2107 = vsel %vm2083, %v2074, %v1489
      %v2108 = vsel %vm2083, %v2075, %v1491
      %v2109 = vsel %vm2083, %v2076, %v1493
      %v2110 = vsel %vm2083, %v2077, %v1495
      %v2111 = vsel %vm2083, %v2078, %v1497
      %v2112 = vsel %vm2083, %v2079, %v1499
      %v2113 = vsel %vm2083, %v2080, %v1501
      %v2114 = vsel %vm2083, %v2081, %v1503
      %v2115 = vsel %vm2083, %v2082, %v1505
      %vm2116 = vcmask 31744
      %v2117 = vsel %vm2116, %v2084, %v1539
      %v2118 = vsel %vm2116, %v2085, %v1541
      %v2119 = vsel %vm2116, %v2086, %v1543
      %v2120 = vsel %vm2116, %v2087, %v1545
      %v2121 = vsel %vm2116, %v2088, %v1547
      %v2122 = vsel %vm2116, %v2089, %v1549
      %v2123 = vsel %vm2116, %v2090, %v1551
      %v2124 = vsel %vm2116, %v2091, %v1553
      %v2125 = vsel %vm2116, %v2092, %v1555
      %v2126 = vsel %vm2116, %v2093, %v1557
      %v2127 = vsel %vm2116, %v2094, %v1559
      %v2128 = vsel %vm2116, %v2095, %v1561
      %v2129 = vsel %vm2116, %v2096, %v1563
      %v2130 = vsel %vm2116, %v2097, %v1565
      %v2131 = vsel %vm2116, %v2098, %v1567
      %v2132 = vsel %vm2116, %v2099, %v1569
      %v2133 = vsel %vm2116, %v2100, %v1571
      %v2134 = vsel %vm2116, %v2101, %v1573
      %v2135 = vsel %vm2116, %v2102, %v1575
      %v2136 = vsel %vm2116, %v2103, %v1577
      %v2137 = vsel %vm2116, %v2104, %v1579
      %v2138 = vsel %vm2116, %v2105, %v1581
      %v2139 = vsel %vm2116, %v2106, %v1583
      %v2140 = vsel %vm2116, %v2107, %v1585
      %v2141 = vsel %vm2116, %v2108, %v1587
      %v2142 = vsel %vm2116, %v2109, %v1589
      %v2143 = vsel %vm2116, %v2110, %v1591
      %v2144 = vsel %vm2116, %v2111, %v1593
      %v2145 = vsel %vm2116, %v2112, %v1595
      %v2146 = vsel %vm2116, %v2113, %v1597
      %v2147 = vsel %vm2116, %v2114, %v1599
      %v2148 = vsel %vm2116, %v2115, %v1601
      %vm2149 = vcmask 39936
      %v2150 = vsel %vm2149, %v2117, %v1635
      %v2151 = vsel %vm2149, %v2118, %v1637
      %v2152 = vsel %vm2149, %v2119, %v1639
      %v2153 = vsel %vm2149, %v2120, %v1641
      %v2154 = vsel %vm2149, %v2121, %v1643
      %v2155 = vsel %vm2149, %v2122, %v1645
      %v2156 = vsel %vm2149, %v2123, %v1647
      %v2157 = vsel %vm2149, %v2124, %v1649
      %v2158 = vsel %vm2149, %v2125, %v1651
      %v2159 = vsel %vm2149, %v2126, %v1653
      %v2160 = vsel %vm2149, %v2127, %v1655
      %v2161 = vsel %vm2149, %v2128, %v1657
      %v2162 = vsel %vm2149, %v2129, %v1659
      %v2163 = vsel %vm2149, %v2130, %v1661
      %v2164 = vsel %vm2149, %v2131, %v1663
      %v2165 = vsel %vm2149, %v2132, %v1665
      %v2166 = vsel %vm2149, %v2133, %v1667
      %v2167 = vsel %vm2149, %v2134, %v1669
      %v2168 = vsel %vm2149, %v2135, %v1671
      %v2169 = vsel %vm2149, %v2136, %v1673
      %v2170 = vsel %vm2149, %v2137, %v1675
      %v2171 = vsel %vm2149, %v2138, %v1677
      %v2172 = vsel %vm2149, %v2139, %v1679
      %v2173 = vsel %vm2149, %v2140, %v1681
      %v2174 = vsel %vm2149, %v2141, %v1683
      %v2175 = vsel %vm2149, %v2142, %v1685
      %v2176 = vsel %vm2149, %v2143, %v1687
      %v2177 = vsel %vm2149, %v2144, %v1689
      %v2178 = vsel %vm2149, %v2145, %v1691
      %v2179 = vsel %vm2149, %v2146, %v1693
      %v2180 = vsel %vm2149, %v2147, %v1695
      %v2181 = vsel %vm2149, %v2148, %v1697
      %vm2182 = vcmask 48128
      %v2183 = vsel %vm2182, %v2150, %v1731
      %v2184 = vsel %vm2182, %v2151, %v1733
      %v2185 = vsel %vm2182, %v2152, %v1735
      %v2186 = vsel %vm2182, %v2153, %v1737
      %v2187 = vsel %vm2182, %v2154, %v1739
      %v2188 = vsel %vm2182, %v2155, %v1741
      %v2189 = vsel %vm2182, %v2156, %v1743
      %v2190 = vsel %vm2182, %v2157, %v1745
      %v2191 = vsel %vm2182, %v2158, %v1747
      %v2192 = vsel %vm2182, %v2159, %v1749
      %v2193 = vsel %vm2182, %v2160, %v1751
      %v2194 = vsel %vm2182, %v2161, %v1753
      %v2195 = vsel %vm2182, %v2162, %v1755
      %v2196 = vsel %vm2182, %v2163, %v1757
      %v2197 = vsel %vm2182, %v2164, %v1759
      %v2198 = vsel %vm2182, %v2165, %v1761
      %v2199 = vsel %vm2182, %v2166, %v1763
      %v2200 = vsel %vm2182, %v2167, %v1765
      %v2201 = vsel %vm2182, %v2168, %v1767
      %v2202 = vsel %vm2182, %v2169, %v1769
      %v2203 = vsel %vm2182, %v2170, %v1771
      %v2204 = vsel %vm2182, %v2171, %v1773
      %v2205 = vsel %vm2182, %v2172, %v1775
      %v2206 = vsel %vm2182, %v2173, %v1777
      %v2207 = vsel %vm2182, %v2174, %v1779
      %v2208 = vsel %vm2182, %v2175, %v1781
      %v2209 = vsel %vm2182, %v2176, %v1783
      %v2210 = vsel %vm2182, %v2177, %v1785
      %v2211 = vsel %vm2182, %v2178, %v1787
      %v2212 = vsel %vm2182, %v2179, %v1789
      %v2213 = vsel %vm2182, %v2180, %v1791
      %v2214 = vsel %vm2182, %v2181, %v1793
      %vm2215 = vcmask 56320
      %v2216 = vsel %vm2215, %v2183, %v1827
      %v2217 = vsel %vm2215, %v2184, %v1829
      %v2218 = vsel %vm2215, %v2185, %v1831
      %v2219 = vsel %vm2215, %v2186, %v1833
      %v2220 = vsel %vm2215, %v2187, %v1835
      %v2221 = vsel %vm2215, %v2188, %v1837
      %v2222 = vsel %vm2215, %v2189, %v1839
      %v2223 = vsel %vm2215, %v2190, %v1841
      %v2224 = vsel %vm2215, %v2191, %v1843
      %v2225 = vsel %vm2215, %v2192, %v1845
      %v2226 = vsel %vm2215, %v2193, %v1847
      %v2227 = vsel %vm2215, %v2194, %v1849
      %v2228 = vsel %vm2215, %v2195, %v1851
      %v2229 = vsel %vm2215, %v2196, %v1853
      %v2230 = vsel %vm2215, %v2197, %v1855
      %v2231 = vsel %vm2215, %v2198, %v1857
      %v2232 = vsel %vm2215, %v2199, %v1859
      %v2233 = vsel %vm2215, %v2200, %v1861
      %v2234 = vsel %vm2215, %v2201, %v1863
      %v2235 = vsel %vm2215, %v2202, %v1865
      %v2236 = vsel %vm2215, %v2203, %v1867
      %v2237 = vsel %vm2215, %v2204, %v1869
      %v2238 = vsel %vm2215, %v2205, %v1871
      %v2239 = vsel %vm2215, %v2206, %v1873
      %v2240 = vsel %vm2215, %v2207, %v1875
      %v2241 = vsel %vm2215, %v2208, %v1877
      %v2242 = vsel %vm2215, %v2209, %v1879
      %v2243 = vsel %vm2215, %v2210, %v1881
      %v2244 = vsel %vm2215, %v2211, %v1883
      %v2245 = vsel %vm2215, %v2212, %v1885
      %v2246 = vsel %vm2215, %v2213, %v1887
      %v2247 = vsel %vm2215, %v2214, %v1889
      %v2248 = vsel %vm716, %v2216, %v1923
      %v2249 = vsel %vm716, %v2217, %v1925
      %v2250 = vsel %vm716, %v2218, %v1927
      %v2251 = vsel %vm716, %v2219, %v1929
      %v2252 = vsel %vm716, %v2220, %v1931
      %v2253 = vsel %vm716, %v2221, %v1933
      %v2254 = vsel %vm716, %v2222, %v1935
      %v2255 = vsel %vm716, %v2223, %v1937
      %v2256 = vsel %vm716, %v2224, %v1939
      %v2257 = vsel %vm716, %v2225, %v1941
      %v2258 = vsel %vm716, %v2226, %v1943
      %v2259 = vsel %vm716, %v2227, %v1945
      %v2260 = vsel %vm716, %v2228, %v1947
      %v2261 = vsel %vm716, %v2229, %v1949
      %v2262 = vsel %vm716, %v2230, %v1951
      %v2263 = vsel %vm716, %v2231, %v1953
      %v2264 = vsel %vm716, %v2232, %v1955
      %v2265 = vsel %vm716, %v2233, %v1957
      %v2266 = vsel %vm716, %v2234, %v1959
      %v2267 = vsel %vm716, %v2235, %v1961
      %v2268 = vsel %vm716, %v2236, %v1963
      %v2269 = vsel %vm716, %v2237, %v1965
      %v2270 = vsel %vm716, %v2238, %v1967
      %v2271 = vsel %vm716, %v2239, %v1969
      %v2272 = vsel %vm716, %v2240, %v1971
      %v2273 = vsel %vm716, %v2241, %v1973
      %v2274 = vsel %vm716, %v2242, %v1975
      %v2275 = vsel %vm716, %v2243, %v1977
      %v2276 = vsel %vm716, %v2244, %v1979
      %v2277 = vsel %vm716, %v2245, %v1981
      %v2278 = vsel %vm716, %v2246, %v1983
      %v2279 = vsel %vm716, %v2247, %v1985
      %v2280 = vpack.c.bf16 %v2249, %v2248
      %v2281 = vpack.c.bf16 %v2251, %v2250
      %v2282 = vpack.c.bf16 %v2253, %v2252
      %v2283 = vpack.c.bf16 %v2255, %v2254
      %v2284 = vpack.c.bf16 %v2257, %v2256
      %v2285 = vpack.c.bf16 %v2259, %v2258
      %v2286 = vpack.c.bf16 %v2261, %v2260
      %v2287 = vpack.c.bf16 %v2263, %v2262
      %v2288 = vpack.c.bf16 %v2265, %v2264
      %v2289 = vpack.c.bf16 %v2267, %v2266
      %v2290 = vpack.c.bf16 %v2269, %v2268
      %v2291 = vpack.c.bf16 %v2271, %v2270
      %v2292 = vpack.c.bf16 %v2273, %v2272
      %v2293 = vpack.c.bf16 %v2275, %v2274
      %v2294 = vpack.c.bf16 %v2277, %v2276
      %v2295 = vpack.c.bf16 %v2279, %v2278
      %v2296 = vld [vmem:[%s1] sm:$0xf]
      %v2297 = vld [vmem:[%s1 + $0x4] sm:$0x1]
      %v2298 = vld [vmem:[%s2] sm:$0x1]
      %v2300 = vlaneseq
      %v2301 = vshrl.u32 %v2300, 7
      %v2302 = vsub.s32 0, %v2301
      %v2303 = vrot.slane %v2298, %v2302
      %v2307 = vunpack.c.l.b16 %v2296
      %v2308 = vunpack.c.l.b16 %v2297
      %v2309 = vpack.c.b16 %v2308, %v2307
      %vm2310 = vcmask 72704
      %v2312 = vsel %vm2310, %v2280, 0
      %v2315 = vsel %vm2310, %v2281, 0
      %v2318 = vsel %vm2310, %v2282, 0
      %v2321 = vsel %vm2310, %v2283, 0
      %v2324 = vsel %vm2310, %v2284, 0
      %v2327 = vsel %vm2310, %v2285, 0
      %v2330 = vsel %vm2310, %v2286, 0
      %v2333 = vsel %vm2310, %v2287, 0
      %v2336 = vsel %vm2310, %v2288, 0
      %v2339 = vsel %vm2310, %v2289, 0
      %v2342 = vsel %vm2310, %v2290, 0
      %v2345 = vsel %vm2310, %v2291, 0
      %v2348 = vsel %vm2310, %v2292, 0
      %v2351 = vsel %vm2310, %v2293, 0
      %v2354 = vsel %vm2310, %v2294, 0
      %v2357 = vsel %vm2310, %v2295, 0
      %vm2359 = vcmask 1043456
      %vm2360 = vcmask 1044480
      %v2361 = vsel %vm2359, 4294967295, 65535
      %v2362 = vsel %vm2360, %v2361, 0
      %v2364 = vand.u32 %v2309, %v2362
      %2366 = vmatprep.subr.bf16.mxu0 0
      %2367 = vmatpush1.bf16.msra.mxu0 %v2364
      %2368 = vmatprep.subr.bf16.mxu0 0
      %2369 = vmatpush1.bf16.msra.mxu0 0
      %2370 = vmatprep.subr.bf16.mxu0 0
      %2371 = vmatpush1.bf16.msra.mxu0 0
      %2372 = vmatprep.subr.bf16.mxu0 0
      %2373 = vmatpush1.bf16.msra.mxu0 0
      %2374 = vmatprep.subr.bf16.mxu0 0
      %2375 = vmatpush1.bf16.msra.mxu0 0
      %2376 = vmatprep.subr.bf16.mxu0 0
      %2377 = vmatpush1.bf16.msra.mxu0 0
      %2378 = vmatprep.subr.bf16.mxu0 0
      %2379 = vmatpush1.bf16.msra.mxu0 0
      %2380 = vmatprep.subr.bf16.mxu0 0
      %2381 = vmatpush1.bf16.msra.mxu0 0
      %2382 = vmatprep.subr.bf16.mxu0 0
      %2383 = vmatpush1.bf16.msra.mxu0 0
      %2384 = vmatprep.subr.bf16.mxu0 0
      %2385 = vmatpush1.bf16.msra.mxu0 0
      %2386 = vmatprep.subr.bf16.mxu0 0
      %2387 = vmatpush1.bf16.msra.mxu0 0
      %2388 = vmatprep.subr.bf16.mxu0 0
      %2389 = vmatpush1.bf16.msra.mxu0 0
      %2390 = vmatprep.subr.bf16.mxu0 0
      %2391 = vmatpush1.bf16.msra.mxu0 0
      %2392 = vmatprep.subr.bf16.mxu0 0
      %2393 = vmatpush1.bf16.msra.mxu0 0
      %2394 = vmatprep.subr.bf16.mxu0 0
      %2395 = vmatpush1.bf16.msra.mxu0 0
      %2396 = vmatprep.subr.bf16.mxu0 0
      %2397 = vmatpush1.bf16.msra.mxu0 0
      %2398 = vmatprep.mubr.bf16.mxu0 0
      %2399 = vmatmul.mubr.bf16.gmra.mrb[0].mxu0 %v2312
      %v2400 = vpop.f32.mrb[0].mxu0
      %v2401 = vadd.f32 %v2303, %v2400
      %v2402 = vpop.f32.mrb[0].mxu0
      %v2403 = vpop.f32.mrb[0].mxu0
      %v2404 = vadd.f32 %v2303, %v2403
      %v2405 = vpop.f32.mrb[0].mxu0
      %2406 = vmatprep.mubr.bf16.mxu0 0
      %2407 = vmatmul.mubr.bf16.gmra.mrb[0].mxu0 %v2315
      %v2408 = vpop.f32.mrb[0].mxu0
      %v2409 = vadd.f32 %v2303, %v2408
      %v2410 = vpop.f32.mrb[0].mxu0
      %v2411 = vpop.f32.mrb[0].mxu0
      %v2412 = vadd.f32 %v2303, %v2411
      %v2413 = vpop.f32.mrb[0].mxu0
      %2414 = vmatprep.mubr.bf16.mxu0 0
      %2415 = vmatmul.mubr.bf16.gmra.mrb[0].mxu0 %v2318
      %v2416 = vpop.f32.mrb[0].mxu0
      %v2417 = vadd.f32 %v2303, %v2416
      %v2418 = vpop.f32.mrb[0].mxu0
      %v2419 = vpop.f32.mrb[0].mxu0
      %v2420 = vadd.f32 %v2303, %v2419
      %v2421 = vpop.f32.mrb[0].mxu0
      %2422 = vmatprep.mubr.bf16.mxu0 0
      %2423 = vmatmul.mubr.bf16.gmra.mrb[0].mxu0 %v2321
      %v2424 = vpop.f32.mrb[0].mxu0
      %v2425 = vadd.f32 %v2303, %v2424
      %v2426 = vpop.f32.mrb[0].mxu0
      %v2427 = vpop.f32.mrb[0].mxu0
      %v2428 = vadd.f32 %v2303, %v2427
      %v2429 = vpop.f32.mrb[0].mxu0
      %2430 = vmatprep.mubr.bf16.mxu0 0
      %2431 = vmatmul.mubr.bf16.gmra.mrb[0].mxu0 %v2324
      %v2432 = vpop.f32.mrb[0].mxu0
      %v2433 = vadd.f32 %v2303, %v2432
      %v2434 = vpop.f32.mrb[0].mxu0
      %v2435 = vpop.f32.mrb[0].mxu0
      %v2436 = vadd.f32 %v2303, %v2435
      %v2437 = vpop.f32.mrb[0].mxu0
      %2438 = vmatprep.mubr.bf16.mxu0 0
      %2439 = vmatmul.mubr.bf16.gmra.mrb[0].mxu0 %v2327
      %v2440 = vpop.f32.mrb[0].mxu0
      %v2441 = vadd.f32 %v2303, %v2440
      %v2442 = vpop.f32.mrb[0].mxu0
      %v2443 = vpop.f32.mrb[0].mxu0
      %v2444 = vadd.f32 %v2303, %v2443
      %v2445 = vpop.f32.mrb[0].mxu0
      %2446 = vmatprep.mubr.bf16.mxu0 0
      %2447 = vmatmul.mubr.bf16.gmra.mrb[0].mxu0 %v2330
      %v2448 = vpop.f32.mrb[0].mxu0
      %v2449 = vadd.f32 %v2303, %v2448
      %v2450 = vpop.f32.mrb[0].mxu0
      %v2451 = vpop.f32.mrb[0].mxu0
      %v2452 = vadd.f32 %v2303, %v2451
      %v2453 = vpop.f32.mrb[0].mxu0
      %2454 = vmatprep.mubr.bf16.mxu0 0
      %2455 = vmatmul.mubr.bf16.gmra.mrb[0].mxu0 %v2333
      %v2456 = vpop.f32.mrb[0].mxu0
      %v2457 = vadd.f32 %v2303, %v2456
      %v2458 = vpop.f32.mrb[0].mxu0
      %v2459 = vpop.f32.mrb[0].mxu0
      %v2460 = vadd.f32 %v2303, %v2459
      %v2461 = vpop.f32.mrb[0].mxu0
      %2462 = vmatprep.mubr.bf16.mxu0 0
      %2463 = vmatmul.mubr.bf16.gmra.mrb[0].mxu0 %v2336
      %v2464 = vpop.f32.mrb[0].mxu0
      %v2465 = vadd.f32 %v2303, %v2464
      %v2466 = vpop.f32.mrb[0].mxu0
      %v2467 = vpop.f32.mrb[0].mxu0
      %v2468 = vadd.f32 %v2303, %v2467
      %v2469 = vpop.f32.mrb[0].mxu0
      %2470 = vmatprep.mubr.bf16.mxu0 0
      %2471 = vmatmul.mubr.bf16.gmra.mrb[0].mxu0 %v2339
      %v2472 = vpop.f32.mrb[0].mxu0
      %v2473 = vadd.f32 %v2303, %v2472
      %v2474 = vpop.f32.mrb[0].mxu0
      %v2475 = vpop.f32.mrb[0].mxu0
      %v2476 = vadd.f32 %v2303, %v2475
      %v2477 = vpop.f32.mrb[0].mxu0
      %2478 = vmatprep.mubr.bf16.mxu0 0
      %2479 = vmatmul.mubr.bf16.gmra.mrb[0].mxu0 %v2342
      %v2480 = vpop.f32.mrb[0].mxu0
      %v2481 = vadd.f32 %v2303, %v2480
      %v2482 = vpop.f32.mrb[0].mxu0
      %v2483 = vpop.f32.mrb[0].mxu0
      %v2484 = vadd.f32 %v2303, %v2483
      %v2485 = vpop.f32.mrb[0].mxu0
      %2486 = vmatprep.mubr.bf16.mxu0 0
      %2487 = vmatmul.mubr.bf16.gmra.mrb[0].mxu0 %v2345
      %v2488 = vpop.f32.mrb[0].mxu0
      %v2489 = vadd.f32 %v2303, %v2488
      %v2490 = vpop.f32.mrb[0].mxu0
      %v2491 = vpop.f32.mrb[0].mxu0
      %v2492 = vadd.f32 %v2303, %v2491
      %v2493 = vpop.f32.mrb[0].mxu0
      %2494 = vmatprep.mubr.bf16.mxu0 0
      %2495 = vmatmul.mubr.bf16.gmra.mrb[0].mxu0 %v2348
      %v2496 = vpop.f32.mrb[0].mxu0
      %v2497 = vadd.f32 %v2303, %v2496
      %v2498 = vpop.f32.mrb[0].mxu0
      %v2499 = vpop.f32.mrb[0].mxu0
      %v2500 = vadd.f32 %v2303, %v2499
      %v2501 = vpop.f32.mrb[0].mxu0
      %2502 = vmatprep.mubr.bf16.mxu0 0
      %2503 = vmatmul.mubr.bf16.gmra.mrb[0].mxu0 %v2351
      %v2504 = vpop.f32.mrb[0].mxu0
      %v2505 = vadd.f32 %v2303, %v2504
      %v2506 = vpop.f32.mrb[0].mxu0
      %v2507 = vpop.f32.mrb[0].mxu0
      %v2508 = vadd.f32 %v2303, %v2507
      %v2509 = vpop.f32.mrb[0].mxu0
      %2510 = vmatprep.mubr.bf16.mxu0 0
      %2511 = vmatmul.mubr.bf16.gmra.mrb[0].mxu0 %v2354
      %v2512 = vpop.f32.mrb[0].mxu0
      %v2513 = vadd.f32 %v2303, %v2512
      %v2514 = vpop.f32.mrb[0].mxu0
      %v2515 = vpop.f32.mrb[0].mxu0
      %v2516 = vadd.f32 %v2303, %v2515
      %v2517 = vpop.f32.mrb[0].mxu0
      %2518 = vmatprep.mubr.bf16.mxu0 0
      %2519 = vmatmul.mubr.bf16.gmra.mrb[0].mxu0 %v2357
      %v2520 = vpop.f32.mrb[0].mxu0
      %v2521 = vadd.f32 %v2303, %v2520
      %v2522 = vpop.f32.mrb[0].mxu0
      %v2523 = vpop.f32.mrb[0].mxu0
      %v2524 = vadd.f32 %v2303, %v2523
      %v2525 = vpop.f32.mrb[0].mxu0
      %2526 = vdwg.mxu0
      %v2527 = vmax.f32 %v2401, 0.0
      %v2528 = vmax.f32 %v2404, 0.0
      %v2529 = vmax.f32 %v2409, 0.0
      %v2530 = vmax.f32 %v2412, 0.0
      %v2531 = vmax.f32 %v2417, 0.0
      %v2532 = vmax.f32 %v2420, 0.0
      %v2533 = vmax.f32 %v2425, 0.0
      %v2534 = vmax.f32 %v2428, 0.0
      %v2535 = vmax.f32 %v2433, 0.0
      %v2536 = vmax.f32 %v2436, 0.0
      %v2537 = vmax.f32 %v2441, 0.0
      %v2538 = vmax.f32 %v2444, 0.0
      %v2539 = vmax.f32 %v2449, 0.0
      %v2540 = vmax.f32 %v2452, 0.0
      %v2541 = vmax.f32 %v2457, 0.0
      %v2542 = vmax.f32 %v2460, 0.0
      %v2543 = vmax.f32 %v2465, 0.0
      %v2544 = vmax.f32 %v2468, 0.0
      %v2545 = vmax.f32 %v2473, 0.0
      %v2546 = vmax.f32 %v2476, 0.0
      %v2547 = vmax.f32 %v2481, 0.0
      %v2548 = vmax.f32 %v2484, 0.0
      %v2549 = vmax.f32 %v2489, 0.0
      %v2550 = vmax.f32 %v2492, 0.0
      %v2551 = vmax.f32 %v2497, 0.0
      %v2552 = vmax.f32 %v2500, 0.0
      %v2553 = vmax.f32 %v2505, 0.0
      %v2554 = vmax.f32 %v2508, 0.0
      %v2555 = vmax.f32 %v2513, 0.0
      %v2556 = vmax.f32 %v2516, 0.0
      %v2557 = vmax.f32 %v2521, 0.0
      %v2558 = vmax.f32 %v2524, 0.0
      %s2559 = scalar_lea.vmem [#allocation3], 24
      %2560 = vst.msk [vmem:[%s2559 + $0x1] sm:$0xff] %vm716, %v2527
      %2561 = vst.msk [vmem:[%s2559 + $0x9] sm:$0xff] %vm716, %v2528
      %2562 = vst.msk [vmem:[%s2559 + $0x19] sm:$0xff] %vm716, %v2529
      %2563 = vst.msk [vmem:[%s2559 + $0x21] sm:$0xff] %vm716, %v2530
      %2564 = vst.msk [vmem:[%s2559 + $0x31] sm:$0xff] %vm716, %v2531
      %2565 = vst.msk [vmem:[%s2559 + $0x39] sm:$0xff] %vm716, %v2532
      %2566 = vst.msk [vmem:[%s2559 + $0x49] sm:$0xff] %vm716, %v2533
      %2567 = vst.msk [vmem:[%s2559 + $0x51] sm:$0xff] %vm716, %v2534
      %2568 = vst.msk [vmem:[%s2559 + $0x61] sm:$0xff] %vm716, %v2535
      %2569 = vst.msk [vmem:[%s2559 + $0x69] sm:$0xff] %vm716, %v2536
      %2570 = vst.msk [vmem:[%s2559 + $0x79] sm:$0xff] %vm716, %v2537
      %2571 = vst.msk [vmem:[%s2559 + $0x81] sm:$0xff] %vm716, %v2538
      %2572 = vst.msk [vmem:[%s2559 + $0x91] sm:$0xff] %vm716, %v2539
      %2573 = vst.msk [vmem:[%s2559 + $0x99] sm:$0xff] %vm716, %v2540
      %2574 = vst.msk [vmem:[%s2559 + $0xa9] sm:$0xff] %vm716, %v2541
      %2575 = vst.msk [vmem:[%s2559 + $0xb1] sm:$0xff] %vm716, %v2542
      %2576 = vst.msk [vmem:[%s2559 + $0xc1] sm:$0xff] %vm716, %v2543
      %2577 = vst.msk [vmem:[%s2559 + $0xc9] sm:$0xff] %vm716, %v2544
      %2578 = vst.msk [vmem:[%s2559 + $0xd9] sm:$0xff] %vm716, %v2545
      %2579 = vst.msk [vmem:[%s2559 + $0xe1] sm:$0xff] %vm716, %v2546
      %2580 = vst.msk [vmem:[%s2559 + $0xf1] sm:$0xff] %vm716, %v2547
      %2581 = vst.msk [vmem:[%s2559 + $0xf9] sm:$0xff] %vm716, %v2548
      %2582 = vst.msk [vmem:[%s2559 + $0x109] sm:$0xff] %vm716, %v2549
      %2583 = vst.msk [vmem:[%s2559 + $0x111] sm:$0xff] %vm716, %v2550
      %2584 = vst.msk [vmem:[%s2559 + $0x121] sm:$0xff] %vm716, %v2551
      %2585 = vst.msk [vmem:[%s2559 + $0x129] sm:$0xff] %vm716, %v2552
      %2586 = vst.msk [vmem:[%s2559 + $0x139] sm:$0xff] %vm716, %v2553
      %2587 = vst.msk [vmem:[%s2559 + $0x141] sm:$0xff] %vm716, %v2554
      %2588 = vst.msk [vmem:[%s2559 + $0x151] sm:$0xff] %vm716, %v2555
      %2589 = vst.msk [vmem:[%s2559 + $0x159] sm:$0xff] %vm716, %v2556
      %2590 = vst.msk [vmem:[%s2559 + $0x169] sm:$0xff] %vm716, %v2557
      %2591 = vst.msk [vmem:[%s2559 + $0x171] sm:$0xff] %vm716, %v2558
      %v2624 = vcombine.high %v2527, %v2527
      %v2626 = vunpack.c.l.s4 1983009808
      %v2627 = vunpack.c.0.s8 %v2626
      %v2628 = vlaneseq
      %v2629 = vshrl.u32 %v2628, 7
      %v2630 = vsub.s32 %v2627, %v2629
      %v2631 = vrot.slane %v2527, %v2630
      %v2633 = vunpack.c.l.s4 1983009808
      %v2634 = vunpack.c.0.s8 %v2633
      %v2635 = vlaneseq
      %v2636 = vshrl.u32 %v2635, 7
      %v2637 = vsub.s32 %v2634, %v2636
      %v2638 = vrot.slane %v2624, %v2637
      %v2639 = vcombine.high %v2631, %v2631
      %v2640 = vcombine.high %v2638, %v2638
      %v2641 = vcombine.high %v2528, %v2528
      %v2643 = vunpack.c.l.s4 1983009808
      %v2644 = vunpack.c.0.s8 %v2643
      %v2645 = vlaneseq
      %v2646 = vshrl.u32 %v2645, 7
      %v2647 = vsub.s32 %v2644, %v2646
      %v2648 = vrot.slane %v2528, %v2647
      %v2650 = vunpack.c.l.s4 1983009808
      %v2651 = vunpack.c.0.s8 %v2650
      %v2652 = vlaneseq
      %v2653 = vshrl.u32 %v2652, 7
      %v2654 = vsub.s32 %v2651, %v2653
      %v2655 = vrot.slane %v2641, %v2654
      %v2656 = vcombine.high %v2648, %v2648
      %v2657 = vcombine.high %v2655, %v2655
      %v2658 = vcombine.high %v2529, %v2529
      %v2660 = vunpack.c.l.s4 1983009808
      %v2661 = vunpack.c.0.s8 %v2660
      %v2662 = vlaneseq
      %v2663 = vshrl.u32 %v2662, 7
      %v2664 = vsub.s32 %v2661, %v2663
      %v2665 = vrot.slane %v2529, %v2664
      %v2667 = vunpack.c.l.s4 1983009808
      %v2668 = vunpack.c.0.s8 %v2667
      %v2669 = vlaneseq
      %v2670 = vshrl.u32 %v2669, 7
      %v2671 = vsub.s32 %v2668, %v2670
      %v2672 = vrot.slane %v2658, %v2671
      %v2673 = vcombine.high %v2665, %v2665
      %v2674 = vcombine.high %v2672, %v2672
      %v2675 = vcombine.high %v2530, %v2530
      %v2677 = vunpack.c.l.s4 1983009808
      %v2678 = vunpack.c.0.s8 %v2677
      %v2679 = vlaneseq
      %v2680 = vshrl.u32 %v2679, 7
      %v2681 = vsub.s32 %v2678, %v2680
      %v2682 = vrot.slane %v2530, %v2681
      %v2684 = vunpack.c.l.s4 1983009808
      %v2685 = vunpack.c.0.s8 %v2684
      %v2686 = vlaneseq
      %v2687 = vshrl.u32 %v2686, 7
      %v2688 = vsub.s32 %v2685, %v2687
      %v2689 = vrot.slane %v2675, %v2688
      %v2690 = vcombine.high %v2682, %v2682
      %v2691 = vcombine.high %v2689, %v2689
      %v2692 = vcombine.high %v2531, %v2531
      %v2694 = vunpack.c.l.s4 1983009808
      %v2695 = vunpack.c.0.s8 %v2694
      %v2696 = vlaneseq
      %v2697 = vshrl.u32 %v2696, 7
      %v2698 = vsub.s32 %v2695, %v2697
      %v2699 = vrot.slane %v2531, %v2698
      %v2701 = vunpack.c.l.s4 1983009808
      %v2702 = vunpack.c.0.s8 %v2701
      %v2703 = vlaneseq
      %v2704 = vshrl.u32 %v2703, 7
      %v2705 = vsub.s32 %v2702, %v2704
      %v2706 = vrot.slane %v2692, %v2705
      %v2707 = vcombine.high %v2699, %v2699
      %v2708 = vcombine.high %v2706, %v2706
      %v2709 = vcombine.high %v2532, %v2532
      %v2711 = vunpack.c.l.s4 1983009808
      %v2712 = vunpack.c.0.s8 %v2711
      %v2713 = vlaneseq
      %v2714 = vshrl.u32 %v2713, 7
      %v2715 = vsub.s32 %v2712, %v2714
      %v2716 = vrot.slane %v2532, %v2715
      %v2718 = vunpack.c.l.s4 1983009808
      %v2719 = vunpack.c.0.s8 %v2718
      %v2720 = vlaneseq
      %v2721 = vshrl.u32 %v2720, 7
      %v2722 = vsub.s32 %v2719, %v2721
      %v2723 = vrot.slane %v2709, %v2722
      %v2724 = vcombine.high %v2716, %v2716
      %v2725 = vcombine.high %v2723, %v2723
      %v2726 = vcombine.high %v2533, %v2533
      %v2728 = vunpack.c.l.s4 1983009808
      %v2729 = vunpack.c.0.s8 %v2728
      %v2730 = vlaneseq
      %v2731 = vshrl.u32 %v2730, 7
      %v2732 = vsub.s32 %v2729, %v2731
      %v2733 = vrot.slane %v2533, %v2732
      %v2735 = vunpack.c.l.s4 1983009808
      %v2736 = vunpack.c.0.s8 %v2735
      %v2737 = vlaneseq
      %v2738 = vshrl.u32 %v2737, 7
      %v2739 = vsub.s32 %v2736, %v2738
      %v2740 = vrot.slane %v2726, %v2739
      %v2741 = vcombine.high %v2733, %v2733
      %v2742 = vcombine.high %v2740, %v2740
      %v2743 = vcombine.high %v2534, %v2534
      %v2745 = vunpack.c.l.s4 1983009808
      %v2746 = vunpack.c.0.s8 %v2745
      %v2747 = vlaneseq
      %v2748 = vshrl.u32 %v2747, 7
      %v2749 = vsub.s32 %v2746, %v2748
      %v2750 = vrot.slane %v2534, %v2749
      %v2752 = vunpack.c.l.s4 1983009808
      %v2753 = vunpack.c.0.s8 %v2752
      %v2754 = vlaneseq
      %v2755 = vshrl.u32 %v2754, 7
      %v2756 = vsub.s32 %v2753, %v2755
      %v2757 = vrot.slane %v2743, %v2756
      %v2758 = vcombine.high %v2750, %v2750
      %v2759 = vcombine.high %v2757, %v2757
      %v2760 = vcombine.high %v2535, %v2535
      %v2762 = vunpack.c.l.s4 1983009808
      %v2763 = vunpack.c.0.s8 %v2762
      %v2764 = vlaneseq
      %v2765 = vshrl.u32 %v2764, 7
      %v2766 = vsub.s32 %v2763, %v2765
      %v2767 = vrot.slane %v2535, %v2766
      %v2769 = vunpack.c.l.s4 1983009808
      %v2770 = vunpack.c.0.s8 %v2769
      %v2771 = vlaneseq
      %v2772 = vshrl.u32 %v2771, 7
      %v2773 = vsub.s32 %v2770, %v2772
      %v2774 = vrot.slane %v2760, %v2773
      %v2775 = vcombine.high %v2767, %v2767
      %v2776 = vcombine.high %v2774, %v2774
      %v2777 = vcombine.high %v2536, %v2536
      %v2779 = vunpack.c.l.s4 1983009808
      %v2780 = vunpack.c.0.s8 %v2779
      %v2781 = vlaneseq
      %v2782 = vshrl.u32 %v2781, 7
      %v2783 = vsub.s32 %v2780, %v2782
      %v2784 = vrot.slane %v2536, %v2783
      %v2786 = vunpack.c.l.s4 1983009808
      %v2787 = vunpack.c.0.s8 %v2786
      %v2788 = vlaneseq
      %v2789 = vshrl.u32 %v2788, 7
      %v2790 = vsub.s32 %v2787, %v2789
      %v2791 = vrot.slane %v2777, %v2790
      %v2792 = vcombine.high %v2784, %v2784
      %v2793 = vcombine.high %v2791, %v2791
      %v2794 = vcombine.high %v2537, %v2537
      %v2796 = vunpack.c.l.s4 1983009808
      %v2797 = vunpack.c.0.s8 %v2796
      %v2798 = vlaneseq
      %v2799 = vshrl.u32 %v2798, 7
      %v2800 = vsub.s32 %v2797, %v2799
      %v2801 = vrot.slane %v2537, %v2800
      %v2803 = vunpack.c.l.s4 1983009808
      %v2804 = vunpack.c.0.s8 %v2803
      %v2805 = vlaneseq
      %v2806 = vshrl.u32 %v2805, 7
      %v2807 = vsub.s32 %v2804, %v2806
      %v2808 = vrot.slane %v2794, %v2807
      %v2809 = vcombine.high %v2801, %v2801
      %v2810 = vcombine.high %v2808, %v2808
      %v2811 = vcombine.high %v2538, %v2538
      %v2813 = vunpack.c.l.s4 1983009808
      %v2814 = vunpack.c.0.s8 %v2813
      %v2815 = vlaneseq
      %v2816 = vshrl.u32 %v2815, 7
      %v2817 = vsub.s32 %v2814, %v2816
      %v2818 = vrot.slane %v2538, %v2817
      %v2820 = vunpack.c.l.s4 1983009808
      %v2821 = vunpack.c.0.s8 %v2820
      %v2822 = vlaneseq
      %v2823 = vshrl.u32 %v2822, 7
      %v2824 = vsub.s32 %v2821, %v2823
      %v2825 = vrot.slane %v2811, %v2824
      %v2826 = vcombine.high %v2818, %v2818
      %v2827 = vcombine.high %v2825, %v2825
      %v2828 = vcombine.high %v2539, %v2539
      %v2830 = vunpack.c.l.s4 1983009808
      %v2831 = vunpack.c.0.s8 %v2830
      %v2832 = vlaneseq
      %v2833 = vshrl.u32 %v2832, 7
      %v2834 = vsub.s32 %v2831, %v2833
      %v2835 = vrot.slane %v2539, %v2834
      %v2837 = vunpack.c.l.s4 1983009808
      %v2838 = vunpack.c.0.s8 %v2837
      %v2839 = vlaneseq
      %v2840 = vshrl.u32 %v2839, 7
      %v2841 = vsub.s32 %v2838, %v2840
      %v2842 = vrot.slane %v2828, %v2841
      %v2843 = vcombine.high %v2835, %v2835
      %v2844 = vcombine.high %v2842, %v2842
      %v2845 = vcombine.high %v2540, %v2540
      %v2847 = vunpack.c.l.s4 1983009808
      %v2848 = vunpack.c.0.s8 %v2847
      %v2849 = vlaneseq
      %v2850 = vshrl.u32 %v2849, 7
      %v2851 = vsub.s32 %v2848, %v2850
      %v2852 = vrot.slane %v2540, %v2851
      %v2854 = vunpack.c.l.s4 1983009808
      %v2855 = vunpack.c.0.s8 %v2854
      %v2856 = vlaneseq
      %v2857 = vshrl.u32 %v2856, 7
      %v2858 = vsub.s32 %v2855, %v2857
      %v2859 = vrot.slane %v2845, %v2858
      %v2860 = vcombine.high %v2852, %v2852
      %v2861 = vcombine.high %v2859, %v2859
      %v2862 = vcombine.high %v2541, %v2541
      %v2864 = vunpack.c.l.s4 1983009808
      %v2865 = vunpack.c.0.s8 %v2864
      %v2866 = vlaneseq
      %v2867 = vshrl.u32 %v2866, 7
      %v2868 = vsub.s32 %v2865, %v2867
      %v2869 = vrot.slane %v2541, %v2868
      %v2871 = vunpack.c.l.s4 1983009808
      %v2872 = vunpack.c.0.s8 %v2871
      %v2873 = vlaneseq
      %v2874 = vshrl.u32 %v2873, 7
      %v2875 = vsub.s32 %v2872, %v2874
      %v2876 = vrot.slane %v2862, %v2875
      %v2877 = vcombine.high %v2869, %v2869
      %v2878 = vcombine.high %v2876, %v2876
      %v2879 = vcombine.high %v2542, %v2542
      %v2881 = vunpack.c.l.s4 1983009808
      %v2882 = vunpack.c.0.s8 %v2881
      %v2883 = vlaneseq
      %v2884 = vshrl.u32 %v2883, 7
      %v2885 = vsub.s32 %v2882, %v2884
      %v2886 = vrot.slane %v2542, %v2885
      %v2888 = vunpack.c.l.s4 1983009808
      %v2889 = vunpack.c.0.s8 %v2888
      %v2890 = vlaneseq
      %v2891 = vshrl.u32 %v2890, 7
      %v2892 = vsub.s32 %v2889, %v2891
      %v2893 = vrot.slane %v2879, %v2892
      %v2894 = vcombine.high %v2886, %v2886
      %v2895 = vcombine.high %v2893, %v2893
      %v2896 = vcombine.high %v2543, %v2543
      %v2898 = vunpack.c.l.s4 1983009808
      %v2899 = vunpack.c.0.s8 %v2898
      %v2900 = vlaneseq
      %v2901 = vshrl.u32 %v2900, 7
      %v2902 = vsub.s32 %v2899, %v2901
      %v2903 = vrot.slane %v2543, %v2902
      %v2905 = vunpack.c.l.s4 1983009808
      %v2906 = vunpack.c.0.s8 %v2905
      %v2907 = vlaneseq
      %v2908 = vshrl.u32 %v2907, 7
      %v2909 = vsub.s32 %v2906, %v2908
      %v2910 = vrot.slane %v2896, %v2909
      %v2911 = vcombine.high %v2903, %v2903
      %v2912 = vcombine.high %v2910, %v2910
      %v2913 = vcombine.high %v2544, %v2544
      %v2915 = vunpack.c.l.s4 1983009808
      %v2916 = vunpack.c.0.s8 %v2915
      %v2917 = vlaneseq
      %v2918 = vshrl.u32 %v2917, 7
      %v2919 = vsub.s32 %v2916, %v2918
      %v2920 = vrot.slane %v2544, %v2919
      %v2922 = vunpack.c.l.s4 1983009808
      %v2923 = vunpack.c.0.s8 %v2922
      %v2924 = vlaneseq
      %v2925 = vshrl.u32 %v2924, 7
      %v2926 = vsub.s32 %v2923, %v2925
      %v2927 = vrot.slane %v2913, %v2926
      %v2928 = vcombine.high %v2920, %v2920
      %v2929 = vcombine.high %v2927, %v2927
      %v2930 = vcombine.high %v2545, %v2545
      %v2932 = vunpack.c.l.s4 1983009808
      %v2933 = vunpack.c.0.s8 %v2932
      %v2934 = vlaneseq
      %v2935 = vshrl.u32 %v2934, 7
      %v2936 = vsub.s32 %v2933, %v2935
      %v2937 = vrot.slane %v2545, %v2936
      %v2939 = vunpack.c.l.s4 1983009808
      %v2940 = vunpack.c.0.s8 %v2939
      %v2941 = vlaneseq
      %v2942 = vshrl.u32 %v2941, 7
      %v2943 = vsub.s32 %v2940, %v2942
      %v2944 = vrot.slane %v2930, %v2943
      %v2945 = vcombine.high %v2937, %v2937
      %v2946 = vcombine.high %v2944, %v2944
      %v2947 = vcombine.high %v2546, %v2546
      %v2949 = vunpack.c.l.s4 1983009808
      %v2950 = vunpack.c.0.s8 %v2949
      %v2951 = vlaneseq
      %v2952 = vshrl.u32 %v2951, 7
      %v2953 = vsub.s32 %v2950, %v2952
      %v2954 = vrot.slane %v2546, %v2953
      %v2956 = vunpack.c.l.s4 1983009808
      %v2957 = vunpack.c.0.s8 %v2956
      %v2958 = vlaneseq
      %v2959 = vshrl.u32 %v2958, 7
      %v2960 = vsub.s32 %v2957, %v2959
      %v2961 = vrot.slane %v2947, %v2960
      %v2962 = vcombine.high %v2954, %v2954
      %v2963 = vcombine.high %v2961, %v2961
      %v2964 = vcombine.high %v2547, %v2547
      %v2966 = vunpack.c.l.s4 1983009808
      %v2967 = vunpack.c.0.s8 %v2966
      %v2968 = vlaneseq
      %v2969 = vshrl.u32 %v2968, 7
      %v2970 = vsub.s32 %v2967, %v2969
      %v2971 = vrot.slane %v2547, %v2970
      %v2973 = vunpack.c.l.s4 1983009808
      %v2974 = vunpack.c.0.s8 %v2973
      %v2975 = vlaneseq
      %v2976 = vshrl.u32 %v2975, 7
      %v2977 = vsub.s32 %v2974, %v2976
      %v2978 = vrot.slane %v2964, %v2977
      %v2979 = vcombine.high %v2971, %v2971
      %v2980 = vcombine.high %v2978, %v2978
      %v2981 = vcombine.high %v2548, %v2548
      %v2983 = vunpack.c.l.s4 1983009808
      %v2984 = vunpack.c.0.s8 %v2983
      %v2985 = vlaneseq
      %v2986 = vshrl.u32 %v2985, 7
      %v2987 = vsub.s32 %v2984, %v2986
      %v2988 = vrot.slane %v2548, %v2987
      %v2990 = vunpack.c.l.s4 1983009808
      %v2991 = vunpack.c.0.s8 %v2990
      %v2992 = vlaneseq
      %v2993 = vshrl.u32 %v2992, 7
      %v2994 = vsub.s32 %v2991, %v2993
      %v2995 = vrot.slane %v2981, %v2994
      %v2996 = vcombine.high %v2988, %v2988
      %v2997 = vcombine.high %v2995, %v2995
      %v2998 = vcombine.high %v2549, %v2549
      %v3000 = vunpack.c.l.s4 1983009808
      %v3001 = vunpack.c.0.s8 %v3000
      %v3002 = vlaneseq
      %v3003 = vshrl.u32 %v3002, 7
      %v3004 = vsub.s32 %v3001, %v3003
      %v3005 = vrot.slane %v2549, %v3004
      %v3007 = vunpack.c.l.s4 1983009808
      %v3008 = vunpack.c.0.s8 %v3007
      %v3009 = vlaneseq
      %v3010 = vshrl.u32 %v3009, 7
      %v3011 = vsub.s32 %v3008, %v3010
      %v3012 = vrot.slane %v2998, %v3011
      %v3013 = vcombine.high %v3005, %v3005
      %v3014 = vcombine.high %v3012, %v3012
      %v3015 = vcombine.high %v2550, %v2550
      %v3017 = vunpack.c.l.s4 1983009808
      %v3018 = vunpack.c.0.s8 %v3017
      %v3019 = vlaneseq
      %v3020 = vshrl.u32 %v3019, 7
      %v3021 = vsub.s32 %v3018, %v3020
      %v3022 = vrot.slane %v2550, %v3021
      %v3024 = vunpack.c.l.s4 1983009808
      %v3025 = vunpack.c.0.s8 %v3024
      %v3026 = vlaneseq
      %v3027 = vshrl.u32 %v3026, 7
      %v3028 = vsub.s32 %v3025, %v3027
      %v3029 = vrot.slane %v3015, %v3028
      %v3030 = vcombine.high %v3022, %v3022
      %v3031 = vcombine.high %v3029, %v3029
      %v3032 = vcombine.high %v2551, %v2551
      %v3034 = vunpack.c.l.s4 1983009808
      %v3035 = vunpack.c.0.s8 %v3034
      %v3036 = vlaneseq
      %v3037 = vshrl.u32 %v3036, 7
      %v3038 = vsub.s32 %v3035, %v3037
      %v3039 = vrot.slane %v2551, %v3038
      %v3041 = vunpack.c.l.s4 1983009808
      %v3042 = vunpack.c.0.s8 %v3041
      %v3043 = vlaneseq
      %v3044 = vshrl.u32 %v3043, 7
      %v3045 = vsub.s32 %v3042, %v3044
      %v3046 = vrot.slane %v3032, %v3045
      %v3047 = vcombine.high %v3039, %v3039
      %v3048 = vcombine.high %v3046, %v3046
      %v3049 = vcombine.high %v2552, %v2552
      %v3051 = vunpack.c.l.s4 1983009808
      %v3052 = vunpack.c.0.s8 %v3051
      %v3053 = vlaneseq
      %v3054 = vshrl.u32 %v3053, 7
      %v3055 = vsub.s32 %v3052, %v3054
      %v3056 = vrot.slane %v2552, %v3055
      %v3058 = vunpack.c.l.s4 1983009808
      %v3059 = vunpack.c.0.s8 %v3058
      %v3060 = vlaneseq
      %v3061 = vshrl.u32 %v3060, 7
      %v3062 = vsub.s32 %v3059, %v3061
      %v3063 = vrot.slane %v3049, %v3062
      %v3064 = vcombine.high %v3056, %v3056
      %v3065 = vcombine.high %v3063, %v3063
      %v3066 = vcombine.high %v2553, %v2553
      %v3068 = vunpack.c.l.s4 1983009808
      %v3069 = vunpack.c.0.s8 %v3068
      %v3070 = vlaneseq
      %v3071 = vshrl.u32 %v3070, 7
      %v3072 = vsub.s32 %v3069, %v3071
      %v3073 = vrot.slane %v2553, %v3072
      %v3075 = vunpack.c.l.s4 1983009808
      %v3076 = vunpack.c.0.s8 %v3075
      %v3077 = vlaneseq
      %v3078 = vshrl.u32 %v3077, 7
      %v3079 = vsub.s32 %v3076, %v3078
      %v3080 = vrot.slane %v3066, %v3079
      %v3081 = vcombine.high %v3073, %v3073
      %v3082 = vcombine.high %v3080, %v3080
      %v3083 = vcombine.high %v2554, %v2554
      %v3085 = vunpack.c.l.s4 1983009808
      %v3086 = vunpack.c.0.s8 %v3085
      %v3087 = vlaneseq
      %v3088 = vshrl.u32 %v3087, 7
      %v3089 = vsub.s32 %v3086, %v3088
      %v3090 = vrot.slane %v2554, %v3089
      %v3092 = vunpack.c.l.s4 1983009808
      %v3093 = vunpack.c.0.s8 %v3092
      %v3094 = vlaneseq
      %v3095 = vshrl.u32 %v3094, 7
      %v3096 = vsub.s32 %v3093, %v3095
      %v3097 = vrot.slane %v3083, %v3096
      %v3098 = vcombine.high %v3090, %v3090
      %v3099 = vcombine.high %v3097, %v3097
      %v3100 = vcombine.high %v2555, %v2555
      %v3102 = vunpack.c.l.s4 1983009808
      %v3103 = vunpack.c.0.s8 %v3102
      %v3104 = vlaneseq
      %v3105 = vshrl.u32 %v3104, 7
      %v3106 = vsub.s32 %v3103, %v3105
      %v3107 = vrot.slane %v2555, %v3106
      %v3109 = vunpack.c.l.s4 1983009808
      %v3110 = vunpack.c.0.s8 %v3109
      %v3111 = vlaneseq
      %v3112 = vshrl.u32 %v3111, 7
      %v3113 = vsub.s32 %v3110, %v3112
      %v3114 = vrot.slane %v3100, %v3113
      %v3115 = vcombine.high %v3107, %v3107
      %v3116 = vcombine.high %v3114, %v3114
      %v3117 = vcombine.high %v2556, %v2556
      %v3119 = vunpack.c.l.s4 1983009808
      %v3120 = vunpack.c.0.s8 %v3119
      %v3121 = vlaneseq
      %v3122 = vshrl.u32 %v3121, 7
      %v3123 = vsub.s32 %v3120, %v3122
      %v3124 = vrot.slane %v2556, %v3123
      %v3126 = vunpack.c.l.s4 1983009808
      %v3127 = vunpack.c.0.s8 %v3126
      %v3128 = vlaneseq
      %v3129 = vshrl.u32 %v3128, 7
      %v3130 = vsub.s32 %v3127, %v3129
      %v3131 = vrot.slane %v3117, %v3130
      %v3132 = vcombine.high %v3124, %v3124
      %v3133 = vcombine.high %v3131, %v3131
      %v3134 = vcombine.high %v2557, %v2557
      %v3136 = vunpack.c.l.s4 1983009808
      %v3137 = vunpack.c.0.s8 %v3136
      %v3138 = vlaneseq
      %v3139 = vshrl.u32 %v3138, 7
      %v3140 = vsub.s32 %v3137, %v3139
      %v3141 = vrot.slane %v2557, %v3140
      %v3143 = vunpack.c.l.s4 1983009808
      %v3144 = vunpack.c.0.s8 %v3143
      %v3145 = vlaneseq
      %v3146 = vshrl.u32 %v3145, 7
      %v3147 = vsub.s32 %v3144, %v3146
      %v3148 = vrot.slane %v3134, %v3147
      %v3149 = vcombine.high %v3141, %v3141
      %v3150 = vcombine.high %v3148, %v3148
      %v3151 = vcombine.high %v2558, %v2558
      %v3153 = vunpack.c.l.s4 1983009808
      %v3154 = vunpack.c.0.s8 %v3153
      %v3155 = vlaneseq
      %v3156 = vshrl.u32 %v3155, 7
      %v3157 = vsub.s32 %v3154, %v3156
      %v3158 = vrot.slane %v2558, %v3157
      %v3160 = vunpack.c.l.s4 1983009808
      %v3161 = vunpack.c.0.s8 %v3160
      %v3162 = vlaneseq
      %v3163 = vshrl.u32 %v3162, 7
      %v3164 = vsub.s32 %v3161, %v3163
      %v3165 = vrot.slane %v3151, %v3164
      %v3166 = vcombine.high %v3158, %v3158
      %v3167 = vcombine.high %v3165, %v3165
      %v3296 = vrot.slane %v2631, 7
      %v3297 = vrot.slane %v3296, 2
      %v3298 = vrot.slane %v2639, 7
      %v3299 = vrot.slane %v3298, 2
      %v3300 = vrot.slane %v2638, 7
      %v3301 = vrot.slane %v3300, 2
      %v3302 = vrot.slane %v2640, 7
      %v3303 = vrot.slane %v3302, 2
      %v3304 = vrot.slane %v2648, 7
      %v3305 = vrot.slane %v3304, 2
      %v3306 = vrot.slane %v2656, 7
      %v3307 = vrot.slane %v3306, 2
      %v3308 = vrot.slane %v2655, 7
      %v3309 = vrot.slane %v3308, 2
      %v3310 = vrot.slane %v2657, 7
      %v3311 = vrot.slane %v3310, 2
      %v3312 = vrot.slane %v2699, 7
      %v3313 = vrot.slane %v3312, 2
      %v3314 = vrot.slane %v2707, 7
      %v3315 = vrot.slane %v3314, 2
      %v3316 = vrot.slane %v2706, 7
      %v3317 = vrot.slane %v3316, 2
      %v3318 = vrot.slane %v2708, 7
      %v3319 = vrot.slane %v3318, 2
      %v3320 = vrot.slane %v2716, 7
      %v3321 = vrot.slane %v3320, 2
      %v3322 = vrot.slane %v2724, 7
      %v3323 = vrot.slane %v3322, 2
      %v3324 = vrot.slane %v2723, 7
      %v3325 = vrot.slane %v3324, 2
      %v3326 = vrot.slane %v2725, 7
      %v3327 = vrot.slane %v3326, 2
      %v3328 = vrot.slane %v2767, 7
      %v3329 = vrot.slane %v3328, 2
      %v3330 = vrot.slane %v2775, 7
      %v3331 = vrot.slane %v3330, 2
      %v3332 = vrot.slane %v2774, 7
      %v3333 = vrot.slane %v3332, 2
      %v3334 = vrot.slane %v2776, 7
      %v3335 = vrot.slane %v3334, 2
      %v3336 = vrot.slane %v2784, 7
      %v3337 = vrot.slane %v3336, 2
      %v3338 = vrot.slane %v2792, 7
      %v3339 = vrot.slane %v3338, 2
      %v3340 = vrot.slane %v2791, 7
      %v3341 = vrot.slane %v3340, 2
      %v3342 = vrot.slane %v2793, 7
      %v3343 = vrot.slane %v3342, 2
      %v3344 = vrot.slane %v2835, 7
      %v3345 = vrot.slane %v3344, 2
      %v3346 = vrot.slane %v2843, 7
      %v3347 = vrot.slane %v3346, 2
      %v3348 = vrot.slane %v2842, 7
      %v3349 = vrot.slane %v3348, 2
      %v3350 = vrot.slane %v2844, 7
      %v3351 = vrot.slane %v3350, 2
      %v3352 = vrot.slane %v2852, 7
      %v3353 = vrot.slane %v3352, 2
      %v3354 = vrot.slane %v2860, 7
      %v3355 = vrot.slane %v3354, 2
      %v3356 = vrot.slane %v2859, 7
      %v3357 = vrot.slane %v3356, 2
      %v3358 = vrot.slane %v2861, 7
      %v3359 = vrot.slane %v3358, 2
      %v3360 = vrot.slane %v2903, 7
      %v3361 = vrot.slane %v3360, 2
      %v3362 = vrot.slane %v2911, 7
      %v3363 = vrot.slane %v3362, 2
      %v3364 = vrot.slane %v2910, 7
      %v3365 = vrot.slane %v3364, 2
      %v3366 = vrot.slane %v2912, 7
      %v3367 = vrot.slane %v3366, 2
      %v3368 = vrot.slane %v2920, 7
      %v3369 = vrot.slane %v3368, 2
      %v3370 = vrot.slane %v2928, 7
      %v3371 = vrot.slane %v3370, 2
      %v3372 = vrot.slane %v2927, 7
      %v3373 = vrot.slane %v3372, 2
      %v3374 = vrot.slane %v2929, 7
      %v3375 = vrot.slane %v3374, 2
      %v3376 = vrot.slane %v2971, 7
      %v3377 = vrot.slane %v3376, 2
      %v3378 = vrot.slane %v2979, 7
      %v3379 = vrot.slane %v3378, 2
      %v3380 = vrot.slane %v2978, 7
      %v3381 = vrot.slane %v3380, 2
      %v3382 = vrot.slane %v2980, 7
      %v3383 = vrot.slane %v3382, 2
      %v3384 = vrot.slane %v2988, 7
      %v3385 = vrot.slane %v3384, 2
      %v3386 = vrot.slane %v2996, 7
      %v3387 = vrot.slane %v3386, 2
      %v3388 = vrot.slane %v2995, 7
      %v3389 = vrot.slane %v3388, 2
      %v3390 = vrot.slane %v2997, 7
      %v3391 = vrot.slane %v3390, 2
      %v3392 = vrot.slane %v3039, 7
      %v3393 = vrot.slane %v3392, 2
      %v3394 = vrot.slane %v3047, 7
      %v3395 = vrot.slane %v3394, 2
      %v3396 = vrot.slane %v3046, 7
      %v3397 = vrot.slane %v3396, 2
      %v3398 = vrot.slane %v3048, 7
      %v3399 = vrot.slane %v3398, 2
      %v3400 = vrot.slane %v3056, 7
      %v3401 = vrot.slane %v3400, 2
      %v3402 = vrot.slane %v3064, 7
      %v3403 = vrot.slane %v3402, 2
      %v3404 = vrot.slane %v3063, 7
      %v3405 = vrot.slane %v3404, 2
      %v3406 = vrot.slane %v3065, 7
      %v3407 = vrot.slane %v3406, 2
      %v3408 = vrot.slane %v3107, 7
      %v3409 = vrot.slane %v3408, 2
      %v3410 = vrot.slane %v3115, 7
      %v3411 = vrot.slane %v3410, 2
      %v3412 = vrot.slane %v3114, 7
      %v3413 = vrot.slane %v3412, 2
      %v3414 = vrot.slane %v3116, 7
      %v3415 = vrot.slane %v3414, 2
      %v3416 = vrot.slane %v3124, 7
      %v3417 = vrot.slane %v3416, 2
      %v3418 = vrot.slane %v3132, 7
      %v3419 = vrot.slane %v3418, 2
      %v3420 = vrot.slane %v3131, 7
      %v3421 = vrot.slane %v3420, 2
      %v3422 = vrot.slane %v3133, 7
      %v3423 = vrot.slane %v3422, 2
      %v3488 = vmax.f32 %v2631, %v3297
      %v3489 = vmax.f32 %v2639, %v3299
      %v3490 = vmax.f32 %v2638, %v3301
      %v3491 = vmax.f32 %v2640, %v3303
      %v3492 = vmax.f32 %v2648, %v3305
      %v3493 = vmax.f32 %v2656, %v3307
      %v3494 = vmax.f32 %v2655, %v3309
      %v3495 = vmax.f32 %v2657, %v3311
      %v3496 = vmax.f32 %v2699, %v3313
      %v3497 = vmax.f32 %v2707, %v3315
      %v3498 = vmax.f32 %v2706, %v3317
      %v3499 = vmax.f32 %v2708, %v3319
      %v3500 = vmax.f32 %v2716, %v3321
      %v3501 = vmax.f32 %v2724, %v3323
      %v3502 = vmax.f32 %v2723, %v3325
      %v3503 = vmax.f32 %v2725, %v3327
      %v3504 = vmax.f32 %v2767, %v3329
      %v3505 = vmax.f32 %v2775, %v3331
      %v3506 = vmax.f32 %v2774, %v3333
      %v3507 = vmax.f32 %v2776, %v3335
      %v3508 = vmax.f32 %v2784, %v3337
      %v3509 = vmax.f32 %v2792, %v3339
      %v3510 = vmax.f32 %v2791, %v3341
      %v3511 = vmax.f32 %v2793, %v3343
      %v3512 = vmax.f32 %v2835, %v3345
      %v3513 = vmax.f32 %v2843, %v3347
      %v3514 = vmax.f32 %v2842, %v3349
      %v3515 = vmax.f32 %v2844, %v3351
      %v3516 = vmax.f32 %v2852, %v3353
      %v3517 = vmax.f32 %v2860, %v3355
      %v3518 = vmax.f32 %v2859, %v3357
      %v3519 = vmax.f32 %v2861, %v3359
      %v3520 = vmax.f32 %v2903, %v3361
      %v3521 = vmax.f32 %v2911, %v3363
      %v3522 = vmax.f32 %v2910, %v3365
      %v3523 = vmax.f32 %v2912, %v3367
      %v3524 = vmax.f32 %v2920, %v3369
      %v3525 = vmax.f32 %v2928, %v3371
      %v3526 = vmax.f32 %v2927, %v3373
      %v3527 = vmax.f32 %v2929, %v3375
      %v3528 = vmax.f32 %v2971, %v3377
      %v3529 = vmax.f32 %v2979, %v3379
      %v3530 = vmax.f32 %v2978, %v3381
      %v3531 = vmax.f32 %v2980, %v3383
      %v3532 = vmax.f32 %v2988, %v3385
      %v3533 = vmax.f32 %v2996, %v3387
      %v3534 = vmax.f32 %v2995, %v3389
      %v3535 = vmax.f32 %v2997, %v3391
      %v3536 = vmax.f32 %v3039, %v3393
      %v3537 = vmax.f32 %v3047, %v3395
      %v3538 = vmax.f32 %v3046, %v3397
      %v3539 = vmax.f32 %v3048, %v3399
      %v3540 = vmax.f32 %v3056, %v3401
      %v3541 = vmax.f32 %v3064, %v3403
      %v3542 = vmax.f32 %v3063, %v3405
      %v3543 = vmax.f32 %v3065, %v3407
      %v3544 = vmax.f32 %v3107, %v3409
      %v3545 = vmax.f32 %v3115, %v3411
      %v3546 = vmax.f32 %v3114, %v3413
      %v3547 = vmax.f32 %v3116, %v3415
      %v3548 = vmax.f32 %v3124, %v3417
      %v3549 = vmax.f32 %v3132, %v3419
      %v3550 = vmax.f32 %v3131, %v3421
      %v3551 = vmax.f32 %v3133, %v3423
      %v3552 = vrot.slane %v2665, 7
      %v3553 = vrot.slane %v3552, 2
      %v3554 = vrot.slane %v2673, 7
      %v3555 = vrot.slane %v3554, 2
      %v3556 = vrot.slane %v2672, 7
      %v3557 = vrot.slane %v3556, 2
      %v3558 = vrot.slane %v2674, 7
      %v3559 = vrot.slane %v3558, 2
      %v3560 = vrot.slane %v2682, 7
      %v3561 = vrot.slane %v3560, 2
      %v3562 = vrot.slane %v2690, 7
      %v3563 = vrot.slane %v3562, 2
      %v3564 = vrot.slane %v2689, 7
      %v3565 = vrot.slane %v3564, 2
      %v3566 = vrot.slane %v2691, 7
      %v3567 = vrot.slane %v3566, 2
      %v3568 = vrot.slane %v2733, 7
      %v3569 = vrot.slane %v3568, 2
      %v3570 = vrot.slane %v2741, 7
      %v3571 = vrot.slane %v3570, 2
      %v3572 = vrot.slane %v2740, 7
      %v3573 = vrot.slane %v3572, 2
      %v3574 = vrot.slane %v2742, 7
      %v3575 = vrot.slane %v3574, 2
      %v3576 = vrot.slane %v2750, 7
      %v3577 = vrot.slane %v3576, 2
      %v3578 = vrot.slane %v2758, 7
      %v3579 = vrot.slane %v3578, 2
      %v3580 = vrot.slane %v2757, 7
      %v3581 = vrot.slane %v3580, 2
      %v3582 = vrot.slane %v2759, 7
      %v3583 = vrot.slane %v3582, 2
      %v3584 = vrot.slane %v2801, 7
      %v3585 = vrot.slane %v3584, 2
      %v3586 = vrot.slane %v2809, 7
      %v3587 = vrot.slane %v3586, 2
      %v3588 = vrot.slane %v2808, 7
      %v3589 = vrot.slane %v3588, 2
      %v3590 = vrot.slane %v2810, 7
      %v3591 = vrot.slane %v3590, 2
      %v3592 = vrot.slane %v2818, 7
      %v3593 = vrot.slane %v3592, 2
      %v3594 = vrot.slane %v2826, 7
      %v3595 = vrot.slane %v3594, 2
      %v3596 = vrot.slane %v2825, 7
      %v3597 = vrot.slane %v3596, 2
      %v3598 = vrot.slane %v2827, 7
      %v3599 = vrot.slane %v3598, 2
      %v3600 = vrot.slane %v2869, 7
      %v3601 = vrot.slane %v3600, 2
      %v3602 = vrot.slane %v2877, 7
      %v3603 = vrot.slane %v3602, 2
      %v3604 = vrot.slane %v2876, 7
      %v3605 = vrot.slane %v3604, 2
      %v3606 = vrot.slane %v2878, 7
      %v3607 = vrot.slane %v3606, 2
      %v3608 = vrot.slane %v2886, 7
      %v3609 = vrot.slane %v3608, 2
      %v3610 = vrot.slane %v2894, 7
      %v3611 = vrot.slane %v3610, 2
      %v3612 = vrot.slane %v2893, 7
      %v3613 = vrot.slane %v3612, 2
      %v3614 = vrot.slane %v2895, 7
      %v3615 = vrot.slane %v3614, 2
      %v3616 = vrot.slane %v2937, 7
      %v3617 = vrot.slane %v3616, 2
      %v3618 = vrot.slane %v2945, 7
      %v3619 = vrot.slane %v3618, 2
      %v3620 = vrot.slane %v2944, 7
      %v3621 = vrot.slane %v3620, 2
      %v3622 = vrot.slane %v2946, 7
      %v3623 = vrot.slane %v3622, 2
      %v3624 = vrot.slane %v2954, 7
      %v3625 = vrot.slane %v3624, 2
      %v3626 = vrot.slane %v2962, 7
      %v3627 = vrot.slane %v3626, 2
      %v3628 = vrot.slane %v2961, 7
      %v3629 = vrot.slane %v3628, 2
      %v3630 = vrot.slane %v2963, 7
      %v3631 = vrot.slane %v3630, 2
      %v3632 = vrot.slane %v3005, 7
      %v3633 = vrot.slane %v3632, 2
      %v3634 = vrot.slane %v3013, 7
      %v3635 = vrot.slane %v3634, 2
      %v3636 = vrot.slane %v3012, 7
      %v3637 = vrot.slane %v3636, 2
      %v3638 = vrot.slane %v3014, 7
      %v3639 = vrot.slane %v3638, 2
      %v3640 = vrot.slane %v3022, 7
      %v3641 = vrot.slane %v3640, 2
      %v3642 = vrot.slane %v3030, 7
      %v3643 = vrot.slane %v3642, 2
      %v3644 = vrot.slane %v3029, 7
      %v3645 = vrot.slane %v3644, 2
      %v3646 = vrot.slane %v3031, 7
      %v3647 = vrot.slane %v3646, 2
      %v3648 = vrot.slane %v3073, 7
      %v3649 = vrot.slane %v3648, 2
      %v3650 = vrot.slane %v3081, 7
      %v3651 = vrot.slane %v3650, 2
      %v3652 = vrot.slane %v3080, 7
      %v3653 = vrot.slane %v3652, 2
      %v3654 = vrot.slane %v3082, 7
      %v3655 = vrot.slane %v3654, 2
      %v3656 = vrot.slane %v3090, 7
      %v3657 = vrot.slane %v3656, 2
      %v3658 = vrot.slane %v3098, 7
      %v3659 = vrot.slane %v3658, 2
      %v3660 = vrot.slane %v3097, 7
      %v3661 = vrot.slane %v3660, 2
      %v3662 = vrot.slane %v3099, 7
      %v3663 = vrot.slane %v3662, 2
      %v3664 = vrot.slane %v3141, 7
      %v3665 = vrot.slane %v3664, 2
      %v3666 = vrot.slane %v3149, 7
      %v3667 = vrot.slane %v3666, 2
      %v3668 = vrot.slane %v3148, 7
      %v3669 = vrot.slane %v3668, 2
      %v3670 = vrot.slane %v3150, 7
      %v3671 = vrot.slane %v3670, 2
      %v3672 = vrot.slane %v3158, 7
      %v3673 = vrot.slane %v3672, 2
      %v3674 = vrot.slane %v3166, 7
      %v3675 = vrot.slane %v3674, 2
      %v3676 = vrot.slane %v3165, 7
      %v3677 = vrot.slane %v3676, 2
      %v3678 = vrot.slane %v3167, 7
      %v3679 = vrot.slane %v3678, 2
      %v3744 = vmax.f32 %v2665, %v3553
      %v3745 = vmax.f32 %v2673, %v3555
      %v3746 = vmax.f32 %v2672, %v3557
      %v3747 = vmax.f32 %v2674, %v3559
      %v3748 = vmax.f32 %v2682, %v3561
      %v3749 = vmax.f32 %v2690, %v3563
      %v3750 = vmax.f32 %v2689, %v3565
      %v3751 = vmax.f32 %v2691, %v3567
      %v3752 = vmax.f32 %v2733, %v3569
      %v3753 = vmax.f32 %v2741, %v3571
      %v3754 = vmax.f32 %v2740, %v3573
      %v3755 = vmax.f32 %v2742, %v3575
      %v3756 = vmax.f32 %v2750, %v3577
      %v3757 = vmax.f32 %v2758, %v3579
      %v3758 = vmax.f32 %v2757, %v3581
      %v3759 = vmax.f32 %v2759, %v3583
      %v3760 = vmax.f32 %v2801, %v3585
      %v3761 = vmax.f32 %v2809, %v3587
      %v3762 = vmax.f32 %v2808, %v3589
      %v3763 = vmax.f32 %v2810, %v3591
      %v3764 = vmax.f32 %v2818, %v3593
      %v3765 = vmax.f32 %v2826, %v3595
      %v3766 = vmax.f32 %v2825, %v3597
      %v3767 = vmax.f32 %v2827, %v3599
      %v3768 = vmax.f32 %v2869, %v3601
      %v3769 = vmax.f32 %v2877, %v3603
      %v3770 = vmax.f32 %v2876, %v3605
      %v3771 = vmax.f32 %v2878, %v3607
      %v3772 = vmax.f32 %v2886, %v3609
      %v3773 = vmax.f32 %v2894, %v3611
      %v3774 = vmax.f32 %v2893, %v3613
      %v3775 = vmax.f32 %v2895, %v3615
      %v3776 = vmax.f32 %v2937, %v3617
      %v3777 = vmax.f32 %v2945, %v3619
      %v3778 = vmax.f32 %v2944, %v3621
      %v3779 = vmax.f32 %v2946, %v3623
      %v3780 = vmax.f32 %v2954, %v3625
      %v3781 = vmax.f32 %v2962, %v3627
      %v3782 = vmax.f32 %v2961, %v3629
      %v3783 = vmax.f32 %v2963, %v3631
      %v3784 = vmax.f32 %v3005, %v3633
      %v3785 = vmax.f32 %v3013, %v3635
      %v3786 = vmax.f32 %v3012, %v3637
      %v3787 = vmax.f32 %v3014, %v3639
      %v3788 = vmax.f32 %v3022, %v3641
      %v3789 = vmax.f32 %v3030, %v3643
      %v3790 = vmax.f32 %v3029, %v3645
      %v3791 = vmax.f32 %v3031, %v3647
      %v3792 = vmax.f32 %v3073, %v3649
      %v3793 = vmax.f32 %v3081, %v3651
      %v3794 = vmax.f32 %v3080, %v3653
      %v3795 = vmax.f32 %v3082, %v3655
      %v3796 = vmax.f32 %v3090, %v3657
      %v3797 = vmax.f32 %v3098, %v3659
      %v3798 = vmax.f32 %v3097, %v3661
      %v3799 = vmax.f32 %v3099, %v3663
      %v3800 = vmax.f32 %v3141, %v3665
      %v3801 = vmax.f32 %v3149, %v3667
      %v3802 = vmax.f32 %v3148, %v3669
      %v3803 = vmax.f32 %v3150, %v3671
      %v3804 = vmax.f32 %v3158, %v3673
      %v3805 = vmax.f32 %v3166, %v3675
      %v3806 = vmax.f32 %v3165, %v3677
      %v3807 = vmax.f32 %v3167, %v3679
      %v3808 = vmax.f32 %v3488, %v3744
      %v3809 = vmax.f32 %v3489, %v3745
      %v3810 = vmax.f32 %v3490, %v3746
      %v3811 = vmax.f32 %v3491, %v3747
      %v3812 = vmax.f32 %v3492, %v3748
      %v3813 = vmax.f32 %v3493, %v3749
      %v3814 = vmax.f32 %v3494, %v3750
      %v3815 = vmax.f32 %v3495, %v3751
      %v3816 = vmax.f32 %v3496, %v3752
      %v3817 = vmax.f32 %v3497, %v3753
      %v3818 = vmax.f32 %v3498, %v3754
      %v3819 = vmax.f32 %v3499, %v3755
      %v3820 = vmax.f32 %v3500, %v3756
      %v3821 = vmax.f32 %v3501, %v3757
      %v3822 = vmax.f32 %v3502, %v3758
      %v3823 = vmax.f32 %v3503, %v3759
      %v3824 = vmax.f32 %v3504, %v3760
      %v3825 = vmax.f32 %v3505, %v3761
      %v3826 = vmax.f32 %v3506, %v3762
      %v3827 = vmax.f32 %v3507, %v3763
      %v3828 = vmax.f32 %v3508, %v3764
      %v3829 = vmax.f32 %v3509, %v3765
      %v3830 = vmax.f32 %v3510, %v3766
      %v3831 = vmax.f32 %v3511, %v3767
      %v3832 = vmax.f32 %v3512, %v3768
      %v3833 = vmax.f32 %v3513, %v3769
      %v3834 = vmax.f32 %v3514, %v3770
      %v3835 = vmax.f32 %v3515, %v3771
      %v3836 = vmax.f32 %v3516, %v3772
      %v3837 = vmax.f32 %v3517, %v3773
      %v3838 = vmax.f32 %v3518, %v3774
      %v3839 = vmax.f32 %v3519, %v3775
      %v3840 = vmax.f32 %v3520, %v3776
      %v3841 = vmax.f32 %v3521, %v3777
      %v3842 = vmax.f32 %v3522, %v3778
      %v3843 = vmax.f32 %v3523, %v3779
      %v3844 = vmax.f32 %v3524, %v3780
      %v3845 = vmax.f32 %v3525, %v3781
      %v3846 = vmax.f32 %v3526, %v3782
      %v3847 = vmax.f32 %v3527, %v3783
      %v3848 = vmax.f32 %v3528, %v3784
      %v3849 = vmax.f32 %v3529, %v3785
      %v3850 = vmax.f32 %v3530, %v3786
      %v3851 = vmax.f32 %v3531, %v3787
      %v3852 = vmax.f32 %v3532, %v3788
      %v3853 = vmax.f32 %v3533, %v3789
      %v3854 = vmax.f32 %v3534, %v3790
      %v3855 = vmax.f32 %v3535, %v3791
      %v3856 = vmax.f32 %v3536, %v3792
      %v3857 = vmax.f32 %v3537, %v3793
      %v3858 = vmax.f32 %v3538, %v3794
      %v3859 = vmax.f32 %v3539, %v3795
      %v3860 = vmax.f32 %v3540, %v3796
      %v3861 = vmax.f32 %v3541, %v3797
      %v3862 = vmax.f32 %v3542, %v3798
      %v3863 = vmax.f32 %v3543, %v3799
      %v3864 = vmax.f32 %v3544, %v3800
      %v3865 = vmax.f32 %v3545, %v3801
      %v3866 = vmax.f32 %v3546, %v3802
      %v3867 = vmax.f32 %v3547, %v3803
      %v3868 = vmax.f32 %v3548, %v3804
      %v3869 = vmax.f32 %v3549, %v3805
      %v3870 = vmax.f32 %v3550, %v3806
      %v3871 = vmax.f32 %v3551, %v3807
      %v3936 = vlaneseq
      %v3937 = vshrl.u32 %v3936, 7
      %v3938 = vsub.s32 0, %v3937
      %v3939 = vrot.slane %v3808, %v3938
      %v3940 = vlaneseq
      %v3941 = vshrl.u32 %v3940, 7
      %v3942 = vsub.s32 0, %v3941
      %v3943 = vrot.slane %v3809, %v3942
      %v3944 = vlaneseq
      %v3945 = vshrl.u32 %v3944, 7
      %v3946 = vsub.s32 0, %v3945
      %v3947 = vrot.slane %v3810, %v3946
      %v3948 = vlaneseq
      %v3949 = vshrl.u32 %v3948, 7
      %v3950 = vsub.s32 0, %v3949
      %v3951 = vrot.slane %v3811, %v3950
      %v3952 = vlaneseq
      %v3953 = vshrl.u32 %v3952, 7
      %v3954 = vsub.s32 0, %v3953
      %v3955 = vrot.slane %v3812, %v3954
      %v3956 = vlaneseq
      %v3957 = vshrl.u32 %v3956, 7
      %v3958 = vsub.s32 0, %v3957
      %v3959 = vrot.slane %v3813, %v3958
      %v3960 = vlaneseq
      %v3961 = vshrl.u32 %v3960, 7
      %v3962 = vsub.s32 0, %v3961
      %v3963 = vrot.slane %v3814, %v3962
      %v3964 = vlaneseq
      %v3965 = vshrl.u32 %v3964, 7
      %v3966 = vsub.s32 0, %v3965
      %v3967 = vrot.slane %v3815, %v3966
      %v3968 = vlaneseq
      %v3969 = vshrl.u32 %v3968, 7
      %v3970 = vsub.s32 0, %v3969
      %v3971 = vrot.slane %v3816, %v3970
      %v3972 = vlaneseq
      %v3973 = vshrl.u32 %v3972, 7
      %v3974 = vsub.s32 0, %v3973
      %v3975 = vrot.slane %v3817, %v3974
      %v3976 = vlaneseq
      %v3977 = vshrl.u32 %v3976, 7
      %v3978 = vsub.s32 0, %v3977
      %v3979 = vrot.slane %v3818, %v3978
      %v3980 = vlaneseq
      %v3981 = vshrl.u32 %v3980, 7
      %v3982 = vsub.s32 0, %v3981
      %v3983 = vrot.slane %v3819, %v3982
      %v3984 = vlaneseq
      %v3985 = vshrl.u32 %v3984, 7
      %v3986 = vsub.s32 0, %v3985
      %v3987 = vrot.slane %v3820, %v3986
      %v3988 = vlaneseq
      %v3989 = vshrl.u32 %v3988, 7
      %v3990 = vsub.s32 0, %v3989
      %v3991 = vrot.slane %v3821, %v3990
      %v3992 = vlaneseq
      %v3993 = vshrl.u32 %v3992, 7
      %v3994 = vsub.s32 0, %v3993
      %v3995 = vrot.slane %v3822, %v3994
      %v3996 = vlaneseq
      %v3997 = vshrl.u32 %v3996, 7
      %v3998 = vsub.s32 0, %v3997
      %v3999 = vrot.slane %v3823, %v3998
      %v4000 = vlaneseq
      %v4001 = vshrl.u32 %v4000, 7
      %v4002 = vsub.s32 0, %v4001
      %v4003 = vrot.slane %v3824, %v4002
      %v4004 = vlaneseq
      %v4005 = vshrl.u32 %v4004, 7
      %v4006 = vsub.s32 0, %v4005
      %v4007 = vrot.slane %v3825, %v4006
      %v4008 = vlaneseq
      %v4009 = vshrl.u32 %v4008, 7
      %v4010 = vsub.s32 0, %v4009
      %v4011 = vrot.slane %v3826, %v4010
      %v4012 = vlaneseq
      %v4013 = vshrl.u32 %v4012, 7
      %v4014 = vsub.s32 0, %v4013
      %v4015 = vrot.slane %v3827, %v4014
      %v4016 = vlaneseq
      %v4017 = vshrl.u32 %v4016, 7
      %v4018 = vsub.s32 0, %v4017
      %v4019 = vrot.slane %v3828, %v4018
      %v4020 = vlaneseq
      %v4021 = vshrl.u32 %v4020, 7
      %v4022 = vsub.s32 0, %v4021
      %v4023 = vrot.slane %v3829, %v4022
      %v4024 = vlaneseq
      %v4025 = vshrl.u32 %v4024, 7
      %v4026 = vsub.s32 0, %v4025
      %v4027 = vrot.slane %v3830, %v4026
      %v4028 = vlaneseq
      %v4029 = vshrl.u32 %v4028, 7
      %v4030 = vsub.s32 0, %v4029
      %v4031 = vrot.slane %v3831, %v4030
      %v4032 = vlaneseq
      %v4033 = vshrl.u32 %v4032, 7
      %v4034 = vsub.s32 0, %v4033
      %v4035 = vrot.slane %v3832, %v4034
      %v4036 = vlaneseq
      %v4037 = vshrl.u32 %v4036, 7
      %v4038 = vsub.s32 0, %v4037
      %v4039 = vrot.slane %v3833, %v4038
      %v4040 = vlaneseq
      %v4041 = vshrl.u32 %v4040, 7
      %v4042 = vsub.s32 0, %v4041
      %v4043 = vrot.slane %v3834, %v4042
      %v4044 = vlaneseq
      %v4045 = vshrl.u32 %v4044, 7
      %v4046 = vsub.s32 0, %v4045
      %v4047 = vrot.slane %v3835, %v4046
      %v4048 = vlaneseq
      %v4049 = vshrl.u32 %v4048, 7
      %v4050 = vsub.s32 0, %v4049
      %v4051 = vrot.slane %v3836, %v4050
      %v4052 = vlaneseq
      %v4053 = vshrl.u32 %v4052, 7
      %v4054 = vsub.s32 0, %v4053
      %v4055 = vrot.slane %v3837, %v4054
      %v4056 = vlaneseq
      %v4057 = vshrl.u32 %v4056, 7
      %v4058 = vsub.s32 0, %v4057
      %v4059 = vrot.slane %v3838, %v4058
      %v4060 = vlaneseq
      %v4061 = vshrl.u32 %v4060, 7
      %v4062 = vsub.s32 0, %v4061
      %v4063 = vrot.slane %v3839, %v4062
      %v4064 = vlaneseq
      %v4065 = vshrl.u32 %v4064, 7
      %v4066 = vsub.s32 0, %v4065
      %v4067 = vrot.slane %v3840, %v4066
      %v4068 = vlaneseq
      %v4069 = vshrl.u32 %v4068, 7
      %v4070 = vsub.s32 0, %v4069
      %v4071 = vrot.slane %v3841, %v4070
      %v4072 = vlaneseq
      %v4073 = vshrl.u32 %v4072, 7
      %v4074 = vsub.s32 0, %v4073
      %v4075 = vrot.slane %v3842, %v4074
      %v4076 = vlaneseq
      %v4077 = vshrl.u32 %v4076, 7
      %v4078 = vsub.s32 0, %v4077
      %v4079 = vrot.slane %v3843, %v4078
      %v4080 = vlaneseq
      %v4081 = vshrl.u32 %v4080, 7
      %v4082 = vsub.s32 0, %v4081
      %v4083 = vrot.slane %v3844, %v4082
      %v4084 = vlaneseq
      %v4085 = vshrl.u32 %v4084, 7
      %v4086 = vsub.s32 0, %v4085
      %v4087 = vrot.slane %v3845, %v4086
      %v4088 = vlaneseq
      %v4089 = vshrl.u32 %v4088, 7
      %v4090 = vsub.s32 0, %v4089
      %v4091 = vrot.slane %v3846, %v4090
      %v4092 = vlaneseq
      %v4093 = vshrl.u32 %v4092, 7
      %v4094 = vsub.s32 0, %v4093
      %v4095 = vrot.slane %v3847, %v4094
      %v4096 = vlaneseq
      %v4097 = vshrl.u32 %v4096, 7
      %v4098 = vsub.s32 0, %v4097
      %v4099 = vrot.slane %v3848, %v4098
      %v4100 = vlaneseq
      %v4101 = vshrl.u32 %v4100, 7
      %v4102 = vsub.s32 0, %v4101
      %v4103 = vrot.slane %v3849, %v4102
      %v4104 = vlaneseq
      %v4105 = vshrl.u32 %v4104, 7
      %v4106 = vsub.s32 0, %v4105
      %v4107 = vrot.slane %v3850, %v4106
      %v4108 = vlaneseq
      %v4109 = vshrl.u32 %v4108, 7
      %v4110 = vsub.s32 0, %v4109
      %v4111 = vrot.slane %v3851, %v4110
      %v4112 = vlaneseq
      %v4113 = vshrl.u32 %v4112, 7
      %v4114 = vsub.s32 0, %v4113
      %v4115 = vrot.slane %v3852, %v4114
      %v4116 = vlaneseq
      %v4117 = vshrl.u32 %v4116, 7
      %v4118 = vsub.s32 0, %v4117
      %v4119 = vrot.slane %v3853, %v4118
      %v4120 = vlaneseq
      %v4121 = vshrl.u32 %v4120, 7
      %v4122 = vsub.s32 0, %v4121
      %v4123 = vrot.slane %v3854, %v4122
      %v4124 = vlaneseq
      %v4125 = vshrl.u32 %v4124, 7
      %v4126 = vsub.s32 0, %v4125
      %v4127 = vrot.slane %v3855, %v4126
      %v4128 = vlaneseq
      %v4129 = vshrl.u32 %v4128, 7
      %v4130 = vsub.s32 0, %v4129
      %v4131 = vrot.slane %v3856, %v4130
      %v4132 = vlaneseq
      %v4133 = vshrl.u32 %v4132, 7
      %v4134 = vsub.s32 0, %v4133
      %v4135 = vrot.slane %v3857, %v4134
      %v4136 = vlaneseq
      %v4137 = vshrl.u32 %v4136, 7
      %v4138 = vsub.s32 0, %v4137
      %v4139 = vrot.slane %v3858, %v4138
      %v4140 = vlaneseq
      %v4141 = vshrl.u32 %v4140, 7
      %v4142 = vsub.s32 0, %v4141
      %v4143 = vrot.slane %v3859, %v4142
      %v4144 = vlaneseq
      %v4145 = vshrl.u32 %v4144, 7
      %v4146 = vsub.s32 0, %v4145
      %v4147 = vrot.slane %v3860, %v4146
      %v4148 = vlaneseq
      %v4149 = vshrl.u32 %v4148, 7
      %v4150 = vsub.s32 0, %v4149
      %v4151 = vrot.slane %v3861, %v4150
      %v4152 = vlaneseq
      %v4153 = vshrl.u32 %v4152, 7
      %v4154 = vsub.s32 0, %v4153
      %v4155 = vrot.slane %v3862, %v4154
      %v4156 = vlaneseq
      %v4157 = vshrl.u32 %v4156, 7
      %v4158 = vsub.s32 0, %v4157
      %v4159 = vrot.slane %v3863, %v4158
      %v4160 = vlaneseq
      %v4161 = vshrl.u32 %v4160, 7
      %v4162 = vsub.s32 0, %v4161
      %v4163 = vrot.slane %v3864, %v4162
      %v4164 = vlaneseq
      %v4165 = vshrl.u32 %v4164, 7
      %v4166 = vsub.s32 0, %v4165
      %v4167 = vrot.slane %v3865, %v4166
      %v4168 = vlaneseq
      %v4169 = vshrl.u32 %v4168, 7
      %v4170 = vsub.s32 0, %v4169
      %v4171 = vrot.slane %v3866, %v4170
      %v4172 = vlaneseq
      %v4173 = vshrl.u32 %v4172, 7
      %v4174 = vsub.s32 0, %v4173
      %v4175 = vrot.slane %v3867, %v4174
      %v4176 = vlaneseq
      %v4177 = vshrl.u32 %v4176, 7
      %v4178 = vsub.s32 0, %v4177
      %v4179 = vrot.slane %v3868, %v4178
      %v4180 = vlaneseq
      %v4181 = vshrl.u32 %v4180, 7
      %v4182 = vsub.s32 0, %v4181
      %v4183 = vrot.slane %v3869, %v4182
      %v4184 = vlaneseq
      %v4185 = vshrl.u32 %v4184, 7
      %v4186 = vsub.s32 0, %v4185
      %v4187 = vrot.slane %v3870, %v4186
      %v4188 = vlaneseq
      %v4189 = vshrl.u32 %v4188, 7
      %v4190 = vsub.s32 0, %v4189
      %v4191 = vrot.slane %v3871, %v4190
      %vm4192 = vcmask 1041409
      %v4193 = vsel %vm4192, %v3943, %v3939
      %vm4194 = vcmask 1042434
      %v4195 = vsel %vm4194, %v3947, %v4193
      %vm4196 = vcmask 1043459
      %v4197 = vsel %vm4196, %v3951, %v4195
      %vm4198 = vcmask 1044484
      %v4199 = vsel %vm4198, %v3955, %v4197
      %vm4200 = vcmask 1045509
      %v4201 = vsel %vm4200, %v3959, %v4199
      %vm4202 = vcmask 1046534
      %v4203 = vsel %vm4202, %v3963, %v4201
      %vm4204 = vcmask 1047559
      %v4205 = vsel %vm4204, %v3967, %v4203
      %v4206 = vsel %vm4192, %v3975, %v3971
      %v4207 = vsel %vm4194, %v3979, %v4206
      %v4208 = vsel %vm4196, %v3983, %v4207
      %v4209 = vsel %vm4198, %v3987, %v4208
      %v4210 = vsel %vm4200, %v3991, %v4209
      %v4211 = vsel %vm4202, %v3995, %v4210
      %v4212 = vsel %vm4204, %v3999, %v4211
      %v4213 = vsel %vm4192, %v4007, %v4003
      %v4214 = vsel %vm4194, %v4011, %v4213
      %v4215 = vsel %vm4196, %v4015, %v4214
      %v4216 = vsel %vm4198, %v4019, %v4215
      %v4217 = vsel %vm4200, %v4023, %v4216
      %v4218 = vsel %vm4202, %v4027, %v4217
      %v4219 = vsel %vm4204, %v4031, %v4218
      %v4220 = vsel %vm4192, %v4039, %v4035
      %v4221 = vsel %vm4194, %v4043, %v4220
      %v4222 = vsel %vm4196, %v4047, %v4221
      %v4223 = vsel %vm4198, %v4051, %v4222
      %v4224 = vsel %vm4200, %v4055, %v4223
      %v4225 = vsel %vm4202, %v4059, %v4224
      %v4226 = vsel %vm4204, %v4063, %v4225
      %v4227 = vsel %vm4192, %v4071, %v4067
      %v4228 = vsel %vm4194, %v4075, %v4227
      %v4229 = vsel %vm4196, %v4079, %v4228
      %v4230 = vsel %vm4198, %v4083, %v4229
      %v4231 = vsel %vm4200, %v4087, %v4230
      %v4232 = vsel %vm4202, %v4091, %v4231
      %v4233 = vsel %vm4204, %v4095, %v4232
      %v4234 = vsel %vm4192, %v4103, %v4099
      %v4235 = vsel %vm4194, %v4107, %v4234
      %v4236 = vsel %vm4196, %v4111, %v4235
      %v4237 = vsel %vm4198, %v4115, %v4236
      %v4238 = vsel %vm4200, %v4119, %v4237
      %v4239 = vsel %vm4202, %v4123, %v4238
      %v4240 = vsel %vm4204, %v4127, %v4239
      %v4241 = vsel %vm4192, %v4135, %v4131
      %v4242 = vsel %vm4194, %v4139, %v4241
      %v4243 = vsel %vm4196, %v4143, %v4242
      %v4244 = vsel %vm4198, %v4147, %v4243
      %v4245 = vsel %vm4200, %v4151, %v4244
      %v4246 = vsel %vm4202, %v4155, %v4245
      %v4247 = vsel %vm4204, %v4159, %v4246
      %v4248 = vsel %vm4192, %v4167, %v4163
      %v4249 = vsel %vm4194, %v4171, %v4248
      %v4250 = vsel %vm4196, %v4175, %v4249
      %v4251 = vsel %vm4198, %v4179, %v4250
      %v4252 = vsel %vm4200, %v4183, %v4251
      %v4253 = vsel %vm4202, %v4187, %v4252
      %v4254 = vsel %vm4204, %v4191, %v4253
      %s4263 = scalar_lea.vmem [#allocation4], 16
      %4264 = vst.msk [vmem:[%s4263 + $0x1] sm:$0xff] %vm716, %v4205
      %4265 = vst.msk [vmem:[%s4263 + $0x11] sm:$0xff] %vm716, %v4212
      %4266 = vst.msk [vmem:[%s4263 + $0x21] sm:$0xff] %vm716, %v4219
      %4267 = vst.msk [vmem:[%s4263 + $0x31] sm:$0xff] %vm716, %v4226
      %4268 = vst.msk [vmem:[%s4263 + $0x41] sm:$0xff] %vm716, %v4233
      %4269 = vst.msk [vmem:[%s4263 + $0x51] sm:$0xff] %vm716, %v4240
      %4270 = vst.msk [vmem:[%s4263 + $0x61] sm:$0xff] %vm716, %v4247
      %4271 = vst.msk [vmem:[%s4263 + $0x71] sm:$0xff] %vm716, %v4254
      %v4272 = vld [vmem:[#allocation4] sm:$0xff]
      %v4273 = vld [vmem:[#allocation4 + $0x8] sm:$0x3]
      %v4274 = vld [vmem:[#allocation4 + $0x10] sm:$0xff]
      %v4275 = vld [vmem:[#allocation4 + $0x18] sm:$0x3]
      %v4276 = vld [vmem:[#allocation4 + $0x20] sm:$0xff]
      %v4277 = vld [vmem:[#allocation4 + $0x28] sm:$0x3]
      %v4278 = vld [vmem:[#allocation4 + $0x30] sm:$0xff]
      %v4279 = vld [vmem:[#allocation4 + $0x38] sm:$0x3]
      %v4280 = vld [vmem:[#allocation4 + $0x40] sm:$0xff]
      %v4281 = vld [vmem:[#allocation4 + $0x48] sm:$0x3]
      %v4282 = vld [vmem:[#allocation4 + $0x50] sm:$0xff]
      %v4283 = vld [vmem:[#allocation4 + $0x58] sm:$0x3]
      %v4284 = vld [vmem:[#allocation4 + $0x60] sm:$0xff]
      %v4285 = vld [vmem:[#allocation4 + $0x68] sm:$0x3]
      %v4286 = vld [vmem:[#allocation4 + $0x70] sm:$0xff]
      %v4287 = vld [vmem:[#allocation4 + $0x78] sm:$0x3]
      %v4288 = vld [vmem:[#allocation4 + $0x80] sm:$0xff]
      %v4289 = vld [vmem:[#allocation4 + $0x88] sm:$0x3]
      %v4290 = vld [vmem:[#allocation4 + $0x90] sm:$0xff]
      %v4291 = vld [vmem:[#allocation4 + $0x98] sm:$0x3]
      %v4308 = vrot.slane %v4272, 1
      %v4309 = vrot.slane %v4273, 1
      %v4310 = vsel %vm1062, %v4308, %v4309
      %v4311 = vrot.slane %v4274, 1
      %v4312 = vrot.slane %v4275, 1
      %v4313 = vsel %vm1062, %v4311, %v4312
      %v4314 = vrot.slane %v4276, 1
      %v4315 = vrot.slane %v4277, 1
      %v4316 = vsel %vm1062, %v4314, %v4315
      %v4317 = vrot.slane %v4278, 1
      %v4318 = vrot.slane %v4279, 1
      %v4319 = vsel %vm1062, %v4317, %v4318
      %v4320 = vrot.slane %v4280, 1
      %v4321 = vrot.slane %v4281, 1
      %v4322 = vsel %vm1062, %v4320, %v4321
      %v4323 = vrot.slane %v4282, 1
      %v4324 = vrot.slane %v4283, 1
      %v4325 = vsel %vm1062, %v4323, %v4324
      %v4326 = vrot.slane %v4284, 1
      %v4327 = vrot.slane %v4285, 1
      %v4328 = vsel %vm1062, %v4326, %v4327
      %v4329 = vrot.slane %v4286, 1
      %v4330 = vrot.slane %v4287, 1
      %v4331 = vsel %vm1062, %v4329, %v4330
      %v4332 = vrot.slane %v4272, 2
      %v4333 = vrot.slane %v4273, 2
      %v4334 = vsel %vm1143, %v4332, %v4333
      %v4335 = vrot.slane %v4274, 2
      %v4336 = vrot.slane %v4275, 2
      %v4337 = vsel %vm1143, %v4335, %v4336
      %v4338 = vrot.slane %v4276, 2
      %v4339 = vrot.slane %v4277, 2
      %v4340 = vsel %vm1143, %v4338, %v4339
      %v4341 = vrot.slane %v4278, 2
      %v4342 = vrot.slane %v4279, 2
      %v4343 = vsel %vm1143, %v4341, %v4342
      %v4344 = vrot.slane %v4280, 2
      %v4345 = vrot.slane %v4281, 2
      %v4346 = vsel %vm1143, %v4344, %v4345
      %v4347 = vrot.slane %v4282, 2
      %v4348 = vrot.slane %v4283, 2
      %v4349 = vsel %vm1143, %v4347, %v4348
      %v4350 = vrot.slane %v4284, 2
      %v4351 = vrot.slane %v4285, 2
      %v4352 = vsel %vm1143, %v4350, %v4351
      %v4353 = vrot.slane %v4286, 2
      %v4354 = vrot.slane %v4287, 2
      %v4355 = vsel %vm1143, %v4353, %v4354
      %v4358 = vrot.slane %v4288, 1
      %v4359 = vrot.slane %v4289, 1
      %v4360 = vsel %vm1062, %v4358, %v4359
      %v4361 = vrot.slane %v4288, 2
      %v4362 = vrot.slane %v4289, 2
      %v4363 = vsel %vm1143, %v4361, %v4362
      %v4366 = vrot.slane %v4290, 1
      %v4367 = vrot.slane %v4291, 1
      %v4368 = vsel %vm1062, %v4366, %v4367
      %v4369 = vrot.slane %v4290, 2
      %v4370 = vrot.slane %v4291, 2
      %v4371 = vsel %vm1143, %v4369, %v4370
      %4372 = vrot.lane.b32.xlu0 %v4310, 8
      %v4373 = vpop.permute.xlu0 %4372
      %4374 = vrot.lane.b32.xlu0 %v4313, 8
      %v4375 = vpop.permute.xlu0 %4374
      %4376 = vrot.lane.b32.xlu0 %v4316, 8
      %v4377 = vpop.permute.xlu0 %4376
      %4378 = vrot.lane.b32.xlu0 %v4319, 8
      %v4379 = vpop.permute.xlu0 %4378
      %4380 = vrot.lane.b32.xlu0 %v4322, 8
      %v4381 = vpop.permute.xlu0 %4380
      %4382 = vrot.lane.b32.xlu0 %v4325, 8
      %v4383 = vpop.permute.xlu0 %4382
      %4384 = vrot.lane.b32.xlu0 %v4328, 8
      %v4385 = vpop.permute.xlu0 %4384
      %4386 = vrot.lane.b32.xlu0 %v4331, 8
      %v4387 = vpop.permute.xlu0 %4386
      %4396 = vrot.lane.b32.xlu0 %v4334, 16
      %v4397 = vpop.permute.xlu0 %4396
      %4398 = vrot.lane.b32.xlu0 %v4337, 16
      %v4399 = vpop.permute.xlu0 %4398
      %4400 = vrot.lane.b32.xlu0 %v4340, 16
      %v4401 = vpop.permute.xlu0 %4400
      %4402 = vrot.lane.b32.xlu0 %v4343, 16
      %v4403 = vpop.permute.xlu0 %4402
      %4404 = vrot.lane.b32.xlu0 %v4346, 16
      %v4405 = vpop.permute.xlu0 %4404
      %4406 = vrot.lane.b32.xlu0 %v4349, 16
      %v4407 = vpop.permute.xlu0 %4406
      %4408 = vrot.lane.b32.xlu0 %v4352, 16
      %v4409 = vpop.permute.xlu0 %4408
      %4410 = vrot.lane.b32.xlu0 %v4355, 16
      %v4411 = vpop.permute.xlu0 %4410
      %4420 = vrot.lane.b32.xlu0 %v4274, 24
      %v4421 = vpop.permute.xlu0 %4420
      %4422 = vrot.lane.b32.xlu0 %v4276, 24
      %v4423 = vpop.permute.xlu0 %4422
      %4424 = vrot.lane.b32.xlu0 %v4278, 24
      %v4425 = vpop.permute.xlu0 %4424
      %4426 = vrot.lane.b32.xlu0 %v4280, 24
      %v4427 = vpop.permute.xlu0 %4426
      %4428 = vrot.lane.b32.xlu0 %v4282, 24
      %v4429 = vpop.permute.xlu0 %4428
      %4430 = vrot.lane.b32.xlu0 %v4284, 24
      %v4431 = vpop.permute.xlu0 %4430
      %4432 = vrot.lane.b32.xlu0 %v4286, 24
      %v4433 = vpop.permute.xlu0 %4432
      %4434 = vrot.lane.b32.xlu0 %v4288, 24
      %v4435 = vpop.permute.xlu0 %4434
      %4444 = vrot.lane.b32.xlu0 %v4313, 32
      %v4445 = vpop.permute.xlu0 %4444
      %4446 = vrot.lane.b32.xlu0 %v4316, 32
      %v4447 = vpop.permute.xlu0 %4446
      %4448 = vrot.lane.b32.xlu0 %v4319, 32
      %v4449 = vpop.permute.xlu0 %4448
      %4450 = vrot.lane.b32.xlu0 %v4322, 32
      %v4451 = vpop.permute.xlu0 %4450
      %4452 = vrot.lane.b32.xlu0 %v4325, 32
      %v4453 = vpop.permute.xlu0 %4452
      %4454 = vrot.lane.b32.xlu0 %v4328, 32
      %v4455 = vpop.permute.xlu0 %4454
      %4456 = vrot.lane.b32.xlu0 %v4331, 32
      %v4457 = vpop.permute.xlu0 %4456
      %4458 = vrot.lane.b32.xlu0 %v4360, 32
      %v4459 = vpop.permute.xlu0 %4458
      %4468 = vrot.lane.b32.xlu0 %v4337, 40
      %v4469 = vpop.permute.xlu0 %4468
      %4470 = vrot.lane.b32.xlu0 %v4340, 40
      %v4471 = vpop.permute.xlu0 %4470
      %4472 = vrot.lane.b32.xlu0 %v4343, 40
      %v4473 = vpop.permute.xlu0 %4472
      %4474 = vrot.lane.b32.xlu0 %v4346, 40
      %v4475 = vpop.permute.xlu0 %4474
      %4476 = vrot.lane.b32.xlu0 %v4349, 40
      %v4477 = vpop.permute.xlu0 %4476
      %4478 = vrot.lane.b32.xlu0 %v4352, 40
      %v4479 = vpop.permute.xlu0 %4478
      %4480 = vrot.lane.b32.xlu0 %v4355, 40
      %v4481 = vpop.permute.xlu0 %4480
      %4482 = vrot.lane.b32.xlu0 %v4363, 40
      %v4483 = vpop.permute.xlu0 %4482
      %4492 = vrot.lane.b32.xlu0 %v4276, 48
      %v4493 = vpop.permute.xlu0 %4492
      %4494 = vrot.lane.b32.xlu0 %v4278, 48
      %v4495 = vpop.permute.xlu0 %4494
      %4496 = vrot.lane.b32.xlu0 %v4280, 48
      %v4497 = vpop.permute.xlu0 %4496
      %4498 = vrot.lane.b32.xlu0 %v4282, 48
      %v4499 = vpop.permute.xlu0 %4498
      %4500 = vrot.lane.b32.xlu0 %v4284, 48
      %v4501 = vpop.permute.xlu0 %4500
      %4502 = vrot.lane.b32.xlu0 %v4286, 48
      %v4503 = vpop.permute.xlu0 %4502
      %4504 = vrot.lane.b32.xlu0 %v4288, 48
      %v4505 = vpop.permute.xlu0 %4504
      %4506 = vrot.lane.b32.xlu0 %v4290, 48
      %v4507 = vpop.permute.xlu0 %4506
      %4516 = vrot.lane.b32.xlu0 %v4316, 56
      %v4517 = vpop.permute.xlu0 %4516
      %4518 = vrot.lane.b32.xlu0 %v4319, 56
      %v4519 = vpop.permute.xlu0 %4518
      %4520 = vrot.lane.b32.xlu0 %v4322, 56
      %v4521 = vpop.permute.xlu0 %4520
      %4522 = vrot.lane.b32.xlu0 %v4325, 56
      %v4523 = vpop.permute.xlu0 %4522
      %4524 = vrot.lane.b32.xlu0 %v4328, 56
      %v4525 = vpop.permute.xlu0 %4524
      %4526 = vrot.lane.b32.xlu0 %v4331, 56
      %v4527 = vpop.permute.xlu0 %4526
      %4528 = vrot.lane.b32.xlu0 %v4360, 56
      %v4529 = vpop.permute.xlu0 %4528
      %4530 = vrot.lane.b32.xlu0 %v4368, 56
      %v4531 = vpop.permute.xlu0 %4530
      %4540 = vrot.lane.b32.xlu0 %v4340, 64
      %v4541 = vpop.permute.xlu0 %4540
      %4542 = vrot.lane.b32.xlu0 %v4343, 64
      %v4543 = vpop.permute.xlu0 %4542
      %4544 = vrot.lane.b32.xlu0 %v4346, 64
      %v4545 = vpop.permute.xlu0 %4544
      %4546 = vrot.lane.b32.xlu0 %v4349, 64
      %v4547 = vpop.permute.xlu0 %4546
      %4548 = vrot.lane.b32.xlu0 %v4352, 64
      %v4549 = vpop.permute.xlu0 %4548
      %4550 = vrot.lane.b32.xlu0 %v4355, 64
      %v4551 = vpop.permute.xlu0 %4550
      %4552 = vrot.lane.b32.xlu0 %v4363, 64
      %v4553 = vpop.permute.xlu0 %4552
      %4554 = vrot.lane.b32.xlu0 %v4371, 64
      %v4555 = vpop.permute.xlu0 %4554
      %v4564 = vsel %vm716, %v4272, %v4373
      %v4565 = vsel %vm716, %v4274, %v4375
      %v4566 = vsel %vm716, %v4276, %v4377
      %v4567 = vsel %vm716, %v4278, %v4379
      %v4568 = vsel %vm716, %v4280, %v4381
      %v4569 = vsel %vm716, %v4282, %v4383
      %v4570 = vsel %vm716, %v4284, %v4385
      %v4571 = vsel %vm716, %v4286, %v4387
      %v4572 = vsel %vm772, %v4564, %v4397
      %v4573 = vsel %vm772, %v4565, %v4399
      %v4574 = vsel %vm772, %v4566, %v4401
      %v4575 = vsel %vm772, %v4567, %v4403
      %v4576 = vsel %vm772, %v4568, %v4405
      %v4577 = vsel %vm772, %v4569, %v4407
      %v4578 = vsel %vm772, %v4570, %v4409
      %v4579 = vsel %vm772, %v4571, %v4411
      %vm4580 = vcmask 195584
      %v4581 = vsel %vm4580, %v4572, %v4421
      %v4582 = vsel %vm4580, %v4573, %v4423
      %v4583 = vsel %vm4580, %v4574, %v4425
      %v4584 = vsel %vm4580, %v4575, %v4427
      %v4585 = vsel %vm4580, %v4576, %v4429
      %v4586 = vsel %vm4580, %v4577, %v4431
      %v4587 = vsel %vm4580, %v4578, %v4433
      %v4588 = vsel %vm4580, %v4579, %v4435
      %vm4589 = vcmask 261120
      %v4590 = vsel %vm4589, %v4581, %v4445
      %v4591 = vsel %vm4589, %v4582, %v4447
      %v4592 = vsel %vm4589, %v4583, %v4449
      %v4593 = vsel %vm4589, %v4584, %v4451
      %v4594 = vsel %vm4589, %v4585, %v4453
      %v4595 = vsel %vm4589, %v4586, %v4455
      %v4596 = vsel %vm4589, %v4587, %v4457
      %v4597 = vsel %vm4589, %v4588, %v4459
      %vm4598 = vcmask 326656
      %v4599 = vsel %vm4598, %v4590, %v4469
      %v4600 = vsel %vm4598, %v4591, %v4471
      %v4601 = vsel %vm4598, %v4592, %v4473
      %v4602 = vsel %vm4598, %v4593, %v4475
      %v4603 = vsel %vm4598, %v4594, %v4477
      %v4604 = vsel %vm4598, %v4595, %v4479
      %v4605 = vsel %vm4598, %v4596, %v4481
      %v4606 = vsel %vm4598, %v4597, %v4483
      %vm4607 = vcmask 392192
      %v4608 = vsel %vm4607, %v4599, %v4493
      %v4609 = vsel %vm4607, %v4600, %v4495
      %v4610 = vsel %vm4607, %v4601, %v4497
      %v4611 = vsel %vm4607, %v4602, %v4499
      %v4612 = vsel %vm4607, %v4603, %v4501
      %v4613 = vsel %vm4607, %v4604, %v4503
      %v4614 = vsel %vm4607, %v4605, %v4505
      %v4615 = vsel %vm4607, %v4606, %v4507
      %vm4616 = vcmask 457728
      %v4617 = vsel %vm4616, %v4608, %v4517
      %v4618 = vsel %vm4616, %v4609, %v4519
      %v4619 = vsel %vm4616, %v4610, %v4521
      %v4620 = vsel %vm4616, %v4611, %v4523
      %v4621 = vsel %vm4616, %v4612, %v4525
      %v4622 = vsel %vm4616, %v4613, %v4527
      %v4623 = vsel %vm4616, %v4614, %v4529
      %v4624 = vsel %vm4616, %v4615, %v4531
      %vm4625 = vcmask 523264
      %v4626 = vsel %vm4625, %v4617, %v4541
      %v4627 = vsel %vm4625, %v4618, %v4543
      %v4628 = vsel %vm4625, %v4619, %v4545
      %v4629 = vsel %vm4625, %v4620, %v4547
      %v4630 = vsel %vm4625, %v4621, %v4549
      %v4631 = vsel %vm4625, %v4622, %v4551
      %v4632 = vsel %vm4625, %v4623, %v4553
      %v4633 = vsel %vm4625, %v4624, %v4555
      %v4634 = vpack.c.bf16 %v4627, %v4626
      %v4635 = vpack.c.bf16 %v4629, %v4628
      %v4636 = vpack.c.bf16 %v4631, %v4630
      %v4637 = vpack.c.bf16 %v4633, %v4632
      %v4638 = vld [vmem:[%s3] sm:$0xf]
      %v4639 = vld [vmem:[%s3 + $0x4] sm:$0xf]
      %v4640 = vld [vmem:[%s3 + $0x8] sm:$0xf]
      %v4641 = vld [vmem:[%s3 + $0xc] sm:$0xf]
      %v4642 = vld [vmem:[%s3 + $0x10] sm:$0xf]
      %v4643 = vld [vmem:[%s3 + $0x14] sm:$0xf]
      %v4644 = vld [vmem:[%s3 + $0x18] sm:$0xf]
      %v4645 = vld [vmem:[%s3 + $0x1c] sm:$0xf]
      %v4646 = vld [vmem:[%s3 + $0x20] sm:$0xf]
      %v4647 = vld [vmem:[%s4] sm:$0x1]
      %v4649 = vlaneseq
      %v4650 = vshrl.u32 %v4649, 7
      %v4651 = vsub.s32 0, %v4650
      %v4652 = vrot.slane %v4647, %v4651
      %v4663 = vunpack.c.l.b16 %v4638
      %v4664 = vunpack.c.l.b16 %v4639
      %v4665 = vunpack.c.l.b16 %v4640
      %v4666 = vunpack.c.l.b16 %v4641
      %v4667 = vunpack.c.l.b16 %v4642
      %v4668 = vunpack.c.l.b16 %v4643
      %v4669 = vunpack.c.l.b16 %v4644
      %v4670 = vunpack.c.l.b16 %v4645
      %v4671 = vunpack.c.l.b16 %v4646
      %v4672 = vpack.c.b16 %v4664, %v4663
      %v4673 = vpack.c.b16 %v4666, %v4665
      %v4674 = vpack.c.b16 %v4668, %v4667
      %v4675 = vpack.c.b16 %v4670, %v4669
      %v4676 = vpack.c.b16 %v4671, %v4671
      %vm4681 = vcmask 588800
      %v4683 = vsel %vm4681, %v4634, 0
      %v4686 = vsel %vm4681, %v4635, 0
      %v4689 = vsel %vm4681, %v4636, 0
      %v4692 = vsel %vm4681, %v4637, 0
      %v4695 = vsel %vm2359, %v4676, 0
      %4697 = vmatprep.subr.bf16.mxu0 0
      %4698 = vmatpush1.bf16.msra.mxu0 %v4672
      %4699 = vmatprep.subr.bf16.mxu0 0
      %4700 = vmatpush1.bf16.msra.mxu0 %v4673
      %4701 = vmatprep.subr.bf16.mxu0 0
      %4702 = vmatpush1.bf16.msra.mxu0 %v4674
      %4703 = vmatprep.subr.bf16.mxu0 0
      %4704 = vmatpush1.bf16.msra.mxu0 %v4675
      %4705 = vmatprep.subr.bf16.mxu0 0
      %4706 = vmatpush1.bf16.msra.mxu0 %v4695
      %4707 = vmatprep.subr.bf16.mxu0 0
      %4708 = vmatpush1.bf16.msra.mxu0 0
      %4709 = vmatprep.subr.bf16.mxu0 0
      %4710 = vmatpush1.bf16.msra.mxu0 0
      %4711 = vmatprep.subr.bf16.mxu0 0
      %4712 = vmatpush1.bf16.msra.mxu0 0
      %4713 = vmatprep.subr.bf16.mxu0 0
      %4714 = vmatpush1.bf16.msra.mxu0 0
      %4715 = vmatprep.subr.bf16.mxu0 0
      %4716 = vmatpush1.bf16.msra.mxu0 0
      %4717 = vmatprep.subr.bf16.mxu0 0
      %4718 = vmatpush1.bf16.msra.mxu0 0
      %4719 = vmatprep.subr.bf16.mxu0 0
      %4720 = vmatpush1.bf16.msra.mxu0 0
      %4721 = vmatprep.subr.bf16.mxu0 0
      %4722 = vmatpush1.bf16.msra.mxu0 0
      %4723 = vmatprep.subr.bf16.mxu0 0
      %4724 = vmatpush1.bf16.msra.mxu0 0
      %4725 = vmatprep.subr.bf16.mxu0 0
      %4726 = vmatpush1.bf16.msra.mxu0 0
      %4727 = vmatprep.subr.bf16.mxu0 0
      %4728 = vmatpush1.bf16.msra.mxu0 0
      %4729 = vmatprep.mubr.bf16.mxu0 0
      %4730 = vmatmul.mubr.bf16.gmra.mrb[0].mxu0 %v4683
      %v4731 = vpop.f32.mrb[0].mxu0
      %v4732 = vadd.f32 %v4652, %v4731
      %v4733 = vpop.f32.mrb[0].mxu0
      %v4734 = vpop.f32.mrb[0].mxu0
      %v4735 = vadd.f32 %v4652, %v4734
      %v4736 = vpop.f32.mrb[0].mxu0
      %4737 = vmatprep.mubr.bf16.mxu0 0
      %4738 = vmatmul.mubr.bf16.gmra.mrb[0].mxu0 %v4686
      %v4739 = vpop.f32.mrb[0].mxu0
      %v4740 = vadd.f32 %v4652, %v4739
      %v4741 = vpop.f32.mrb[0].mxu0
      %v4742 = vpop.f32.mrb[0].mxu0
      %v4743 = vadd.f32 %v4652, %v4742
      %v4744 = vpop.f32.mrb[0].mxu0
      %4745 = vmatprep.mubr.bf16.mxu0 0
      %4746 = vmatmul.mubr.bf16.gmra.mrb[0].mxu0 %v4689
      %v4747 = vpop.f32.mrb[0].mxu0
      %v4748 = vadd.f32 %v4652, %v4747
      %v4749 = vpop.f32.mrb[0].mxu0
      %v4750 = vpop.f32.mrb[0].mxu0
      %v4751 = vadd.f32 %v4652, %v4750
      %v4752 = vpop.f32.mrb[0].mxu0
      %4753 = vmatprep.mubr.bf16.mxu0 0
      %4754 = vmatmul.mubr.bf16.gmra.mrb[0].mxu0 %v4692
      %v4755 = vpop.f32.mrb[0].mxu0
      %v4756 = vadd.f32 %v4652, %v4755
      %v4757 = vpop.f32.mrb[0].mxu0
      %v4758 = vpop.f32.mrb[0].mxu0
      %v4759 = vadd.f32 %v4652, %v4758
      %v4760 = vpop.f32.mrb[0].mxu0
      %4761 = vdwg.mxu0
      %v4762 = vmax.f32 %v4732, 0.0
      %v4763 = vmax.f32 %v4735, 0.0
      %v4764 = vmax.f32 %v4740, 0.0
      %v4765 = vmax.f32 %v4743, 0.0
      %v4766 = vmax.f32 %v4748, 0.0
      %v4767 = vmax.f32 %v4751, 0.0
      %v4768 = vmax.f32 %v4756, 0.0
      %v4769 = vmax.f32 %v4759, 0.0
      %s4770 = scalar_lea.vmem [#allocation5], 16
      %4771 = vst.msk [vmem:[%s4770 + $0x1] sm:$0xff] %vm772, %v4762
      %4772 = vst.msk [vmem:[%s4770 + $0x11] sm:$0xff] %vm772, %v4763
      %4773 = vst.msk [vmem:[%s4770 + $0x21] sm:$0xff] %vm772, %v4764
      %4774 = vst.msk [vmem:[%s4770 + $0x31] sm:$0xff] %vm772, %v4765
      %4775 = vst.msk [vmem:[%s4770 + $0x41] sm:$0xff] %vm772, %v4766
      %4776 = vst.msk [vmem:[%s4770 + $0x51] sm:$0xff] %vm772, %v4767
      %4777 = vst.msk [vmem:[%s4770 + $0x61] sm:$0xff] %vm772, %v4768
      %4778 = vst.msk [vmem:[%s4770 + $0x71] sm:$0xff] %vm772, %v4769
      %v4787 = vcombine.high %v4762, %v4762
      %v4789 = vunpack.c.l.s4 1983009808
      %v4790 = vunpack.c.0.s8 %v4789
      %v4791 = vlaneseq
      %v4792 = vshrl.u32 %v4791, 7
      %v4793 = vsub.s32 %v4790, %v4792
      %v4794 = vrot.slane %v4762, %v4793
      %v4796 = vunpack.c.l.s4 1983009808
      %v4797 = vunpack.c.0.s8 %v4796
      %v4798 = vlaneseq
      %v4799 = vshrl.u32 %v4798, 7
      %v4800 = vsub.s32 %v4797, %v4799
      %v4801 = vrot.slane %v4787, %v4800
      %v4802 = vcombine.high %v4794, %v4794
      %v4803 = vcombine.high %v4801, %v4801
      %v4804 = vcombine.high %v4763, %v4763
      %v4806 = vunpack.c.l.s4 1983009808
      %v4807 = vunpack.c.0.s8 %v4806
      %v4808 = vlaneseq
      %v4809 = vshrl.u32 %v4808, 7
      %v4810 = vsub.s32 %v4807, %v4809
      %v4811 = vrot.slane %v4763, %v4810
      %v4813 = vunpack.c.l.s4 1983009808
      %v4814 = vunpack.c.0.s8 %v4813
      %v4815 = vlaneseq
      %v4816 = vshrl.u32 %v4815, 7
      %v4817 = vsub.s32 %v4814, %v4816
      %v4818 = vrot.slane %v4804, %v4817
      %v4819 = vcombine.high %v4811, %v4811
      %v4820 = vcombine.high %v4818, %v4818
      %v4821 = vcombine.high %v4764, %v4764
      %v4823 = vunpack.c.l.s4 1983009808
      %v4824 = vunpack.c.0.s8 %v4823
      %v4825 = vlaneseq
      %v4826 = vshrl.u32 %v4825, 7
      %v4827 = vsub.s32 %v4824, %v4826
      %v4828 = vrot.slane %v4764, %v4827
      %v4830 = vunpack.c.l.s4 1983009808
      %v4831 = vunpack.c.0.s8 %v4830
      %v4832 = vlaneseq
      %v4833 = vshrl.u32 %v4832, 7
      %v4834 = vsub.s32 %v4831, %v4833
      %v4835 = vrot.slane %v4821, %v4834
      %v4836 = vcombine.high %v4828, %v4828
      %v4837 = vcombine.high %v4835, %v4835
      %v4838 = vcombine.high %v4765, %v4765
      %v4840 = vunpack.c.l.s4 1983009808
      %v4841 = vunpack.c.0.s8 %v4840
      %v4842 = vlaneseq
      %v4843 = vshrl.u32 %v4842, 7
      %v4844 = vsub.s32 %v4841, %v4843
      %v4845 = vrot.slane %v4765, %v4844
      %v4847 = vunpack.c.l.s4 1983009808
      %v4848 = vunpack.c.0.s8 %v4847
      %v4849 = vlaneseq
      %v4850 = vshrl.u32 %v4849, 7
      %v4851 = vsub.s32 %v4848, %v4850
      %v4852 = vrot.slane %v4838, %v4851
      %v4853 = vcombine.high %v4845, %v4845
      %v4854 = vcombine.high %v4852, %v4852
      %v4855 = vcombine.high %v4766, %v4766
      %v4857 = vunpack.c.l.s4 1983009808
      %v4858 = vunpack.c.0.s8 %v4857
      %v4859 = vlaneseq
      %v4860 = vshrl.u32 %v4859, 7
      %v4861 = vsub.s32 %v4858, %v4860
      %v4862 = vrot.slane %v4766, %v4861
      %v4864 = vunpack.c.l.s4 1983009808
      %v4865 = vunpack.c.0.s8 %v4864
      %v4866 = vlaneseq
      %v4867 = vshrl.u32 %v4866, 7
      %v4868 = vsub.s32 %v4865, %v4867
      %v4869 = vrot.slane %v4855, %v4868
      %v4870 = vcombine.high %v4862, %v4862
      %v4871 = vcombine.high %v4869, %v4869
      %v4872 = vcombine.high %v4767, %v4767
      %v4874 = vunpack.c.l.s4 1983009808
      %v4875 = vunpack.c.0.s8 %v4874
      %v4876 = vlaneseq
      %v4877 = vshrl.u32 %v4876, 7
      %v4878 = vsub.s32 %v4875, %v4877
      %v4879 = vrot.slane %v4767, %v4878
      %v4881 = vunpack.c.l.s4 1983009808
      %v4882 = vunpack.c.0.s8 %v4881
      %v4883 = vlaneseq
      %v4884 = vshrl.u32 %v4883, 7
      %v4885 = vsub.s32 %v4882, %v4884
      %v4886 = vrot.slane %v4872, %v4885
      %v4887 = vcombine.high %v4879, %v4879
      %v4888 = vcombine.high %v4886, %v4886
      %v4889 = vcombine.high %v4768, %v4768
      %v4891 = vunpack.c.l.s4 1983009808
      %v4892 = vunpack.c.0.s8 %v4891
      %v4893 = vlaneseq
      %v4894 = vshrl.u32 %v4893, 7
      %v4895 = vsub.s32 %v4892, %v4894
      %v4896 = vrot.slane %v4768, %v4895
      %v4898 = vunpack.c.l.s4 1983009808
      %v4899 = vunpack.c.0.s8 %v4898
      %v4900 = vlaneseq
      %v4901 = vshrl.u32 %v4900, 7
      %v4902 = vsub.s32 %v4899, %v4901
      %v4903 = vrot.slane %v4889, %v4902
      %v4904 = vcombine.high %v4896, %v4896
      %v4905 = vcombine.high %v4903, %v4903
      %v4906 = vcombine.high %v4769, %v4769
      %v4908 = vunpack.c.l.s4 1983009808
      %v4909 = vunpack.c.0.s8 %v4908
      %v4910 = vlaneseq
      %v4911 = vshrl.u32 %v4910, 7
      %v4912 = vsub.s32 %v4909, %v4911
      %v4913 = vrot.slane %v4769, %v4912
      %v4915 = vunpack.c.l.s4 1983009808
      %v4916 = vunpack.c.0.s8 %v4915
      %v4917 = vlaneseq
      %v4918 = vshrl.u32 %v4917, 7
      %v4919 = vsub.s32 %v4916, %v4918
      %v4920 = vrot.slane %v4906, %v4919
      %v4921 = vcombine.high %v4913, %v4913
      %v4922 = vcombine.high %v4920, %v4920
      %v4955 = vrot.slane %v4794, 7
      %v4956 = vrot.slane %v4955, 2
      %v4957 = vrot.slane %v4802, 7
      %v4958 = vrot.slane %v4957, 2
      %v4959 = vrot.slane %v4801, 7
      %v4960 = vrot.slane %v4959, 2
      %v4961 = vrot.slane %v4803, 7
      %v4962 = vrot.slane %v4961, 2
      %v4963 = vrot.slane %v4828, 7
      %v4964 = vrot.slane %v4963, 2
      %v4965 = vrot.slane %v4836, 7
      %v4966 = vrot.slane %v4965, 2
      %v4967 = vrot.slane %v4835, 7
      %v4968 = vrot.slane %v4967, 2
      %v4969 = vrot.slane %v4837, 7
      %v4970 = vrot.slane %v4969, 2
      %v4971 = vrot.slane %v4862, 7
      %v4972 = vrot.slane %v4971, 2
      %v4973 = vrot.slane %v4870, 7
      %v4974 = vrot.slane %v4973, 2
      %v4975 = vrot.slane %v4869, 7
      %v4976 = vrot.slane %v4975, 2
      %v4977 = vrot.slane %v4871, 7
      %v4978 = vrot.slane %v4977, 2
      %v4979 = vrot.slane %v4896, 7
      %v4980 = vrot.slane %v4979, 2
      %v4981 = vrot.slane %v4904, 7
      %v4982 = vrot.slane %v4981, 2
      %v4983 = vrot.slane %v4903, 7
      %v4984 = vrot.slane %v4983, 2
      %v4985 = vrot.slane %v4905, 7
      %v4986 = vrot.slane %v4985, 2
      %v5003 = vmax.f32 %v4794, %v4956
      %v5004 = vmax.f32 %v4802, %v4958
      %v5005 = vmax.f32 %v4801, %v4960
      %v5006 = vmax.f32 %v4803, %v4962
      %v5007 = vmax.f32 %v4828, %v4964
      %v5008 = vmax.f32 %v4836, %v4966
      %v5009 = vmax.f32 %v4835, %v4968
      %v5010 = vmax.f32 %v4837, %v4970
      %v5011 = vmax.f32 %v4862, %v4972
      %v5012 = vmax.f32 %v4870, %v4974
      %v5013 = vmax.f32 %v4869, %v4976
      %v5014 = vmax.f32 %v4871, %v4978
      %v5015 = vmax.f32 %v4896, %v4980
      %v5016 = vmax.f32 %v4904, %v4982
      %v5017 = vmax.f32 %v4903, %v4984
      %v5018 = vmax.f32 %v4905, %v4986
      %v5019 = vrot.slane %v4811, 7
      %v5020 = vrot.slane %v5019, 2
      %v5021 = vrot.slane %v4819, 7
      %v5022 = vrot.slane %v5021, 2
      %v5023 = vrot.slane %v4818, 7
      %v5024 = vrot.slane %v5023, 2
      %v5025 = vrot.slane %v4820, 7
      %v5026 = vrot.slane %v5025, 2
      %v5027 = vrot.slane %v4845, 7
      %v5028 = vrot.slane %v5027, 2
      %v5029 = vrot.slane %v4853, 7
      %v5030 = vrot.slane %v5029, 2
      %v5031 = vrot.slane %v4852, 7
      %v5032 = vrot.slane %v5031, 2
      %v5033 = vrot.slane %v4854, 7
      %v5034 = vrot.slane %v5033, 2
      %v5035 = vrot.slane %v4879, 7
      %v5036 = vrot.slane %v5035, 2
      %v5037 = vrot.slane %v4887, 7
      %v5038 = vrot.slane %v5037, 2
      %v5039 = vrot.slane %v4886, 7
      %v5040 = vrot.slane %v5039, 2
      %v5041 = vrot.slane %v4888, 7
      %v5042 = vrot.slane %v5041, 2
      %v5043 = vrot.slane %v4913, 7
      %v5044 = vrot.slane %v5043, 2
      %v5045 = vrot.slane %v4921, 7
      %v5046 = vrot.slane %v5045, 2
      %v5047 = vrot.slane %v4920, 7
      %v5048 = vrot.slane %v5047, 2
      %v5049 = vrot.slane %v4922, 7
      %v5050 = vrot.slane %v5049, 2
      %v5067 = vmax.f32 %v4811, %v5020
      %v5068 = vmax.f32 %v4819, %v5022
      %v5069 = vmax.f32 %v4818, %v5024
      %v5070 = vmax.f32 %v4820, %v5026
      %v5071 = vmax.f32 %v4845, %v5028
      %v5072 = vmax.f32 %v4853, %v5030
      %v5073 = vmax.f32 %v4852, %v5032
      %v5074 = vmax.f32 %v4854, %v5034
      %v5075 = vmax.f32 %v4879, %v5036
      %v5076 = vmax.f32 %v4887, %v5038
      %v5077 = vmax.f32 %v4886, %v5040
      %v5078 = vmax.f32 %v4888, %v5042
      %v5079 = vmax.f32 %v4913, %v5044
      %v5080 = vmax.f32 %v4921, %v5046
      %v5081 = vmax.f32 %v4920, %v5048
      %v5082 = vmax.f32 %v4922, %v5050
      %v5083 = vmax.f32 %v5003, %v5067
      %v5084 = vmax.f32 %v5004, %v5068
      %v5085 = vmax.f32 %v5005, %v5069
      %v5086 = vmax.f32 %v5006, %v5070
      %v5087 = vmax.f32 %v5007, %v5071
      %v5088 = vmax.f32 %v5008, %v5072
      %v5089 = vmax.f32 %v5009, %v5073
      %v5090 = vmax.f32 %v5010, %v5074
      %v5091 = vmax.f32 %v5011, %v5075
      %v5092 = vmax.f32 %v5012, %v5076
      %v5093 = vmax.f32 %v5013, %v5077
      %v5094 = vmax.f32 %v5014, %v5078
      %v5095 = vmax.f32 %v5015, %v5079
      %v5096 = vmax.f32 %v5016, %v5080
      %v5097 = vmax.f32 %v5017, %v5081
      %v5098 = vmax.f32 %v5018, %v5082
      %v5115 = vlaneseq
      %v5116 = vshrl.u32 %v5115, 7
      %v5117 = vsub.s32 0, %v5116
      %v5118 = vrot.slane %v5083, %v5117
      %v5119 = vlaneseq
      %v5120 = vshrl.u32 %v5119, 7
      %v5121 = vsub.s32 0, %v5120
      %v5122 = vrot.slane %v5084, %v5121
      %v5123 = vlaneseq
      %v5124 = vshrl.u32 %v5123, 7
      %v5125 = vsub.s32 0, %v5124
      %v5126 = vrot.slane %v5085, %v5125
      %v5127 = vlaneseq
      %v5128 = vshrl.u32 %v5127, 7
      %v5129 = vsub.s32 0, %v5128
      %v5130 = vrot.slane %v5086, %v5129
      %v5131 = vlaneseq
      %v5132 = vshrl.u32 %v5131, 7
      %v5133 = vsub.s32 0, %v5132
      %v5134 = vrot.slane %v5087, %v5133
      %v5135 = vlaneseq
      %v5136 = vshrl.u32 %v5135, 7
      %v5137 = vsub.s32 0, %v5136
      %v5138 = vrot.slane %v5088, %v5137
      %v5139 = vlaneseq
      %v5140 = vshrl.u32 %v5139, 7
      %v5141 = vsub.s32 0, %v5140
      %v5142 = vrot.slane %v5089, %v5141
      %v5143 = vlaneseq
      %v5144 = vshrl.u32 %v5143, 7
      %v5145 = vsub.s32 0, %v5144
      %v5146 = vrot.slane %v5090, %v5145
      %v5147 = vlaneseq
      %v5148 = vshrl.u32 %v5147, 7
      %v5149 = vsub.s32 0, %v5148
      %v5150 = vrot.slane %v5091, %v5149
      %v5151 = vlaneseq
      %v5152 = vshrl.u32 %v5151, 7
      %v5153 = vsub.s32 0, %v5152
      %v5154 = vrot.slane %v5092, %v5153
      %v5155 = vlaneseq
      %v5156 = vshrl.u32 %v5155, 7
      %v5157 = vsub.s32 0, %v5156
      %v5158 = vrot.slane %v5093, %v5157
      %v5159 = vlaneseq
      %v5160 = vshrl.u32 %v5159, 7
      %v5161 = vsub.s32 0, %v5160
      %v5162 = vrot.slane %v5094, %v5161
      %v5163 = vlaneseq
      %v5164 = vshrl.u32 %v5163, 7
      %v5165 = vsub.s32 0, %v5164
      %v5166 = vrot.slane %v5095, %v5165
      %v5167 = vlaneseq
      %v5168 = vshrl.u32 %v5167, 7
      %v5169 = vsub.s32 0, %v5168
      %v5170 = vrot.slane %v5096, %v5169
      %v5171 = vlaneseq
      %v5172 = vshrl.u32 %v5171, 7
      %v5173 = vsub.s32 0, %v5172
      %v5174 = vrot.slane %v5097, %v5173
      %v5175 = vlaneseq
      %v5176 = vshrl.u32 %v5175, 7
      %v5177 = vsub.s32 0, %v5176
      %v5178 = vrot.slane %v5098, %v5177
      %v5179 = vsel %vm4192, %v5122, %v5118
      %v5180 = vsel %vm4194, %v5126, %v5179
      %v5181 = vsel %vm4196, %v5130, %v5180
      %v5182 = vsel %vm4192, %v5138, %v5134
      %v5183 = vsel %vm4194, %v5142, %v5182
      %v5184 = vsel %vm4196, %v5146, %v5183
      %v5185 = vsel %vm4192, %v5154, %v5150
      %v5186 = vsel %vm4194, %v5158, %v5185
      %v5187 = vsel %vm4196, %v5162, %v5186
      %v5188 = vsel %vm4192, %v5170, %v5166
      %v5189 = vsel %vm4194, %v5174, %v5188
      %v5190 = vsel %vm4196, %v5178, %v5189
      %s5195 = scalar_lea.vmem [#allocation6], 8
      %vm5196 = vcmask 125952
      %5197 = vst.msk [vmem:[%s5195 + $0x1] sm:$0xf] %vm5196, %v5181
      %5198 = vst.msk [vmem:[%s5195 + $0x9] sm:$0xf] %vm5196, %v5184
      %5199 = vst.msk [vmem:[%s5195 + $0x11] sm:$0xf] %vm5196, %v5187
      %5200 = vst.msk [vmem:[%s5195 + $0x19] sm:$0xf] %vm5196, %v5190
      %v5201 = vld [vmem:[#allocation6] sm:$0x3f]
      %v5202 = vld [vmem:[#allocation6 + $0x8] sm:$0x3f]
      %v5203 = vld [vmem:[#allocation6 + $0x10] sm:$0x3f]
      %v5204 = vld [vmem:[#allocation6 + $0x18] sm:$0x3f]
      %v5205 = vld [vmem:[#allocation6 + $0x20] sm:$0x3f]
      %v5206 = vld [vmem:[#allocation6 + $0x28] sm:$0x3f]
      %v5211 = vcombine.high %v5201, %v5201
      %v5212 = vcombine.high %v5202, %v5202
      %v5213 = vcombine.high %v5203, %v5203
      %v5214 = vcombine.high %v5204, %v5204
      %vm5215 = vcmask 1042432
      %vm5216 = vcmask 1046532
      %vm5217 = vmor %vm5215, %vm5216
      %v5218 = vrot.slane %v5201, 5
      %v5219 = vrot.slane %v5218, 4
      %v5220 = vrot.slane %v5211, 5
      %v5221 = vsel %vm5217, %v5219, %v5220
      %v5222 = vrot.slane %v5202, 5
      %v5223 = vrot.slane %v5222, 4
      %v5224 = vrot.slane %v5212, 5
      %v5225 = vsel %vm5217, %v5223, %v5224
      %v5226 = vrot.slane %v5203, 5
      %v5227 = vrot.slane %v5226, 4
      %v5228 = vrot.slane %v5213, 5
      %v5229 = vsel %vm5217, %v5227, %v5228
      %v5230 = vrot.slane %v5204, 5
      %v5231 = vrot.slane %v5230, 4
      %v5232 = vrot.slane %v5214, 5
      %v5233 = vsel %vm5217, %v5231, %v5232
      %vm5234 = vcmask 1041408
      %vm5235 = vcmask 1045508
      %vm5236 = vmor %vm5234, %vm5235
      %v5237 = vrot.slane %v5201, 6
      %v5238 = vrot.slane %v5237, 4
      %v5239 = vrot.slane %v5211, 6
      %v5240 = vsel %vm5236, %v5238, %v5239
      %v5241 = vrot.slane %v5202, 6
      %v5242 = vrot.slane %v5241, 4
      %v5243 = vrot.slane %v5212, 6
      %v5244 = vsel %vm5236, %v5242, %v5243
      %v5245 = vrot.slane %v5203, 6
      %v5246 = vrot.slane %v5245, 4
      %v5247 = vrot.slane %v5213, 6
      %v5248 = vsel %vm5236, %v5246, %v5247
      %v5249 = vrot.slane %v5204, 6
      %v5250 = vrot.slane %v5249, 4
      %v5251 = vrot.slane %v5214, 6
      %v5252 = vsel %vm5236, %v5250, %v5251
      %v5254 = vcombine.high %v5205, %v5205
      %v5255 = vrot.slane %v5205, 5
      %v5256 = vrot.slane %v5255, 4
      %v5257 = vrot.slane %v5254, 5
      %v5258 = vsel %vm5217, %v5256, %v5257
      %v5259 = vrot.slane %v5205, 6
      %v5260 = vrot.slane %v5259, 4
      %v5261 = vrot.slane %v5254, 6
      %v5262 = vsel %vm5236, %v5260, %v5261
      %v5264 = vcombine.high %v5206, %v5206
      %v5265 = vrot.slane %v5206, 5
      %v5266 = vrot.slane %v5265, 4
      %v5267 = vrot.slane %v5264, 5
      %v5268 = vsel %vm5217, %v5266, %v5267
      %v5269 = vrot.slane %v5206, 6
      %v5270 = vrot.slane %v5269, 4
      %v5271 = vrot.slane %v5264, 6
      %v5272 = vsel %vm5236, %v5270, %v5271
      %v5273 = vcombine.low %v5201, %v5202
      %v5274 = vcombine.low %v5203, %v5204
      %v5277 = vcombine.low %v5221, %v5225
      %v5278 = vcombine.low %v5229, %v5233
      %5279 = vrot.lane.b32.xlu0 %v5277, 16
      %v5280 = vpop.permute.xlu0 %5279
      %5281 = vrot.lane.b32.xlu0 %v5278, 16
      %v5282 = vpop.permute.xlu0 %5281
      %v5285 = vcombine.low %v5240, %v5244
      %v5286 = vcombine.low %v5248, %v5252
      %5287 = vrot.lane.b32.xlu0 %v5285, 32
      %v5288 = vpop.permute.xlu0 %5287
      %5289 = vrot.lane.b32.xlu0 %v5286, 32
      %v5290 = vpop.permute.xlu0 %5289
      %v5293 = vcombine.low %v5202, %v5203
      %v5294 = vcombine.low %v5204, %v5205
      %5295 = vrot.lane.b32.xlu0 %v5293, 48
      %v5296 = vpop.permute.xlu0 %5295
      %5297 = vrot.lane.b32.xlu0 %v5294, 48
      %v5298 = vpop.permute.xlu0 %5297
      %v5301 = vcombine.low %v5225, %v5229
      %v5302 = vcombine.low %v5233, %v5258
      %5303 = vrot.lane.b32.xlu0 %v5301, 64
      %v5304 = vpop.permute.xlu0 %5303
      %5305 = vrot.lane.b32.xlu0 %v5302, 64
      %v5306 = vpop.permute.xlu0 %5305
      %v5309 = vcombine.low %v5244, %v5248
      %v5310 = vcombine.low %v5252, %v5262
      %5311 = vrot.lane.b32.xlu0 %v5309, 80
      %v5312 = vpop.permute.xlu0 %5311
      %5313 = vrot.lane.b32.xlu0 %v5310, 80
      %v5314 = vpop.permute.xlu0 %5313
      %v5317 = vcombine.low %v5205, %v5206
      %5318 = vrot.lane.b32.xlu0 %v5274, 96
      %v5319 = vpop.permute.xlu0 %5318
      %5320 = vrot.lane.b32.xlu0 %v5317, 96
      %v5321 = vpop.permute.xlu0 %5320
      %v5324 = vcombine.low %v5258, %v5268
      %5325 = vrot.lane.b32.xlu0 %v5278, 112
      %v5326 = vpop.permute.xlu0 %5325
      %5327 = vrot.lane.b32.xlu0 %v5324, 112
      %v5328 = vpop.permute.xlu0 %5327
      %v5331 = vcombine.low %v5262, %v5272
      %v5334 = vsel %vm772, %v5273, %v5280
      %v5335 = vsel %vm772, %v5274, %v5282
      %v5336 = vsel %vm4589, %v5334, %v5288
      %v5337 = vsel %vm4589, %v5335, %v5290
      %v5338 = vsel %vm4607, %v5336, %v5296
      %v5339 = vsel %vm4607, %v5337, %v5298
      %v5340 = vsel %vm4625, %v5338, %v5304
      %v5341 = vsel %vm4625, %v5339, %v5306
      %vm5342 = vcmask 654336
      %v5343 = vsel %vm5342, %v5340, %v5312
      %v5344 = vsel %vm5342, %v5341, %v5314
      %vm5345 = vcmask 785408
      %v5346 = vsel %vm5345, %v5343, %v5319
      %v5347 = vsel %vm5345, %v5344, %v5321
      %vm5348 = vcmask 916480
      %v5349 = vsel %vm5348, %v5346, %v5326
      %v5350 = vsel %vm5348, %v5347, %v5328
      %v5351 = vpack.c.bf16 %v5350, %v5349
      %v5352 = vpack.c.bf16 %v5331, %v5286
      %v5353 = vld [vmem:[%s5] sm:$0xf]
      %v5354 = vld [vmem:[%s5 + $0x4] sm:$0xf]
      %v5355 = vld [vmem:[%s5 + $0x8] sm:$0xf]
      %v5356 = vld [vmem:[%s5 + $0xc] sm:$0xf]
      %v5357 = vld [vmem:[%s5 + $0x10] sm:$0xf]
      %v5358 = vld [vmem:[%s5 + $0x14] sm:$0xf]
      %v5359 = vld [vmem:[%s5 + $0x18] sm:$0xf]
      %v5360 = vld [vmem:[%s5 + $0x1c] sm:$0xf]
      %v5361 = vld [vmem:[%s5 + $0x20] sm:$0xf]
      %v5362 = vld [vmem:[%s5 + $0x24] sm:$0xf]
      %v5363 = vld [vmem:[%s5 + $0x28] sm:$0xf]
      %v5364 = vld [vmem:[%s5 + $0x2c] sm:$0xf]
      %v5365 = vld [vmem:[%s5 + $0x30] sm:$0xf]
      %v5366 = vld [vmem:[%s5 + $0x34] sm:$0xf]
      %v5367 = vld [vmem:[%s5 + $0x38] sm:$0xf]
      %v5368 = vld [vmem:[%s5 + $0x3c] sm:$0xf]
      %v5369 = vld [vmem:[%s5 + $0x40] sm:$0xf]
      %v5370 = vld [vmem:[%s5 + $0x44] sm:$0xf]
      %v5371 = vld [vmem:[%s6] sm:$0x1]
      %v5373 = vlaneseq
      %v5374 = vshrl.u32 %v5373, 7
      %v5375 = vsub.s32 0, %v5374
      %v5376 = vrot.slane %v5371, %v5375
      %v5396 = vunpack.c.l.b16 %v5353
      %v5397 = vunpack.c.l.b16 %v5354
      %v5398 = vunpack.c.l.b16 %v5355
      %v5399 = vunpack.c.l.b16 %v5356
      %v5400 = vunpack.c.l.b16 %v5357
      %v5401 = vunpack.c.l.b16 %v5358
      %v5402 = vunpack.c.l.b16 %v5359
      %v5403 = vunpack.c.l.b16 %v5360
      %v5404 = vunpack.c.l.b16 %v5361
      %v5405 = vunpack.c.l.b16 %v5362
      %v5406 = vunpack.c.l.b16 %v5363
      %v5407 = vunpack.c.l.b16 %v5364
      %v5408 = vunpack.c.l.b16 %v5365
      %v5409 = vunpack.c.l.b16 %v5366
      %v5410 = vunpack.c.l.b16 %v5367
      %v5411 = vunpack.c.l.b16 %v5368
      %v5412 = vunpack.c.l.b16 %v5369
      %v5413 = vunpack.c.l.b16 %v5370
      %v5414 = vpack.c.b16 %v5397, %v5396
      %v5415 = vpack.c.b16 %v5399, %v5398
      %v5416 = vpack.c.b16 %v5401, %v5400
      %v5417 = vpack.c.b16 %v5403, %v5402
      %v5418 = vpack.c.b16 %v5405, %v5404
      %v5419 = vpack.c.b16 %v5407, %v5406
      %v5420 = vpack.c.b16 %v5409, %v5408
      %v5421 = vpack.c.b16 %v5411, %v5410
      %v5422 = vpack.c.b16 %v5413, %v5412
      %v5433 = vsel %vm772, %v5352, 0
      %5435 = vmatprep.subr.bf16.mxu0 0
      %5436 = vmatpush1.bf16.msra.mxu0 %v5414
      %5437 = vmatprep.subr.bf16.mxu0 0
      %5438 = vmatpush1.bf16.msra.mxu0 %v5415
      %5439 = vmatprep.subr.bf16.mxu0 0
      %5440 = vmatpush1.bf16.msra.mxu0 %v5416
      %5441 = vmatprep.subr.bf16.mxu0 0
      %5442 = vmatpush1.bf16.msra.mxu0 %v5417
      %5443 = vmatprep.subr.bf16.mxu0 0
      %5444 = vmatpush1.bf16.msra.mxu0 %v5418
      %5445 = vmatprep.subr.bf16.mxu0 0
      %5446 = vmatpush1.bf16.msra.mxu0 %v5419
      %5447 = vmatprep.subr.bf16.mxu0 0
      %5448 = vmatpush1.bf16.msra.mxu0 %v5420
      %5449 = vmatprep.subr.bf16.mxu0 0
      %5450 = vmatpush1.bf16.msra.mxu0 %v5421
      %5451 = vmatprep.subr.bf16.mxu0 0
      %5452 = vmatpush1.bf16.msra.mxu0 %v5422
      %5453 = vmatprep.subr.bf16.mxu0 0
      %5454 = vmatpush1.bf16.msra.mxu0 0
      %5455 = vmatprep.subr.bf16.mxu0 0
      %5456 = vmatpush1.bf16.msra.mxu0 0
      %5457 = vmatprep.subr.bf16.mxu0 0
      %5458 = vmatpush1.bf16.msra.mxu0 0
      %5459 = vmatprep.subr.bf16.mxu0 0
      %5460 = vmatpush1.bf16.msra.mxu0 0
      %5461 = vmatprep.subr.bf16.mxu0 0
      %5462 = vmatpush1.bf16.msra.mxu0 0
      %5463 = vmatprep.subr.bf16.mxu0 0
      %5464 = vmatpush1.bf16.msra.mxu0 0
      %5465 = vmatprep.subr.bf16.mxu0 0
      %5466 = vmatpush1.bf16.msra.mxu0 0
      %5467 = vmatprep.mubr.bf16.mxu0 %v5433
      %5468 = vmatmul.mubr.bf16.gmra.mrb[0].mxu0 %v5351
      %v5469 = vpop.f32.mrb[0].mxu0
      %v5470 = vadd.f32 %v5376, %v5469
      %v5471 = vpop.f32.mrb[0].mxu0
      %v5472 = vpop.f32.mrb[0].mxu0
      %v5473 = vadd.f32 %v5376, %v5472
      %v5474 = vpop.f32.mrb[0].mxu0
      %5475 = vdwg.mxu0
      %v5476 = vmax.f32 %v5470, 0.0
      %v5477 = vmax.f32 %v5473, 0.0
      %v5478 = vpack.c.bf16 %v5477, %v5476
      %v5479 = vld [vmem:[%s7] sm:$0xf]
      %v5480 = vld [vmem:[%s7 + $0x4] sm:$0xf]
      %v5481 = vld [vmem:[%s7 + $0x8] sm:$0xf]
      %v5482 = vld [vmem:[%s7 + $0xc] sm:$0xf]
      %v5483 = vld [vmem:[%s8] sm:$0x1]
      %v5485 = vlaneseq
      %v5486 = vshrl.u32 %v5485, 7
      %v5487 = vsub.s32 0, %v5486
      %v5488 = vrot.slane %v5483, %v5487
      %v5494 = vunpack.c.l.b16 %v5479
      %v5495 = vunpack.c.l.b16 %v5480
      %v5496 = vunpack.c.l.b16 %v5481
      %v5497 = vunpack.c.l.b16 %v5482
      %v5498 = vpack.c.b16 %v5495, %v5494
      %v5499 = vpack.c.b16 %v5497, %v5496
      %v5503 = vsel %vm4589, %v5478, 0
      %5505 = vmatprep.subr.bf16.mxu0 0
      %5506 = vmatpush1.bf16.msra.mxu0 %v5498
      %5507 = vmatprep.subr.bf16.mxu0 0
      %5508 = vmatpush1.bf16.msra.mxu0 %v5499
      %5509 = vmatprep.subr.bf16.mxu0 0
      %5510 = vmatpush1.bf16.msra.mxu0 0
      %5511 = vmatprep.subr.bf16.mxu0 0
      %5512 = vmatpush1.bf16.msra.mxu0 0
      %5513 = vmatprep.subr.bf16.mxu0 0
      %5514 = vmatpush1.bf16.msra.mxu0 0
      %5515 = vmatprep.subr.bf16.mxu0 0
      %5516 = vmatpush1.bf16.msra.mxu0 0
      %5517 = vmatprep.subr.bf16.mxu0 0
      %5518 = vmatpush1.bf16.msra.mxu0 0
      %5519 = vmatprep.subr.bf16.mxu0 0
      %5520 = vmatpush1.bf16.msra.mxu0 0
      %5521 = vmatprep.subr.bf16.mxu0 0
      %5522 = vmatpush1.bf16.msra.mxu0 0
      %5523 = vmatprep.subr.bf16.mxu0 0
      %5524 = vmatpush1.bf16.msra.mxu0 0
      %5525 = vmatprep.subr.bf16.mxu0 0
      %5526 = vmatpush1.bf16.msra.mxu0 0
      %5527 = vmatprep.subr.bf16.mxu0 0
      %5528 = vmatpush1.bf16.msra.mxu0 0
      %5529 = vmatprep.subr.bf16.mxu0 0
      %5530 = vmatpush1.bf16.msra.mxu0 0
      %5531 = vmatprep.subr.bf16.mxu0 0
      %5532 = vmatpush1.bf16.msra.mxu0 0
      %5533 = vmatprep.subr.bf16.mxu0 0
      %5534 = vmatpush1.bf16.msra.mxu0 0
      %5535 = vmatprep.subr.bf16.mxu0 0
      %5536 = vmatpush1.bf16.msra.mxu0 0
      %5537 = vmatprep.mubr.bf16.mxu0 0
      %5538 = vmatmul.mubr.bf16.gmra.mrb[0].mxu0 %v5503
      %v5539 = vpop.f32.mrb[0].mxu0
      %v5540 = vadd.f32 %v5488, %v5539
      %v5541 = vpop.f32.mrb[0].mxu0
      %v5542 = vpop.f32.mrb[0].mxu0
      %v5543 = vadd.f32 %v5488, %v5542
      %v5544 = vpop.f32.mrb[0].mxu0
      %5545 = vdwg.mxu0
      %v5546 = vld [vmem:[%s12] sm:$0xff]
      %v5547 = vld [vmem:[%s12 + $0x8] sm:$0xff]
      %v5548 = vld [vmem:[%s12 + $0x10] sm:$0xff]
      %v5549 = vld [vmem:[%s12 + $0x18] sm:$0xff]
      %v5550 = vld [vmem:[%s12 + $0x20] sm:$0xff]
      %v5551 = vld [vmem:[%s12 + $0x28] sm:$0xff]
      %v5552 = vld [vmem:[%s12 + $0x30] sm:$0xff]
      %v5553 = vld [vmem:[%s12 + $0x38] sm:$0xff]
      %v5555 = vsel %vm772, %v5546, 0
      %v5558 = vsel %vm772, %v5547, 0
      %v5561 = vsel %vm772, %v5548, 0
      %v5564 = vsel %vm772, %v5549, 0
      %v5567 = vsel %vm772, %v5550, 0
      %v5570 = vsel %vm772, %v5551, 0
      %v5573 = vsel %vm772, %v5552, 0
      %v5576 = vsel %vm772, %v5553, 0
      %5578 = vmatprep.subr.mxu0 0.0
      %5579 = vmatpush1.msra.mxu0 %v5540
      %5580 = vmatprep.subr.mxu0 0.0
      %5581 = vmatpush1.msra.mxu0 %v5543
      %5582 = vmatprep.subr.mxu0 0.0
      %5583 = vmatpush1.msra.mxu0 0.0
      %5584 = vmatprep.subr.mxu0 0.0
      %5585 = vmatpush1.msra.mxu0 0.0
      %5586 = vmatprep.subr.mxu0 0.0
      %5587 = vmatpush1.msra.mxu0 0.0
      %5588 = vmatprep.subr.mxu0 0.0
      %5589 = vmatpush1.msra.mxu0 0.0
      %5590 = vmatprep.subr.mxu0 0.0
      %5591 = vmatpush1.msra.mxu0 0.0
      %5592 = vmatprep.subr.mxu0 0.0
      %5593 = vmatpush1.msra.mxu0 0.0
      %5594 = vmatprep.subr.mxu0 0.0
      %5595 = vmatpush1.msra.mxu0 0.0
      %5596 = vmatprep.subr.mxu0 0.0
      %5597 = vmatpush1.msra.mxu0 0.0
      %5598 = vmatprep.subr.mxu0 0.0
      %5599 = vmatpush1.msra.mxu0 0.0
      %5600 = vmatprep.subr.mxu0 0.0
      %5601 = vmatpush1.msra.mxu0 0.0
      %5602 = vmatprep.subr.mxu0 0.0
      %5603 = vmatpush1.msra.mxu0 0.0
      %5604 = vmatprep.subr.mxu0 0.0
      %5605 = vmatpush1.msra.mxu0 0.0
      %5606 = vmatprep.subr.mxu0 0.0
      %5607 = vmatpush1.msra.mxu0 0.0
      %5608 = vmatprep.subr.mxu0 0.0
      %5609 = vmatpush1.msra.mxu0 0.0
      %5610 = vmatprep.subr.mxu0 0.0
      %5611 = vmatpush1.msra.mxu0 0.0
      %5612 = vmatprep.subr.mxu0 0.0
      %5613 = vmatpush1.msra.mxu0 0.0
      %5614 = vmatprep.subr.mxu0 0.0
      %5615 = vmatpush1.msra.mxu0 0.0
      %5616 = vmatprep.subr.mxu0 0.0
      %5617 = vmatpush1.msra.mxu0 0.0
      %5618 = vmatprep.subr.mxu0 0.0
      %5619 = vmatpush1.msra.mxu0 0.0
      %5620 = vmatprep.subr.mxu0 0.0
      %5621 = vmatpush1.msra.mxu0 0.0
      %5622 = vmatprep.subr.mxu0 0.0
      %5623 = vmatpush1.msra.mxu0 0.0
      %5624 = vmatprep.subr.mxu0 0.0
      %5625 = vmatpush1.msra.mxu0 0.0
      %5626 = vmatprep.subr.mxu0 0.0
      %5627 = vmatpush1.msra.mxu0 0.0
      %5628 = vmatprep.subr.mxu0 0.0
      %5629 = vmatpush1.msra.mxu0 0.0
      %5630 = vmatprep.subr.mxu0 0.0
      %5631 = vmatpush1.msra.mxu0 0.0
      %5632 = vmatprep.subr.mxu0 0.0
      %5633 = vmatpush1.msra.mxu0 0.0
      %5634 = vmatprep.subr.mxu0 0.0
      %5635 = vmatpush1.msra.mxu0 0.0
      %5636 = vmatprep.subr.mxu0 0.0
      %5637 = vmatpush1.msra.mxu0 0.0
      %5638 = vmatprep.subr.mxu0 0.0
      %5639 = vmatpush1.msra.mxu0 0.0
      %5640 = vmatprep.subr.mxu0 0.0
      %5641 = vmatpush1.msra.mxu0 0.0
      %5642 = vmatprep.mubr.f32.mxu0 0.0
      %5643 = vmatmul.mubr.f32.gmra.mrb[0].mxu0 %v5555
      %v5644 = vpop.f32.mrb[0].mxu0
      %v5645 = vadd.f32 0.0, %v5644
      %v5646 = vpop.f32.mrb[0].mxu0
      %5647 = vmatprep.mubr.f32.mxu0 0.0
      %5648 = vmatmul.mubr.f32.gmra.mrb[0].mxu0 %v5558
      %v5649 = vpop.f32.mrb[0].mxu0
      %v5650 = vadd.f32 0.0, %v5649
      %v5651 = vpop.f32.mrb[0].mxu0
      %5652 = vmatprep.mubr.f32.mxu0 0.0
      %5653 = vmatmul.mubr.f32.gmra.mrb[0].mxu0 %v5561
      %v5654 = vpop.f32.mrb[0].mxu0
      %v5655 = vadd.f32 0.0, %v5654
      %v5656 = vpop.f32.mrb[0].mxu0
      %5657 = vmatprep.mubr.f32.mxu0 0.0
      %5658 = vmatmul.mubr.f32.gmra.mrb[0].mxu0 %v5564
      %v5659 = vpop.f32.mrb[0].mxu0
      %v5660 = vadd.f32 0.0, %v5659
      %v5661 = vpop.f32.mrb[0].mxu0
      %5662 = vmatprep.mubr.f32.mxu0 0.0
      %5663 = vmatmul.mubr.f32.gmra.mrb[0].mxu0 %v5567
      %v5664 = vpop.f32.mrb[0].mxu0
      %v5665 = vadd.f32 0.0, %v5664
      %v5666 = vpop.f32.mrb[0].mxu0
      %5667 = vmatprep.mubr.f32.mxu0 0.0
      %5668 = vmatmul.mubr.f32.gmra.mrb[0].mxu0 %v5570
      %v5669 = vpop.f32.mrb[0].mxu0
      %v5670 = vadd.f32 0.0, %v5669
      %v5671 = vpop.f32.mrb[0].mxu0
      %5672 = vmatprep.mubr.f32.mxu0 0.0
      %5673 = vmatmul.mubr.f32.gmra.mrb[0].mxu0 %v5573
      %v5674 = vpop.f32.mrb[0].mxu0
      %v5675 = vadd.f32 0.0, %v5674
      %v5676 = vpop.f32.mrb[0].mxu0
      %5677 = vmatprep.mubr.f32.mxu0 0.0
      %5678 = vmatmul.mubr.f32.gmra.mrb[0].mxu0 %v5576
      %v5679 = vpop.f32.mrb[0].mxu0
      %v5680 = vadd.f32 0.0, %v5679
      %v5681 = vpop.f32.mrb[0].mxu0
      %5682 = vdwg.mxu0
      %s5683 = scalar_lea.vmem [#allocation7], 16
      %5684 = vst.msk [vmem:[%s5683 + $0x1] sm:$0xff] %vm772, %v5645
      %5685 = vst.msk [vmem:[%s5683 + $0x11] sm:$0xff] %vm772, %v5650
      %5686 = vst.msk [vmem:[%s5683 + $0x21] sm:$0xff] %vm772, %v5655
      %5687 = vst.msk [vmem:[%s5683 + $0x31] sm:$0xff] %vm772, %v5660
      %5688 = vst.msk [vmem:[%s5683 + $0x41] sm:$0xff] %vm772, %v5665
      %5689 = vst.msk [vmem:[%s5683 + $0x51] sm:$0xff] %vm772, %v5670
      %5690 = vst.msk [vmem:[%s5683 + $0x61] sm:$0xff] %vm772, %v5675
      %5691 = vst.msk [vmem:[%s5683 + $0x71] sm:$0xff] %vm772, %v5680
      %v5692 = vld [vmem:[#allocation7] sm:$0xff]
      %v5693 = vld [vmem:[#allocation7 + $0x8] sm:$0x3]
      %v5694 = vld [vmem:[#allocation7 + $0x10] sm:$0xff]
      %v5695 = vld [vmem:[#allocation7 + $0x18] sm:$0x3]
      %v5696 = vld [vmem:[#allocation7 + $0x20] sm:$0xff]
      %v5697 = vld [vmem:[#allocation7 + $0x28] sm:$0x3]
      %v5698 = vld [vmem:[#allocation7 + $0x30] sm:$0xff]
      %v5699 = vld [vmem:[#allocation7 + $0x38] sm:$0x3]
      %v5700 = vld [vmem:[#allocation7 + $0x40] sm:$0xff]
      %v5701 = vld [vmem:[#allocation7 + $0x48] sm:$0x3]
      %v5702 = vld [vmem:[#allocation7 + $0x50] sm:$0xff]
      %v5703 = vld [vmem:[#allocation7 + $0x58] sm:$0x3]
      %v5704 = vld [vmem:[#allocation7 + $0x60] sm:$0xff]
      %v5705 = vld [vmem:[#allocation7 + $0x68] sm:$0x3]
      %v5706 = vld [vmem:[#allocation7 + $0x70] sm:$0xff]
      %v5707 = vld [vmem:[#allocation7 + $0x78] sm:$0x3]
      %v5708 = vld [vmem:[#allocation7 + $0x80] sm:$0xff]
      %v5709 = vld [vmem:[#allocation7 + $0x88] sm:$0x3]
      %v5710 = vld [vmem:[#allocation7 + $0x90] sm:$0xff]
      %v5711 = vld [vmem:[#allocation7 + $0x98] sm:$0x3]
      %v5728 = vrot.slane %v5692, 1
      %v5729 = vrot.slane %v5693, 1
      %v5730 = vsel %vm1062, %v5728, %v5729
      %v5731 = vrot.slane %v5694, 1
      %v5732 = vrot.slane %v5695, 1
      %v5733 = vsel %vm1062, %v5731, %v5732
      %v5734 = vrot.slane %v5696, 1
      %v5735 = vrot.slane %v5697, 1
      %v5736 = vsel %vm1062, %v5734, %v5735
      %v5737 = vrot.slane %v5698, 1
      %v5738 = vrot.slane %v5699, 1
      %v5739 = vsel %vm1062, %v5737, %v5738
      %v5740 = vrot.slane %v5700, 1
      %v5741 = vrot.slane %v5701, 1
      %v5742 = vsel %vm1062, %v5740, %v5741
      %v5743 = vrot.slane %v5702, 1
      %v5744 = vrot.slane %v5703, 1
      %v5745 = vsel %vm1062, %v5743, %v5744
      %v5746 = vrot.slane %v5704, 1
      %v5747 = vrot.slane %v5705, 1
      %v5748 = vsel %vm1062, %v5746, %v5747
      %v5749 = vrot.slane %v5706, 1
      %v5750 = vrot.slane %v5707, 1
      %v5751 = vsel %vm1062, %v5749, %v5750
      %v5752 = vrot.slane %v5692, 2
      %v5753 = vrot.slane %v5693, 2
      %v5754 = vsel %vm1143, %v5752, %v5753
      %v5755 = vrot.slane %v5694, 2
      %v5756 = vrot.slane %v5695, 2
      %v5757 = vsel %vm1143, %v5755, %v5756
      %v5758 = vrot.slane %v5696, 2
      %v5759 = vrot.slane %v5697, 2
      %v5760 = vsel %vm1143, %v5758, %v5759
      %v5761 = vrot.slane %v5698, 2
      %v5762 = vrot.slane %v5699, 2
      %v5763 = vsel %vm1143, %v5761, %v5762
      %v5764 = vrot.slane %v5700, 2
      %v5765 = vrot.slane %v5701, 2
      %v5766 = vsel %vm1143, %v5764, %v5765
      %v5767 = vrot.slane %v5702, 2
      %v5768 = vrot.slane %v5703, 2
      %v5769 = vsel %vm1143, %v5767, %v5768
      %v5770 = vrot.slane %v5704, 2
      %v5771 = vrot.slane %v5705, 2
      %v5772 = vsel %vm1143, %v5770, %v5771
      %v5773 = vrot.slane %v5706, 2
      %v5774 = vrot.slane %v5707, 2
      %v5775 = vsel %vm1143, %v5773, %v5774
      %v5778 = vrot.slane %v5708, 1
      %v5779 = vrot.slane %v5709, 1
      %v5780 = vsel %vm1062, %v5778, %v5779
      %v5781 = vrot.slane %v5708, 2
      %v5782 = vrot.slane %v5709, 2
      %v5783 = vsel %vm1143, %v5781, %v5782
      %v5786 = vrot.slane %v5710, 1
      %v5787 = vrot.slane %v5711, 1
      %v5788 = vsel %vm1062, %v5786, %v5787
      %v5789 = vrot.slane %v5710, 2
      %v5790 = vrot.slane %v5711, 2
      %v5791 = vsel %vm1143, %v5789, %v5790
      %5800 = vrot.lane.b32.xlu0 %v5730, 16
      %v5801 = vpop.permute.xlu0 %5800
      %5802 = vrot.lane.b32.xlu0 %v5733, 16
      %v5803 = vpop.permute.xlu0 %5802
      %5804 = vrot.lane.b32.xlu0 %v5736, 16
      %v5805 = vpop.permute.xlu0 %5804
      %5806 = vrot.lane.b32.xlu0 %v5739, 16
      %v5807 = vpop.permute.xlu0 %5806
      %5808 = vrot.lane.b32.xlu0 %v5742, 16
      %v5809 = vpop.permute.xlu0 %5808
      %5810 = vrot.lane.b32.xlu0 %v5745, 16
      %v5811 = vpop.permute.xlu0 %5810
      %5812 = vrot.lane.b32.xlu0 %v5748, 16
      %v5813 = vpop.permute.xlu0 %5812
      %5814 = vrot.lane.b32.xlu0 %v5751, 16
      %v5815 = vpop.permute.xlu0 %5814
      %5824 = vrot.lane.b32.xlu0 %v5754, 32
      %v5825 = vpop.permute.xlu0 %5824
      %5826 = vrot.lane.b32.xlu0 %v5757, 32
      %v5827 = vpop.permute.xlu0 %5826
      %5828 = vrot.lane.b32.xlu0 %v5760, 32
      %v5829 = vpop.permute.xlu0 %5828
      %5830 = vrot.lane.b32.xlu0 %v5763, 32
      %v5831 = vpop.permute.xlu0 %5830
      %5832 = vrot.lane.b32.xlu0 %v5766, 32
      %v5833 = vpop.permute.xlu0 %5832
      %5834 = vrot.lane.b32.xlu0 %v5769, 32
      %v5835 = vpop.permute.xlu0 %5834
      %5836 = vrot.lane.b32.xlu0 %v5772, 32
      %v5837 = vpop.permute.xlu0 %5836
      %5838 = vrot.lane.b32.xlu0 %v5775, 32
      %v5839 = vpop.permute.xlu0 %5838
      %5848 = vrot.lane.b32.xlu0 %v5694, 48
      %v5849 = vpop.permute.xlu0 %5848
      %5850 = vrot.lane.b32.xlu0 %v5696, 48
      %v5851 = vpop.permute.xlu0 %5850
      %5852 = vrot.lane.b32.xlu0 %v5698, 48
      %v5853 = vpop.permute.xlu0 %5852
      %5854 = vrot.lane.b32.xlu0 %v5700, 48
      %v5855 = vpop.permute.xlu0 %5854
      %5856 = vrot.lane.b32.xlu0 %v5702, 48
      %v5857 = vpop.permute.xlu0 %5856
      %5858 = vrot.lane.b32.xlu0 %v5704, 48
      %v5859 = vpop.permute.xlu0 %5858
      %5860 = vrot.lane.b32.xlu0 %v5706, 48
      %v5861 = vpop.permute.xlu0 %5860
      %5862 = vrot.lane.b32.xlu0 %v5708, 48
      %v5863 = vpop.permute.xlu0 %5862
      %5872 = vrot.lane.b32.xlu0 %v5733, 64
      %v5873 = vpop.permute.xlu0 %5872
      %5874 = vrot.lane.b32.xlu0 %v5736, 64
      %v5875 = vpop.permute.xlu0 %5874
      %5876 = vrot.lane.b32.xlu0 %v5739, 64
      %v5877 = vpop.permute.xlu0 %5876
      %5878 = vrot.lane.b32.xlu0 %v5742, 64
      %v5879 = vpop.permute.xlu0 %5878
      %5880 = vrot.lane.b32.xlu0 %v5745, 64
      %v5881 = vpop.permute.xlu0 %5880
      %5882 = vrot.lane.b32.xlu0 %v5748, 64
      %v5883 = vpop.permute.xlu0 %5882
      %5884 = vrot.lane.b32.xlu0 %v5751, 64
      %v5885 = vpop.permute.xlu0 %5884
      %5886 = vrot.lane.b32.xlu0 %v5780, 64
      %v5887 = vpop.permute.xlu0 %5886
      %5896 = vrot.lane.b32.xlu0 %v5757, 80
      %v5897 = vpop.permute.xlu0 %5896
      %5898 = vrot.lane.b32.xlu0 %v5760, 80
      %v5899 = vpop.permute.xlu0 %5898
      %5900 = vrot.lane.b32.xlu0 %v5763, 80
      %v5901 = vpop.permute.xlu0 %5900
      %5902 = vrot.lane.b32.xlu0 %v5766, 80
      %v5903 = vpop.permute.xlu0 %5902
      %5904 = vrot.lane.b32.xlu0 %v5769, 80
      %v5905 = vpop.permute.xlu0 %5904
      %5906 = vrot.lane.b32.xlu0 %v5772, 80
      %v5907 = vpop.permute.xlu0 %5906
      %5908 = vrot.lane.b32.xlu0 %v5775, 80
      %v5909 = vpop.permute.xlu0 %5908
      %5910 = vrot.lane.b32.xlu0 %v5783, 80
      %v5911 = vpop.permute.xlu0 %5910
      %5920 = vrot.lane.b32.xlu0 %v5696, 96
      %v5921 = vpop.permute.xlu0 %5920
      %5922 = vrot.lane.b32.xlu0 %v5698, 96
      %v5923 = vpop.permute.xlu0 %5922
      %5924 = vrot.lane.b32.xlu0 %v5700, 96
      %v5925 = vpop.permute.xlu0 %5924
      %5926 = vrot.lane.b32.xlu0 %v5702, 96
      %v5927 = vpop.permute.xlu0 %5926
      %5928 = vrot.lane.b32.xlu0 %v5704, 96
      %v5929 = vpop.permute.xlu0 %5928
      %5930 = vrot.lane.b32.xlu0 %v5706, 96
      %v5931 = vpop.permute.xlu0 %5930
      %5932 = vrot.lane.b32.xlu0 %v5708, 96
      %v5933 = vpop.permute.xlu0 %5932
      %5934 = vrot.lane.b32.xlu0 %v5710, 96
      %v5935 = vpop.permute.xlu0 %5934
      %5944 = vrot.lane.b32.xlu0 %v5736, 112
      %v5945 = vpop.permute.xlu0 %5944
      %5946 = vrot.lane.b32.xlu0 %v5739, 112
      %v5947 = vpop.permute.xlu0 %5946
      %5948 = vrot.lane.b32.xlu0 %v5742, 112
      %v5949 = vpop.permute.xlu0 %5948
      %5950 = vrot.lane.b32.xlu0 %v5745, 112
      %v5951 = vpop.permute.xlu0 %5950
      %5952 = vrot.lane.b32.xlu0 %v5748, 112
      %v5953 = vpop.permute.xlu0 %5952
      %5954 = vrot.lane.b32.xlu0 %v5751, 112
      %v5955 = vpop.permute.xlu0 %5954
      %5956 = vrot.lane.b32.xlu0 %v5780, 112
      %v5957 = vpop.permute.xlu0 %5956
      %5958 = vrot.lane.b32.xlu0 %v5788, 112
      %v5959 = vpop.permute.xlu0 %5958
      %v5968 = vsel %vm772, %v5692, %v5801
      %v5969 = vsel %vm772, %v5694, %v5803
      %v5970 = vsel %vm772, %v5696, %v5805
      %v5971 = vsel %vm772, %v5698, %v5807
      %v5972 = vsel %vm772, %v5700, %v5809
      %v5973 = vsel %vm772, %v5702, %v5811
      %v5974 = vsel %vm772, %v5704, %v5813
      %v5975 = vsel %vm772, %v5706, %v5815
      %v5976 = vsel %vm4589, %v5968, %v5825
      %v5977 = vsel %vm4589, %v5969, %v5827
      %v5978 = vsel %vm4589, %v5970, %v5829
      %v5979 = vsel %vm4589, %v5971, %v5831
      %v5980 = vsel %vm4589, %v5972, %v5833
      %v5981 = vsel %vm4589, %v5973, %v5835
      %v5982 = vsel %vm4589, %v5974, %v5837
      %v5983 = vsel %vm4589, %v5975, %v5839
      %v5984 = vsel %vm4607, %v5976, %v5849
      %v5985 = vsel %vm4607, %v5977, %v5851
      %v5986 = vsel %vm4607, %v5978, %v5853
      %v5987 = vsel %vm4607, %v5979, %v5855
      %v5988 = vsel %vm4607, %v5980, %v5857
      %v5989 = vsel %vm4607, %v5981, %v5859
      %v5990 = vsel %vm4607, %v5982, %v5861
      %v5991 = vsel %vm4607, %v5983, %v5863
      %v5992 = vsel %vm4625, %v5984, %v5873
      %v5993 = vsel %vm4625, %v5985, %v5875
      %v5994 = vsel %vm4625, %v5986, %v5877
      %v5995 = vsel %vm4625, %v5987, %v5879
      %v5996 = vsel %vm4625, %v5988, %v5881
      %v5997 = vsel %vm4625, %v5989, %v5883
      %v5998 = vsel %vm4625, %v5990, %v5885
      %v5999 = vsel %vm4625, %v5991, %v5887
      %v6000 = vsel %vm5342, %v5992, %v5897
      %v6001 = vsel %vm5342, %v5993, %v5899
      %v6002 = vsel %vm5342, %v5994, %v5901
      %v6003 = vsel %vm5342, %v5995, %v5903
      %v6004 = vsel %vm5342, %v5996, %v5905
      %v6005 = vsel %vm5342, %v5997, %v5907
      %v6006 = vsel %vm5342, %v5998, %v5909
      %v6007 = vsel %vm5342, %v5999, %v5911
      %v6008 = vsel %vm5345, %v6000, %v5921
      %v6009 = vsel %vm5345, %v6001, %v5923
      %v6010 = vsel %vm5345, %v6002, %v5925
      %v6011 = vsel %vm5345, %v6003, %v5927
      %v6012 = vsel %vm5345, %v6004, %v5929
      %v6013 = vsel %vm5345, %v6005, %v5931
      %v6014 = vsel %vm5345, %v6006, %v5933
      %v6015 = vsel %vm5345, %v6007, %v5935
      %v6016 = vsel %vm5348, %v6008, %v5945
      %v6017 = vsel %vm5348, %v6009, %v5947
      %v6018 = vsel %vm5348, %v6010, %v5949
      %v6019 = vsel %vm5348, %v6011, %v5951
      %v6020 = vsel %vm5348, %v6012, %v5953
      %v6021 = vsel %vm5348, %v6013, %v5955
      %v6022 = vsel %vm5348, %v6014, %v5957
      %v6023 = vsel %vm5348, %v6015, %v5959
      %v6024 = vpack.c.bf16 %v6017, %v6016
      %v6025 = vpack.c.bf16 %v5763, %v5760
      %v6026 = vpack.c.bf16 %v6019, %v6018
      %v6027 = vpack.c.bf16 %v5769, %v5766
      %v6028 = vpack.c.bf16 %v6021, %v6020
      %v6029 = vpack.c.bf16 %v5775, %v5772
      %v6030 = vpack.c.bf16 %v6023, %v6022
      %v6031 = vpack.c.bf16 %v5791, %v5783
      %v6032 = vld [vmem:[%s9] sm:$0xf]
      %v6033 = vld [vmem:[%s9 + $0x4] sm:$0xf]
      %v6034 = vld [vmem:[%s9 + $0x8] sm:$0xf]
      %v6035 = vld [vmem:[%s9 + $0xc] sm:$0xf]
      %v6036 = vld [vmem:[%s9 + $0x10] sm:$0xf]
      %v6037 = vld [vmem:[%s9 + $0x14] sm:$0xf]
      %v6038 = vld [vmem:[%s9 + $0x18] sm:$0xf]
      %v6039 = vld [vmem:[%s9 + $0x1c] sm:$0xf]
      %v6040 = vld [vmem:[%s9 + $0x20] sm:$0xf]
      %v6041 = vld [vmem:[%s9 + $0x24] sm:$0xf]
      %v6042 = vld [vmem:[%s9 + $0x28] sm:$0xf]
      %v6043 = vld [vmem:[%s9 + $0x2c] sm:$0xf]
      %v6044 = vld [vmem:[%s9 + $0x30] sm:$0xf]
      %v6045 = vld [vmem:[%s9 + $0x34] sm:$0xf]
      %v6046 = vld [vmem:[%s9 + $0x38] sm:$0xf]
      %v6047 = vld [vmem:[%s9 + $0x3c] sm:$0xf]
      %v6048 = vld [vmem:[%s9 + $0x40] sm:$0xf]
      %v6049 = vld [vmem:[%s9 + $0x44] sm:$0xf]
      %v6050 = vld [vmem:[#allocation5] sm:$0xff]
      %v6051 = vld [vmem:[#allocation5 + $0x8] sm:$0x3]
      %v6052 = vld [vmem:[#allocation5 + $0x10] sm:$0xff]
      %v6053 = vld [vmem:[#allocation5 + $0x18] sm:$0x3]
      %v6054 = vld [vmem:[#allocation5 + $0x20] sm:$0xff]
      %v6055 = vld [vmem:[#allocation5 + $0x28] sm:$0x3]
      %v6056 = vld [vmem:[#allocation5 + $0x30] sm:$0xff]
      %v6057 = vld [vmem:[#allocation5 + $0x38] sm:$0x3]
      %v6058 = vld [vmem:[#allocation5 + $0x40] sm:$0xff]
      %v6059 = vld [vmem:[#allocation5 + $0x48] sm:$0x3]
      %v6060 = vld [vmem:[#allocation5 + $0x50] sm:$0xff]
      %v6061 = vld [vmem:[#allocation5 + $0x58] sm:$0x3]
      %v6062 = vld [vmem:[#allocation5 + $0x60] sm:$0xff]
      %v6063 = vld [vmem:[#allocation5 + $0x68] sm:$0x3]
      %v6064 = vld [vmem:[#allocation5 + $0x70] sm:$0xff]
      %v6065 = vld [vmem:[#allocation5 + $0x78] sm:$0x3]
      %v6066 = vld [vmem:[#allocation5 + $0x80] sm:$0xff]
      %v6067 = vld [vmem:[#allocation5 + $0x88] sm:$0x3]
      %v6068 = vld [vmem:[#allocation5 + $0x90] sm:$0xff]
      %v6069 = vld [vmem:[#allocation5 + $0x98] sm:$0x3]
      %v6086 = vrot.slane %v6050, 1
      %v6087 = vrot.slane %v6051, 1
      %v6088 = vsel %vm1062, %v6086, %v6087
      %v6089 = vrot.slane %v6052, 1
      %v6090 = vrot.slane %v6053, 1
      %v6091 = vsel %vm1062, %v6089, %v6090
      %v6092 = vrot.slane %v6054, 1
      %v6093 = vrot.slane %v6055, 1
      %v6094 = vsel %vm1062, %v6092, %v6093
      %v6095 = vrot.slane %v6056, 1
      %v6096 = vrot.slane %v6057, 1
      %v6097 = vsel %vm1062, %v6095, %v6096
      %v6098 = vrot.slane %v6058, 1
      %v6099 = vrot.slane %v6059, 1
      %v6100 = vsel %vm1062, %v6098, %v6099
      %v6101 = vrot.slane %v6060, 1
      %v6102 = vrot.slane %v6061, 1
      %v6103 = vsel %vm1062, %v6101, %v6102
      %v6104 = vrot.slane %v6062, 1
      %v6105 = vrot.slane %v6063, 1
      %v6106 = vsel %vm1062, %v6104, %v6105
      %v6107 = vrot.slane %v6064, 1
      %v6108 = vrot.slane %v6065, 1
      %v6109 = vsel %vm1062, %v6107, %v6108
      %v6110 = vrot.slane %v6050, 2
      %v6111 = vrot.slane %v6051, 2
      %v6112 = vsel %vm1143, %v6110, %v6111
      %v6113 = vrot.slane %v6052, 2
      %v6114 = vrot.slane %v6053, 2
      %v6115 = vsel %vm1143, %v6113, %v6114
      %v6116 = vrot.slane %v6054, 2
      %v6117 = vrot.slane %v6055, 2
      %v6118 = vsel %vm1143, %v6116, %v6117
      %v6119 = vrot.slane %v6056, 2
      %v6120 = vrot.slane %v6057, 2
      %v6121 = vsel %vm1143, %v6119, %v6120
      %v6122 = vrot.slane %v6058, 2
      %v6123 = vrot.slane %v6059, 2
      %v6124 = vsel %vm1143, %v6122, %v6123
      %v6125 = vrot.slane %v6060, 2
      %v6126 = vrot.slane %v6061, 2
      %v6127 = vsel %vm1143, %v6125, %v6126
      %v6128 = vrot.slane %v6062, 2
      %v6129 = vrot.slane %v6063, 2
      %v6130 = vsel %vm1143, %v6128, %v6129
      %v6131 = vrot.slane %v6064, 2
      %v6132 = vrot.slane %v6065, 2
      %v6133 = vsel %vm1143, %v6131, %v6132
      %v6136 = vrot.slane %v6066, 1
      %v6137 = vrot.slane %v6067, 1
      %v6138 = vsel %vm1062, %v6136, %v6137
      %v6139 = vrot.slane %v6066, 2
      %v6140 = vrot.slane %v6067, 2
      %v6141 = vsel %vm1143, %v6139, %v6140
      %v6144 = vrot.slane %v6068, 1
      %v6145 = vrot.slane %v6069, 1
      %v6146 = vsel %vm1062, %v6144, %v6145
      %v6147 = vrot.slane %v6068, 2
      %v6148 = vrot.slane %v6069, 2
      %v6149 = vsel %vm1143, %v6147, %v6148
      %6158 = vrot.lane.b32.xlu0 %v6088, 16
      %v6159 = vpop.permute.xlu0 %6158
      %6160 = vrot.lane.b32.xlu0 %v6091, 16
      %v6161 = vpop.permute.xlu0 %6160
      %6162 = vrot.lane.b32.xlu0 %v6094, 16
      %v6163 = vpop.permute.xlu0 %6162
      %6164 = vrot.lane.b32.xlu0 %v6097, 16
      %v6165 = vpop.permute.xlu0 %6164
      %6166 = vrot.lane.b32.xlu0 %v6100, 16
      %v6167 = vpop.permute.xlu0 %6166
      %6168 = vrot.lane.b32.xlu0 %v6103, 16
      %v6169 = vpop.permute.xlu0 %6168
      %6170 = vrot.lane.b32.xlu0 %v6106, 16
      %v6171 = vpop.permute.xlu0 %6170
      %6172 = vrot.lane.b32.xlu0 %v6109, 16
      %v6173 = vpop.permute.xlu0 %6172
      %6182 = vrot.lane.b32.xlu0 %v6112, 32
      %v6183 = vpop.permute.xlu0 %6182
      %6184 = vrot.lane.b32.xlu0 %v6115, 32
      %v6185 = vpop.permute.xlu0 %6184
      %6186 = vrot.lane.b32.xlu0 %v6118, 32
      %v6187 = vpop.permute.xlu0 %6186
      %6188 = vrot.lane.b32.xlu0 %v6121, 32
      %v6189 = vpop.permute.xlu0 %6188
      %6190 = vrot.lane.b32.xlu0 %v6124, 32
      %v6191 = vpop.permute.xlu0 %6190
      %6192 = vrot.lane.b32.xlu0 %v6127, 32
      %v6193 = vpop.permute.xlu0 %6192
      %6194 = vrot.lane.b32.xlu0 %v6130, 32
      %v6195 = vpop.permute.xlu0 %6194
      %6196 = vrot.lane.b32.xlu0 %v6133, 32
      %v6197 = vpop.permute.xlu0 %6196
      %6206 = vrot.lane.b32.xlu0 %v6052, 48
      %v6207 = vpop.permute.xlu0 %6206
      %6208 = vrot.lane.b32.xlu0 %v6054, 48
      %v6209 = vpop.permute.xlu0 %6208
      %6210 = vrot.lane.b32.xlu0 %v6056, 48
      %v6211 = vpop.permute.xlu0 %6210
      %6212 = vrot.lane.b32.xlu0 %v6058, 48
      %v6213 = vpop.permute.xlu0 %6212
      %6214 = vrot.lane.b32.xlu0 %v6060, 48
      %v6215 = vpop.permute.xlu0 %6214
      %6216 = vrot.lane.b32.xlu0 %v6062, 48
      %v6217 = vpop.permute.xlu0 %6216
      %6218 = vrot.lane.b32.xlu0 %v6064, 48
      %v6219 = vpop.permute.xlu0 %6218
      %6220 = vrot.lane.b32.xlu0 %v6066, 48
      %v6221 = vpop.permute.xlu0 %6220
      %6230 = vrot.lane.b32.xlu0 %v6091, 64
      %v6231 = vpop.permute.xlu0 %6230
      %6232 = vrot.lane.b32.xlu0 %v6094, 64
      %v6233 = vpop.permute.xlu0 %6232
      %6234 = vrot.lane.b32.xlu0 %v6097, 64
      %v6235 = vpop.permute.xlu0 %6234
      %6236 = vrot.lane.b32.xlu0 %v6100, 64
      %v6237 = vpop.permute.xlu0 %6236
      %6238 = vrot.lane.b32.xlu0 %v6103, 64
      %v6239 = vpop.permute.xlu0 %6238
      %6240 = vrot.lane.b32.xlu0 %v6106, 64
      %v6241 = vpop.permute.xlu0 %6240
      %6242 = vrot.lane.b32.xlu0 %v6109, 64
      %v6243 = vpop.permute.xlu0 %6242
      %6244 = vrot.lane.b32.xlu0 %v6138, 64
      %v6245 = vpop.permute.xlu0 %6244
      %6254 = vrot.lane.b32.xlu0 %v6115, 80
      %v6255 = vpop.permute.xlu0 %6254
      %6256 = vrot.lane.b32.xlu0 %v6118, 80
      %v6257 = vpop.permute.xlu0 %6256
      %6258 = vrot.lane.b32.xlu0 %v6121, 80
      %v6259 = vpop.permute.xlu0 %6258
      %6260 = vrot.lane.b32.xlu0 %v6124, 80
      %v6261 = vpop.permute.xlu0 %6260
      %6262 = vrot.lane.b32.xlu0 %v6127, 80
      %v6263 = vpop.permute.xlu0 %6262
      %6264 = vrot.lane.b32.xlu0 %v6130, 80
      %v6265 = vpop.permute.xlu0 %6264
      %6266 = vrot.lane.b32.xlu0 %v6133, 80
      %v6267 = vpop.permute.xlu0 %6266
      %6268 = vrot.lane.b32.xlu0 %v6141, 80
      %v6269 = vpop.permute.xlu0 %6268
      %6278 = vrot.lane.b32.xlu0 %v6054, 96
      %v6279 = vpop.permute.xlu0 %6278
      %6280 = vrot.lane.b32.xlu0 %v6056, 96
      %v6281 = vpop.permute.xlu0 %6280
      %6282 = vrot.lane.b32.xlu0 %v6058, 96
      %v6283 = vpop.permute.xlu0 %6282
      %6284 = vrot.lane.b32.xlu0 %v6060, 96
      %v6285 = vpop.permute.xlu0 %6284
      %6286 = vrot.lane.b32.xlu0 %v6062, 96
      %v6287 = vpop.permute.xlu0 %6286
      %6288 = vrot.lane.b32.xlu0 %v6064, 96
      %v6289 = vpop.permute.xlu0 %6288
      %6290 = vrot.lane.b32.xlu0 %v6066, 96
      %v6291 = vpop.permute.xlu0 %6290
      %6292 = vrot.lane.b32.xlu0 %v6068, 96
      %v6293 = vpop.permute.xlu0 %6292
      %6302 = vrot.lane.b32.xlu0 %v6094, 112
      %v6303 = vpop.permute.xlu0 %6302
      %6304 = vrot.lane.b32.xlu0 %v6097, 112
      %v6305 = vpop.permute.xlu0 %6304
      %6306 = vrot.lane.b32.xlu0 %v6100, 112
      %v6307 = vpop.permute.xlu0 %6306
      %6308 = vrot.lane.b32.xlu0 %v6103, 112
      %v6309 = vpop.permute.xlu0 %6308
      %6310 = vrot.lane.b32.xlu0 %v6106, 112
      %v6311 = vpop.permute.xlu0 %6310
      %6312 = vrot.lane.b32.xlu0 %v6109, 112
      %v6313 = vpop.permute.xlu0 %6312
      %6314 = vrot.lane.b32.xlu0 %v6138, 112
      %v6315 = vpop.permute.xlu0 %6314
      %6316 = vrot.lane.b32.xlu0 %v6146, 112
      %v6317 = vpop.permute.xlu0 %6316
      %v6326 = vsel %vm772, %v6050, %v6159
      %v6327 = vsel %vm772, %v6052, %v6161
      %v6328 = vsel %vm772, %v6054, %v6163
      %v6329 = vsel %vm772, %v6056, %v6165
      %v6330 = vsel %vm772, %v6058, %v6167
      %v6331 = vsel %vm772, %v6060, %v6169
      %v6332 = vsel %vm772, %v6062, %v6171
      %v6333 = vsel %vm772, %v6064, %v6173
      %v6334 = vsel %vm4589, %v6326, %v6183
      %v6335 = vsel %vm4589, %v6327, %v6185
      %v6336 = vsel %vm4589, %v6328, %v6187
      %v6337 = vsel %vm4589, %v6329, %v6189
      %v6338 = vsel %vm4589, %v6330, %v6191
      %v6339 = vsel %vm4589, %v6331, %v6193
      %v6340 = vsel %vm4589, %v6332, %v6195
      %v6341 = vsel %vm4589, %v6333, %v6197
      %v6342 = vsel %vm4607, %v6334, %v6207
      %v6343 = vsel %vm4607, %v6335, %v6209
      %v6344 = vsel %vm4607, %v6336, %v6211
      %v6345 = vsel %vm4607, %v6337, %v6213
      %v6346 = vsel %vm4607, %v6338, %v6215
      %v6347 = vsel %vm4607, %v6339, %v6217
      %v6348 = vsel %vm4607, %v6340, %v6219
      %v6349 = vsel %vm4607, %v6341, %v6221
      %v6350 = vsel %vm4625, %v6342, %v6231
      %v6351 = vsel %vm4625, %v6343, %v6233
      %v6352 = vsel %vm4625, %v6344, %v6235
      %v6353 = vsel %vm4625, %v6345, %v6237
      %v6354 = vsel %vm4625, %v6346, %v6239
      %v6355 = vsel %vm4625, %v6347, %v6241
      %v6356 = vsel %vm4625, %v6348, %v6243
      %v6357 = vsel %vm4625, %v6349, %v6245
      %v6358 = vsel %vm5342, %v6350, %v6255
      %v6359 = vsel %vm5342, %v6351, %v6257
      %v6360 = vsel %vm5342, %v6352, %v6259
      %v6361 = vsel %vm5342, %v6353, %v6261
      %v6362 = vsel %vm5342, %v6354, %v6263
      %v6363 = vsel %vm5342, %v6355, %v6265
      %v6364 = vsel %vm5342, %v6356, %v6267
      %v6365 = vsel %vm5342, %v6357, %v6269
      %v6366 = vsel %vm5345, %v6358, %v6279
      %v6367 = vsel %vm5345, %v6359, %v6281
      %v6368 = vsel %vm5345, %v6360, %v6283
      %v6369 = vsel %vm5345, %v6361, %v6285
      %v6370 = vsel %vm5345, %v6362, %v6287
      %v6371 = vsel %vm5345, %v6363, %v6289
      %v6372 = vsel %vm5345, %v6364, %v6291
      %v6373 = vsel %vm5345, %v6365, %v6293
      %v6374 = vsel %vm5348, %v6366, %v6303
      %v6375 = vsel %vm5348, %v6367, %v6305
      %v6376 = vsel %vm5348, %v6368, %v6307
      %v6377 = vsel %vm5348, %v6369, %v6309
      %v6378 = vsel %vm5348, %v6370, %v6311
      %v6379 = vsel %vm5348, %v6371, %v6313
      %v6380 = vsel %vm5348, %v6372, %v6315
      %v6381 = vsel %vm5348, %v6373, %v6317
      %v6382 = vpack.c.bf16 %v6375, %v6374
      %v6383 = vpack.c.bf16 %v6121, %v6118
      %v6384 = vpack.c.bf16 %v6377, %v6376
      %v6385 = vpack.c.bf16 %v6127, %v6124
      %v6386 = vpack.c.bf16 %v6379, %v6378
      %v6387 = vpack.c.bf16 %v6133, %v6130
      %v6388 = vpack.c.bf16 %v6381, %v6380
      %v6389 = vpack.c.bf16 %v6149, %v6141
      %v6390 = vld [vmem:[%s10] sm:$0xf]
      %v6391 = vld [vmem:[%s10 + $0x4] sm:$0xf]
      %v6392 = vld [vmem:[%s10 + $0x8] sm:$0xf]
      %v6393 = vld [vmem:[%s10 + $0xc] sm:$0xf]
      %v6394 = vld [vmem:[%s10 + $0x10] sm:$0xf]
      %v6395 = vld [vmem:[%s10 + $0x14] sm:$0xf]
      %v6396 = vld [vmem:[%s10 + $0x18] sm:$0xf]
      %v6397 = vld [vmem:[%s10 + $0x1c] sm:$0xf]
      %v6398 = vld [vmem:[%s10 + $0x20] sm:$0xf]
      %v6399 = vld [vmem:[%s10 + $0x24] sm:$0xf]
      %v6400 = vld [vmem:[%s10 + $0x28] sm:$0xf]
      %v6401 = vld [vmem:[%s10 + $0x2c] sm:$0xf]
      %v6402 = vld [vmem:[%s10 + $0x30] sm:$0xf]
      %v6403 = vld [vmem:[%s10 + $0x34] sm:$0xf]
      %v6404 = vld [vmem:[%s10 + $0x38] sm:$0xf]
      %v6405 = vld [vmem:[%s10 + $0x3c] sm:$0xf]
      %v6406 = vld [vmem:[%s10 + $0x40] sm:$0xf]
      %v6407 = vld [vmem:[%s10 + $0x44] sm:$0xf]
      %v6426 = vunpack.c.l.b16 %v6390
      %v6427 = vunpack.c.l.b16 %v6391
      %v6428 = vunpack.c.l.b16 %v6392
      %v6429 = vunpack.c.l.b16 %v6393
      %v6430 = vunpack.c.l.b16 %v6394
      %v6431 = vunpack.c.l.b16 %v6395
      %v6432 = vunpack.c.l.b16 %v6396
      %v6433 = vunpack.c.l.b16 %v6397
      %v6434 = vunpack.c.l.b16 %v6398
      %v6435 = vunpack.c.l.b16 %v6399
      %v6436 = vunpack.c.l.b16 %v6400
      %v6437 = vunpack.c.l.b16 %v6401
      %v6438 = vunpack.c.l.b16 %v6402
      %v6439 = vunpack.c.l.b16 %v6403
      %v6440 = vunpack.c.l.b16 %v6404
      %v6441 = vunpack.c.l.b16 %v6405
      %v6442 = vunpack.c.l.b16 %v6406
      %v6443 = vunpack.c.l.b16 %v6407
      %v6444 = vpack.c.b16 %v6427, %v6426
      %v6445 = vpack.c.b16 %v6429, %v6428
      %v6446 = vpack.c.b16 %v6431, %v6430
      %v6447 = vpack.c.b16 %v6433, %v6432
      %v6448 = vpack.c.b16 %v6435, %v6434
      %v6449 = vpack.c.b16 %v6437, %v6436
      %v6450 = vpack.c.b16 %v6439, %v6438
      %v6451 = vpack.c.b16 %v6441, %v6440
      %v6452 = vpack.c.b16 %v6443, %v6442
      %v6463 = vsel %vm772, %v6383, 0
      %v6466 = vsel %vm772, %v6385, 0
      %v6469 = vsel %vm772, %v6387, 0
      %v6472 = vsel %vm772, %v6389, 0
      %6474 = vmatprep.subr.bf16.mxu0 0
      %6475 = vmatpush1.bf16.msra.mxu0 %v6444
      %6476 = vmatprep.subr.bf16.mxu0 0
      %6477 = vmatpush1.bf16.msra.mxu0 %v6445
      %6478 = vmatprep.subr.bf16.mxu0 0
      %6479 = vmatpush1.bf16.msra.mxu0 %v6446
      %6480 = vmatprep.subr.bf16.mxu0 0
      %6481 = vmatpush1.bf16.msra.mxu0 %v6447
      %6482 = vmatprep.subr.bf16.mxu0 0
      %6483 = vmatpush1.bf16.msra.mxu0 %v6448
      %6484 = vmatprep.subr.bf16.mxu0 0
      %6485 = vmatpush1.bf16.msra.mxu0 %v6449
      %6486 = vmatprep.subr.bf16.mxu0 0
      %6487 = vmatpush1.bf16.msra.mxu0 %v6450
      %6488 = vmatprep.subr.bf16.mxu0 0
      %6489 = vmatpush1.bf16.msra.mxu0 %v6451
      %6490 = vmatprep.subr.bf16.mxu0 0
      %6491 = vmatpush1.bf16.msra.mxu0 %v6452
      %6492 = vmatprep.subr.bf16.mxu0 0
      %6493 = vmatpush1.bf16.msra.mxu0 0
      %6494 = vmatprep.subr.bf16.mxu0 0
      %6495 = vmatpush1.bf16.msra.mxu0 0
      %6496 = vmatprep.subr.bf16.mxu0 0
      %6497 = vmatpush1.bf16.msra.mxu0 0
      %6498 = vmatprep.subr.bf16.mxu0 0
      %6499 = vmatpush1.bf16.msra.mxu0 0
      %6500 = vmatprep.subr.bf16.mxu0 0
      %6501 = vmatpush1.bf16.msra.mxu0 0
      %6502 = vmatprep.subr.bf16.mxu0 0
      %6503 = vmatpush1.bf16.msra.mxu0 0
      %6504 = vmatprep.subr.bf16.mxu0 0
      %6505 = vmatpush1.bf16.msra.mxu0 0
      %6506 = vmatprep.mubr.bf16.mxu0 %v6463
      %6507 = vmatmul.mubr.bf16.gmra.mrb[0].mxu0 %v6382
      %v6508 = vpop.f32.mrb[0].mxu0
      %v6509 = vadd.f32 0.0, %v6508
      %v6510 = vpop.f32.mrb[0].mxu0
      %v6511 = vpop.f32.mrb[0].mxu0
      %v6512 = vadd.f32 0.0, %v6511
      %v6513 = vpop.f32.mrb[0].mxu0
      %6514 = vmatprep.mubr.bf16.mxu0 %v6466
      %6515 = vmatmul.mubr.bf16.gmra.mrb[0].mxu0 %v6384
      %v6516 = vpop.f32.mrb[0].mxu0
      %v6517 = vadd.f32 0.0, %v6516
      %v6518 = vpop.f32.mrb[0].mxu0
      %v6519 = vpop.f32.mrb[0].mxu0
      %v6520 = vadd.f32 0.0, %v6519
      %v6521 = vpop.f32.mrb[0].mxu0
      %6522 = vmatprep.mubr.bf16.mxu0 %v6469
      %6523 = vmatmul.mubr.bf16.gmra.mrb[0].mxu0 %v6386
      %v6524 = vpop.f32.mrb[0].mxu0
      %v6525 = vadd.f32 0.0, %v6524
      %v6526 = vpop.f32.mrb[0].mxu0
      %v6527 = vpop.f32.mrb[0].mxu0
      %v6528 = vadd.f32 0.0, %v6527
      %v6529 = vpop.f32.mrb[0].mxu0
      %6530 = vmatprep.mubr.bf16.mxu0 %v6472
      %6531 = vmatmul.mubr.bf16.gmra.mrb[0].mxu0 %v6388
      %v6532 = vpop.f32.mrb[0].mxu0
      %v6533 = vadd.f32 0.0, %v6532
      %v6534 = vpop.f32.mrb[0].mxu0
      %v6535 = vpop.f32.mrb[0].mxu0
      %v6536 = vadd.f32 0.0, %v6535
      %v6537 = vpop.f32.mrb[0].mxu0
      %6538 = vdwg.mxu0
      %v6557 = vunpack.c.l.b16 %v6032
      %v6558 = vunpack.c.l.b16 %v6033
      %v6559 = vunpack.c.l.b16 %v6034
      %v6560 = vunpack.c.l.b16 %v6035
      %v6561 = vunpack.c.l.b16 %v6036
      %v6562 = vunpack.c.l.b16 %v6037
      %v6563 = vunpack.c.l.b16 %v6038
      %v6564 = vunpack.c.l.b16 %v6039
      %v6565 = vunpack.c.l.b16 %v6040
      %v6566 = vunpack.c.l.b16 %v6041
      %v6567 = vunpack.c.l.b16 %v6042
      %v6568 = vunpack.c.l.b16 %v6043
      %v6569 = vunpack.c.l.b16 %v6044
      %v6570 = vunpack.c.l.b16 %v6045
      %v6571 = vunpack.c.l.b16 %v6046
      %v6572 = vunpack.c.l.b16 %v6047
      %v6573 = vunpack.c.l.b16 %v6048
      %v6574 = vunpack.c.l.b16 %v6049
      %v6575 = vpack.c.b16 %v6558, %v6557
      %v6576 = vpack.c.b16 %v6560, %v6559
      %v6577 = vpack.c.b16 %v6562, %v6561
      %v6578 = vpack.c.b16 %v6564, %v6563
      %v6579 = vpack.c.b16 %v6566, %v6565
      %v6580 = vpack.c.b16 %v6568, %v6567
      %v6581 = vpack.c.b16 %v6570, %v6569
      %v6582 = vpack.c.b16 %v6572, %v6571
      %v6583 = vpack.c.b16 %v6574, %v6573
      %v6594 = vsel %vm772, %v6025, 0
      %v6597 = vsel %vm772, %v6027, 0
      %v6600 = vsel %vm772, %v6029, 0
      %v6603 = vsel %vm772, %v6031, 0
      %6605 = vmatprep.subr.bf16.mxu0 0
      %6606 = vmatpush1.bf16.msra.mxu0 %v6575
      %6607 = vmatprep.subr.bf16.mxu0 0
      %6608 = vmatpush1.bf16.msra.mxu0 %v6576
      %6609 = vmatprep.subr.bf16.mxu0 0
      %6610 = vmatpush1.bf16.msra.mxu0 %v6577
      %6611 = vmatprep.subr.bf16.mxu0 0
      %6612 = vmatpush1.bf16.msra.mxu0 %v6578
      %6613 = vmatprep.subr.bf16.mxu0 0
      %6614 = vmatpush1.bf16.msra.mxu0 %v6579
      %6615 = vmatprep.subr.bf16.mxu0 0
      %6616 = vmatpush1.bf16.msra.mxu0 %v6580
      %6617 = vmatprep.subr.bf16.mxu0 0
      %6618 = vmatpush1.bf16.msra.mxu0 %v6581
      %6619 = vmatprep.subr.bf16.mxu0 0
      %6620 = vmatpush1.bf16.msra.mxu0 %v6582
      %6621 = vmatprep.subr.bf16.mxu0 0
      %6622 = vmatpush1.bf16.msra.mxu0 %v6583
      %6623 = vmatprep.subr.bf16.mxu0 0
      %6624 = vmatpush1.bf16.msra.mxu0 0
      %6625 = vmatprep.subr.bf16.mxu0 0
      %6626 = vmatpush1.bf16.msra.mxu0 0
      %6627 = vmatprep.subr.bf16.mxu0 0
      %6628 = vmatpush1.bf16.msra.mxu0 0
      %6629 = vmatprep.subr.bf16.mxu0 0
      %6630 = vmatpush1.bf16.msra.mxu0 0
      %6631 = vmatprep.subr.bf16.mxu0 0
      %6632 = vmatpush1.bf16.msra.mxu0 0
      %6633 = vmatprep.subr.bf16.mxu0 0
      %6634 = vmatpush1.bf16.msra.mxu0 0
      %6635 = vmatprep.subr.bf16.mxu0 0
      %6636 = vmatpush1.bf16.msra.mxu0 0
      %6637 = vmatprep.mubr.bf16.mxu0 %v6594
      %6638 = vmatmul.mubr.bf16.gmra.mrb[0].mxu0 %v6024
      %v6639 = vpop.f32.mrb[0].mxu0
      %v6640 = vadd.f32 %v6509, %v6639
      %v6641 = vpop.f32.mrb[0].mxu0
      %v6642 = vpop.f32.mrb[0].mxu0
      %v6643 = vadd.f32 %v6512, %v6642
      %v6644 = vpop.f32.mrb[0].mxu0
      %6645 = vmatprep.mubr.bf16.mxu0 %v6597
      %6646 = vmatmul.mubr.bf16.gmra.mrb[0].mxu0 %v6026
      %v6647 = vpop.f32.mrb[0].mxu0
      %v6648 = vadd.f32 %v6517, %v6647
      %v6649 = vpop.f32.mrb[0].mxu0
      %v6650 = vpop.f32.mrb[0].mxu0
      %v6651 = vadd.f32 %v6520, %v6650
      %v6652 = vpop.f32.mrb[0].mxu0
      %6653 = vmatprep.mubr.bf16.mxu0 %v6600
      %6654 = vmatmul.mubr.bf16.gmra.mrb[0].mxu0 %v6028
      %v6655 = vpop.f32.mrb[0].mxu0
      %v6656 = vadd.f32 %v6525, %v6655
      %v6657 = vpop.f32.mrb[0].mxu0
      %v6658 = vpop.f32.mrb[0].mxu0
      %v6659 = vadd.f32 %v6528, %v6658
      %v6660 = vpop.f32.mrb[0].mxu0
      %6661 = vmatprep.mubr.bf16.mxu0 %v6603
      %6662 = vmatmul.mubr.bf16.gmra.mrb[0].mxu0 %v6030
      %v6663 = vpop.f32.mrb[0].mxu0
      %v6664 = vadd.f32 %v6533, %v6663
      %v6665 = vpop.f32.mrb[0].mxu0
      %v6666 = vpop.f32.mrb[0].mxu0
      %v6667 = vadd.f32 %v6536, %v6666
      %v6668 = vpop.f32.mrb[0].mxu0
      %6669 = vdwg.mxu0
      %v6670 = vld [vmem:[%s11] sm:$0x1]
      %v6672 = vlaneseq
      %v6673 = vshrl.u32 %v6672, 7
      %v6674 = vsub.s32 0, %v6673
      %v6675 = vrot.slane %v6670, %v6674
      %v6677 = vadd.f32 %v6640, %v6675
      %v6678 = vadd.f32 %v6643, %v6675
      %v6679 = vadd.f32 %v6648, %v6675
      %v6680 = vadd.f32 %v6651, %v6675
      %v6681 = vadd.f32 %v6656, %v6675
      %v6682 = vadd.f32 %v6659, %v6675
      %v6683 = vadd.f32 %v6664, %v6675
      %v6684 = vadd.f32 %v6667, %v6675
      %v6685 = vmax.f32 %v6677, 0.0
      %v6686 = vmax.f32 %v6678, 0.0
      %v6687 = vmax.f32 %v6679, 0.0
      %v6688 = vmax.f32 %v6680, 0.0
      %v6689 = vmax.f32 %v6681, 0.0
      %v6690 = vmax.f32 %v6682, 0.0
      %v6691 = vmax.f32 %v6683, 0.0
      %v6692 = vmax.f32 %v6684, 0.0
      %v6693 = vpack.c.bf16 %v6686, %v6685
      %v6694 = vpack.c.bf16 %v6688, %v6687
      %v6695 = vpack.c.bf16 %v6690, %v6689
      %v6696 = vpack.c.bf16 %v6692, %v6691
      %v6697 = vld [vmem:[%s13] sm:$0xf]
      %v6698 = vld [vmem:[%s13 + $0x4] sm:$0xf]
      %v6699 = vld [vmem:[%s14] sm:$0x1]
      %v6701 = vlaneseq
      %v6702 = vshrl.u32 %v6701, 7
      %v6703 = vsub.s32 0, %v6702
      %v6704 = vrot.slane %v6699, %v6703
      %v6708 = vunpack.c.l.b16 %v6697
      %v6709 = vunpack.c.l.b16 %v6698
      %v6710 = vpack.c.b16 %v6709, %v6708
      %v6713 = vsel %vm772, %v6693, 0
      %v6716 = vsel %vm772, %v6694, 0
      %v6719 = vsel %vm772, %v6695, 0
      %v6722 = vsel %vm772, %v6696, 0
      %6724 = vmatprep.subr.bf16.mxu0 0
      %6725 = vmatpush1.bf16.msra.mxu0 %v6710
      %6726 = vmatprep.subr.bf16.mxu0 0
      %6727 = vmatpush1.bf16.msra.mxu0 0
      %6728 = vmatprep.subr.bf16.mxu0 0
      %6729 = vmatpush1.bf16.msra.mxu0 0
      %6730 = vmatprep.subr.bf16.mxu0 0
      %6731 = vmatpush1.bf16.msra.mxu0 0
      %6732 = vmatprep.subr.bf16.mxu0 0
      %6733 = vmatpush1.bf16.msra.mxu0 0
      %6734 = vmatprep.subr.bf16.mxu0 0
      %6735 = vmatpush1.bf16.msra.mxu0 0
      %6736 = vmatprep.subr.bf16.mxu0 0
      %6737 = vmatpush1.bf16.msra.mxu0 0
      %6738 = vmatprep.subr.bf16.mxu0 0
      %6739 = vmatpush1.bf16.msra.mxu0 0
      %6740 = vmatprep.subr.bf16.mxu0 0
      %6741 = vmatpush1.bf16.msra.mxu0 0
      %6742 = vmatprep.subr.bf16.mxu0 0
      %6743 = vmatpush1.bf16.msra.mxu0 0
      %6744 = vmatprep.subr.bf16.mxu0 0
      %6745 = vmatpush1.bf16.msra.mxu0 0
      %6746 = vmatprep.subr.bf16.mxu0 0
      %6747 = vmatpush1.bf16.msra.mxu0 0
      %6748 = vmatprep.subr.bf16.mxu0 0
      %6749 = vmatpush1.bf16.msra.mxu0 0
      %6750 = vmatprep.subr.bf16.mxu0 0
      %6751 = vmatpush1.bf16.msra.mxu0 0
      %6752 = vmatprep.subr.bf16.mxu0 0
      %6753 = vmatpush1.bf16.msra.mxu0 0
      %6754 = vmatprep.subr.bf16.mxu0 0
      %6755 = vmatpush1.bf16.msra.mxu0 0
      %6756 = vmatprep.mubr.bf16.mxu0 0
      %6757 = vmatmul.mubr.bf16.gmra.mrb[0].mxu0 %v6713
      %v6758 = vpop.f32.mrb[0].mxu0
      %v6759 = vadd.f32 %v6704, %v6758
      %v6760 = vpop.f32.mrb[0].mxu0
      %v6761 = vpop.f32.mrb[0].mxu0
      %v6762 = vadd.f32 %v6704, %v6761
      %v6763 = vpop.f32.mrb[0].mxu0
      %6764 = vmatprep.mubr.bf16.mxu0 0
      %6765 = vmatmul.mubr.bf16.gmra.mrb[0].mxu0 %v6716
      %v6766 = vpop.f32.mrb[0].mxu0
      %v6767 = vadd.f32 %v6704, %v6766
      %v6768 = vpop.f32.mrb[0].mxu0
      %v6769 = vpop.f32.mrb[0].mxu0
      %v6770 = vadd.f32 %v6704, %v6769
      %v6771 = vpop.f32.mrb[0].mxu0
      %6772 = vmatprep.mubr.bf16.mxu0 0
      %6773 = vmatmul.mubr.bf16.gmra.mrb[0].mxu0 %v6719
      %v6774 = vpop.f32.mrb[0].mxu0
      %v6775 = vadd.f32 %v6704, %v6774
      %v6776 = vpop.f32.mrb[0].mxu0
      %v6777 = vpop.f32.mrb[0].mxu0
      %v6778 = vadd.f32 %v6704, %v6777
      %v6779 = vpop.f32.mrb[0].mxu0
      %6780 = vmatprep.mubr.bf16.mxu0 0
      %6781 = vmatmul.mubr.bf16.gmra.mrb[0].mxu0 %v6722
      %v6782 = vpop.f32.mrb[0].mxu0
      %v6783 = vadd.f32 %v6704, %v6782
      %v6784 = vpop.f32.mrb[0].mxu0
      %v6785 = vpop.f32.mrb[0].mxu0
      %v6786 = vadd.f32 %v6704, %v6785
      %v6787 = vpop.f32.mrb[0].mxu0
      %6788 = vdwg.mxu0
      %v6789 = vld [vmem:[%s18] sm:$0xff]
      %v6790 = vld [vmem:[%s18 + $0x8] sm:$0xff]
      %v6791 = vld [vmem:[%s18 + $0x10] sm:$0xff]
      %v6792 = vld [vmem:[%s18 + $0x18] sm:$0xff]
      %v6793 = vld [vmem:[%s18 + $0x20] sm:$0xff]
      %v6794 = vld [vmem:[%s18 + $0x28] sm:$0xff]
      %v6795 = vld [vmem:[%s18 + $0x30] sm:$0xff]
      %v6796 = vld [vmem:[%s18 + $0x38] sm:$0xff]
      %v6797 = vld [vmem:[%s18 + $0x40] sm:$0xff]
      %v6798 = vld [vmem:[%s18 + $0x48] sm:$0xff]
      %v6799 = vld [vmem:[%s18 + $0x50] sm:$0xff]
      %v6800 = vld [vmem:[%s18 + $0x58] sm:$0xff]
      %v6801 = vld [vmem:[%s18 + $0x60] sm:$0xff]
      %v6802 = vld [vmem:[%s18 + $0x68] sm:$0xff]
      %v6803 = vld [vmem:[%s18 + $0x70] sm:$0xff]
      %v6804 = vld [vmem:[%s18 + $0x78] sm:$0xff]
      %v6805 = vld [vmem:[%s18 + $0x80] sm:$0xff]
      %v6806 = vld [vmem:[%s18 + $0x88] sm:$0xff]
      %v6807 = vld [vmem:[%s18 + $0x90] sm:$0xff]
      %v6808 = vld [vmem:[%s18 + $0x98] sm:$0xff]
      %v6809 = vld [vmem:[%s18 + $0xa0] sm:$0xff]
      %v6810 = vld [vmem:[%s18 + $0xa8] sm:$0xff]
      %v6811 = vld [vmem:[%s18 + $0xb0] sm:$0xff]
      %v6812 = vld [vmem:[%s18 + $0xb8] sm:$0xff]
      %v6813 = vld [vmem:[%s18 + $0xc0] sm:$0xff]
      %v6814 = vld [vmem:[%s18 + $0xc8] sm:$0xff]
      %v6815 = vld [vmem:[%s18 + $0xd0] sm:$0xff]
      %v6816 = vld [vmem:[%s18 + $0xd8] sm:$0xff]
      %v6817 = vld [vmem:[%s18 + $0xe0] sm:$0xff]
      %v6818 = vld [vmem:[%s18 + $0xe8] sm:$0xff]
      %v6819 = vld [vmem:[%s18 + $0xf0] sm:$0xff]
      %v6820 = vld [vmem:[%s18 + $0xf8] sm:$0xff]
      %v6822 = vsel %vm4625, %v6789, 0
      %v6825 = vsel %vm4625, %v6790, 0
      %v6828 = vsel %vm4625, %v6791, 0
      %v6831 = vsel %vm4625, %v6792, 0
      %v6834 = vsel %vm4625, %v6793, 0
      %v6837 = vsel %vm4625, %v6794, 0
      %v6840 = vsel %vm4625, %v6795, 0
      %v6843 = vsel %vm4625, %v6796, 0
      %v6846 = vsel %vm4625, %v6797, 0
      %v6849 = vsel %vm4625, %v6798, 0
      %v6852 = vsel %vm4625, %v6799, 0
      %v6855 = vsel %vm4625, %v6800, 0
      %v6858 = vsel %vm4625, %v6801, 0
      %v6861 = vsel %vm4625, %v6802, 0
      %v6864 = vsel %vm4625, %v6803, 0
      %v6867 = vsel %vm4625, %v6804, 0
      %v6870 = vsel %vm4625, %v6805, 0
      %v6873 = vsel %vm4625, %v6806, 0
      %v6876 = vsel %vm4625, %v6807, 0
      %v6879 = vsel %vm4625, %v6808, 0
      %v6882 = vsel %vm4625, %v6809, 0
      %v6885 = vsel %vm4625, %v6810, 0
      %v6888 = vsel %vm4625, %v6811, 0
      %v6891 = vsel %vm4625, %v6812, 0
      %v6894 = vsel %vm4625, %v6813, 0
      %v6897 = vsel %vm4625, %v6814, 0
      %v6900 = vsel %vm4625, %v6815, 0
      %v6903 = vsel %vm4625, %v6816, 0
      %v6906 = vsel %vm4625, %v6817, 0
      %v6909 = vsel %vm4625, %v6818, 0
      %v6912 = vsel %vm4625, %v6819, 0
      %v6915 = vsel %vm4625, %v6820, 0
      %6917 = vmatprep.subr.mxu0 0.0
      %6918 = vmatpush1.msra.mxu0 %v6759
      %6919 = vmatprep.subr.mxu0 0.0
      %6920 = vmatpush1.msra.mxu0 %v6762
      %6921 = vmatprep.subr.mxu0 0.0
      %6922 = vmatpush1.msra.mxu0 %v6767
      %6923 = vmatprep.subr.mxu0 0.0
      %6924 = vmatpush1.msra.mxu0 %v6770
      %6925 = vmatprep.subr.mxu0 0.0
      %6926 = vmatpush1.msra.mxu0 %v6775
      %6927 = vmatprep.subr.mxu0 0.0
      %6928 = vmatpush1.msra.mxu0 %v6778
      %6929 = vmatprep.subr.mxu0 0.0
      %6930 = vmatpush1.msra.mxu0 %v6783
      %6931 = vmatprep.subr.mxu0 0.0
      %6932 = vmatpush1.msra.mxu0 %v6786
      %6933 = vmatprep.subr.mxu0 0.0
      %6934 = vmatpush1.msra.mxu0 0.0
      %6935 = vmatprep.subr.mxu0 0.0
      %6936 = vmatpush1.msra.mxu0 0.0
      %6937 = vmatprep.subr.mxu0 0.0
      %6938 = vmatpush1.msra.mxu0 0.0
      %6939 = vmatprep.subr.mxu0 0.0
      %6940 = vmatpush1.msra.mxu0 0.0
      %6941 = vmatprep.subr.mxu0 0.0
      %6942 = vmatpush1.msra.mxu0 0.0
      %6943 = vmatprep.subr.mxu0 0.0
      %6944 = vmatpush1.msra.mxu0 0.0
      %6945 = vmatprep.subr.mxu0 0.0
      %6946 = vmatpush1.msra.mxu0 0.0
      %6947 = vmatprep.subr.mxu0 0.0
      %6948 = vmatpush1.msra.mxu0 0.0
      %6949 = vmatprep.subr.mxu0 0.0
      %6950 = vmatpush1.msra.mxu0 0.0
      %6951 = vmatprep.subr.mxu0 0.0
      %6952 = vmatpush1.msra.mxu0 0.0
      %6953 = vmatprep.subr.mxu0 0.0
      %6954 = vmatpush1.msra.mxu0 0.0
      %6955 = vmatprep.subr.mxu0 0.0
      %6956 = vmatpush1.msra.mxu0 0.0
      %6957 = vmatprep.subr.mxu0 0.0
      %6958 = vmatpush1.msra.mxu0 0.0
      %6959 = vmatprep.subr.mxu0 0.0
      %6960 = vmatpush1.msra.mxu0 0.0
      %6961 = vmatprep.subr.mxu0 0.0
      %6962 = vmatpush1.msra.mxu0 0.0
      %6963 = vmatprep.subr.mxu0 0.0
      %6964 = vmatpush1.msra.mxu0 0.0
      %6965 = vmatprep.subr.mxu0 0.0
      %6966 = vmatpush1.msra.mxu0 0.0
      %6967 = vmatprep.subr.mxu0 0.0
      %6968 = vmatpush1.msra.mxu0 0.0
      %6969 = vmatprep.subr.mxu0 0.0
      %6970 = vmatpush1.msra.mxu0 0.0
      %6971 = vmatprep.subr.mxu0 0.0
      %6972 = vmatpush1.msra.mxu0 0.0
      %6973 = vmatprep.subr.mxu0 0.0
      %6974 = vmatpush1.msra.mxu0 0.0
      %6975 = vmatprep.subr.mxu0 0.0
      %6976 = vmatpush1.msra.mxu0 0.0
      %6977 = vmatprep.subr.mxu0 0.0
      %6978 = vmatpush1.msra.mxu0 0.0
      %6979 = vmatprep.subr.mxu0 0.0
      %6980 = vmatpush1.msra.mxu0 0.0
      %6981 = vmatprep.mubr.f32.mxu0 0.0
      %6982 = vmatmul.mubr.f32.gmra.mrb[0].mxu0 %v6822
      %v6983 = vpop.f32.mrb[0].mxu0
      %v6984 = vadd.f32 0.0, %v6983
      %v6985 = vpop.f32.mrb[0].mxu0
      %6986 = vmatprep.mubr.f32.mxu0 0.0
      %6987 = vmatmul.mubr.f32.gmra.mrb[0].mxu0 %v6825
      %v6988 = vpop.f32.mrb[0].mxu0
      %v6989 = vadd.f32 0.0, %v6988
      %v6990 = vpop.f32.mrb[0].mxu0
      %6991 = vmatprep.mubr.f32.mxu0 0.0
      %6992 = vmatmul.mubr.f32.gmra.mrb[0].mxu0 %v6828
      %v6993 = vpop.f32.mrb[0].mxu0
      %v6994 = vadd.f32 0.0, %v6993
      %v6995 = vpop.f32.mrb[0].mxu0
      %6996 = vmatprep.mubr.f32.mxu0 0.0
      %6997 = vmatmul.mubr.f32.gmra.mrb[0].mxu0 %v6831
      %v6998 = vpop.f32.mrb[0].mxu0
      %v6999 = vadd.f32 0.0, %v6998
      %v7000 = vpop.f32.mrb[0].mxu0
      %7001 = vmatprep.mubr.f32.mxu0 0.0
      %7002 = vmatmul.mubr.f32.gmra.mrb[0].mxu0 %v6834
      %v7003 = vpop.f32.mrb[0].mxu0
      %v7004 = vadd.f32 0.0, %v7003
      %v7005 = vpop.f32.mrb[0].mxu0
      %7006 = vmatprep.mubr.f32.mxu0 0.0
      %7007 = vmatmul.mubr.f32.gmra.mrb[0].mxu0 %v6837
      %v7008 = vpop.f32.mrb[0].mxu0
      %v7009 = vadd.f32 0.0, %v7008
      %v7010 = vpop.f32.mrb[0].mxu0
      %7011 = vmatprep.mubr.f32.mxu0 0.0
      %7012 = vmatmul.mubr.f32.gmra.mrb[0].mxu0 %v6840
      %v7013 = vpop.f32.mrb[0].mxu0
      %v7014 = vadd.f32 0.0, %v7013
      %v7015 = vpop.f32.mrb[0].mxu0
      %7016 = vmatprep.mubr.f32.mxu0 0.0
      %7017 = vmatmul.mubr.f32.gmra.mrb[0].mxu0 %v6843
      %v7018 = vpop.f32.mrb[0].mxu0
      %v7019 = vadd.f32 0.0, %v7018
      %v7020 = vpop.f32.mrb[0].mxu0
      %7021 = vmatprep.mubr.f32.mxu0 0.0
      %7022 = vmatmul.mubr.f32.gmra.mrb[0].mxu0 %v6846
      %v7023 = vpop.f32.mrb[0].mxu0
      %v7024 = vadd.f32 0.0, %v7023
      %v7025 = vpop.f32.mrb[0].mxu0
      %7026 = vmatprep.mubr.f32.mxu0 0.0
      %7027 = vmatmul.mubr.f32.gmra.mrb[0].mxu0 %v6849
      %v7028 = vpop.f32.mrb[0].mxu0
      %v7029 = vadd.f32 0.0, %v7028
      %v7030 = vpop.f32.mrb[0].mxu0
      %7031 = vmatprep.mubr.f32.mxu0 0.0
      %7032 = vmatmul.mubr.f32.gmra.mrb[0].mxu0 %v6852
      %v7033 = vpop.f32.mrb[0].mxu0
      %v7034 = vadd.f32 0.0, %v7033
      %v7035 = vpop.f32.mrb[0].mxu0
      %7036 = vmatprep.mubr.f32.mxu0 0.0
      %7037 = vmatmul.mubr.f32.gmra.mrb[0].mxu0 %v6855
      %v7038 = vpop.f32.mrb[0].mxu0
      %v7039 = vadd.f32 0.0, %v7038
      %v7040 = vpop.f32.mrb[0].mxu0
      %7041 = vmatprep.mubr.f32.mxu0 0.0
      %7042 = vmatmul.mubr.f32.gmra.mrb[0].mxu0 %v6858
      %v7043 = vpop.f32.mrb[0].mxu0
      %v7044 = vadd.f32 0.0, %v7043
      %v7045 = vpop.f32.mrb[0].mxu0
      %7046 = vmatprep.mubr.f32.mxu0 0.0
      %7047 = vmatmul.mubr.f32.gmra.mrb[0].mxu0 %v6861
      %v7048 = vpop.f32.mrb[0].mxu0
      %v7049 = vadd.f32 0.0, %v7048
      %v7050 = vpop.f32.mrb[0].mxu0
      %7051 = vmatprep.mubr.f32.mxu0 0.0
      %7052 = vmatmul.mubr.f32.gmra.mrb[0].mxu0 %v6864
      %v7053 = vpop.f32.mrb[0].mxu0
      %v7054 = vadd.f32 0.0, %v7053
      %v7055 = vpop.f32.mrb[0].mxu0
      %7056 = vmatprep.mubr.f32.mxu0 0.0
      %7057 = vmatmul.mubr.f32.gmra.mrb[0].mxu0 %v6867
      %v7058 = vpop.f32.mrb[0].mxu0
      %v7059 = vadd.f32 0.0, %v7058
      %v7060 = vpop.f32.mrb[0].mxu0
      %7061 = vmatprep.mubr.f32.mxu0 0.0
      %7062 = vmatmul.mubr.f32.gmra.mrb[0].mxu0 %v6870
      %v7063 = vpop.f32.mrb[0].mxu0
      %v7064 = vadd.f32 0.0, %v7063
      %v7065 = vpop.f32.mrb[0].mxu0
      %7066 = vmatprep.mubr.f32.mxu0 0.0
      %7067 = vmatmul.mubr.f32.gmra.mrb[0].mxu0 %v6873
      %v7068 = vpop.f32.mrb[0].mxu0
      %v7069 = vadd.f32 0.0, %v7068
      %v7070 = vpop.f32.mrb[0].mxu0
      %7071 = vmatprep.mubr.f32.mxu0 0.0
      %7072 = vmatmul.mubr.f32.gmra.mrb[0].mxu0 %v6876
      %v7073 = vpop.f32.mrb[0].mxu0
      %v7074 = vadd.f32 0.0, %v7073
      %v7075 = vpop.f32.mrb[0].mxu0
      %7076 = vmatprep.mubr.f32.mxu0 0.0
      %7077 = vmatmul.mubr.f32.gmra.mrb[0].mxu0 %v6879
      %v7078 = vpop.f32.mrb[0].mxu0
      %v7079 = vadd.f32 0.0, %v7078
      %v7080 = vpop.f32.mrb[0].mxu0
      %7081 = vmatprep.mubr.f32.mxu0 0.0
      %7082 = vmatmul.mubr.f32.gmra.mrb[0].mxu0 %v6882
      %v7083 = vpop.f32.mrb[0].mxu0
      %v7084 = vadd.f32 0.0, %v7083
      %v7085 = vpop.f32.mrb[0].mxu0
      %7086 = vmatprep.mubr.f32.mxu0 0.0
      %7087 = vmatmul.mubr.f32.gmra.mrb[0].mxu0 %v6885
      %v7088 = vpop.f32.mrb[0].mxu0
      %v7089 = vadd.f32 0.0, %v7088
      %v7090 = vpop.f32.mrb[0].mxu0
      %7091 = vmatprep.mubr.f32.mxu0 0.0
      %7092 = vmatmul.mubr.f32.gmra.mrb[0].mxu0 %v6888
      %v7093 = vpop.f32.mrb[0].mxu0
      %v7094 = vadd.f32 0.0, %v7093
      %v7095 = vpop.f32.mrb[0].mxu0
      %7096 = vmatprep.mubr.f32.mxu0 0.0
      %7097 = vmatmul.mubr.f32.gmra.mrb[0].mxu0 %v6891
      %v7098 = vpop.f32.mrb[0].mxu0
      %v7099 = vadd.f32 0.0, %v7098
      %v7100 = vpop.f32.mrb[0].mxu0
      %7101 = vmatprep.mubr.f32.mxu0 0.0
      %7102 = vmatmul.mubr.f32.gmra.mrb[0].mxu0 %v6894
      %v7103 = vpop.f32.mrb[0].mxu0
      %v7104 = vadd.f32 0.0, %v7103
      %v7105 = vpop.f32.mrb[0].mxu0
      %7106 = vmatprep.mubr.f32.mxu0 0.0
      %7107 = vmatmul.mubr.f32.gmra.mrb[0].mxu0 %v6897
      %v7108 = vpop.f32.mrb[0].mxu0
      %v7109 = vadd.f32 0.0, %v7108
      %v7110 = vpop.f32.mrb[0].mxu0
      %7111 = vmatprep.mubr.f32.mxu0 0.0
      %7112 = vmatmul.mubr.f32.gmra.mrb[0].mxu0 %v6900
      %v7113 = vpop.f32.mrb[0].mxu0
      %v7114 = vadd.f32 0.0, %v7113
      %v7115 = vpop.f32.mrb[0].mxu0
      %7116 = vmatprep.mubr.f32.mxu0 0.0
      %7117 = vmatmul.mubr.f32.gmra.mrb[0].mxu0 %v6903
      %v7118 = vpop.f32.mrb[0].mxu0
      %v7119 = vadd.f32 0.0, %v7118
      %v7120 = vpop.f32.mrb[0].mxu0
      %7121 = vmatprep.mubr.f32.mxu0 0.0
      %7122 = vmatmul.mubr.f32.gmra.mrb[0].mxu0 %v6906
      %v7123 = vpop.f32.mrb[0].mxu0
      %v7124 = vadd.f32 0.0, %v7123
      %v7125 = vpop.f32.mrb[0].mxu0
      %7126 = vmatprep.mubr.f32.mxu0 0.0
      %7127 = vmatmul.mubr.f32.gmra.mrb[0].mxu0 %v6909
      %v7128 = vpop.f32.mrb[0].mxu0
      %v7129 = vadd.f32 0.0, %v7128
      %v7130 = vpop.f32.mrb[0].mxu0
      %7131 = vmatprep.mubr.f32.mxu0 0.0
      %7132 = vmatmul.mubr.f32.gmra.mrb[0].mxu0 %v6912
      %v7133 = vpop.f32.mrb[0].mxu0
      %v7134 = vadd.f32 0.0, %v7133
      %v7135 = vpop.f32.mrb[0].mxu0
      %7136 = vmatprep.mubr.f32.mxu0 0.0
      %7137 = vmatmul.mubr.f32.gmra.mrb[0].mxu0 %v6915
      %v7138 = vpop.f32.mrb[0].mxu0
      %v7139 = vadd.f32 0.0, %v7138
      %v7140 = vpop.f32.mrb[0].mxu0
      %7141 = vdwg.mxu0
      %s7142 = scalar_lea.vmem [#allocation8], 24
      %7143 = vst.msk [vmem:[%s7142 + $0x1] sm:$0xff] %vm716, %v6984
      %7144 = vst.msk [vmem:[%s7142 + $0x9] sm:$0xff] %vm716, %v6989
      %7145 = vst.msk [vmem:[%s7142 + $0x19] sm:$0xff] %vm716, %v6994
      %7146 = vst.msk [vmem:[%s7142 + $0x21] sm:$0xff] %vm716, %v6999
      %7147 = vst.msk [vmem:[%s7142 + $0x31] sm:$0xff] %vm716, %v7004
      %7148 = vst.msk [vmem:[%s7142 + $0x39] sm:$0xff] %vm716, %v7009
      %7149 = vst.msk [vmem:[%s7142 + $0x49] sm:$0xff] %vm716, %v7014
      %7150 = vst.msk [vmem:[%s7142 + $0x51] sm:$0xff] %vm716, %v7019
      %7151 = vst.msk [vmem:[%s7142 + $0x61] sm:$0xff] %vm716, %v7024
      %7152 = vst.msk [vmem:[%s7142 + $0x69] sm:$0xff] %vm716, %v7029
      %7153 = vst.msk [vmem:[%s7142 + $0x79] sm:$0xff] %vm716, %v7034
      %7154 = vst.msk [vmem:[%s7142 + $0x81] sm:$0xff] %vm716, %v7039
      %7155 = vst.msk [vmem:[%s7142 + $0x91] sm:$0xff] %vm716, %v7044
      %7156 = vst.msk [vmem:[%s7142 + $0x99] sm:$0xff] %vm716, %v7049
      %7157 = vst.msk [vmem:[%s7142 + $0xa9] sm:$0xff] %vm716, %v7054
      %7158 = vst.msk [vmem:[%s7142 + $0xb1] sm:$0xff] %vm716, %v7059
      %7159 = vst.msk [vmem:[%s7142 + $0xc1] sm:$0xff] %vm716, %v7064
      %7160 = vst.msk [vmem:[%s7142 + $0xc9] sm:$0xff] %vm716, %v7069
      %7161 = vst.msk [vmem:[%s7142 + $0xd9] sm:$0xff] %vm716, %v7074
      %7162 = vst.msk [vmem:[%s7142 + $0xe1] sm:$0xff] %vm716, %v7079
      %7163 = vst.msk [vmem:[%s7142 + $0xf1] sm:$0xff] %vm716, %v7084
      %7164 = vst.msk [vmem:[%s7142 + $0xf9] sm:$0xff] %vm716, %v7089
      %7165 = vst.msk [vmem:[%s7142 + $0x109] sm:$0xff] %vm716, %v7094
      %7166 = vst.msk [vmem:[%s7142 + $0x111] sm:$0xff] %vm716, %v7099
      %7167 = vst.msk [vmem:[%s7142 + $0x121] sm:$0xff] %vm716, %v7104
      %7168 = vst.msk [vmem:[%s7142 + $0x129] sm:$0xff] %vm716, %v7109
      %7169 = vst.msk [vmem:[%s7142 + $0x139] sm:$0xff] %vm716, %v7114
      %7170 = vst.msk [vmem:[%s7142 + $0x141] sm:$0xff] %vm716, %v7119
      %7171 = vst.msk [vmem:[%s7142 + $0x151] sm:$0xff] %vm716, %v7124
      %7172 = vst.msk [vmem:[%s7142 + $0x159] sm:$0xff] %vm716, %v7129
      %7173 = vst.msk [vmem:[%s7142 + $0x169] sm:$0xff] %vm716, %v7134
      %7174 = vst.msk [vmem:[%s7142 + $0x171] sm:$0xff] %vm716, %v7139
      %v7175 = vld [vmem:[#allocation8] sm:$0xff]
      %v7176 = vld [vmem:[#allocation8 + $0x8] sm:$0xff]
      %v7177 = vld [vmem:[#allocation8 + $0x10] sm:$0x3]
      %v7178 = vld [vmem:[#allocation8 + $0x18] sm:$0xff]
      %v7179 = vld [vmem:[#allocation8 + $0x20] sm:$0xff]
      %v7180 = vld [vmem:[#allocation8 + $0x28] sm:$0x3]
      %v7181 = vld [vmem:[#allocation8 + $0x30] sm:$0xff]
      %v7182 = vld [vmem:[#allocation8 + $0x38] sm:$0xff]
      %v7183 = vld [vmem:[#allocation8 + $0x40] sm:$0x3]
      %v7184 = vld [vmem:[#allocation8 + $0x48] sm:$0xff]
      %v7185 = vld [vmem:[#allocation8 + $0x50] sm:$0xff]
      %v7186 = vld [vmem:[#allocation8 + $0x58] sm:$0x3]
      %v7187 = vld [vmem:[#allocation8 + $0x60] sm:$0xff]
      %v7188 = vld [vmem:[#allocation8 + $0x68] sm:$0xff]
      %v7189 = vld [vmem:[#allocation8 + $0x70] sm:$0x3]
      %v7190 = vld [vmem:[#allocation8 + $0x78] sm:$0xff]
      %v7191 = vld [vmem:[#allocation8 + $0x80] sm:$0xff]
      %v7192 = vld [vmem:[#allocation8 + $0x88] sm:$0x3]
      %v7193 = vld [vmem:[#allocation8 + $0x90] sm:$0xff]
      %v7194 = vld [vmem:[#allocation8 + $0x98] sm:$0xff]
      %v7195 = vld [vmem:[#allocation8 + $0xa0] sm:$0x3]
      %v7196 = vld [vmem:[#allocation8 + $0xa8] sm:$0xff]
      %v7197 = vld [vmem:[#allocation8 + $0xb0] sm:$0xff]
      %v7198 = vld [vmem:[#allocation8 + $0xb8] sm:$0x3]
      %v7199 = vld [vmem:[#allocation8 + $0xc0] sm:$0xff]
      %v7200 = vld [vmem:[#allocation8 + $0xc8] sm:$0xff]
      %v7201 = vld [vmem:[#allocation8 + $0xd0] sm:$0x3]
      %v7202 = vld [vmem:[#allocation8 + $0xd8] sm:$0xff]
      %v7203 = vld [vmem:[#allocation8 + $0xe0] sm:$0xff]
      %v7204 = vld [vmem:[#allocation8 + $0xe8] sm:$0x3]
      %v7205 = vld [vmem:[#allocation8 + $0xf0] sm:$0xff]
      %v7206 = vld [vmem:[#allocation8 + $0xf8] sm:$0xff]
      %v7207 = vld [vmem:[#allocation8 + $0x100] sm:$0x3]
      %v7208 = vld [vmem:[#allocation8 + $0x108] sm:$0xff]
      %v7209 = vld [vmem:[#allocation8 + $0x110] sm:$0xff]
      %v7210 = vld [vmem:[#allocation8 + $0x118] sm:$0x3]
      %v7211 = vld [vmem:[#allocation8 + $0x120] sm:$0xff]
      %v7212 = vld [vmem:[#allocation8 + $0x128] sm:$0xff]
      %v7213 = vld [vmem:[#allocation8 + $0x130] sm:$0x3]
      %v7214 = vld [vmem:[#allocation8 + $0x138] sm:$0xff]
      %v7215 = vld [vmem:[#allocation8 + $0x140] sm:$0xff]
      %v7216 = vld [vmem:[#allocation8 + $0x148] sm:$0x3]
      %v7217 = vld [vmem:[#allocation8 + $0x150] sm:$0xff]
      %v7218 = vld [vmem:[#allocation8 + $0x158] sm:$0xff]
      %v7219 = vld [vmem:[#allocation8 + $0x160] sm:$0x3]
      %v7220 = vld [vmem:[#allocation8 + $0x168] sm:$0xff]
      %v7221 = vld [vmem:[#allocation8 + $0x170] sm:$0xff]
      %v7222 = vld [vmem:[#allocation8 + $0x178] sm:$0x3]
      %v7223 = vld [vmem:[#allocation8 + $0x180] sm:$0xff]
      %v7224 = vld [vmem:[#allocation8 + $0x188] sm:$0xff]
      %v7225 = vld [vmem:[#allocation8 + $0x190] sm:$0x3]
      %v7226 = vld [vmem:[#allocation8 + $0x198] sm:$0xff]
      %v7227 = vld [vmem:[#allocation8 + $0x1a0] sm:$0xff]
      %v7228 = vld [vmem:[#allocation8 + $0x1a8] sm:$0x3]
      %v7277 = vrot.slane %v7175, 1
      %v7278 = vrot.slane %v7176, 1
      %v7279 = vsel %vm1062, %v7277, %v7278
      %v7280 = vrot.slane %v7177, 1
      %v7281 = vsel %vm1062, %v7278, %v7280
      %v7282 = vrot.slane %v7178, 1
      %v7283 = vrot.slane %v7179, 1
      %v7284 = vsel %vm1062, %v7282, %v7283
      %v7285 = vrot.slane %v7180, 1
      %v7286 = vsel %vm1062, %v7283, %v7285
      %v7287 = vrot.slane %v7181, 1
      %v7288 = vrot.slane %v7182, 1
      %v7289 = vsel %vm1062, %v7287, %v7288
      %v7290 = vrot.slane %v7183, 1
      %v7291 = vsel %vm1062, %v7288, %v7290
      %v7292 = vrot.slane %v7184, 1
      %v7293 = vrot.slane %v7185, 1
      %v7294 = vsel %vm1062, %v7292, %v7293
      %v7295 = vrot.slane %v7186, 1
      %v7296 = vsel %vm1062, %v7293, %v7295
      %v7297 = vrot.slane %v7187, 1
      %v7298 = vrot.slane %v7188, 1
      %v7299 = vsel %vm1062, %v7297, %v7298
      %v7300 = vrot.slane %v7189, 1
      %v7301 = vsel %vm1062, %v7298, %v7300
      %v7302 = vrot.slane %v7190, 1
      %v7303 = vrot.slane %v7191, 1
      %v7304 = vsel %vm1062, %v7302, %v7303
      %v7305 = vrot.slane %v7192, 1
      %v7306 = vsel %vm1062, %v7303, %v7305
      %v7307 = vrot.slane %v7193, 1
      %v7308 = vrot.slane %v7194, 1
      %v7309 = vsel %vm1062, %v7307, %v7308
      %v7310 = vrot.slane %v7195, 1
      %v7311 = vsel %vm1062, %v7308, %v7310
      %v7312 = vrot.slane %v7196, 1
      %v7313 = vrot.slane %v7197, 1
      %v7314 = vsel %vm1062, %v7312, %v7313
      %v7315 = vrot.slane %v7198, 1
      %v7316 = vsel %vm1062, %v7313, %v7315
      %v7317 = vrot.slane %v7199, 1
      %v7318 = vrot.slane %v7200, 1
      %v7319 = vsel %vm1062, %v7317, %v7318
      %v7320 = vrot.slane %v7201, 1
      %v7321 = vsel %vm1062, %v7318, %v7320
      %v7322 = vrot.slane %v7202, 1
      %v7323 = vrot.slane %v7203, 1
      %v7324 = vsel %vm1062, %v7322, %v7323
      %v7325 = vrot.slane %v7204, 1
      %v7326 = vsel %vm1062, %v7323, %v7325
      %v7327 = vrot.slane %v7205, 1
      %v7328 = vrot.slane %v7206, 1
      %v7329 = vsel %vm1062, %v7327, %v7328
      %v7330 = vrot.slane %v7207, 1
      %v7331 = vsel %vm1062, %v7328, %v7330
      %v7332 = vrot.slane %v7208, 1
      %v7333 = vrot.slane %v7209, 1
      %v7334 = vsel %vm1062, %v7332, %v7333
      %v7335 = vrot.slane %v7210, 1
      %v7336 = vsel %vm1062, %v7333, %v7335
      %v7337 = vrot.slane %v7211, 1
      %v7338 = vrot.slane %v7212, 1
      %v7339 = vsel %vm1062, %v7337, %v7338
      %v7340 = vrot.slane %v7213, 1
      %v7341 = vsel %vm1062, %v7338, %v7340
      %v7342 = vrot.slane %v7214, 1
      %v7343 = vrot.slane %v7215, 1
      %v7344 = vsel %vm1062, %v7342, %v7343
      %v7345 = vrot.slane %v7216, 1
      %v7346 = vsel %vm1062, %v7343, %v7345
      %v7347 = vrot.slane %v7217, 1
      %v7348 = vrot.slane %v7218, 1
      %v7349 = vsel %vm1062, %v7347, %v7348
      %v7350 = vrot.slane %v7219, 1
      %v7351 = vsel %vm1062, %v7348, %v7350
      %v7352 = vrot.slane %v7220, 1
      %v7353 = vrot.slane %v7221, 1
      %v7354 = vsel %vm1062, %v7352, %v7353
      %v7355 = vrot.slane %v7222, 1
      %v7356 = vsel %vm1062, %v7353, %v7355
      %v7357 = vrot.slane %v7175, 2
      %v7358 = vrot.slane %v7176, 2
      %v7359 = vsel %vm1143, %v7357, %v7358
      %v7360 = vrot.slane %v7177, 2
      %v7361 = vsel %vm1143, %v7358, %v7360
      %v7362 = vrot.slane %v7178, 2
      %v7363 = vrot.slane %v7179, 2
      %v7364 = vsel %vm1143, %v7362, %v7363
      %v7365 = vrot.slane %v7180, 2
      %v7366 = vsel %vm1143, %v7363, %v7365
      %v7367 = vrot.slane %v7181, 2
      %v7368 = vrot.slane %v7182, 2
      %v7369 = vsel %vm1143, %v7367, %v7368
      %v7370 = vrot.slane %v7183, 2
      %v7371 = vsel %vm1143, %v7368, %v7370
      %v7372 = vrot.slane %v7184, 2
      %v7373 = vrot.slane %v7185, 2
      %v7374 = vsel %vm1143, %v7372, %v7373
      %v7375 = vrot.slane %v7186, 2
      %v7376 = vsel %vm1143, %v7373, %v7375
      %v7377 = vrot.slane %v7187, 2
      %v7378 = vrot.slane %v7188, 2
      %v7379 = vsel %vm1143, %v7377, %v7378
      %v7380 = vrot.slane %v7189, 2
      %v7381 = vsel %vm1143, %v7378, %v7380
      %v7382 = vrot.slane %v7190, 2
      %v7383 = vrot.slane %v7191, 2
      %v7384 = vsel %vm1143, %v7382, %v7383
      %v7385 = vrot.slane %v7192, 2
      %v7386 = vsel %vm1143, %v7383, %v7385
      %v7387 = vrot.slane %v7193, 2
      %v7388 = vrot.slane %v7194, 2
      %v7389 = vsel %vm1143, %v7387, %v7388
      %v7390 = vrot.slane %v7195, 2
      %v7391 = vsel %vm1143, %v7388, %v7390
      %v7392 = vrot.slane %v7196, 2
      %v7393 = vrot.slane %v7197, 2
      %v7394 = vsel %vm1143, %v7392, %v7393
      %v7395 = vrot.slane %v7198, 2
      %v7396 = vsel %vm1143, %v7393, %v7395
      %v7397 = vrot.slane %v7199, 2
      %v7398 = vrot.slane %v7200, 2
      %v7399 = vsel %vm1143, %v7397, %v7398
      %v7400 = vrot.slane %v7201, 2
      %v7401 = vsel %vm1143, %v7398, %v7400
      %v7402 = vrot.slane %v7202, 2
      %v7403 = vrot.slane %v7203, 2
      %v7404 = vsel %vm1143, %v7402, %v7403
      %v7405 = vrot.slane %v7204, 2
      %v7406 = vsel %vm1143, %v7403, %v7405
      %v7407 = vrot.slane %v7205, 2
      %v7408 = vrot.slane %v7206, 2
      %v7409 = vsel %vm1143, %v7407, %v7408
      %v7410 = vrot.slane %v7207, 2
      %v7411 = vsel %vm1143, %v7408, %v7410
      %v7412 = vrot.slane %v7208, 2
      %v7413 = vrot.slane %v7209, 2
      %v7414 = vsel %vm1143, %v7412, %v7413
      %v7415 = vrot.slane %v7210, 2
      %v7416 = vsel %vm1143, %v7413, %v7415
      %v7417 = vrot.slane %v7211, 2
      %v7418 = vrot.slane %v7212, 2
      %v7419 = vsel %vm1143, %v7417, %v7418
      %v7420 = vrot.slane %v7213, 2
      %v7421 = vsel %vm1143, %v7418, %v7420
      %v7422 = vrot.slane %v7214, 2
      %v7423 = vrot.slane %v7215, 2
      %v7424 = vsel %vm1143, %v7422, %v7423
      %v7425 = vrot.slane %v7216, 2
      %v7426 = vsel %vm1143, %v7423, %v7425
      %v7427 = vrot.slane %v7217, 2
      %v7428 = vrot.slane %v7218, 2
      %v7429 = vsel %vm1143, %v7427, %v7428
      %v7430 = vrot.slane %v7219, 2
      %v7431 = vsel %vm1143, %v7428, %v7430
      %v7432 = vrot.slane %v7220, 2
      %v7433 = vrot.slane %v7221, 2
      %v7434 = vsel %vm1143, %v7432, %v7433
      %v7435 = vrot.slane %v7222, 2
      %v7436 = vsel %vm1143, %v7433, %v7435
      %v7440 = vrot.slane %v7223, 1
      %v7441 = vrot.slane %v7224, 1
      %v7442 = vsel %vm1062, %v7440, %v7441
      %v7443 = vrot.slane %v7225, 1
      %v7444 = vsel %vm1062, %v7441, %v7443
      %v7445 = vrot.slane %v7223, 2
      %v7446 = vrot.slane %v7224, 2
      %v7447 = vsel %vm1143, %v7445, %v7446
      %v7448 = vrot.slane %v7225, 2
      %v7449 = vsel %vm1143, %v7446, %v7448
      %v7453 = vrot.slane %v7226, 1
      %v7454 = vrot.slane %v7227, 1
      %v7455 = vsel %vm1062, %v7453, %v7454
      %v7456 = vrot.slane %v7228, 1
      %v7457 = vsel %vm1062, %v7454, %v7456
      %v7458 = vrot.slane %v7226, 2
      %v7459 = vrot.slane %v7227, 2
      %v7460 = vsel %vm1143, %v7458, %v7459
      %v7461 = vrot.slane %v7228, 2
      %v7462 = vsel %vm1143, %v7459, %v7461
      %7463 = vrot.lane.b32.xlu0 %v7279, 8
      %v7464 = vpop.permute.xlu0 %7463
      %7465 = vrot.lane.b32.xlu0 %v7281, 8
      %v7466 = vpop.permute.xlu0 %7465
      %7467 = vrot.lane.b32.xlu0 %v7284, 8
      %v7468 = vpop.permute.xlu0 %7467
      %7469 = vrot.lane.b32.xlu0 %v7286, 8
      %v7470 = vpop.permute.xlu0 %7469
      %7471 = vrot.lane.b32.xlu0 %v7289, 8
      %v7472 = vpop.permute.xlu0 %7471
      %7473 = vrot.lane.b32.xlu0 %v7291, 8
      %v7474 = vpop.permute.xlu0 %7473
      %7475 = vrot.lane.b32.xlu0 %v7294, 8
      %v7476 = vpop.permute.xlu0 %7475
      %7477 = vrot.lane.b32.xlu0 %v7296, 8
      %v7478 = vpop.permute.xlu0 %7477
      %7479 = vrot.lane.b32.xlu0 %v7299, 8
      %v7480 = vpop.permute.xlu0 %7479
      %7481 = vrot.lane.b32.xlu0 %v7301, 8
      %v7482 = vpop.permute.xlu0 %7481
      %7483 = vrot.lane.b32.xlu0 %v7304, 8
      %v7484 = vpop.permute.xlu0 %7483
      %7485 = vrot.lane.b32.xlu0 %v7306, 8
      %v7486 = vpop.permute.xlu0 %7485
      %7487 = vrot.lane.b32.xlu0 %v7309, 8
      %v7488 = vpop.permute.xlu0 %7487
      %7489 = vrot.lane.b32.xlu0 %v7311, 8
      %v7490 = vpop.permute.xlu0 %7489
      %7491 = vrot.lane.b32.xlu0 %v7314, 8
      %v7492 = vpop.permute.xlu0 %7491
      %7493 = vrot.lane.b32.xlu0 %v7316, 8
      %v7494 = vpop.permute.xlu0 %7493
      %7495 = vrot.lane.b32.xlu0 %v7319, 8
      %v7496 = vpop.permute.xlu0 %7495
      %7497 = vrot.lane.b32.xlu0 %v7321, 8
      %v7498 = vpop.permute.xlu0 %7497
      %7499 = vrot.lane.b32.xlu0 %v7324, 8
      %v7500 = vpop.permute.xlu0 %7499
      %7501 = vrot.lane.b32.xlu0 %v7326, 8
      %v7502 = vpop.permute.xlu0 %7501
      %7503 = vrot.lane.b32.xlu0 %v7329, 8
      %v7504 = vpop.permute.xlu0 %7503
      %7505 = vrot.lane.b32.xlu0 %v7331, 8
      %v7506 = vpop.permute.xlu0 %7505
      %7507 = vrot.lane.b32.xlu0 %v7334, 8
      %v7508 = vpop.permute.xlu0 %7507
      %7509 = vrot.lane.b32.xlu0 %v7336, 8
      %v7510 = vpop.permute.xlu0 %7509
      %7511 = vrot.lane.b32.xlu0 %v7339, 8
      %v7512 = vpop.permute.xlu0 %7511
      %7513 = vrot.lane.b32.xlu0 %v7341, 8
      %v7514 = vpop.permute.xlu0 %7513
      %7515 = vrot.lane.b32.xlu0 %v7344, 8
      %v7516 = vpop.permute.xlu0 %7515
      %7517 = vrot.lane.b32.xlu0 %v7346, 8
      %v7518 = vpop.permute.xlu0 %7517
      %7519 = vrot.lane.b32.xlu0 %v7349, 8
      %v7520 = vpop.permute.xlu0 %7519
      %7521 = vrot.lane.b32.xlu0 %v7351, 8
      %v7522 = vpop.permute.xlu0 %7521
      %7523 = vrot.lane.b32.xlu0 %v7354, 8
      %v7524 = vpop.permute.xlu0 %7523
      %7525 = vrot.lane.b32.xlu0 %v7356, 8
      %v7526 = vpop.permute.xlu0 %7525
      %7559 = vrot.lane.b32.xlu0 %v7359, 16
      %v7560 = vpop.permute.xlu0 %7559
      %7561 = vrot.lane.b32.xlu0 %v7361, 16
      %v7562 = vpop.permute.xlu0 %7561
      %7563 = vrot.lane.b32.xlu0 %v7364, 16
      %v7564 = vpop.permute.xlu0 %7563
      %7565 = vrot.lane.b32.xlu0 %v7366, 16
      %v7566 = vpop.permute.xlu0 %7565
      %7567 = vrot.lane.b32.xlu0 %v7369, 16
      %v7568 = vpop.permute.xlu0 %7567
      %7569 = vrot.lane.b32.xlu0 %v7371, 16
      %v7570 = vpop.permute.xlu0 %7569
      %7571 = vrot.lane.b32.xlu0 %v7374, 16
      %v7572 = vpop.permute.xlu0 %7571
      %7573 = vrot.lane.b32.xlu0 %v7376, 16
      %v7574 = vpop.permute.xlu0 %7573
      %7575 = vrot.lane.b32.xlu0 %v7379, 16
      %v7576 = vpop.permute.xlu0 %7575
      %7577 = vrot.lane.b32.xlu0 %v7381, 16
      %v7578 = vpop.permute.xlu0 %7577
      %7579 = vrot.lane.b32.xlu0 %v7384, 16
      %v7580 = vpop.permute.xlu0 %7579
      %7581 = vrot.lane.b32.xlu0 %v7386, 16
      %v7582 = vpop.permute.xlu0 %7581
      %7583 = vrot.lane.b32.xlu0 %v7389, 16
      %v7584 = vpop.permute.xlu0 %7583
      %7585 = vrot.lane.b32.xlu0 %v7391, 16
      %v7586 = vpop.permute.xlu0 %7585
      %7587 = vrot.lane.b32.xlu0 %v7394, 16
      %v7588 = vpop.permute.xlu0 %7587
      %7589 = vrot.lane.b32.xlu0 %v7396, 16
      %v7590 = vpop.permute.xlu0 %7589
      %7591 = vrot.lane.b32.xlu0 %v7399, 16
      %v7592 = vpop.permute.xlu0 %7591
      %7593 = vrot.lane.b32.xlu0 %v7401, 16
      %v7594 = vpop.permute.xlu0 %7593
      %7595 = vrot.lane.b32.xlu0 %v7404, 16
      %v7596 = vpop.permute.xlu0 %7595
      %7597 = vrot.lane.b32.xlu0 %v7406, 16
      %v7598 = vpop.permute.xlu0 %7597
      %7599 = vrot.lane.b32.xlu0 %v7409, 16
      %v7600 = vpop.permute.xlu0 %7599
      %7601 = vrot.lane.b32.xlu0 %v7411, 16
      %v7602 = vpop.permute.xlu0 %7601
      %7603 = vrot.lane.b32.xlu0 %v7414, 16
      %v7604 = vpop.permute.xlu0 %7603
      %7605 = vrot.lane.b32.xlu0 %v7416, 16
      %v7606 = vpop.permute.xlu0 %7605
      %7607 = vrot.lane.b32.xlu0 %v7419, 16
      %v7608 = vpop.permute.xlu0 %7607
      %7609 = vrot.lane.b32.xlu0 %v7421, 16
      %v7610 = vpop.permute.xlu0 %7609
      %7611 = vrot.lane.b32.xlu0 %v7424, 16
      %v7612 = vpop.permute.xlu0 %7611
      %7613 = vrot.lane.b32.xlu0 %v7426, 16
      %v7614 = vpop.permute.xlu0 %7613
      %7615 = vrot.lane.b32.xlu0 %v7429, 16
      %v7616 = vpop.permute.xlu0 %7615
      %7617 = vrot.lane.b32.xlu0 %v7431, 16
      %v7618 = vpop.permute.xlu0 %7617
      %7619 = vrot.lane.b32.xlu0 %v7434, 16
      %v7620 = vpop.permute.xlu0 %7619
      %7621 = vrot.lane.b32.xlu0 %v7436, 16
      %v7622 = vpop.permute.xlu0 %7621
      %7655 = vrot.lane.b32.xlu0 %v7178, 24
      %v7656 = vpop.permute.xlu0 %7655
      %7657 = vrot.lane.b32.xlu0 %v7179, 24
      %v7658 = vpop.permute.xlu0 %7657
      %7659 = vrot.lane.b32.xlu0 %v7181, 24
      %v7660 = vpop.permute.xlu0 %7659
      %7661 = vrot.lane.b32.xlu0 %v7182, 24
      %v7662 = vpop.permute.xlu0 %7661
      %7663 = vrot.lane.b32.xlu0 %v7184, 24
      %v7664 = vpop.permute.xlu0 %7663
      %7665 = vrot.lane.b32.xlu0 %v7185, 24
      %v7666 = vpop.permute.xlu0 %7665
      %7667 = vrot.lane.b32.xlu0 %v7187, 24
      %v7668 = vpop.permute.xlu0 %7667
      %7669 = vrot.lane.b32.xlu0 %v7188, 24
      %v7670 = vpop.permute.xlu0 %7669
      %7671 = vrot.lane.b32.xlu0 %v7190, 24
      %v7672 = vpop.permute.xlu0 %7671
      %7673 = vrot.lane.b32.xlu0 %v7191, 24
      %v7674 = vpop.permute.xlu0 %7673
      %7675 = vrot.lane.b32.xlu0 %v7193, 24
      %v7676 = vpop.permute.xlu0 %7675
      %7677 = vrot.lane.b32.xlu0 %v7194, 24
      %v7678 = vpop.permute.xlu0 %7677
      %7679 = vrot.lane.b32.xlu0 %v7196, 24
      %v7680 = vpop.permute.xlu0 %7679
      %7681 = vrot.lane.b32.xlu0 %v7197, 24
      %v7682 = vpop.permute.xlu0 %7681
      %7683 = vrot.lane.b32.xlu0 %v7199, 24
      %v7684 = vpop.permute.xlu0 %7683
      %7685 = vrot.lane.b32.xlu0 %v7200, 24
      %v7686 = vpop.permute.xlu0 %7685
      %7687 = vrot.lane.b32.xlu0 %v7202, 24
      %v7688 = vpop.permute.xlu0 %7687
      %7689 = vrot.lane.b32.xlu0 %v7203, 24
      %v7690 = vpop.permute.xlu0 %7689
      %7691 = vrot.lane.b32.xlu0 %v7205, 24
      %v7692 = vpop.permute.xlu0 %7691
      %7693 = vrot.lane.b32.xlu0 %v7206, 24
      %v7694 = vpop.permute.xlu0 %7693
      %7695 = vrot.lane.b32.xlu0 %v7208, 24
      %v7696 = vpop.permute.xlu0 %7695
      %7697 = vrot.lane.b32.xlu0 %v7209, 24
      %v7698 = vpop.permute.xlu0 %7697
      %7699 = vrot.lane.b32.xlu0 %v7211, 24
      %v7700 = vpop.permute.xlu0 %7699
      %7701 = vrot.lane.b32.xlu0 %v7212, 24
      %v7702 = vpop.permute.xlu0 %7701
      %7703 = vrot.lane.b32.xlu0 %v7214, 24
      %v7704 = vpop.permute.xlu0 %7703
      %7705 = vrot.lane.b32.xlu0 %v7215, 24
      %v7706 = vpop.permute.xlu0 %7705
      %7707 = vrot.lane.b32.xlu0 %v7217, 24
      %v7708 = vpop.permute.xlu0 %7707
      %7709 = vrot.lane.b32.xlu0 %v7218, 24
      %v7710 = vpop.permute.xlu0 %7709
      %7711 = vrot.lane.b32.xlu0 %v7220, 24
      %v7712 = vpop.permute.xlu0 %7711
      %7713 = vrot.lane.b32.xlu0 %v7221, 24
      %v7714 = vpop.permute.xlu0 %7713
      %7715 = vrot.lane.b32.xlu0 %v7223, 24
      %v7716 = vpop.permute.xlu0 %7715
      %7717 = vrot.lane.b32.xlu0 %v7224, 24
      %v7718 = vpop.permute.xlu0 %7717
      %7751 = vrot.lane.b32.xlu0 %v7284, 32
      %v7752 = vpop.permute.xlu0 %7751
      %7753 = vrot.lane.b32.xlu0 %v7286, 32
      %v7754 = vpop.permute.xlu0 %7753
      %7755 = vrot.lane.b32.xlu0 %v7289, 32
      %v7756 = vpop.permute.xlu0 %7755
      %7757 = vrot.lane.b32.xlu0 %v7291, 32
      %v7758 = vpop.permute.xlu0 %7757
      %7759 = vrot.lane.b32.xlu0 %v7294, 32
      %v7760 = vpop.permute.xlu0 %7759
      %7761 = vrot.lane.b32.xlu0 %v7296, 32
      %v7762 = vpop.permute.xlu0 %7761
      %7763 = vrot.lane.b32.xlu0 %v7299, 32
      %v7764 = vpop.permute.xlu0 %7763
      %7765 = vrot.lane.b32.xlu0 %v7301, 32
      %v7766 = vpop.permute.xlu0 %7765
      %7767 = vrot.lane.b32.xlu0 %v7304, 32
      %v7768 = vpop.permute.xlu0 %7767
      %7769 = vrot.lane.b32.xlu0 %v7306, 32
      %v7770 = vpop.permute.xlu0 %7769
      %7771 = vrot.lane.b32.xlu0 %v7309, 32
      %v7772 = vpop.permute.xlu0 %7771
      %7773 = vrot.lane.b32.xlu0 %v7311, 32
      %v7774 = vpop.permute.xlu0 %7773
      %7775 = vrot.lane.b32.xlu0 %v7314, 32
      %v7776 = vpop.permute.xlu0 %7775
      %7777 = vrot.lane.b32.xlu0 %v7316, 32
      %v7778 = vpop.permute.xlu0 %7777
      %7779 = vrot.lane.b32.xlu0 %v7319, 32
      %v7780 = vpop.permute.xlu0 %7779
      %7781 = vrot.lane.b32.xlu0 %v7321, 32
      %v7782 = vpop.permute.xlu0 %7781
      %7783 = vrot.lane.b32.xlu0 %v7324, 32
      %v7784 = vpop.permute.xlu0 %7783
      %7785 = vrot.lane.b32.xlu0 %v7326, 32
      %v7786 = vpop.permute.xlu0 %7785
      %7787 = vrot.lane.b32.xlu0 %v7329, 32
      %v7788 = vpop.permute.xlu0 %7787
      %7789 = vrot.lane.b32.xlu0 %v7331, 32
      %v7790 = vpop.permute.xlu0 %7789
      %7791 = vrot.lane.b32.xlu0 %v7334, 32
      %v7792 = vpop.permute.xlu0 %7791
      %7793 = vrot.lane.b32.xlu0 %v7336, 32
      %v7794 = vpop.permute.xlu0 %7793
      %7795 = vrot.lane.b32.xlu0 %v7339, 32
      %v7796 = vpop.permute.xlu0 %7795
      %7797 = vrot.lane.b32.xlu0 %v7341, 32
      %v7798 = vpop.permute.xlu0 %7797
      %7799 = vrot.lane.b32.xlu0 %v7344, 32
      %v7800 = vpop.permute.xlu0 %7799
      %7801 = vrot.lane.b32.xlu0 %v7346, 32
      %v7802 = vpop.permute.xlu0 %7801
      %7803 = vrot.lane.b32.xlu0 %v7349, 32
      %v7804 = vpop.permute.xlu0 %7803
      %7805 = vrot.lane.b32.xlu0 %v7351, 32
      %v7806 = vpop.permute.xlu0 %7805
      %7807 = vrot.lane.b32.xlu0 %v7354, 32
      %v7808 = vpop.permute.xlu0 %7807
      %7809 = vrot.lane.b32.xlu0 %v7356, 32
      %v7810 = vpop.permute.xlu0 %7809
      %7811 = vrot.lane.b32.xlu0 %v7442, 32
      %v7812 = vpop.permute.xlu0 %7811
      %7813 = vrot.lane.b32.xlu0 %v7444, 32
      %v7814 = vpop.permute.xlu0 %7813
      %7847 = vrot.lane.b32.xlu0 %v7364, 40
      %v7848 = vpop.permute.xlu0 %7847
      %7849 = vrot.lane.b32.xlu0 %v7366, 40
      %v7850 = vpop.permute.xlu0 %7849
      %7851 = vrot.lane.b32.xlu0 %v7369, 40
      %v7852 = vpop.permute.xlu0 %7851
      %7853 = vrot.lane.b32.xlu0 %v7371, 40
      %v7854 = vpop.permute.xlu0 %7853
      %7855 = vrot.lane.b32.xlu0 %v7374, 40
      %v7856 = vpop.permute.xlu0 %7855
      %7857 = vrot.lane.b32.xlu0 %v7376, 40
      %v7858 = vpop.permute.xlu0 %7857
      %7859 = vrot.lane.b32.xlu0 %v7379, 40
      %v7860 = vpop.permute.xlu0 %7859
      %7861 = vrot.lane.b32.xlu0 %v7381, 40
      %v7862 = vpop.permute.xlu0 %7861
      %7863 = vrot.lane.b32.xlu0 %v7384, 40
      %v7864 = vpop.permute.xlu0 %7863
      %7865 = vrot.lane.b32.xlu0 %v7386, 40
      %v7866 = vpop.permute.xlu0 %7865
      %7867 = vrot.lane.b32.xlu0 %v7389, 40
      %v7868 = vpop.permute.xlu0 %7867
      %7869 = vrot.lane.b32.xlu0 %v7391, 40
      %v7870 = vpop.permute.xlu0 %7869
      %7871 = vrot.lane.b32.xlu0 %v7394, 40
      %v7872 = vpop.permute.xlu0 %7871
      %7873 = vrot.lane.b32.xlu0 %v7396, 40
      %v7874 = vpop.permute.xlu0 %7873
      %7875 = vrot.lane.b32.xlu0 %v7399, 40
      %v7876 = vpop.permute.xlu0 %7875
      %7877 = vrot.lane.b32.xlu0 %v7401, 40
      %v7878 = vpop.permute.xlu0 %7877
      %7879 = vrot.lane.b32.xlu0 %v7404, 40
      %v7880 = vpop.permute.xlu0 %7879
      %7881 = vrot.lane.b32.xlu0 %v7406, 40
      %v7882 = vpop.permute.xlu0 %7881
      %7883 = vrot.lane.b32.xlu0 %v7409, 40
      %v7884 = vpop.permute.xlu0 %7883
      %7885 = vrot.lane.b32.xlu0 %v7411, 40
      %v7886 = vpop.permute.xlu0 %7885
      %7887 = vrot.lane.b32.xlu0 %v7414, 40
      %v7888 = vpop.permute.xlu0 %7887
      %7889 = vrot.lane.b32.xlu0 %v7416, 40
      %v7890 = vpop.permute.xlu0 %7889
      %7891 = vrot.lane.b32.xlu0 %v7419, 40
      %v7892 = vpop.permute.xlu0 %7891
      %7893 = vrot.lane.b32.xlu0 %v7421, 40
      %v7894 = vpop.permute.xlu0 %7893
      %7895 = vrot.lane.b32.xlu0 %v7424, 40
      %v7896 = vpop.permute.xlu0 %7895
      %7897 = vrot.lane.b32.xlu0 %v7426, 40
      %v7898 = vpop.permute.xlu0 %7897
      %7899 = vrot.lane.b32.xlu0 %v7429, 40
      %v7900 = vpop.permute.xlu0 %7899
      %7901 = vrot.lane.b32.xlu0 %v7431, 40
      %v7902 = vpop.permute.xlu0 %7901
      %7903 = vrot.lane.b32.xlu0 %v7434, 40
      %v7904 = vpop.permute.xlu0 %7903
      %7905 = vrot.lane.b32.xlu0 %v7436, 40
      %v7906 = vpop.permute.xlu0 %7905
      %7907 = vrot.lane.b32.xlu0 %v7447, 40
      %v7908 = vpop.permute.xlu0 %7907
      %7909 = vrot.lane.b32.xlu0 %v7449, 40
      %v7910 = vpop.permute.xlu0 %7909
      %7943 = vrot.lane.b32.xlu0 %v7181, 48
      %v7944 = vpop.permute.xlu0 %7943
      %7945 = vrot.lane.b32.xlu0 %v7182, 48
      %v7946 = vpop.permute.xlu0 %7945
      %7947 = vrot.lane.b32.xlu0 %v7184, 48
      %v7948 = vpop.permute.xlu0 %7947
      %7949 = vrot.lane.b32.xlu0 %v7185, 48
      %v7950 = vpop.permute.xlu0 %7949
      %7951 = vrot.lane.b32.xlu0 %v7187, 48
      %v7952 = vpop.permute.xlu0 %7951
      %7953 = vrot.lane.b32.xlu0 %v7188, 48
      %v7954 = vpop.permute.xlu0 %7953
      %7955 = vrot.lane.b32.xlu0 %v7190, 48
      %v7956 = vpop.permute.xlu0 %7955
      %7957 = vrot.lane.b32.xlu0 %v7191, 48
      %v7958 = vpop.permute.xlu0 %7957
      %7959 = vrot.lane.b32.xlu0 %v7193, 48
      %v7960 = vpop.permute.xlu0 %7959
      %7961 = vrot.lane.b32.xlu0 %v7194, 48
      %v7962 = vpop.permute.xlu0 %7961
      %7963 = vrot.lane.b32.xlu0 %v7196, 48
      %v7964 = vpop.permute.xlu0 %7963
      %7965 = vrot.lane.b32.xlu0 %v7197, 48
      %v7966 = vpop.permute.xlu0 %7965
      %7967 = vrot.lane.b32.xlu0 %v7199, 48
      %v7968 = vpop.permute.xlu0 %7967
      %7969 = vrot.lane.b32.xlu0 %v7200, 48
      %v7970 = vpop.permute.xlu0 %7969
      %7971 = vrot.lane.b32.xlu0 %v7202, 48
      %v7972 = vpop.permute.xlu0 %7971
      %7973 = vrot.lane.b32.xlu0 %v7203, 48
      %v7974 = vpop.permute.xlu0 %7973
      %7975 = vrot.lane.b32.xlu0 %v7205, 48
      %v7976 = vpop.permute.xlu0 %7975
      %7977 = vrot.lane.b32.xlu0 %v7206, 48
      %v7978 = vpop.permute.xlu0 %7977
      %7979 = vrot.lane.b32.xlu0 %v7208, 48
      %v7980 = vpop.permute.xlu0 %7979
      %7981 = vrot.lane.b32.xlu0 %v7209, 48
      %v7982 = vpop.permute.xlu0 %7981
      %7983 = vrot.lane.b32.xlu0 %v7211, 48
      %v7984 = vpop.permute.xlu0 %7983
      %7985 = vrot.lane.b32.xlu0 %v7212, 48
      %v7986 = vpop.permute.xlu0 %7985
      %7987 = vrot.lane.b32.xlu0 %v7214, 48
      %v7988 = vpop.permute.xlu0 %7987
      %7989 = vrot.lane.b32.xlu0 %v7215, 48
      %v7990 = vpop.permute.xlu0 %7989
      %7991 = vrot.lane.b32.xlu0 %v7217, 48
      %v7992 = vpop.permute.xlu0 %7991
      %7993 = vrot.lane.b32.xlu0 %v7218, 48
      %v7994 = vpop.permute.xlu0 %7993
      %7995 = vrot.lane.b32.xlu0 %v7220, 48
      %v7996 = vpop.permute.xlu0 %7995
      %7997 = vrot.lane.b32.xlu0 %v7221, 48
      %v7998 = vpop.permute.xlu0 %7997
      %7999 = vrot.lane.b32.xlu0 %v7223, 48
      %v8000 = vpop.permute.xlu0 %7999
      %8001 = vrot.lane.b32.xlu0 %v7224, 48
      %v8002 = vpop.permute.xlu0 %8001
      %8003 = vrot.lane.b32.xlu0 %v7226, 48
      %v8004 = vpop.permute.xlu0 %8003
      %8005 = vrot.lane.b32.xlu0 %v7227, 48
      %v8006 = vpop.permute.xlu0 %8005
      %8039 = vrot.lane.b32.xlu0 %v7289, 56
      %v8040 = vpop.permute.xlu0 %8039
      %8041 = vrot.lane.b32.xlu0 %v7291, 56
      %v8042 = vpop.permute.xlu0 %8041
      %8043 = vrot.lane.b32.xlu0 %v7294, 56
      %v8044 = vpop.permute.xlu0 %8043
      %8045 = vrot.lane.b32.xlu0 %v7296, 56
      %v8046 = vpop.permute.xlu0 %8045
      %8047 = vrot.lane.b32.xlu0 %v7299, 56
      %v8048 = vpop.permute.xlu0 %8047
      %8049 = vrot.lane.b32.xlu0 %v7301, 56
      %v8050 = vpop.permute.xlu0 %8049
      %8051 = vrot.lane.b32.xlu0 %v7304, 56
      %v8052 = vpop.permute.xlu0 %8051
      %8053 = vrot.lane.b32.xlu0 %v7306, 56
      %v8054 = vpop.permute.xlu0 %8053
      %8055 = vrot.lane.b32.xlu0 %v7309, 56
      %v8056 = vpop.permute.xlu0 %8055
      %8057 = vrot.lane.b32.xlu0 %v7311, 56
      %v8058 = vpop.permute.xlu0 %8057
      %8059 = vrot.lane.b32.xlu0 %v7314, 56
      %v8060 = vpop.permute.xlu0 %8059
      %8061 = vrot.lane.b32.xlu0 %v7316, 56
      %v8062 = vpop.permute.xlu0 %8061
      %8063 = vrot.lane.b32.xlu0 %v7319, 56
      %v8064 = vpop.permute.xlu0 %8063
      %8065 = vrot.lane.b32.xlu0 %v7321, 56
      %v8066 = vpop.permute.xlu0 %8065
      %8067 = vrot.lane.b32.xlu0 %v7324, 56
      %v8068 = vpop.permute.xlu0 %8067
      %8069 = vrot.lane.b32.xlu0 %v7326, 56
      %v8070 = vpop.permute.xlu0 %8069
      %8071 = vrot.lane.b32.xlu0 %v7329, 56
      %v8072 = vpop.permute.xlu0 %8071
      %8073 = vrot.lane.b32.xlu0 %v7331, 56
      %v8074 = vpop.permute.xlu0 %8073
      %8075 = vrot.lane.b32.xlu0 %v7334, 56
      %v8076 = vpop.permute.xlu0 %8075
      %8077 = vrot.lane.b32.xlu0 %v7336, 56
      %v8078 = vpop.permute.xlu0 %8077
      %8079 = vrot.lane.b32.xlu0 %v7339, 56
      %v8080 = vpop.permute.xlu0 %8079
      %8081 = vrot.lane.b32.xlu0 %v7341, 56
      %v8082 = vpop.permute.xlu0 %8081
      %8083 = vrot.lane.b32.xlu0 %v7344, 56
      %v8084 = vpop.permute.xlu0 %8083
      %8085 = vrot.lane.b32.xlu0 %v7346, 56
      %v8086 = vpop.permute.xlu0 %8085
      %8087 = vrot.lane.b32.xlu0 %v7349, 56
      %v8088 = vpop.permute.xlu0 %8087
      %8089 = vrot.lane.b32.xlu0 %v7351, 56
      %v8090 = vpop.permute.xlu0 %8089
      %8091 = vrot.lane.b32.xlu0 %v7354, 56
      %v8092 = vpop.permute.xlu0 %8091
      %8093 = vrot.lane.b32.xlu0 %v7356, 56
      %v8094 = vpop.permute.xlu0 %8093
      %8095 = vrot.lane.b32.xlu0 %v7442, 56
      %v8096 = vpop.permute.xlu0 %8095
      %8097 = vrot.lane.b32.xlu0 %v7444, 56
      %v8098 = vpop.permute.xlu0 %8097
      %8099 = vrot.lane.b32.xlu0 %v7455, 56
      %v8100 = vpop.permute.xlu0 %8099
      %8101 = vrot.lane.b32.xlu0 %v7457, 56
      %v8102 = vpop.permute.xlu0 %8101
      %8135 = vrot.lane.b32.xlu0 %v7369, 64
      %v8136 = vpop.permute.xlu0 %8135
      %8137 = vrot.lane.b32.xlu0 %v7371, 64
      %v8138 = vpop.permute.xlu0 %8137
      %8139 = vrot.lane.b32.xlu0 %v7374, 64
      %v8140 = vpop.permute.xlu0 %8139
      %8141 = vrot.lane.b32.xlu0 %v7376, 64
      %v8142 = vpop.permute.xlu0 %8141
      %8143 = vrot.lane.b32.xlu0 %v7379, 64
      %v8144 = vpop.permute.xlu0 %8143
      %8145 = vrot.lane.b32.xlu0 %v7381, 64
      %v8146 = vpop.permute.xlu0 %8145
      %8147 = vrot.lane.b32.xlu0 %v7384, 64
      %v8148 = vpop.permute.xlu0 %8147
      %8149 = vrot.lane.b32.xlu0 %v7386, 64
      %v8150 = vpop.permute.xlu0 %8149
      %8151 = vrot.lane.b32.xlu0 %v7389, 64
      %v8152 = vpop.permute.xlu0 %8151
      %8153 = vrot.lane.b32.xlu0 %v7391, 64
      %v8154 = vpop.permute.xlu0 %8153
      %8155 = vrot.lane.b32.xlu0 %v7394, 64
      %v8156 = vpop.permute.xlu0 %8155
      %8157 = vrot.lane.b32.xlu0 %v7396, 64
      %v8158 = vpop.permute.xlu0 %8157
      %8159 = vrot.lane.b32.xlu0 %v7399, 64
      %v8160 = vpop.permute.xlu0 %8159
      %8161 = vrot.lane.b32.xlu0 %v7401, 64
      %v8162 = vpop.permute.xlu0 %8161
      %8163 = vrot.lane.b32.xlu0 %v7404, 64
      %v8164 = vpop.permute.xlu0 %8163
      %8165 = vrot.lane.b32.xlu0 %v7406, 64
      %v8166 = vpop.permute.xlu0 %8165
      %8167 = vrot.lane.b32.xlu0 %v7409, 64
      %v8168 = vpop.permute.xlu0 %8167
      %8169 = vrot.lane.b32.xlu0 %v7411, 64
      %v8170 = vpop.permute.xlu0 %8169
      %8171 = vrot.lane.b32.xlu0 %v7414, 64
      %v8172 = vpop.permute.xlu0 %8171
      %8173 = vrot.lane.b32.xlu0 %v7416, 64
      %v8174 = vpop.permute.xlu0 %8173
      %8175 = vrot.lane.b32.xlu0 %v7419, 64
      %v8176 = vpop.permute.xlu0 %8175
      %8177 = vrot.lane.b32.xlu0 %v7421, 64
      %v8178 = vpop.permute.xlu0 %8177
      %8179 = vrot.lane.b32.xlu0 %v7424, 64
      %v8180 = vpop.permute.xlu0 %8179
      %8181 = vrot.lane.b32.xlu0 %v7426, 64
      %v8182 = vpop.permute.xlu0 %8181
      %8183 = vrot.lane.b32.xlu0 %v7429, 64
      %v8184 = vpop.permute.xlu0 %8183
      %8185 = vrot.lane.b32.xlu0 %v7431, 64
      %v8186 = vpop.permute.xlu0 %8185
      %8187 = vrot.lane.b32.xlu0 %v7434, 64
      %v8188 = vpop.permute.xlu0 %8187
      %8189 = vrot.lane.b32.xlu0 %v7436, 64
      %v8190 = vpop.permute.xlu0 %8189
      %8191 = vrot.lane.b32.xlu0 %v7447, 64
      %v8192 = vpop.permute.xlu0 %8191
      %8193 = vrot.lane.b32.xlu0 %v7449, 64
      %v8194 = vpop.permute.xlu0 %8193
      %8195 = vrot.lane.b32.xlu0 %v7460, 64
      %v8196 = vpop.permute.xlu0 %8195
      %8197 = vrot.lane.b32.xlu0 %v7462, 64
      %v8198 = vpop.permute.xlu0 %8197
      %v8231 = vsel %vm716, %v7175, %v7464
      %v8232 = vsel %vm716, %v7176, %v7466
      %v8233 = vsel %vm716, %v7178, %v7468
      %v8234 = vsel %vm716, %v7179, %v7470
      %v8235 = vsel %vm716, %v7181, %v7472
      %v8236 = vsel %vm716, %v7182, %v7474
      %v8237 = vsel %vm716, %v7184, %v7476
      %v8238 = vsel %vm716, %v7185, %v7478
      %v8239 = vsel %vm716, %v7187, %v7480
      %v8240 = vsel %vm716, %v7188, %v7482
      %v8241 = vsel %vm716, %v7190, %v7484
      %v8242 = vsel %vm716, %v7191, %v7486
      %v8243 = vsel %vm716, %v7193, %v7488
      %v8244 = vsel %vm716, %v7194, %v7490
      %v8245 = vsel %vm716, %v7196, %v7492
      %v8246 = vsel %vm716, %v7197, %v7494
      %v8247 = vsel %vm716, %v7199, %v7496
      %v8248 = vsel %vm716, %v7200, %v7498
      %v8249 = vsel %vm716, %v7202, %v7500
      %v8250 = vsel %vm716, %v7203, %v7502
      %v8251 = vsel %vm716, %v7205, %v7504
      %v8252 = vsel %vm716, %v7206, %v7506
      %v8253 = vsel %vm716, %v7208, %v7508
      %v8254 = vsel %vm716, %v7209, %v7510
      %v8255 = vsel %vm716, %v7211, %v7512
      %v8256 = vsel %vm716, %v7212, %v7514
      %v8257 = vsel %vm716, %v7214, %v7516
      %v8258 = vsel %vm716, %v7215, %v7518
      %v8259 = vsel %vm716, %v7217, %v7520
      %v8260 = vsel %vm716, %v7218, %v7522
      %v8261 = vsel %vm716, %v7220, %v7524
      %v8262 = vsel %vm716, %v7221, %v7526
      %v8263 = vsel %vm772, %v8231, %v7560
      %v8264 = vsel %vm772, %v8232, %v7562
      %v8265 = vsel %vm772, %v8233, %v7564
      %v8266 = vsel %vm772, %v8234, %v7566
      %v8267 = vsel %vm772, %v8235, %v7568
      %v8268 = vsel %vm772, %v8236, %v7570
      %v8269 = vsel %vm772, %v8237, %v7572
      %v8270 = vsel %vm772, %v8238, %v7574
      %v8271 = vsel %vm772, %v8239, %v7576
      %v8272 = vsel %vm772, %v8240, %v7578
      %v8273 = vsel %vm772, %v8241, %v7580
      %v8274 = vsel %vm772, %v8242, %v7582
      %v8275 = vsel %vm772, %v8243, %v7584
      %v8276 = vsel %vm772, %v8244, %v7586
      %v8277 = vsel %vm772, %v8245, %v7588
      %v8278 = vsel %vm772, %v8246, %v7590
      %v8279 = vsel %vm772, %v8247, %v7592
      %v8280 = vsel %vm772, %v8248, %v7594
      %v8281 = vsel %vm772, %v8249, %v7596
      %v8282 = vsel %vm772, %v8250, %v7598
      %v8283 = vsel %vm772, %v8251, %v7600
      %v8284 = vsel %vm772, %v8252, %v7602
      %v8285 = vsel %vm772, %v8253, %v7604
      %v8286 = vsel %vm772, %v8254, %v7606
      %v8287 = vsel %vm772, %v8255, %v7608
      %v8288 = vsel %vm772, %v8256, %v7610
      %v8289 = vsel %vm772, %v8257, %v7612
      %v8290 = vsel %vm772, %v8258, %v7614
      %v8291 = vsel %vm772, %v8259, %v7616
      %v8292 = vsel %vm772, %v8260, %v7618
      %v8293 = vsel %vm772, %v8261, %v7620
      %v8294 = vsel %vm772, %v8262, %v7622
      %v8295 = vsel %vm4580, %v8263, %v7656
      %v8296 = vsel %vm4580, %v8264, %v7658
      %v8297 = vsel %vm4580, %v8265, %v7660
      %v8298 = vsel %vm4580, %v8266, %v7662
      %v8299 = vsel %vm4580, %v8267, %v7664
      %v8300 = vsel %vm4580, %v8268, %v7666
      %v8301 = vsel %vm4580, %v8269, %v7668
      %v8302 = vsel %vm4580, %v8270, %v7670
      %v8303 = vsel %vm4580, %v8271, %v7672
      %v8304 = vsel %vm4580, %v8272, %v7674
      %v8305 = vsel %vm4580, %v8273, %v7676
      %v8306 = vsel %vm4580, %v8274, %v7678
      %v8307 = vsel %vm4580, %v8275, %v7680
      %v8308 = vsel %vm4580, %v8276, %v7682
      %v8309 = vsel %vm4580, %v8277, %v7684
      %v8310 = vsel %vm4580, %v8278, %v7686
      %v8311 = vsel %vm4580, %v8279, %v7688
      %v8312 = vsel %vm4580, %v8280, %v7690
      %v8313 = vsel %vm4580, %v8281, %v7692
      %v8314 = vsel %vm4580, %v8282, %v7694
      %v8315 = vsel %vm4580, %v8283, %v7696
      %v8316 = vsel %vm4580, %v8284, %v7698
      %v8317 = vsel %vm4580, %v8285, %v7700
      %v8318 = vsel %vm4580, %v8286, %v7702
      %v8319 = vsel %vm4580, %v8287, %v7704
      %v8320 = vsel %vm4580, %v8288, %v7706
      %v8321 = vsel %vm4580, %v8289, %v7708
      %v8322 = vsel %vm4580, %v8290, %v7710
      %v8323 = vsel %vm4580, %v8291, %v7712
      %v8324 = vsel %vm4580, %v8292, %v7714
      %v8325 = vsel %vm4580, %v8293, %v7716
      %v8326 = vsel %vm4580, %v8294, %v7718
      %v8327 = vsel %vm4589, %v8295, %v7752
      %v8328 = vsel %vm4589, %v8296, %v7754
      %v8329 = vsel %vm4589, %v8297, %v7756
      %v8330 = vsel %vm4589, %v8298, %v7758
      %v8331 = vsel %vm4589, %v8299, %v7760
      %v8332 = vsel %vm4589, %v8300, %v7762
      %v8333 = vsel %vm4589, %v8301, %v7764
      %v8334 = vsel %vm4589, %v8302, %v7766
      %v8335 = vsel %vm4589, %v8303, %v7768
      %v8336 = vsel %vm4589, %v8304, %v7770
      %v8337 = vsel %vm4589, %v8305, %v7772
      %v8338 = vsel %vm4589, %v8306, %v7774
      %v8339 = vsel %vm4589, %v8307, %v7776
      %v8340 = vsel %vm4589, %v8308, %v7778
      %v8341 = vsel %vm4589, %v8309, %v7780
      %v8342 = vsel %vm4589, %v8310, %v7782
      %v8343 = vsel %vm4589, %v8311, %v7784
      %v8344 = vsel %vm4589, %v8312, %v7786
      %v8345 = vsel %vm4589, %v8313, %v7788
      %v8346 = vsel %vm4589, %v8314, %v7790
      %v8347 = vsel %vm4589, %v8315, %v7792
      %v8348 = vsel %vm4589, %v8316, %v7794
      %v8349 = vsel %vm4589, %v8317, %v7796
      %v8350 = vsel %vm4589, %v8318, %v7798
      %v8351 = vsel %vm4589, %v8319, %v7800
      %v8352 = vsel %vm4589, %v8320, %v7802
      %v8353 = vsel %vm4589, %v8321, %v7804
      %v8354 = vsel %vm4589, %v8322, %v7806
      %v8355 = vsel %vm4589, %v8323, %v7808
      %v8356 = vsel %vm4589, %v8324, %v7810
      %v8357 = vsel %vm4589, %v8325, %v7812
      %v8358 = vsel %vm4589, %v8326, %v7814
      %v8359 = vsel %vm4598, %v8327, %v7848
      %v8360 = vsel %vm4598, %v8328, %v7850
      %v8361 = vsel %vm4598, %v8329, %v7852
      %v8362 = vsel %vm4598, %v8330, %v7854
      %v8363 = vsel %vm4598, %v8331, %v7856
      %v8364 = vsel %vm4598, %v8332, %v7858
      %v8365 = vsel %vm4598, %v8333, %v7860
      %v8366 = vsel %vm4598, %v8334, %v7862
      %v8367 = vsel %vm4598, %v8335, %v7864
      %v8368 = vsel %vm4598, %v8336, %v7866
      %v8369 = vsel %vm4598, %v8337, %v7868
      %v8370 = vsel %vm4598, %v8338, %v7870
      %v8371 = vsel %vm4598, %v8339, %v7872
      %v8372 = vsel %vm4598, %v8340, %v7874
      %v8373 = vsel %vm4598, %v8341, %v7876
      %v8374 = vsel %vm4598, %v8342, %v7878
      %v8375 = vsel %vm4598, %v8343, %v7880
      %v8376 = vsel %vm4598, %v8344, %v7882
      %v8377 = vsel %vm4598, %v8345, %v7884
      %v8378 = vsel %vm4598, %v8346, %v7886
      %v8379 = vsel %vm4598, %v8347, %v7888
      %v8380 = vsel %vm4598, %v8348, %v7890
      %v8381 = vsel %vm4598, %v8349, %v7892
      %v8382 = vsel %vm4598, %v8350, %v7894
      %v8383 = vsel %vm4598, %v8351, %v7896
      %v8384 = vsel %vm4598, %v8352, %v7898
      %v8385 = vsel %vm4598, %v8353, %v7900
      %v8386 = vsel %vm4598, %v8354, %v7902
      %v8387 = vsel %vm4598, %v8355, %v7904
      %v8388 = vsel %vm4598, %v8356, %v7906
      %v8389 = vsel %vm4598, %v8357, %v7908
      %v8390 = vsel %vm4598, %v8358, %v7910
      %v8391 = vsel %vm4607, %v8359, %v7944
      %v8392 = vsel %vm4607, %v8360, %v7946
      %v8393 = vsel %vm4607, %v8361, %v7948
      %v8394 = vsel %vm4607, %v8362, %v7950
      %v8395 = vsel %vm4607, %v8363, %v7952
      %v8396 = vsel %vm4607, %v8364, %v7954
      %v8397 = vsel %vm4607, %v8365, %v7956
      %v8398 = vsel %vm4607, %v8366, %v7958
      %v8399 = vsel %vm4607, %v8367, %v7960
      %v8400 = vsel %vm4607, %v8368, %v7962
      %v8401 = vsel %vm4607, %v8369, %v7964
      %v8402 = vsel %vm4607, %v8370, %v7966
      %v8403 = vsel %vm4607, %v8371, %v7968
      %v8404 = vsel %vm4607, %v8372, %v7970
      %v8405 = vsel %vm4607, %v8373, %v7972
      %v8406 = vsel %vm4607, %v8374, %v7974
      %v8407 = vsel %vm4607, %v8375, %v7976
      %v8408 = vsel %vm4607, %v8376, %v7978
      %v8409 = vsel %vm4607, %v8377, %v7980
      %v8410 = vsel %vm4607, %v8378, %v7982
      %v8411 = vsel %vm4607, %v8379, %v7984
      %v8412 = vsel %vm4607, %v8380, %v7986
      %v8413 = vsel %vm4607, %v8381, %v7988
      %v8414 = vsel %vm4607, %v8382, %v7990
      %v8415 = vsel %vm4607, %v8383, %v7992
      %v8416 = vsel %vm4607, %v8384, %v7994
      %v8417 = vsel %vm4607, %v8385, %v7996
      %v8418 = vsel %vm4607, %v8386, %v7998
      %v8419 = vsel %vm4607, %v8387, %v8000
      %v8420 = vsel %vm4607, %v8388, %v8002
      %v8421 = vsel %vm4607, %v8389, %v8004
      %v8422 = vsel %vm4607, %v8390, %v8006
      %v8423 = vsel %vm4616, %v8391, %v8040
      %v8424 = vsel %vm4616, %v8392, %v8042
      %v8425 = vsel %vm4616, %v8393, %v8044
      %v8426 = vsel %vm4616, %v8394, %v8046
      %v8427 = vsel %vm4616, %v8395, %v8048
      %v8428 = vsel %vm4616, %v8396, %v8050
      %v8429 = vsel %vm4616, %v8397, %v8052
      %v8430 = vsel %vm4616, %v8398, %v8054
      %v8431 = vsel %vm4616, %v8399, %v8056
      %v8432 = vsel %vm4616, %v8400, %v8058
      %v8433 = vsel %vm4616, %v8401, %v8060
      %v8434 = vsel %vm4616, %v8402, %v8062
      %v8435 = vsel %vm4616, %v8403, %v8064
      %v8436 = vsel %vm4616, %v8404, %v8066
      %v8437 = vsel %vm4616, %v8405, %v8068
      %v8438 = vsel %vm4616, %v8406, %v8070
      %v8439 = vsel %vm4616, %v8407, %v8072
      %v8440 = vsel %vm4616, %v8408, %v8074
      %v8441 = vsel %vm4616, %v8409, %v8076
      %v8442 = vsel %vm4616, %v8410, %v8078
      %v8443 = vsel %vm4616, %v8411, %v8080
      %v8444 = vsel %vm4616, %v8412, %v8082
      %v8445 = vsel %vm4616, %v8413, %v8084
      %v8446 = vsel %vm4616, %v8414, %v8086
      %v8447 = vsel %vm4616, %v8415, %v8088
      %v8448 = vsel %vm4616, %v8416, %v8090
      %v8449 = vsel %vm4616, %v8417, %v8092
      %v8450 = vsel %vm4616, %v8418, %v8094
      %v8451 = vsel %vm4616, %v8419, %v8096
      %v8452 = vsel %vm4616, %v8420, %v8098
      %v8453 = vsel %vm4616, %v8421, %v8100
      %v8454 = vsel %vm4616, %v8422, %v8102
      %v8455 = vsel %vm4625, %v8423, %v8136
      %v8456 = vsel %vm4625, %v8424, %v8138
      %v8457 = vsel %vm4625, %v8425, %v8140
      %v8458 = vsel %vm4625, %v8426, %v8142
      %v8459 = vsel %vm4625, %v8427, %v8144
      %v8460 = vsel %vm4625, %v8428, %v8146
      %v8461 = vsel %vm4625, %v8429, %v8148
      %v8462 = vsel %vm4625, %v8430, %v8150
      %v8463 = vsel %vm4625, %v8431, %v8152
      %v8464 = vsel %vm4625, %v8432, %v8154
      %v8465 = vsel %vm4625, %v8433, %v8156
      %v8466 = vsel %vm4625, %v8434, %v8158
      %v8467 = vsel %vm4625, %v8435, %v8160
      %v8468 = vsel %vm4625, %v8436, %v8162
      %v8469 = vsel %vm4625, %v8437, %v8164
      %v8470 = vsel %vm4625, %v8438, %v8166
      %v8471 = vsel %vm4625, %v8439, %v8168
      %v8472 = vsel %vm4625, %v8440, %v8170
      %v8473 = vsel %vm4625, %v8441, %v8172
      %v8474 = vsel %vm4625, %v8442, %v8174
      %v8475 = vsel %vm4625, %v8443, %v8176
      %v8476 = vsel %vm4625, %v8444, %v8178
      %v8477 = vsel %vm4625, %v8445, %v8180
      %v8478 = vsel %vm4625, %v8446, %v8182
      %v8479 = vsel %vm4625, %v8447, %v8184
      %v8480 = vsel %vm4625, %v8448, %v8186
      %v8481 = vsel %vm4625, %v8449, %v8188
      %v8482 = vsel %vm4625, %v8450, %v8190
      %v8483 = vsel %vm4625, %v8451, %v8192
      %v8484 = vsel %vm4625, %v8452, %v8194
      %v8485 = vsel %vm4625, %v8453, %v8196
      %v8486 = vsel %vm4625, %v8454, %v8198
      %v8487 = vpack.c.bf16 %v8456, %v8455
      %v8488 = vpack.c.bf16 %v8458, %v8457
      %v8489 = vpack.c.bf16 %v8460, %v8459
      %v8490 = vpack.c.bf16 %v8462, %v8461
      %v8491 = vpack.c.bf16 %v8464, %v8463
      %v8492 = vpack.c.bf16 %v8466, %v8465
      %v8493 = vpack.c.bf16 %v8468, %v8467
      %v8494 = vpack.c.bf16 %v8470, %v8469
      %v8495 = vpack.c.bf16 %v8472, %v8471
      %v8496 = vpack.c.bf16 %v8474, %v8473
      %v8497 = vpack.c.bf16 %v8476, %v8475
      %v8498 = vpack.c.bf16 %v8478, %v8477
      %v8499 = vpack.c.bf16 %v8480, %v8479
      %v8500 = vpack.c.bf16 %v8482, %v8481
      %v8501 = vpack.c.bf16 %v8484, %v8483
      %v8502 = vpack.c.bf16 %v8486, %v8485
      %v8503 = vld [vmem:[%s15] sm:$0xf]
      %v8504 = vld [vmem:[%s15 + $0x4] sm:$0xf]
      %v8505 = vld [vmem:[%s15 + $0x8] sm:$0xf]
      %v8506 = vld [vmem:[%s15 + $0xc] sm:$0xf]
      %v8507 = vld [vmem:[%s15 + $0x10] sm:$0xf]
      %v8508 = vld [vmem:[%s15 + $0x14] sm:$0xf]
      %v8509 = vld [vmem:[%s15 + $0x18] sm:$0xf]
      %v8510 = vld [vmem:[%s15 + $0x1c] sm:$0xf]
      %v8511 = vld [vmem:[%s15 + $0x20] sm:$0xf]
      %v8512 = vld [vmem:[#allocation3] sm:$0xff]
      %v8513 = vld [vmem:[#allocation3 + $0x8] sm:$0xff]
      %v8514 = vld [vmem:[#allocation3 + $0x10] sm:$0x3]
      %v8515 = vld [vmem:[#allocation3 + $0x18] sm:$0xff]
      %v8516 = vld [vmem:[#allocation3 + $0x20] sm:$0xff]
      %v8517 = vld [vmem:[#allocation3 + $0x28] sm:$0x3]
      %v8518 = vld [vmem:[#allocation3 + $0x30] sm:$0xff]
      %v8519 = vld [vmem:[#allocation3 + $0x38] sm:$0xff]
      %v8520 = vld [vmem:[#allocation3 + $0x40] sm:$0x3]
      %v8521 = vld [vmem:[#allocation3 + $0x48] sm:$0xff]
      %v8522 = vld [vmem:[#allocation3 + $0x50] sm:$0xff]
      %v8523 = vld [vmem:[#allocation3 + $0x58] sm:$0x3]
      %v8524 = vld [vmem:[#allocation3 + $0x60] sm:$0xff]
      %v8525 = vld [vmem:[#allocation3 + $0x68] sm:$0xff]
      %v8526 = vld [vmem:[#allocation3 + $0x70] sm:$0x3]
      %v8527 = vld [vmem:[#allocation3 + $0x78] sm:$0xff]
      %v8528 = vld [vmem:[#allocation3 + $0x80] sm:$0xff]
      %v8529 = vld [vmem:[#allocation3 + $0x88] sm:$0x3]
      %v8530 = vld [vmem:[#allocation3 + $0x90] sm:$0xff]
      %v8531 = vld [vmem:[#allocation3 + $0x98] sm:$0xff]
      %v8532 = vld [vmem:[#allocation3 + $0xa0] sm:$0x3]
      %v8533 = vld [vmem:[#allocation3 + $0xa8] sm:$0xff]
      %v8534 = vld [vmem:[#allocation3 + $0xb0] sm:$0xff]
      %v8535 = vld [vmem:[#allocation3 + $0xb8] sm:$0x3]
      %v8536 = vld [vmem:[#allocation3 + $0xc0] sm:$0xff]
      %v8537 = vld [vmem:[#allocation3 + $0xc8] sm:$0xff]
      %v8538 = vld [vmem:[#allocation3 + $0xd0] sm:$0x3]
      %v8539 = vld [vmem:[#allocation3 + $0xd8] sm:$0xff]
      %v8540 = vld [vmem:[#allocation3 + $0xe0] sm:$0xff]
      %v8541 = vld [vmem:[#allocation3 + $0xe8] sm:$0x3]
      %v8542 = vld [vmem:[#allocation3 + $0xf0] sm:$0xff]
      %v8543 = vld [vmem:[#allocation3 + $0xf8] sm:$0xff]
      %v8544 = vld [vmem:[#allocation3 + $0x100] sm:$0x3]
      %v8545 = vld [vmem:[#allocation3 + $0x108] sm:$0xff]
      %v8546 = vld [vmem:[#allocation3 + $0x110] sm:$0xff]
      %v8547 = vld [vmem:[#allocation3 + $0x118] sm:$0x3]
      %v8548 = vld [vmem:[#allocation3 + $0x120] sm:$0xff]
      %v8549 = vld [vmem:[#allocation3 + $0x128] sm:$0xff]
      %v8550 = vld [vmem:[#allocation3 + $0x130] sm:$0x3]
      %v8551 = vld [vmem:[#allocation3 + $0x138] sm:$0xff]
      %v8552 = vld [vmem:[#allocation3 + $0x140] sm:$0xff]
      %v8553 = vld [vmem:[#allocation3 + $0x148] sm:$0x3]
      %v8554 = vld [vmem:[#allocation3 + $0x150] sm:$0xff]
      %v8555 = vld [vmem:[#allocation3 + $0x158] sm:$0xff]
      %v8556 = vld [vmem:[#allocation3 + $0x160] sm:$0x3]
      %v8557 = vld [vmem:[#allocation3 + $0x168] sm:$0xff]
      %v8558 = vld [vmem:[#allocation3 + $0x170] sm:$0xff]
      %v8559 = vld [vmem:[#allocation3 + $0x178] sm:$0x3]
      %v8560 = vld [vmem:[#allocation3 + $0x180] sm:$0xff]
      %v8561 = vld [vmem:[#allocation3 + $0x188] sm:$0xff]
      %v8562 = vld [vmem:[#allocation3 + $0x190] sm:$0x3]
      %v8563 = vld [vmem:[#allocation3 + $0x198] sm:$0xff]
      %v8564 = vld [vmem:[#allocation3 + $0x1a0] sm:$0xff]
      %v8565 = vld [vmem:[#allocation3 + $0x1a8] sm:$0x3]
      %v8614 = vrot.slane %v8512, 1
      %v8615 = vrot.slane %v8513, 1
      %v8616 = vsel %vm1062, %v8614, %v8615
      %v8617 = vrot.slane %v8514, 1
      %v8618 = vsel %vm1062, %v8615, %v8617
      %v8619 = vrot.slane %v8515, 1
      %v8620 = vrot.slane %v8516, 1
      %v8621 = vsel %vm1062, %v8619, %v8620
      %v8622 = vrot.slane %v8517, 1
      %v8623 = vsel %vm1062, %v8620, %v8622
      %v8624 = vrot.slane %v8518, 1
      %v8625 = vrot.slane %v8519, 1
      %v8626 = vsel %vm1062, %v8624, %v8625
      %v8627 = vrot.slane %v8520, 1
      %v8628 = vsel %vm1062, %v8625, %v8627
      %v8629 = vrot.slane %v8521, 1
      %v8630 = vrot.slane %v8522, 1
      %v8631 = vsel %vm1062, %v8629, %v8630
      %v8632 = vrot.slane %v8523, 1
      %v8633 = vsel %vm1062, %v8630, %v8632
      %v8634 = vrot.slane %v8524, 1
      %v8635 = vrot.slane %v8525, 1
      %v8636 = vsel %vm1062, %v8634, %v8635
      %v8637 = vrot.slane %v8526, 1
      %v8638 = vsel %vm1062, %v8635, %v8637
      %v8639 = vrot.slane %v8527, 1
      %v8640 = vrot.slane %v8528, 1
      %v8641 = vsel %vm1062, %v8639, %v8640
      %v8642 = vrot.slane %v8529, 1
      %v8643 = vsel %vm1062, %v8640, %v8642
      %v8644 = vrot.slane %v8530, 1
      %v8645 = vrot.slane %v8531, 1
      %v8646 = vsel %vm1062, %v8644, %v8645
      %v8647 = vrot.slane %v8532, 1
      %v8648 = vsel %vm1062, %v8645, %v8647
      %v8649 = vrot.slane %v8533, 1
      %v8650 = vrot.slane %v8534, 1
      %v8651 = vsel %vm1062, %v8649, %v8650
      %v8652 = vrot.slane %v8535, 1
      %v8653 = vsel %vm1062, %v8650, %v8652
      %v8654 = vrot.slane %v8536, 1
      %v8655 = vrot.slane %v8537, 1
      %v8656 = vsel %vm1062, %v8654, %v8655
      %v8657 = vrot.slane %v8538, 1
      %v8658 = vsel %vm1062, %v8655, %v8657
      %v8659 = vrot.slane %v8539, 1
      %v8660 = vrot.slane %v8540, 1
      %v8661 = vsel %vm1062, %v8659, %v8660
      %v8662 = vrot.slane %v8541, 1
      %v8663 = vsel %vm1062, %v8660, %v8662
      %v8664 = vrot.slane %v8542, 1
      %v8665 = vrot.slane %v8543, 1
      %v8666 = vsel %vm1062, %v8664, %v8665
      %v8667 = vrot.slane %v8544, 1
      %v8668 = vsel %vm1062, %v8665, %v8667
      %v8669 = vrot.slane %v8545, 1
      %v8670 = vrot.slane %v8546, 1
      %v8671 = vsel %vm1062, %v8669, %v8670
      %v8672 = vrot.slane %v8547, 1
      %v8673 = vsel %vm1062, %v8670, %v8672
      %v8674 = vrot.slane %v8548, 1
      %v8675 = vrot.slane %v8549, 1
      %v8676 = vsel %vm1062, %v8674, %v8675
      %v8677 = vrot.slane %v8550, 1
      %v8678 = vsel %vm1062, %v8675, %v8677
      %v8679 = vrot.slane %v8551, 1
      %v8680 = vrot.slane %v8552, 1
      %v8681 = vsel %vm1062, %v8679, %v8680
      %v8682 = vrot.slane %v8553, 1
      %v8683 = vsel %vm1062, %v8680, %v8682
      %v8684 = vrot.slane %v8554, 1
      %v8685 = vrot.slane %v8555, 1
      %v8686 = vsel %vm1062, %v8684, %v8685
      %v8687 = vrot.slane %v8556, 1
      %v8688 = vsel %vm1062, %v8685, %v8687
      %v8689 = vrot.slane %v8557, 1
      %v8690 = vrot.slane %v8558, 1
      %v8691 = vsel %vm1062, %v8689, %v8690
      %v8692 = vrot.slane %v8559, 1
      %v8693 = vsel %vm1062, %v8690, %v8692
      %v8694 = vrot.slane %v8512, 2
      %v8695 = vrot.slane %v8513, 2
      %v8696 = vsel %vm1143, %v8694, %v8695
      %v8697 = vrot.slane %v8514, 2
      %v8698 = vsel %vm1143, %v8695, %v8697
      %v8699 = vrot.slane %v8515, 2
      %v8700 = vrot.slane %v8516, 2
      %v8701 = vsel %vm1143, %v8699, %v8700
      %v8702 = vrot.slane %v8517, 2
      %v8703 = vsel %vm1143, %v8700, %v8702
      %v8704 = vrot.slane %v8518, 2
      %v8705 = vrot.slane %v8519, 2
      %v8706 = vsel %vm1143, %v8704, %v8705
      %v8707 = vrot.slane %v8520, 2
      %v8708 = vsel %vm1143, %v8705, %v8707
      %v8709 = vrot.slane %v8521, 2
      %v8710 = vrot.slane %v8522, 2
      %v8711 = vsel %vm1143, %v8709, %v8710
      %v8712 = vrot.slane %v8523, 2
      %v8713 = vsel %vm1143, %v8710, %v8712
      %v8714 = vrot.slane %v8524, 2
      %v8715 = vrot.slane %v8525, 2
      %v8716 = vsel %vm1143, %v8714, %v8715
      %v8717 = vrot.slane %v8526, 2
      %v8718 = vsel %vm1143, %v8715, %v8717
      %v8719 = vrot.slane %v8527, 2
      %v8720 = vrot.slane %v8528, 2
      %v8721 = vsel %vm1143, %v8719, %v8720
      %v8722 = vrot.slane %v8529, 2
      %v8723 = vsel %vm1143, %v8720, %v8722
      %v8724 = vrot.slane %v8530, 2
      %v8725 = vrot.slane %v8531, 2
      %v8726 = vsel %vm1143, %v8724, %v8725
      %v8727 = vrot.slane %v8532, 2
      %v8728 = vsel %vm1143, %v8725, %v8727
      %v8729 = vrot.slane %v8533, 2
      %v8730 = vrot.slane %v8534, 2
      %v8731 = vsel %vm1143, %v8729, %v8730
      %v8732 = vrot.slane %v8535, 2
      %v8733 = vsel %vm1143, %v8730, %v8732
      %v8734 = vrot.slane %v8536, 2
      %v8735 = vrot.slane %v8537, 2
      %v8736 = vsel %vm1143, %v8734, %v8735
      %v8737 = vrot.slane %v8538, 2
      %v8738 = vsel %vm1143, %v8735, %v8737
      %v8739 = vrot.slane %v8539, 2
      %v8740 = vrot.slane %v8540, 2
      %v8741 = vsel %vm1143, %v8739, %v8740
      %v8742 = vrot.slane %v8541, 2
      %v8743 = vsel %vm1143, %v8740, %v8742
      %v8744 = vrot.slane %v8542, 2
      %v8745 = vrot.slane %v8543, 2
      %v8746 = vsel %vm1143, %v8744, %v8745
      %v8747 = vrot.slane %v8544, 2
      %v8748 = vsel %vm1143, %v8745, %v8747
      %v8749 = vrot.slane %v8545, 2
      %v8750 = vrot.slane %v8546, 2
      %v8751 = vsel %vm1143, %v8749, %v8750
      %v8752 = vrot.slane %v8547, 2
      %v8753 = vsel %vm1143, %v8750, %v8752
      %v8754 = vrot.slane %v8548, 2
      %v8755 = vrot.slane %v8549, 2
      %v8756 = vsel %vm1143, %v8754, %v8755
      %v8757 = vrot.slane %v8550, 2
      %v8758 = vsel %vm1143, %v8755, %v8757
      %v8759 = vrot.slane %v8551, 2
      %v8760 = vrot.slane %v8552, 2
      %v8761 = vsel %vm1143, %v8759, %v8760
      %v8762 = vrot.slane %v8553, 2
      %v8763 = vsel %vm1143, %v8760, %v8762
      %v8764 = vrot.slane %v8554, 2
      %v8765 = vrot.slane %v8555, 2
      %v8766 = vsel %vm1143, %v8764, %v8765
      %v8767 = vrot.slane %v8556, 2
      %v8768 = vsel %vm1143, %v8765, %v8767
      %v8769 = vrot.slane %v8557, 2
      %v8770 = vrot.slane %v8558, 2
      %v8771 = vsel %vm1143, %v8769, %v8770
      %v8772 = vrot.slane %v8559, 2
      %v8773 = vsel %vm1143, %v8770, %v8772
      %v8777 = vrot.slane %v8560, 1
      %v8778 = vrot.slane %v8561, 1
      %v8779 = vsel %vm1062, %v8777, %v8778
      %v8780 = vrot.slane %v8562, 1
      %v8781 = vsel %vm1062, %v8778, %v8780
      %v8782 = vrot.slane %v8560, 2
      %v8783 = vrot.slane %v8561, 2
      %v8784 = vsel %vm1143, %v8782, %v8783
      %v8785 = vrot.slane %v8562, 2
      %v8786 = vsel %vm1143, %v8783, %v8785
      %v8790 = vrot.slane %v8563, 1
      %v8791 = vrot.slane %v8564, 1
      %v8792 = vsel %vm1062, %v8790, %v8791
      %v8793 = vrot.slane %v8565, 1
      %v8794 = vsel %vm1062, %v8791, %v8793
      %v8795 = vrot.slane %v8563, 2
      %v8796 = vrot.slane %v8564, 2
      %v8797 = vsel %vm1143, %v8795, %v8796
      %v8798 = vrot.slane %v8565, 2
      %v8799 = vsel %vm1143, %v8796, %v8798
      %8800 = vrot.lane.b32.xlu0 %v8616, 8
      %v8801 = vpop.permute.xlu0 %8800
      %8802 = vrot.lane.b32.xlu0 %v8618, 8
      %v8803 = vpop.permute.xlu0 %8802
      %8804 = vrot.lane.b32.xlu0 %v8621, 8
      %v8805 = vpop.permute.xlu0 %8804
      %8806 = vrot.lane.b32.xlu0 %v8623, 8
      %v8807 = vpop.permute.xlu0 %8806
      %8808 = vrot.lane.b32.xlu0 %v8626, 8
      %v8809 = vpop.permute.xlu0 %8808
      %8810 = vrot.lane.b32.xlu0 %v8628, 8
      %v8811 = vpop.permute.xlu0 %8810
      %8812 = vrot.lane.b32.xlu0 %v8631, 8
      %v8813 = vpop.permute.xlu0 %8812
      %8814 = vrot.lane.b32.xlu0 %v8633, 8
      %v8815 = vpop.permute.xlu0 %8814
      %8816 = vrot.lane.b32.xlu0 %v8636, 8
      %v8817 = vpop.permute.xlu0 %8816
      %8818 = vrot.lane.b32.xlu0 %v8638, 8
      %v8819 = vpop.permute.xlu0 %8818
      %8820 = vrot.lane.b32.xlu0 %v8641, 8
      %v8821 = vpop.permute.xlu0 %8820
      %8822 = vrot.lane.b32.xlu0 %v8643, 8
      %v8823 = vpop.permute.xlu0 %8822
      %8824 = vrot.lane.b32.xlu0 %v8646, 8
      %v8825 = vpop.permute.xlu0 %8824
      %8826 = vrot.lane.b32.xlu0 %v8648, 8
      %v8827 = vpop.permute.xlu0 %8826
      %8828 = vrot.lane.b32.xlu0 %v8651, 8
      %v8829 = vpop.permute.xlu0 %8828
      %8830 = vrot.lane.b32.xlu0 %v8653, 8
      %v8831 = vpop.permute.xlu0 %8830
      %8832 = vrot.lane.b32.xlu0 %v8656, 8
      %v8833 = vpop.permute.xlu0 %8832
      %8834 = vrot.lane.b32.xlu0 %v8658, 8
      %v8835 = vpop.permute.xlu0 %8834
      %8836 = vrot.lane.b32.xlu0 %v8661, 8
      %v8837 = vpop.permute.xlu0 %8836
      %8838 = vrot.lane.b32.xlu0 %v8663, 8
      %v8839 = vpop.permute.xlu0 %8838
      %8840 = vrot.lane.b32.xlu0 %v8666, 8
      %v8841 = vpop.permute.xlu0 %8840
      %8842 = vrot.lane.b32.xlu0 %v8668, 8
      %v8843 = vpop.permute.xlu0 %8842
      %8844 = vrot.lane.b32.xlu0 %v8671, 8
      %v8845 = vpop.permute.xlu0 %8844
      %8846 = vrot.lane.b32.xlu0 %v8673, 8
      %v8847 = vpop.permute.xlu0 %8846
      %8848 = vrot.lane.b32.xlu0 %v8676, 8
      %v8849 = vpop.permute.xlu0 %8848
      %8850 = vrot.lane.b32.xlu0 %v8678, 8
      %v8851 = vpop.permute.xlu0 %8850
      %8852 = vrot.lane.b32.xlu0 %v8681, 8
      %v8853 = vpop.permute.xlu0 %8852
      %8854 = vrot.lane.b32.xlu0 %v8683, 8
      %v8855 = vpop.permute.xlu0 %8854
      %8856 = vrot.lane.b32.xlu0 %v8686, 8
      %v8857 = vpop.permute.xlu0 %8856
      %8858 = vrot.lane.b32.xlu0 %v8688, 8
      %v8859 = vpop.permute.xlu0 %8858
      %8860 = vrot.lane.b32.xlu0 %v8691, 8
      %v8861 = vpop.permute.xlu0 %8860
      %8862 = vrot.lane.b32.xlu0 %v8693, 8
      %v8863 = vpop.permute.xlu0 %8862
      %8896 = vrot.lane.b32.xlu0 %v8696, 16
      %v8897 = vpop.permute.xlu0 %8896
      %8898 = vrot.lane.b32.xlu0 %v8698, 16
      %v8899 = vpop.permute.xlu0 %8898
      %8900 = vrot.lane.b32.xlu0 %v8701, 16
      %v8901 = vpop.permute.xlu0 %8900
      %8902 = vrot.lane.b32.xlu0 %v8703, 16
      %v8903 = vpop.permute.xlu0 %8902
      %8904 = vrot.lane.b32.xlu0 %v8706, 16
      %v8905 = vpop.permute.xlu0 %8904
      %8906 = vrot.lane.b32.xlu0 %v8708, 16
      %v8907 = vpop.permute.xlu0 %8906
      %8908 = vrot.lane.b32.xlu0 %v8711, 16
      %v8909 = vpop.permute.xlu0 %8908
      %8910 = vrot.lane.b32.xlu0 %v8713, 16
      %v8911 = vpop.permute.xlu0 %8910
      %8912 = vrot.lane.b32.xlu0 %v8716, 16
      %v8913 = vpop.permute.xlu0 %8912
      %8914 = vrot.lane.b32.xlu0 %v8718, 16
      %v8915 = vpop.permute.xlu0 %8914
      %8916 = vrot.lane.b32.xlu0 %v8721, 16
      %v8917 = vpop.permute.xlu0 %8916
      %8918 = vrot.lane.b32.xlu0 %v8723, 16
      %v8919 = vpop.permute.xlu0 %8918
      %8920 = vrot.lane.b32.xlu0 %v8726, 16
      %v8921 = vpop.permute.xlu0 %8920
      %8922 = vrot.lane.b32.xlu0 %v8728, 16
      %v8923 = vpop.permute.xlu0 %8922
      %8924 = vrot.lane.b32.xlu0 %v8731, 16
      %v8925 = vpop.permute.xlu0 %8924
      %8926 = vrot.lane.b32.xlu0 %v8733, 16
      %v8927 = vpop.permute.xlu0 %8926
      %8928 = vrot.lane.b32.xlu0 %v8736, 16
      %v8929 = vpop.permute.xlu0 %8928
      %8930 = vrot.lane.b32.xlu0 %v8738, 16
      %v8931 = vpop.permute.xlu0 %8930
      %8932 = vrot.lane.b32.xlu0 %v8741, 16
      %v8933 = vpop.permute.xlu0 %8932
      %8934 = vrot.lane.b32.xlu0 %v8743, 16
      %v8935 = vpop.permute.xlu0 %8934
      %8936 = vrot.lane.b32.xlu0 %v8746, 16
      %v8937 = vpop.permute.xlu0 %8936
      %8938 = vrot.lane.b32.xlu0 %v8748, 16
      %v8939 = vpop.permute.xlu0 %8938
      %8940 = vrot.lane.b32.xlu0 %v8751, 16
      %v8941 = vpop.permute.xlu0 %8940
      %8942 = vrot.lane.b32.xlu0 %v8753, 16
      %v8943 = vpop.permute.xlu0 %8942
      %8944 = vrot.lane.b32.xlu0 %v8756, 16
      %v8945 = vpop.permute.xlu0 %8944
      %8946 = vrot.lane.b32.xlu0 %v8758, 16
      %v8947 = vpop.permute.xlu0 %8946
      %8948 = vrot.lane.b32.xlu0 %v8761, 16
      %v8949 = vpop.permute.xlu0 %8948
      %8950 = vrot.lane.b32.xlu0 %v8763, 16
      %v8951 = vpop.permute.xlu0 %8950
      %8952 = vrot.lane.b32.xlu0 %v8766, 16
      %v8953 = vpop.permute.xlu0 %8952
      %8954 = vrot.lane.b32.xlu0 %v8768, 16
      %v8955 = vpop.permute.xlu0 %8954
      %8956 = vrot.lane.b32.xlu0 %v8771, 16
      %v8957 = vpop.permute.xlu0 %8956
      %8958 = vrot.lane.b32.xlu0 %v8773, 16
      %v8959 = vpop.permute.xlu0 %8958
      %8992 = vrot.lane.b32.xlu0 %v8515, 24
      %v8993 = vpop.permute.xlu0 %8992
      %8994 = vrot.lane.b32.xlu0 %v8516, 24
      %v8995 = vpop.permute.xlu0 %8994
      %8996 = vrot.lane.b32.xlu0 %v8518, 24
      %v8997 = vpop.permute.xlu0 %8996
      %8998 = vrot.lane.b32.xlu0 %v8519, 24
      %v8999 = vpop.permute.xlu0 %8998
      %9000 = vrot.lane.b32.xlu0 %v8521, 24
      %v9001 = vpop.permute.xlu0 %9000
      %9002 = vrot.lane.b32.xlu0 %v8522, 24
      %v9003 = vpop.permute.xlu0 %9002
      %9004 = vrot.lane.b32.xlu0 %v8524, 24
      %v9005 = vpop.permute.xlu0 %9004
      %9006 = vrot.lane.b32.xlu0 %v8525, 24
      %v9007 = vpop.permute.xlu0 %9006
      %9008 = vrot.lane.b32.xlu0 %v8527, 24
      %v9009 = vpop.permute.xlu0 %9008
      %9010 = vrot.lane.b32.xlu0 %v8528, 24
      %v9011 = vpop.permute.xlu0 %9010
      %9012 = vrot.lane.b32.xlu0 %v8530, 24
      %v9013 = vpop.permute.xlu0 %9012
      %9014 = vrot.lane.b32.xlu0 %v8531, 24
      %v9015 = vpop.permute.xlu0 %9014
      %9016 = vrot.lane.b32.xlu0 %v8533, 24
      %v9017 = vpop.permute.xlu0 %9016
      %9018 = vrot.lane.b32.xlu0 %v8534, 24
      %v9019 = vpop.permute.xlu0 %9018
      %9020 = vrot.lane.b32.xlu0 %v8536, 24
      %v9021 = vpop.permute.xlu0 %9020
      %9022 = vrot.lane.b32.xlu0 %v8537, 24
      %v9023 = vpop.permute.xlu0 %9022
      %9024 = vrot.lane.b32.xlu0 %v8539, 24
      %v9025 = vpop.permute.xlu0 %9024
      %9026 = vrot.lane.b32.xlu0 %v8540, 24
      %v9027 = vpop.permute.xlu0 %9026
      %9028 = vrot.lane.b32.xlu0 %v8542, 24
      %v9029 = vpop.permute.xlu0 %9028
      %9030 = vrot.lane.b32.xlu0 %v8543, 24
      %v9031 = vpop.permute.xlu0 %9030
      %9032 = vrot.lane.b32.xlu0 %v8545, 24
      %v9033 = vpop.permute.xlu0 %9032
      %9034 = vrot.lane.b32.xlu0 %v8546, 24
      %v9035 = vpop.permute.xlu0 %9034
      %9036 = vrot.lane.b32.xlu0 %v8548, 24
      %v9037 = vpop.permute.xlu0 %9036
      %9038 = vrot.lane.b32.xlu0 %v8549, 24
      %v9039 = vpop.permute.xlu0 %9038
      %9040 = vrot.lane.b32.xlu0 %v8551, 24
      %v9041 = vpop.permute.xlu0 %9040
      %9042 = vrot.lane.b32.xlu0 %v8552, 24
      %v9043 = vpop.permute.xlu0 %9042
      %9044 = vrot.lane.b32.xlu0 %v8554, 24
      %v9045 = vpop.permute.xlu0 %9044
      %9046 = vrot.lane.b32.xlu0 %v8555, 24
      %v9047 = vpop.permute.xlu0 %9046
      %9048 = vrot.lane.b32.xlu0 %v8557, 24
      %v9049 = vpop.permute.xlu0 %9048
      %9050 = vrot.lane.b32.xlu0 %v8558, 24
      %v9051 = vpop.permute.xlu0 %9050
      %9052 = vrot.lane.b32.xlu0 %v8560, 24
      %v9053 = vpop.permute.xlu0 %9052
      %9054 = vrot.lane.b32.xlu0 %v8561, 24
      %v9055 = vpop.permute.xlu0 %9054
      %9088 = vrot.lane.b32.xlu0 %v8621, 32
      %v9089 = vpop.permute.xlu0 %9088
      %9090 = vrot.lane.b32.xlu0 %v8623, 32
      %v9091 = vpop.permute.xlu0 %9090
      %9092 = vrot.lane.b32.xlu0 %v8626, 32
      %v9093 = vpop.permute.xlu0 %9092
      %9094 = vrot.lane.b32.xlu0 %v8628, 32
      %v9095 = vpop.permute.xlu0 %9094
      %9096 = vrot.lane.b32.xlu0 %v8631, 32
      %v9097 = vpop.permute.xlu0 %9096
      %9098 = vrot.lane.b32.xlu0 %v8633, 32
      %v9099 = vpop.permute.xlu0 %9098
      %9100 = vrot.lane.b32.xlu0 %v8636, 32
      %v9101 = vpop.permute.xlu0 %9100
      %9102 = vrot.lane.b32.xlu0 %v8638, 32
      %v9103 = vpop.permute.xlu0 %9102
      %9104 = vrot.lane.b32.xlu0 %v8641, 32
      %v9105 = vpop.permute.xlu0 %9104
      %9106 = vrot.lane.b32.xlu0 %v8643, 32
      %v9107 = vpop.permute.xlu0 %9106
      %9108 = vrot.lane.b32.xlu0 %v8646, 32
      %v9109 = vpop.permute.xlu0 %9108
      %9110 = vrot.lane.b32.xlu0 %v8648, 32
      %v9111 = vpop.permute.xlu0 %9110
      %9112 = vrot.lane.b32.xlu0 %v8651, 32
      %v9113 = vpop.permute.xlu0 %9112
      %9114 = vrot.lane.b32.xlu0 %v8653, 32
      %v9115 = vpop.permute.xlu0 %9114
      %9116 = vrot.lane.b32.xlu0 %v8656, 32
      %v9117 = vpop.permute.xlu0 %9116
      %9118 = vrot.lane.b32.xlu0 %v8658, 32
      %v9119 = vpop.permute.xlu0 %9118
      %9120 = vrot.lane.b32.xlu0 %v8661, 32
      %v9121 = vpop.permute.xlu0 %9120
      %9122 = vrot.lane.b32.xlu0 %v8663, 32
      %v9123 = vpop.permute.xlu0 %9122
      %9124 = vrot.lane.b32.xlu0 %v8666, 32
      %v9125 = vpop.permute.xlu0 %9124
      %9126 = vrot.lane.b32.xlu0 %v8668, 32
      %v9127 = vpop.permute.xlu0 %9126
      %9128 = vrot.lane.b32.xlu0 %v8671, 32
      %v9129 = vpop.permute.xlu0 %9128
      %9130 = vrot.lane.b32.xlu0 %v8673, 32
      %v9131 = vpop.permute.xlu0 %9130
      %9132 = vrot.lane.b32.xlu0 %v8676, 32
      %v9133 = vpop.permute.xlu0 %9132
      %9134 = vrot.lane.b32.xlu0 %v8678, 32
      %v9135 = vpop.permute.xlu0 %9134
      %9136 = vrot.lane.b32.xlu0 %v8681, 32
      %v9137 = vpop.permute.xlu0 %9136
      %9138 = vrot.lane.b32.xlu0 %v8683, 32
      %v9139 = vpop.permute.xlu0 %9138
      %9140 = vrot.lane.b32.xlu0 %v8686, 32
      %v9141 = vpop.permute.xlu0 %9140
      %9142 = vrot.lane.b32.xlu0 %v8688, 32
      %v9143 = vpop.permute.xlu0 %9142
      %9144 = vrot.lane.b32.xlu0 %v8691, 32
      %v9145 = vpop.permute.xlu0 %9144
      %9146 = vrot.lane.b32.xlu0 %v8693, 32
      %v9147 = vpop.permute.xlu0 %9146
      %9148 = vrot.lane.b32.xlu0 %v8779, 32
      %v9149 = vpop.permute.xlu0 %9148
      %9150 = vrot.lane.b32.xlu0 %v8781, 32
      %v9151 = vpop.permute.xlu0 %9150
      %9184 = vrot.lane.b32.xlu0 %v8701, 40
      %v9185 = vpop.permute.xlu0 %9184
      %9186 = vrot.lane.b32.xlu0 %v8703, 40
      %v9187 = vpop.permute.xlu0 %9186
      %9188 = vrot.lane.b32.xlu0 %v8706, 40
      %v9189 = vpop.permute.xlu0 %9188
      %9190 = vrot.lane.b32.xlu0 %v8708, 40
      %v9191 = vpop.permute.xlu0 %9190
      %9192 = vrot.lane.b32.xlu0 %v8711, 40
      %v9193 = vpop.permute.xlu0 %9192
      %9194 = vrot.lane.b32.xlu0 %v8713, 40
      %v9195 = vpop.permute.xlu0 %9194
      %9196 = vrot.lane.b32.xlu0 %v8716, 40
      %v9197 = vpop.permute.xlu0 %9196
      %9198 = vrot.lane.b32.xlu0 %v8718, 40
      %v9199 = vpop.permute.xlu0 %9198
      %9200 = vrot.lane.b32.xlu0 %v8721, 40
      %v9201 = vpop.permute.xlu0 %9200
      %9202 = vrot.lane.b32.xlu0 %v8723, 40
      %v9203 = vpop.permute.xlu0 %9202
      %9204 = vrot.lane.b32.xlu0 %v8726, 40
      %v9205 = vpop.permute.xlu0 %9204
      %9206 = vrot.lane.b32.xlu0 %v8728, 40
      %v9207 = vpop.permute.xlu0 %9206
      %9208 = vrot.lane.b32.xlu0 %v8731, 40
      %v9209 = vpop.permute.xlu0 %9208
      %9210 = vrot.lane.b32.xlu0 %v8733, 40
      %v9211 = vpop.permute.xlu0 %9210
      %9212 = vrot.lane.b32.xlu0 %v8736, 40
      %v9213 = vpop.permute.xlu0 %9212
      %9214 = vrot.lane.b32.xlu0 %v8738, 40
      %v9215 = vpop.permute.xlu0 %9214
      %9216 = vrot.lane.b32.xlu0 %v8741, 40
      %v9217 = vpop.permute.xlu0 %9216
      %9218 = vrot.lane.b32.xlu0 %v8743, 40
      %v9219 = vpop.permute.xlu0 %9218
      %9220 = vrot.lane.b32.xlu0 %v8746, 40
      %v9221 = vpop.permute.xlu0 %9220
      %9222 = vrot.lane.b32.xlu0 %v8748, 40
      %v9223 = vpop.permute.xlu0 %9222
      %9224 = vrot.lane.b32.xlu0 %v8751, 40
      %v9225 = vpop.permute.xlu0 %9224
      %9226 = vrot.lane.b32.xlu0 %v8753, 40
      %v9227 = vpop.permute.xlu0 %9226
      %9228 = vrot.lane.b32.xlu0 %v8756, 40
      %v9229 = vpop.permute.xlu0 %9228
      %9230 = vrot.lane.b32.xlu0 %v8758, 40
      %v9231 = vpop.permute.xlu0 %9230
      %9232 = vrot.lane.b32.xlu0 %v8761, 40
      %v9233 = vpop.permute.xlu0 %9232
      %9234 = vrot.lane.b32.xlu0 %v8763, 40
      %v9235 = vpop.permute.xlu0 %9234
      %9236 = vrot.lane.b32.xlu0 %v8766, 40
      %v9237 = vpop.permute.xlu0 %9236
      %9238 = vrot.lane.b32.xlu0 %v8768, 40
      %v9239 = vpop.permute.xlu0 %9238
      %9240 = vrot.lane.b32.xlu0 %v8771, 40
      %v9241 = vpop.permute.xlu0 %9240
      %9242 = vrot.lane.b32.xlu0 %v8773, 40
      %v9243 = vpop.permute.xlu0 %9242
      %9244 = vrot.lane.b32.xlu0 %v8784, 40
      %v9245 = vpop.permute.xlu0 %9244
      %9246 = vrot.lane.b32.xlu0 %v8786, 40
      %v9247 = vpop.permute.xlu0 %9246
      %9280 = vrot.lane.b32.xlu0 %v8518, 48
      %v9281 = vpop.permute.xlu0 %9280
      %9282 = vrot.lane.b32.xlu0 %v8519, 48
      %v9283 = vpop.permute.xlu0 %9282
      %9284 = vrot.lane.b32.xlu0 %v8521, 48
      %v9285 = vpop.permute.xlu0 %9284
      %9286 = vrot.lane.b32.xlu0 %v8522, 48
      %v9287 = vpop.permute.xlu0 %9286
      %9288 = vrot.lane.b32.xlu0 %v8524, 48
      %v9289 = vpop.permute.xlu0 %9288
      %9290 = vrot.lane.b32.xlu0 %v8525, 48
      %v9291 = vpop.permute.xlu0 %9290
      %9292 = vrot.lane.b32.xlu0 %v8527, 48
      %v9293 = vpop.permute.xlu0 %9292
      %9294 = vrot.lane.b32.xlu0 %v8528, 48
      %v9295 = vpop.permute.xlu0 %9294
      %9296 = vrot.lane.b32.xlu0 %v8530, 48
      %v9297 = vpop.permute.xlu0 %9296
      %9298 = vrot.lane.b32.xlu0 %v8531, 48
      %v9299 = vpop.permute.xlu0 %9298
      %9300 = vrot.lane.b32.xlu0 %v8533, 48
      %v9301 = vpop.permute.xlu0 %9300
      %9302 = vrot.lane.b32.xlu0 %v8534, 48
      %v9303 = vpop.permute.xlu0 %9302
      %9304 = vrot.lane.b32.xlu0 %v8536, 48
      %v9305 = vpop.permute.xlu0 %9304
      %9306 = vrot.lane.b32.xlu0 %v8537, 48
      %v9307 = vpop.permute.xlu0 %9306
      %9308 = vrot.lane.b32.xlu0 %v8539, 48
      %v9309 = vpop.permute.xlu0 %9308
      %9310 = vrot.lane.b32.xlu0 %v8540, 48
      %v9311 = vpop.permute.xlu0 %9310
      %9312 = vrot.lane.b32.xlu0 %v8542, 48
      %v9313 = vpop.permute.xlu0 %9312
      %9314 = vrot.lane.b32.xlu0 %v8543, 48
      %v9315 = vpop.permute.xlu0 %9314
      %9316 = vrot.lane.b32.xlu0 %v8545, 48
      %v9317 = vpop.permute.xlu0 %9316
      %9318 = vrot.lane.b32.xlu0 %v8546, 48
      %v9319 = vpop.permute.xlu0 %9318
      %9320 = vrot.lane.b32.xlu0 %v8548, 48
      %v9321 = vpop.permute.xlu0 %9320
      %9322 = vrot.lane.b32.xlu0 %v8549, 48
      %v9323 = vpop.permute.xlu0 %9322
      %9324 = vrot.lane.b32.xlu0 %v8551, 48
      %v9325 = vpop.permute.xlu0 %9324
      %9326 = vrot.lane.b32.xlu0 %v8552, 48
      %v9327 = vpop.permute.xlu0 %9326
      %9328 = vrot.lane.b32.xlu0 %v8554, 48
      %v9329 = vpop.permute.xlu0 %9328
      %9330 = vrot.lane.b32.xlu0 %v8555, 48
      %v9331 = vpop.permute.xlu0 %9330
      %9332 = vrot.lane.b32.xlu0 %v8557, 48
      %v9333 = vpop.permute.xlu0 %9332
      %9334 = vrot.lane.b32.xlu0 %v8558, 48
      %v9335 = vpop.permute.xlu0 %9334
      %9336 = vrot.lane.b32.xlu0 %v8560, 48
      %v9337 = vpop.permute.xlu0 %9336
      %9338 = vrot.lane.b32.xlu0 %v8561, 48
      %v9339 = vpop.permute.xlu0 %9338
      %9340 = vrot.lane.b32.xlu0 %v8563, 48
      %v9341 = vpop.permute.xlu0 %9340
      %9342 = vrot.lane.b32.xlu0 %v8564, 48
      %v9343 = vpop.permute.xlu0 %9342
      %9376 = vrot.lane.b32.xlu0 %v8626, 56
      %v9377 = vpop.permute.xlu0 %9376
      %9378 = vrot.lane.b32.xlu0 %v8628, 56
      %v9379 = vpop.permute.xlu0 %9378
      %9380 = vrot.lane.b32.xlu0 %v8631, 56
      %v9381 = vpop.permute.xlu0 %9380
      %9382 = vrot.lane.b32.xlu0 %v8633, 56
      %v9383 = vpop.permute.xlu0 %9382
      %9384 = vrot.lane.b32.xlu0 %v8636, 56
      %v9385 = vpop.permute.xlu0 %9384
      %9386 = vrot.lane.b32.xlu0 %v8638, 56
      %v9387 = vpop.permute.xlu0 %9386
      %9388 = vrot.lane.b32.xlu0 %v8641, 56
      %v9389 = vpop.permute.xlu0 %9388
      %9390 = vrot.lane.b32.xlu0 %v8643, 56
      %v9391 = vpop.permute.xlu0 %9390
      %9392 = vrot.lane.b32.xlu0 %v8646, 56
      %v9393 = vpop.permute.xlu0 %9392
      %9394 = vrot.lane.b32.xlu0 %v8648, 56
      %v9395 = vpop.permute.xlu0 %9394
      %9396 = vrot.lane.b32.xlu0 %v8651, 56
      %v9397 = vpop.permute.xlu0 %9396
      %9398 = vrot.lane.b32.xlu0 %v8653, 56
      %v9399 = vpop.permute.xlu0 %9398
      %9400 = vrot.lane.b32.xlu0 %v8656, 56
      %v9401 = vpop.permute.xlu0 %9400
      %9402 = vrot.lane.b32.xlu0 %v8658, 56
      %v9403 = vpop.permute.xlu0 %9402
      %9404 = vrot.lane.b32.xlu0 %v8661, 56
      %v9405 = vpop.permute.xlu0 %9404
      %9406 = vrot.lane.b32.xlu0 %v8663, 56
      %v9407 = vpop.permute.xlu0 %9406
      %9408 = vrot.lane.b32.xlu0 %v8666, 56
      %v9409 = vpop.permute.xlu0 %9408
      %9410 = vrot.lane.b32.xlu0 %v8668, 56
      %v9411 = vpop.permute.xlu0 %9410
      %9412 = vrot.lane.b32.xlu0 %v8671, 56
      %v9413 = vpop.permute.xlu0 %9412
      %9414 = vrot.lane.b32.xlu0 %v8673, 56
      %v9415 = vpop.permute.xlu0 %9414
      %9416 = vrot.lane.b32.xlu0 %v8676, 56
      %v9417 = vpop.permute.xlu0 %9416
      %9418 = vrot.lane.b32.xlu0 %v8678, 56
      %v9419 = vpop.permute.xlu0 %9418
      %9420 = vrot.lane.b32.xlu0 %v8681, 56
      %v9421 = vpop.permute.xlu0 %9420
      %9422 = vrot.lane.b32.xlu0 %v8683, 56
      %v9423 = vpop.permute.xlu0 %9422
      %9424 = vrot.lane.b32.xlu0 %v8686, 56
      %v9425 = vpop.permute.xlu0 %9424
      %9426 = vrot.lane.b32.xlu0 %v8688, 56
      %v9427 = vpop.permute.xlu0 %9426
      %9428 = vrot.lane.b32.xlu0 %v8691, 56
      %v9429 = vpop.permute.xlu0 %9428
      %9430 = vrot.lane.b32.xlu0 %v8693, 56
      %v9431 = vpop.permute.xlu0 %9430
      %9432 = vrot.lane.b32.xlu0 %v8779, 56
      %v9433 = vpop.permute.xlu0 %9432
      %9434 = vrot.lane.b32.xlu0 %v8781, 56
      %v9435 = vpop.permute.xlu0 %9434
      %9436 = vrot.lane.b32.xlu0 %v8792, 56
      %v9437 = vpop.permute.xlu0 %9436
      %9438 = vrot.lane.b32.xlu0 %v8794, 56
      %v9439 = vpop.permute.xlu0 %9438
      %9472 = vrot.lane.b32.xlu0 %v8706, 64
      %v9473 = vpop.permute.xlu0 %9472
      %9474 = vrot.lane.b32.xlu0 %v8708, 64
      %v9475 = vpop.permute.xlu0 %9474
      %9476 = vrot.lane.b32.xlu0 %v8711, 64
      %v9477 = vpop.permute.xlu0 %9476
      %9478 = vrot.lane.b32.xlu0 %v8713, 64
      %v9479 = vpop.permute.xlu0 %9478
      %9480 = vrot.lane.b32.xlu0 %v8716, 64
      %v9481 = vpop.permute.xlu0 %9480
      %9482 = vrot.lane.b32.xlu0 %v8718, 64
      %v9483 = vpop.permute.xlu0 %9482
      %9484 = vrot.lane.b32.xlu0 %v8721, 64
      %v9485 = vpop.permute.xlu0 %9484
      %9486 = vrot.lane.b32.xlu0 %v8723, 64
      %v9487 = vpop.permute.xlu0 %9486
      %9488 = vrot.lane.b32.xlu0 %v8726, 64
      %v9489 = vpop.permute.xlu0 %9488
      %9490 = vrot.lane.b32.xlu0 %v8728, 64
      %v9491 = vpop.permute.xlu0 %9490
      %9492 = vrot.lane.b32.xlu0 %v8731, 64
      %v9493 = vpop.permute.xlu0 %9492
      %9494 = vrot.lane.b32.xlu0 %v8733, 64
      %v9495 = vpop.permute.xlu0 %9494
      %9496 = vrot.lane.b32.xlu0 %v8736, 64
      %v9497 = vpop.permute.xlu0 %9496
      %9498 = vrot.lane.b32.xlu0 %v8738, 64
      %v9499 = vpop.permute.xlu0 %9498
      %9500 = vrot.lane.b32.xlu0 %v8741, 64
      %v9501 = vpop.permute.xlu0 %9500
      %9502 = vrot.lane.b32.xlu0 %v8743, 64
      %v9503 = vpop.permute.xlu0 %9502
      %9504 = vrot.lane.b32.xlu0 %v8746, 64
      %v9505 = vpop.permute.xlu0 %9504
      %9506 = vrot.lane.b32.xlu0 %v8748, 64
      %v9507 = vpop.permute.xlu0 %9506
      %9508 = vrot.lane.b32.xlu0 %v8751, 64
      %v9509 = vpop.permute.xlu0 %9508
      %9510 = vrot.lane.b32.xlu0 %v8753, 64
      %v9511 = vpop.permute.xlu0 %9510
      %9512 = vrot.lane.b32.xlu0 %v8756, 64
      %v9513 = vpop.permute.xlu0 %9512
      %9514 = vrot.lane.b32.xlu0 %v8758, 64
      %v9515 = vpop.permute.xlu0 %9514
      %9516 = vrot.lane.b32.xlu0 %v8761, 64
      %v9517 = vpop.permute.xlu0 %9516
      %9518 = vrot.lane.b32.xlu0 %v8763, 64
      %v9519 = vpop.permute.xlu0 %9518
      %9520 = vrot.lane.b32.xlu0 %v8766, 64
      %v9521 = vpop.permute.xlu0 %9520
      %9522 = vrot.lane.b32.xlu0 %v8768, 64
      %v9523 = vpop.permute.xlu0 %9522
      %9524 = vrot.lane.b32.xlu0 %v8771, 64
      %v9525 = vpop.permute.xlu0 %9524
      %9526 = vrot.lane.b32.xlu0 %v8773, 64
      %v9527 = vpop.permute.xlu0 %9526
      %9528 = vrot.lane.b32.xlu0 %v8784, 64
      %v9529 = vpop.permute.xlu0 %9528
      %9530 = vrot.lane.b32.xlu0 %v8786, 64
      %v9531 = vpop.permute.xlu0 %9530
      %9532 = vrot.lane.b32.xlu0 %v8797, 64
      %v9533 = vpop.permute.xlu0 %9532
      %9534 = vrot.lane.b32.xlu0 %v8799, 64
      %v9535 = vpop.permute.xlu0 %9534
      %v9568 = vsel %vm716, %v8512, %v8801
      %v9569 = vsel %vm716, %v8513, %v8803
      %v9570 = vsel %vm716, %v8515, %v8805
      %v9571 = vsel %vm716, %v8516, %v8807
      %v9572 = vsel %vm716, %v8518, %v8809
      %v9573 = vsel %vm716, %v8519, %v8811
      %v9574 = vsel %vm716, %v8521, %v8813
      %v9575 = vsel %vm716, %v8522, %v8815
      %v9576 = vsel %vm716, %v8524, %v8817
      %v9577 = vsel %vm716, %v8525, %v8819
      %v9578 = vsel %vm716, %v8527, %v8821
      %v9579 = vsel %vm716, %v8528, %v8823
      %v9580 = vsel %vm716, %v8530, %v8825
      %v9581 = vsel %vm716, %v8531, %v8827
      %v9582 = vsel %vm716, %v8533, %v8829
      %v9583 = vsel %vm716, %v8534, %v8831
      %v9584 = vsel %vm716, %v8536, %v8833
      %v9585 = vsel %vm716, %v8537, %v8835
      %v9586 = vsel %vm716, %v8539, %v8837
      %v9587 = vsel %vm716, %v8540, %v8839
      %v9588 = vsel %vm716, %v8542, %v8841
      %v9589 = vsel %vm716, %v8543, %v8843
      %v9590 = vsel %vm716, %v8545, %v8845
      %v9591 = vsel %vm716, %v8546, %v8847
      %v9592 = vsel %vm716, %v8548, %v8849
      %v9593 = vsel %vm716, %v8549, %v8851
      %v9594 = vsel %vm716, %v8551, %v8853
      %v9595 = vsel %vm716, %v8552, %v8855
      %v9596 = vsel %vm716, %v8554, %v8857
      %v9597 = vsel %vm716, %v8555, %v8859
      %v9598 = vsel %vm716, %v8557, %v8861
      %v9599 = vsel %vm716, %v8558, %v8863
      %v9600 = vsel %vm772, %v9568, %v8897
      %v9601 = vsel %vm772, %v9569, %v8899
      %v9602 = vsel %vm772, %v9570, %v8901
      %v9603 = vsel %vm772, %v9571, %v8903
      %v9604 = vsel %vm772, %v9572, %v8905
      %v9605 = vsel %vm772, %v9573, %v8907
      %v9606 = vsel %vm772, %v9574, %v8909
      %v9607 = vsel %vm772, %v9575, %v8911
      %v9608 = vsel %vm772, %v9576, %v8913
      %v9609 = vsel %vm772, %v9577, %v8915
      %v9610 = vsel %vm772, %v9578, %v8917
      %v9611 = vsel %vm772, %v9579, %v8919
      %v9612 = vsel %vm772, %v9580, %v8921
      %v9613 = vsel %vm772, %v9581, %v8923
      %v9614 = vsel %vm772, %v9582, %v8925
      %v9615 = vsel %vm772, %v9583, %v8927
      %v9616 = vsel %vm772, %v9584, %v8929
      %v9617 = vsel %vm772, %v9585, %v8931
      %v9618 = vsel %vm772, %v9586, %v8933
      %v9619 = vsel %vm772, %v9587, %v8935
      %v9620 = vsel %vm772, %v9588, %v8937
      %v9621 = vsel %vm772, %v9589, %v8939
      %v9622 = vsel %vm772, %v9590, %v8941
      %v9623 = vsel %vm772, %v9591, %v8943
      %v9624 = vsel %vm772, %v9592, %v8945
      %v9625 = vsel %vm772, %v9593, %v8947
      %v9626 = vsel %vm772, %v9594, %v8949
      %v9627 = vsel %vm772, %v9595, %v8951
      %v9628 = vsel %vm772, %v9596, %v8953
      %v9629 = vsel %vm772, %v9597, %v8955
      %v9630 = vsel %vm772, %v9598, %v8957
      %v9631 = vsel %vm772, %v9599, %v8959
      %v9632 = vsel %vm4580, %v9600, %v8993
      %v9633 = vsel %vm4580, %v9601, %v8995
      %v9634 = vsel %vm4580, %v9602, %v8997
      %v9635 = vsel %vm4580, %v9603, %v8999
      %v9636 = vsel %vm4580, %v9604, %v9001
      %v9637 = vsel %vm4580, %v9605, %v9003
      %v9638 = vsel %vm4580, %v9606, %v9005
      %v9639 = vsel %vm4580, %v9607, %v9007
      %v9640 = vsel %vm4580, %v9608, %v9009
      %v9641 = vsel %vm4580, %v9609, %v9011
      %v9642 = vsel %vm4580, %v9610, %v9013
      %v9643 = vsel %vm4580, %v9611, %v9015
      %v9644 = vsel %vm4580, %v9612, %v9017
      %v9645 = vsel %vm4580, %v9613, %v9019
      %v9646 = vsel %vm4580, %v9614, %v9021
      %v9647 = vsel %vm4580, %v9615, %v9023
      %v9648 = vsel %vm4580, %v9616, %v9025
      %v9649 = vsel %vm4580, %v9617, %v9027
      %v9650 = vsel %vm4580, %v9618, %v9029
      %v9651 = vsel %vm4580, %v9619, %v9031
      %v9652 = vsel %vm4580, %v9620, %v9033
      %v9653 = vsel %vm4580, %v9621, %v9035
      %v9654 = vsel %vm4580, %v9622, %v9037
      %v9655 = vsel %vm4580, %v9623, %v9039
      %v9656 = vsel %vm4580, %v9624, %v9041
      %v9657 = vsel %vm4580, %v9625, %v9043
      %v9658 = vsel %vm4580, %v9626, %v9045
      %v9659 = vsel %vm4580, %v9627, %v9047
      %v9660 = vsel %vm4580, %v9628, %v9049
      %v9661 = vsel %vm4580, %v9629, %v9051
      %v9662 = vsel %vm4580, %v9630, %v9053
      %v9663 = vsel %vm4580, %v9631, %v9055
      %v9664 = vsel %vm4589, %v9632, %v9089
      %v9665 = vsel %vm4589, %v9633, %v9091
      %v9666 = vsel %vm4589, %v9634, %v9093
      %v9667 = vsel %vm4589, %v9635, %v9095
      %v9668 = vsel %vm4589, %v9636, %v9097
      %v9669 = vsel %vm4589, %v9637, %v9099
      %v9670 = vsel %vm4589, %v9638, %v9101
      %v9671 = vsel %vm4589, %v9639, %v9103
      %v9672 = vsel %vm4589, %v9640, %v9105
      %v9673 = vsel %vm4589, %v9641, %v9107
      %v9674 = vsel %vm4589, %v9642, %v9109
      %v9675 = vsel %vm4589, %v9643, %v9111
      %v9676 = vsel %vm4589, %v9644, %v9113
      %v9677 = vsel %vm4589, %v9645, %v9115
      %v9678 = vsel %vm4589, %v9646, %v9117
      %v9679 = vsel %vm4589, %v9647, %v9119
      %v9680 = vsel %vm4589, %v9648, %v9121
      %v9681 = vsel %vm4589, %v9649, %v9123
      %v9682 = vsel %vm4589, %v9650, %v9125
      %v9683 = vsel %vm4589, %v9651, %v9127
      %v9684 = vsel %vm4589, %v9652, %v9129
      %v9685 = vsel %vm4589, %v9653, %v9131
      %v9686 = vsel %vm4589, %v9654, %v9133
      %v9687 = vsel %vm4589, %v9655, %v9135
      %v9688 = vsel %vm4589, %v9656, %v9137
      %v9689 = vsel %vm4589, %v9657, %v9139
      %v9690 = vsel %vm4589, %v9658, %v9141
      %v9691 = vsel %vm4589, %v9659, %v9143
      %v9692 = vsel %vm4589, %v9660, %v9145
      %v9693 = vsel %vm4589, %v9661, %v9147
      %v9694 = vsel %vm4589, %v9662, %v9149
      %v9695 = vsel %vm4589, %v9663, %v9151
      %v9696 = vsel %vm4598, %v9664, %v9185
      %v9697 = vsel %vm4598, %v9665, %v9187
      %v9698 = vsel %vm4598, %v9666, %v9189
      %v9699 = vsel %vm4598, %v9667, %v9191
      %v9700 = vsel %vm4598, %v9668, %v9193
      %v9701 = vsel %vm4598, %v9669, %v9195
      %v9702 = vsel %vm4598, %v9670, %v9197
      %v9703 = vsel %vm4598, %v9671, %v9199
      %v9704 = vsel %vm4598, %v9672, %v9201
      %v9705 = vsel %vm4598, %v9673, %v9203
      %v9706 = vsel %vm4598, %v9674, %v9205
      %v9707 = vsel %vm4598, %v9675, %v9207
      %v9708 = vsel %vm4598, %v9676, %v9209
      %v9709 = vsel %vm4598, %v9677, %v9211
      %v9710 = vsel %vm4598, %v9678, %v9213
      %v9711 = vsel %vm4598, %v9679, %v9215
      %v9712 = vsel %vm4598, %v9680, %v9217
      %v9713 = vsel %vm4598, %v9681, %v9219
      %v9714 = vsel %vm4598, %v9682, %v9221
      %v9715 = vsel %vm4598, %v9683, %v9223
      %v9716 = vsel %vm4598, %v9684, %v9225
      %v9717 = vsel %vm4598, %v9685, %v9227
      %v9718 = vsel %vm4598, %v9686, %v9229
      %v9719 = vsel %vm4598, %v9687, %v9231
      %v9720 = vsel %vm4598, %v9688, %v9233
      %v9721 = vsel %vm4598, %v9689, %v9235
      %v9722 = vsel %vm4598, %v9690, %v9237
      %v9723 = vsel %vm4598, %v9691, %v9239
      %v9724 = vsel %vm4598, %v9692, %v9241
      %v9725 = vsel %vm4598, %v9693, %v9243
      %v9726 = vsel %vm4598, %v9694, %v9245
      %v9727 = vsel %vm4598, %v9695, %v9247
      %v9728 = vsel %vm4607, %v9696, %v9281
      %v9729 = vsel %vm4607, %v9697, %v9283
      %v9730 = vsel %vm4607, %v9698, %v9285
      %v9731 = vsel %vm4607, %v9699, %v9287
      %v9732 = vsel %vm4607, %v9700, %v9289
      %v9733 = vsel %vm4607, %v9701, %v9291
      %v9734 = vsel %vm4607, %v9702, %v9293
      %v9735 = vsel %vm4607, %v9703, %v9295
      %v9736 = vsel %vm4607, %v9704, %v9297
      %v9737 = vsel %vm4607, %v9705, %v9299
      %v9738 = vsel %vm4607, %v9706, %v9301
      %v9739 = vsel %vm4607, %v9707, %v9303
      %v9740 = vsel %vm4607, %v9708, %v9305
      %v9741 = vsel %vm4607, %v9709, %v9307
      %v9742 = vsel %vm4607, %v9710, %v9309
      %v9743 = vsel %vm4607, %v9711, %v9311
      %v9744 = vsel %vm4607, %v9712, %v9313
      %v9745 = vsel %vm4607, %v9713, %v9315
      %v9746 = vsel %vm4607, %v9714, %v9317
      %v9747 = vsel %vm4607, %v9715, %v9319
      %v9748 = vsel %vm4607, %v9716, %v9321
      %v9749 = vsel %vm4607, %v9717, %v9323
      %v9750 = vsel %vm4607, %v9718, %v9325
      %v9751 = vsel %vm4607, %v9719, %v9327
      %v9752 = vsel %vm4607, %v9720, %v9329
      %v9753 = vsel %vm4607, %v9721, %v9331
      %v9754 = vsel %vm4607, %v9722, %v9333
      %v9755 = vsel %vm4607, %v9723, %v9335
      %v9756 = vsel %vm4607, %v9724, %v9337
      %v9757 = vsel %vm4607, %v9725, %v9339
      %v9758 = vsel %vm4607, %v9726, %v9341
      %v9759 = vsel %vm4607, %v9727, %v9343
      %v9760 = vsel %vm4616, %v9728, %v9377
      %v9761 = vsel %vm4616, %v9729, %v9379
      %v9762 = vsel %vm4616, %v9730, %v9381
      %v9763 = vsel %vm4616, %v9731, %v9383
      %v9764 = vsel %vm4616, %v9732, %v9385
      %v9765 = vsel %vm4616, %v9733, %v9387
      %v9766 = vsel %vm4616, %v9734, %v9389
      %v9767 = vsel %vm4616, %v9735, %v9391
      %v9768 = vsel %vm4616, %v9736, %v9393
      %v9769 = vsel %vm4616, %v9737, %v9395
      %v9770 = vsel %vm4616, %v9738, %v9397
      %v9771 = vsel %vm4616, %v9739, %v9399
      %v9772 = vsel %vm4616, %v9740, %v9401
      %v9773 = vsel %vm4616, %v9741, %v9403
      %v9774 = vsel %vm4616, %v9742, %v9405
      %v9775 = vsel %vm4616, %v9743, %v9407
      %v9776 = vsel %vm4616, %v9744, %v9409
      %v9777 = vsel %vm4616, %v9745, %v9411
      %v9778 = vsel %vm4616, %v9746, %v9413
      %v9779 = vsel %vm4616, %v9747, %v9415
      %v9780 = vsel %vm4616, %v9748, %v9417
      %v9781 = vsel %vm4616, %v9749, %v9419
      %v9782 = vsel %vm4616, %v9750, %v9421
      %v9783 = vsel %vm4616, %v9751, %v9423
      %v9784 = vsel %vm4616, %v9752, %v9425
      %v9785 = vsel %vm4616, %v9753, %v9427
      %v9786 = vsel %vm4616, %v9754, %v9429
      %v9787 = vsel %vm4616, %v9755, %v9431
      %v9788 = vsel %vm4616, %v9756, %v9433
      %v9789 = vsel %vm4616, %v9757, %v9435
      %v9790 = vsel %vm4616, %v9758, %v9437
      %v9791 = vsel %vm4616, %v9759, %v9439
      %v9792 = vsel %vm4625, %v9760, %v9473
      %v9793 = vsel %vm4625, %v9761, %v9475
      %v9794 = vsel %vm4625, %v9762, %v9477
      %v9795 = vsel %vm4625, %v9763, %v9479
      %v9796 = vsel %vm4625, %v9764, %v9481
      %v9797 = vsel %vm4625, %v9765, %v9483
      %v9798 = vsel %vm4625, %v9766, %v9485
      %v9799 = vsel %vm4625, %v9767, %v9487
      %v9800 = vsel %vm4625, %v9768, %v9489
      %v9801 = vsel %vm4625, %v9769, %v9491
      %v9802 = vsel %vm4625, %v9770, %v9493
      %v9803 = vsel %vm4625, %v9771, %v9495
      %v9804 = vsel %vm4625, %v9772, %v9497
      %v9805 = vsel %vm4625, %v9773, %v9499
      %v9806 = vsel %vm4625, %v9774, %v9501
      %v9807 = vsel %vm4625, %v9775, %v9503
      %v9808 = vsel %vm4625, %v9776, %v9505
      %v9809 = vsel %vm4625, %v9777, %v9507
      %v9810 = vsel %vm4625, %v9778, %v9509
      %v9811 = vsel %vm4625, %v9779, %v9511
      %v9812 = vsel %vm4625, %v9780, %v9513
      %v9813 = vsel %vm4625, %v9781, %v9515
      %v9814 = vsel %vm4625, %v9782, %v9517
      %v9815 = vsel %vm4625, %v9783, %v9519
      %v9816 = vsel %vm4625, %v9784, %v9521
      %v9817 = vsel %vm4625, %v9785, %v9523
      %v9818 = vsel %vm4625, %v9786, %v9525
      %v9819 = vsel %vm4625, %v9787, %v9527
      %v9820 = vsel %vm4625, %v9788, %v9529
      %v9821 = vsel %vm4625, %v9789, %v9531
      %v9822 = vsel %vm4625, %v9790, %v9533
      %v9823 = vsel %vm4625, %v9791, %v9535
      %v9824 = vpack.c.bf16 %v9793, %v9792
      %v9825 = vpack.c.bf16 %v9795, %v9794
      %v9826 = vpack.c.bf16 %v9797, %v9796
      %v9827 = vpack.c.bf16 %v9799, %v9798
      %v9828 = vpack.c.bf16 %v9801, %v9800
      %v9829 = vpack.c.bf16 %v9803, %v9802
      %v9830 = vpack.c.bf16 %v9805, %v9804
      %v9831 = vpack.c.bf16 %v9807, %v9806
      %v9832 = vpack.c.bf16 %v9809, %v9808
      %v9833 = vpack.c.bf16 %v9811, %v9810
      %v9834 = vpack.c.bf16 %v9813, %v9812
      %v9835 = vpack.c.bf16 %v9815, %v9814
      %v9836 = vpack.c.bf16 %v9817, %v9816
      %v9837 = vpack.c.bf16 %v9819, %v9818
      %v9838 = vpack.c.bf16 %v9821, %v9820
      %v9839 = vpack.c.bf16 %v9823, %v9822
      %v9840 = vld [vmem:[%s16] sm:$0xf]
      %v9841 = vld [vmem:[%s16 + $0x4] sm:$0xf]
      %v9842 = vld [vmem:[%s16 + $0x8] sm:$0xf]
      %v9843 = vld [vmem:[%s16 + $0xc] sm:$0xf]
      %v9844 = vld [vmem:[%s16 + $0x10] sm:$0xf]
      %v9845 = vld [vmem:[%s16 + $0x14] sm:$0xf]
      %v9846 = vld [vmem:[%s16 + $0x18] sm:$0xf]
      %v9847 = vld [vmem:[%s16 + $0x1c] sm:$0xf]
      %v9848 = vld [vmem:[%s16 + $0x20] sm:$0xf]
      %v9858 = vunpack.c.l.b16 %v9840
      %v9859 = vunpack.c.l.b16 %v9841
      %v9860 = vunpack.c.l.b16 %v9842
      %v9861 = vunpack.c.l.b16 %v9843
      %v9862 = vunpack.c.l.b16 %v9844
      %v9863 = vunpack.c.l.b16 %v9845
      %v9864 = vunpack.c.l.b16 %v9846
      %v9865 = vunpack.c.l.b16 %v9847
      %v9866 = vunpack.c.l.b16 %v9848
      %v9867 = vpack.c.b16 %v9859, %v9858
      %v9868 = vpack.c.b16 %v9861, %v9860
      %v9869 = vpack.c.b16 %v9863, %v9862
      %v9870 = vpack.c.b16 %v9865, %v9864
      %v9871 = vpack.c.b16 %v9866, %v9866
      %v9877 = vsel %vm4681, %v9824, 0
      %v9880 = vsel %vm4681, %v9825, 0
      %v9883 = vsel %vm4681, %v9826, 0
      %v9886 = vsel %vm4681, %v9827, 0
      %v9889 = vsel %vm4681, %v9828, 0
      %v9892 = vsel %vm4681, %v9829, 0
      %v9895 = vsel %vm4681, %v9830, 0
      %v9898 = vsel %vm4681, %v9831, 0
      %v9901 = vsel %vm4681, %v9832, 0
      %v9904 = vsel %vm4681, %v9833, 0
      %v9907 = vsel %vm4681, %v9834, 0
      %v9910 = vsel %vm4681, %v9835, 0
      %v9913 = vsel %vm4681, %v9836, 0
      %v9916 = vsel %vm4681, %v9837, 0
      %v9919 = vsel %vm4681, %v9838, 0
      %v9922 = vsel %vm4681, %v9839, 0
      %v9925 = vsel %vm2359, %v9871, 0
      %9927 = vmatprep.subr.bf16.mxu0 0
      %9928 = vmatpush1.bf16.msra.mxu0 %v9867
      %9929 = vmatprep.subr.bf16.mxu0 0
      %9930 = vmatpush1.bf16.msra.mxu0 %v9868
      %9931 = vmatprep.subr.bf16.mxu0 0
      %9932 = vmatpush1.bf16.msra.mxu0 %v9869
      %9933 = vmatprep.subr.bf16.mxu0 0
      %9934 = vmatpush1.bf16.msra.mxu0 %v9870
      %9935 = vmatprep.subr.bf16.mxu0 0
      %9936 = vmatpush1.bf16.msra.mxu0 %v9925
      %9937 = vmatprep.subr.bf16.mxu0 0
      %9938 = vmatpush1.bf16.msra.mxu0 0
      %9939 = vmatprep.subr.bf16.mxu0 0
      %9940 = vmatpush1.bf16.msra.mxu0 0
      %9941 = vmatprep.subr.bf16.mxu0 0
      %9942 = vmatpush1.bf16.msra.mxu0 0
      %9943 = vmatprep.subr.bf16.mxu0 0
      %9944 = vmatpush1.bf16.msra.mxu0 0
      %9945 = vmatprep.subr.bf16.mxu0 0
      %9946 = vmatpush1.bf16.msra.mxu0 0
      %9947 = vmatprep.subr.bf16.mxu0 0
      %9948 = vmatpush1.bf16.msra.mxu0 0
      %9949 = vmatprep.subr.bf16.mxu0 0
      %9950 = vmatpush1.bf16.msra.mxu0 0
      %9951 = vmatprep.subr.bf16.mxu0 0
      %9952 = vmatpush1.bf16.msra.mxu0 0
      %9953 = vmatprep.subr.bf16.mxu0 0
      %9954 = vmatpush1.bf16.msra.mxu0 0
      %9955 = vmatprep.subr.bf16.mxu0 0
      %9956 = vmatpush1.bf16.msra.mxu0 0
      %9957 = vmatprep.subr.bf16.mxu0 0
      %9958 = vmatpush1.bf16.msra.mxu0 0
      %9959 = vmatprep.mubr.bf16.mxu0 0
      %9960 = vmatmul.mubr.bf16.gmra.mrb[0].mxu0 %v9877
      %v9961 = vpop.f32.mrb[0].mxu0
      %v9962 = vadd.f32 0.0, %v9961
      %v9963 = vpop.f32.mrb[0].mxu0
      %v9964 = vpop.f32.mrb[0].mxu0
      %v9965 = vadd.f32 0.0, %v9964
      %v9966 = vpop.f32.mrb[0].mxu0
      %9967 = vmatprep.mubr.bf16.mxu0 0
      %9968 = vmatmul.mubr.bf16.gmra.mrb[0].mxu0 %v9880
      %v9969 = vpop.f32.mrb[0].mxu0
      %v9970 = vadd.f32 0.0, %v9969
      %v9971 = vpop.f32.mrb[0].mxu0
      %v9972 = vpop.f32.mrb[0].mxu0
      %v9973 = vadd.f32 0.0, %v9972
      %v9974 = vpop.f32.mrb[0].mxu0
      %9975 = vmatprep.mubr.bf16.mxu0 0
      %9976 = vmatmul.mubr.bf16.gmra.mrb[0].mxu0 %v9883
      %v9977 = vpop.f32.mrb[0].mxu0
      %v9978 = vadd.f32 0.0, %v9977
      %v9979 = vpop.f32.mrb[0].mxu0
      %v9980 = vpop.f32.mrb[0].mxu0
      %v9981 = vadd.f32 0.0, %v9980
      %v9982 = vpop.f32.mrb[0].mxu0
      %9983 = vmatprep.mubr.bf16.mxu0 0
      %9984 = vmatmul.mubr.bf16.gmra.mrb[0].mxu0 %v9886
      %v9985 = vpop.f32.mrb[0].mxu0
      %v9986 = vadd.f32 0.0, %v9985
      %v9987 = vpop.f32.mrb[0].mxu0
      %v9988 = vpop.f32.mrb[0].mxu0
      %v9989 = vadd.f32 0.0, %v9988
      %v9990 = vpop.f32.mrb[0].mxu0
      %9991 = vmatprep.mubr.bf16.mxu0 0
      %9992 = vmatmul.mubr.bf16.gmra.mrb[0].mxu0 %v9889
      %v9993 = vpop.f32.mrb[0].mxu0
      %v9994 = vadd.f32 0.0, %v9993
      %v9995 = vpop.f32.mrb[0].mxu0
      %v9996 = vpop.f32.mrb[0].mxu0
      %v9997 = vadd.f32 0.0, %v9996
      %v9998 = vpop.f32.mrb[0].mxu0
      %9999 = vmatprep.mubr.bf16.mxu0 0
      %10000 = vmatmul.mubr.bf16.gmra.mrb[0].mxu0 %v9892
      %v10001 = vpop.f32.mrb[0].mxu0
      %v10002 = vadd.f32 0.0, %v10001
      %v10003 = vpop.f32.mrb[0].mxu0
      %v10004 = vpop.f32.mrb[0].mxu0
      %v10005 = vadd.f32 0.0, %v10004
      %v10006 = vpop.f32.mrb[0].mxu0
      %10007 = vmatprep.mubr.bf16.mxu0 0
      %10008 = vmatmul.mubr.bf16.gmra.mrb[0].mxu0 %v9895
      %v10009 = vpop.f32.mrb[0].mxu0
      %v10010 = vadd.f32 0.0, %v10009
      %v10011 = vpop.f32.mrb[0].mxu0
      %v10012 = vpop.f32.mrb[0].mxu0
      %v10013 = vadd.f32 0.0, %v10012
      %v10014 = vpop.f32.mrb[0].mxu0
      %10015 = vmatprep.mubr.bf16.mxu0 0
      %10016 = vmatmul.mubr.bf16.gmra.mrb[0].mxu0 %v9898
      %v10017 = vpop.f32.mrb[0].mxu0
      %v10018 = vadd.f32 0.0, %v10017
      %v10019 = vpop.f32.mrb[0].mxu0
      %v10020 = vpop.f32.mrb[0].mxu0
      %v10021 = vadd.f32 0.0, %v10020
      %v10022 = vpop.f32.mrb[0].mxu0
      %10023 = vmatprep.mubr.bf16.mxu0 0
      %10024 = vmatmul.mubr.bf16.gmra.mrb[0].mxu0 %v9901
      %v10025 = vpop.f32.mrb[0].mxu0
      %v10026 = vadd.f32 0.0, %v10025
      %v10027 = vpop.f32.mrb[0].mxu0
      %v10028 = vpop.f32.mrb[0].mxu0
      %v10029 = vadd.f32 0.0, %v10028
      %v10030 = vpop.f32.mrb[0].mxu0
      %10031 = vmatprep.mubr.bf16.mxu0 0
      %10032 = vmatmul.mubr.bf16.gmra.mrb[0].mxu0 %v9904
      %v10033 = vpop.f32.mrb[0].mxu0
      %v10034 = vadd.f32 0.0, %v10033
      %v10035 = vpop.f32.mrb[0].mxu0
      %v10036 = vpop.f32.mrb[0].mxu0
      %v10037 = vadd.f32 0.0, %v10036
      %v10038 = vpop.f32.mrb[0].mxu0
      %10039 = vmatprep.mubr.bf16.mxu0 0
      %10040 = vmatmul.mubr.bf16.gmra.mrb[0].mxu0 %v9907
      %v10041 = vpop.f32.mrb[0].mxu0
      %v10042 = vadd.f32 0.0, %v10041
      %v10043 = vpop.f32.mrb[0].mxu0
      %v10044 = vpop.f32.mrb[0].mxu0
      %v10045 = vadd.f32 0.0, %v10044
      %v10046 = vpop.f32.mrb[0].mxu0
      %10047 = vmatprep.mubr.bf16.mxu0 0
      %10048 = vmatmul.mubr.bf16.gmra.mrb[0].mxu0 %v9910
      %v10049 = vpop.f32.mrb[0].mxu0
      %v10050 = vadd.f32 0.0, %v10049
      %v10051 = vpop.f32.mrb[0].mxu0
      %v10052 = vpop.f32.mrb[0].mxu0
      %v10053 = vadd.f32 0.0, %v10052
      %v10054 = vpop.f32.mrb[0].mxu0
      %10055 = vmatprep.mubr.bf16.mxu0 0
      %10056 = vmatmul.mubr.bf16.gmra.mrb[0].mxu0 %v9913
      %v10057 = vpop.f32.mrb[0].mxu0
      %v10058 = vadd.f32 0.0, %v10057
      %v10059 = vpop.f32.mrb[0].mxu0
      %v10060 = vpop.f32.mrb[0].mxu0
      %v10061 = vadd.f32 0.0, %v10060
      %v10062 = vpop.f32.mrb[0].mxu0
      %10063 = vmatprep.mubr.bf16.mxu0 0
      %10064 = vmatmul.mubr.bf16.gmra.mrb[0].mxu0 %v9916
      %v10065 = vpop.f32.mrb[0].mxu0
      %v10066 = vadd.f32 0.0, %v10065
      %v10067 = vpop.f32.mrb[0].mxu0
      %v10068 = vpop.f32.mrb[0].mxu0
      %v10069 = vadd.f32 0.0, %v10068
      %v10070 = vpop.f32.mrb[0].mxu0
      %10071 = vmatprep.mubr.bf16.mxu0 0
      %10072 = vmatmul.mubr.bf16.gmra.mrb[0].mxu0 %v9919
      %v10073 = vpop.f32.mrb[0].mxu0
      %v10074 = vadd.f32 0.0, %v10073
      %v10075 = vpop.f32.mrb[0].mxu0
      %v10076 = vpop.f32.mrb[0].mxu0
      %v10077 = vadd.f32 0.0, %v10076
      %v10078 = vpop.f32.mrb[0].mxu0
      %10079 = vmatprep.mubr.bf16.mxu0 0
      %10080 = vmatmul.mubr.bf16.gmra.mrb[0].mxu0 %v9922
      %v10081 = vpop.f32.mrb[0].mxu0
      %v10082 = vadd.f32 0.0, %v10081
      %v10083 = vpop.f32.mrb[0].mxu0
      %v10084 = vpop.f32.mrb[0].mxu0
      %v10085 = vadd.f32 0.0, %v10084
      %v10086 = vpop.f32.mrb[0].mxu0
      %10087 = vdwg.mxu0
      %v10097 = vunpack.c.l.b16 %v8503
      %v10098 = vunpack.c.l.b16 %v8504
      %v10099 = vunpack.c.l.b16 %v8505
      %v10100 = vunpack.c.l.b16 %v8506
      %v10101 = vunpack.c.l.b16 %v8507
      %v10102 = vunpack.c.l.b16 %v8508
      %v10103 = vunpack.c.l.b16 %v8509
      %v10104 = vunpack.c.l.b16 %v8510
      %v10105 = vunpack.c.l.b16 %v8511
      %v10106 = vpack.c.b16 %v10098, %v10097
      %v10107 = vpack.c.b16 %v10100, %v10099
      %v10108 = vpack.c.b16 %v10102, %v10101
      %v10109 = vpack.c.b16 %v10104, %v10103
      %v10110 = vpack.c.b16 %v10105, %v10105
      %v10116 = vsel %vm4681, %v8487, 0
      %v10119 = vsel %vm4681, %v8488, 0
      %v10122 = vsel %vm4681, %v8489, 0
      %v10125 = vsel %vm4681, %v8490, 0
      %v10128 = vsel %vm4681, %v8491, 0
      %v10131 = vsel %vm4681, %v8492, 0
      %v10134 = vsel %vm4681, %v8493, 0
      %v10137 = vsel %vm4681, %v8494, 0
      %v10140 = vsel %vm4681, %v8495, 0
      %v10143 = vsel %vm4681, %v8496, 0
      %v10146 = vsel %vm4681, %v8497, 0
      %v10149 = vsel %vm4681, %v8498, 0
      %v10152 = vsel %vm4681, %v8499, 0
      %v10155 = vsel %vm4681, %v8500, 0
      %v10158 = vsel %vm4681, %v8501, 0
      %v10161 = vsel %vm4681, %v8502, 0
      %v10164 = vsel %vm2359, %v10110, 0
      %10166 = vmatprep.subr.bf16.mxu0 0
      %10167 = vmatpush1.bf16.msra.mxu0 %v10106
      %10168 = vmatprep.subr.bf16.mxu0 0
      %10169 = vmatpush1.bf16.msra.mxu0 %v10107
      %10170 = vmatprep.subr.bf16.mxu0 0
      %10171 = vmatpush1.bf16.msra.mxu0 %v10108
      %10172 = vmatprep.subr.bf16.mxu0 0
      %10173 = vmatpush1.bf16.msra.mxu0 %v10109
      %10174 = vmatprep.subr.bf16.mxu0 0
      %10175 = vmatpush1.bf16.msra.mxu0 %v10164
      %10176 = vmatprep.subr.bf16.mxu0 0
      %10177 = vmatpush1.bf16.msra.mxu0 0
      %10178 = vmatprep.subr.bf16.mxu0 0
      %10179 = vmatpush1.bf16.msra.mxu0 0
      %10180 = vmatprep.subr.bf16.mxu0 0
      %10181 = vmatpush1.bf16.msra.mxu0 0
      %10182 = vmatprep.subr.bf16.mxu0 0
      %10183 = vmatpush1.bf16.msra.mxu0 0
      %10184 = vmatprep.subr.bf16.mxu0 0
      %10185 = vmatpush1.bf16.msra.mxu0 0
      %10186 = vmatprep.subr.bf16.mxu0 0
      %10187 = vmatpush1.bf16.msra.mxu0 0
      %10188 = vmatprep.subr.bf16.mxu0 0
      %10189 = vmatpush1.bf16.msra.mxu0 0
      %10190 = vmatprep.subr.bf16.mxu0 0
      %10191 = vmatpush1.bf16.msra.mxu0 0
      %10192 = vmatprep.subr.bf16.mxu0 0
      %10193 = vmatpush1.bf16.msra.mxu0 0
      %10194 = vmatprep.subr.bf16.mxu0 0
      %10195 = vmatpush1.bf16.msra.mxu0 0
      %10196 = vmatprep.subr.bf16.mxu0 0
      %10197 = vmatpush1.bf16.msra.mxu0 0
      %10198 = vmatprep.mubr.bf16.mxu0 0
      %10199 = vmatmul.mubr.bf16.gmra.mrb[0].mxu0 %v10116
      %v10200 = vpop.f32.mrb[0].mxu0
      %v10201 = vadd.f32 %v9962, %v10200
      %v10202 = vpop.f32.mrb[0].mxu0
      %v10203 = vpop.f32.mrb[0].mxu0
      %v10204 = vadd.f32 %v9965, %v10203
      %v10205 = vpop.f32.mrb[0].mxu0
      %10206 = vmatprep.mubr.bf16.mxu0 0
      %10207 = vmatmul.mubr.bf16.gmra.mrb[0].mxu0 %v10119
      %v10208 = vpop.f32.mrb[0].mxu0
      %v10209 = vadd.f32 %v9970, %v10208
      %v10210 = vpop.f32.mrb[0].mxu0
      %v10211 = vpop.f32.mrb[0].mxu0
      %v10212 = vadd.f32 %v9973, %v10211
      %v10213 = vpop.f32.mrb[0].mxu0
      %10214 = vmatprep.mubr.bf16.mxu0 0
      %10215 = vmatmul.mubr.bf16.gmra.mrb[0].mxu0 %v10122
      %v10216 = vpop.f32.mrb[0].mxu0
      %v10217 = vadd.f32 %v9978, %v10216
      %v10218 = vpop.f32.mrb[0].mxu0
      %v10219 = vpop.f32.mrb[0].mxu0
      %v10220 = vadd.f32 %v9981, %v10219
      %v10221 = vpop.f32.mrb[0].mxu0
      %10222 = vmatprep.mubr.bf16.mxu0 0
      %10223 = vmatmul.mubr.bf16.gmra.mrb[0].mxu0 %v10125
      %v10224 = vpop.f32.mrb[0].mxu0
      %v10225 = vadd.f32 %v9986, %v10224
      %v10226 = vpop.f32.mrb[0].mxu0
      %v10227 = vpop.f32.mrb[0].mxu0
      %v10228 = vadd.f32 %v9989, %v10227
      %v10229 = vpop.f32.mrb[0].mxu0
      %10230 = vmatprep.mubr.bf16.mxu0 0
      %10231 = vmatmul.mubr.bf16.gmra.mrb[0].mxu0 %v10128
      %v10232 = vpop.f32.mrb[0].mxu0
      %v10233 = vadd.f32 %v9994, %v10232
      %v10234 = vpop.f32.mrb[0].mxu0
      %v10235 = vpop.f32.mrb[0].mxu0
      %v10236 = vadd.f32 %v9997, %v10235
      %v10237 = vpop.f32.mrb[0].mxu0
      %10238 = vmatprep.mubr.bf16.mxu0 0
      %10239 = vmatmul.mubr.bf16.gmra.mrb[0].mxu0 %v10131
      %v10240 = vpop.f32.mrb[0].mxu0
      %v10241 = vadd.f32 %v10002, %v10240
      %v10242 = vpop.f32.mrb[0].mxu0
      %v10243 = vpop.f32.mrb[0].mxu0
      %v10244 = vadd.f32 %v10005, %v10243
      %v10245 = vpop.f32.mrb[0].mxu0
      %10246 = vmatprep.mubr.bf16.mxu0 0
      %10247 = vmatmul.mubr.bf16.gmra.mrb[0].mxu0 %v10134
      %v10248 = vpop.f32.mrb[0].mxu0
      %v10249 = vadd.f32 %v10010, %v10248
      %v10250 = vpop.f32.mrb[0].mxu0
      %v10251 = vpop.f32.mrb[0].mxu0
      %v10252 = vadd.f32 %v10013, %v10251
      %v10253 = vpop.f32.mrb[0].mxu0
      %10254 = vmatprep.mubr.bf16.mxu0 0
      %10255 = vmatmul.mubr.bf16.gmra.mrb[0].mxu0 %v10137
      %v10256 = vpop.f32.mrb[0].mxu0
      %v10257 = vadd.f32 %v10018, %v10256
      %v10258 = vpop.f32.mrb[0].mxu0
      %v10259 = vpop.f32.mrb[0].mxu0
      %v10260 = vadd.f32 %v10021, %v10259
      %v10261 = vpop.f32.mrb[0].mxu0
      %10262 = vmatprep.mubr.bf16.mxu0 0
      %10263 = vmatmul.mubr.bf16.gmra.mrb[0].mxu0 %v10140
      %v10264 = vpop.f32.mrb[0].mxu0
      %v10265 = vadd.f32 %v10026, %v10264
      %v10266 = vpop.f32.mrb[0].mxu0
      %v10267 = vpop.f32.mrb[0].mxu0
      %v10268 = vadd.f32 %v10029, %v10267
      %v10269 = vpop.f32.mrb[0].mxu0
      %10270 = vmatprep.mubr.bf16.mxu0 0
      %10271 = vmatmul.mubr.bf16.gmra.mrb[0].mxu0 %v10143
      %v10272 = vpop.f32.mrb[0].mxu0
      %v10273 = vadd.f32 %v10034, %v10272
      %v10274 = vpop.f32.mrb[0].mxu0
      %v10275 = vpop.f32.mrb[0].mxu0
      %v10276 = vadd.f32 %v10037, %v10275
      %v10277 = vpop.f32.mrb[0].mxu0
      %10278 = vmatprep.mubr.bf16.mxu0 0
      %10279 = vmatmul.mubr.bf16.gmra.mrb[0].mxu0 %v10146
      %v10280 = vpop.f32.mrb[0].mxu0
      %v10281 = vadd.f32 %v10042, %v10280
      %v10282 = vpop.f32.mrb[0].mxu0
      %v10283 = vpop.f32.mrb[0].mxu0
      %v10284 = vadd.f32 %v10045, %v10283
      %v10285 = vpop.f32.mrb[0].mxu0
      %10286 = vmatprep.mubr.bf16.mxu0 0
      %10287 = vmatmul.mubr.bf16.gmra.mrb[0].mxu0 %v10149
      %v10288 = vpop.f32.mrb[0].mxu0
      %v10289 = vadd.f32 %v10050, %v10288
      %v10290 = vpop.f32.mrb[0].mxu0
      %v10291 = vpop.f32.mrb[0].mxu0
      %v10292 = vadd.f32 %v10053, %v10291
      %v10293 = vpop.f32.mrb[0].mxu0
      %10294 = vmatprep.mubr.bf16.mxu0 0
      %10295 = vmatmul.mubr.bf16.gmra.mrb[0].mxu0 %v10152
      %v10296 = vpop.f32.mrb[0].mxu0
      %v10297 = vadd.f32 %v10058, %v10296
      %v10298 = vpop.f32.mrb[0].mxu0
      %v10299 = vpop.f32.mrb[0].mxu0
      %v10300 = vadd.f32 %v10061, %v10299
      %v10301 = vpop.f32.mrb[0].mxu0
      %10302 = vmatprep.mubr.bf16.mxu0 0
      %10303 = vmatmul.mubr.bf16.gmra.mrb[0].mxu0 %v10155
      %v10304 = vpop.f32.mrb[0].mxu0
      %v10305 = vadd.f32 %v10066, %v10304
      %v10306 = vpop.f32.mrb[0].mxu0
      %v10307 = vpop.f32.mrb[0].mxu0
      %v10308 = vadd.f32 %v10069, %v10307
      %v10309 = vpop.f32.mrb[0].mxu0
      %10310 = vmatprep.mubr.bf16.mxu0 0
      %10311 = vmatmul.mubr.bf16.gmra.mrb[0].mxu0 %v10158
      %v10312 = vpop.f32.mrb[0].mxu0
      %v10313 = vadd.f32 %v10074, %v10312
      %v10314 = vpop.f32.mrb[0].mxu0
      %v10315 = vpop.f32.mrb[0].mxu0
      %v10316 = vadd.f32 %v10077, %v10315
      %v10317 = vpop.f32.mrb[0].mxu0
      %10318 = vmatprep.mubr.bf16.mxu0 0
      %10319 = vmatmul.mubr.bf16.gmra.mrb[0].mxu0 %v10161
      %v10320 = vpop.f32.mrb[0].mxu0
      %v10321 = vadd.f32 %v10082, %v10320
      %v10322 = vpop.f32.mrb[0].mxu0
      %v10323 = vpop.f32.mrb[0].mxu0
      %v10324 = vadd.f32 %v10085, %v10323
      %v10325 = vpop.f32.mrb[0].mxu0
      %10326 = vdwg.mxu0
      %v10327 = vld [vmem:[%s17] sm:$0x1]
      %v10329 = vlaneseq
      %v10330 = vshrl.u32 %v10329, 7
      %v10331 = vsub.s32 0, %v10330
      %v10332 = vrot.slane %v10327, %v10331
      %v10334 = vadd.f32 %v10201, %v10332
      %v10335 = vadd.f32 %v10204, %v10332
      %v10336 = vadd.f32 %v10209, %v10332
      %v10337 = vadd.f32 %v10212, %v10332
      %v10338 = vadd.f32 %v10217, %v10332
      %v10339 = vadd.f32 %v10220, %v10332
      %v10340 = vadd.f32 %v10225, %v10332
      %v10341 = vadd.f32 %v10228, %v10332
      %v10342 = vadd.f32 %v10233, %v10332
      %v10343 = vadd.f32 %v10236, %v10332
      %v10344 = vadd.f32 %v10241, %v10332
      %v10345 = vadd.f32 %v10244, %v10332
      %v10346 = vadd.f32 %v10249, %v10332
      %v10347 = vadd.f32 %v10252, %v10332
      %v10348 = vadd.f32 %v10257, %v10332
      %v10349 = vadd.f32 %v10260, %v10332
      %v10350 = vadd.f32 %v10265, %v10332
      %v10351 = vadd.f32 %v10268, %v10332
      %v10352 = vadd.f32 %v10273, %v10332
      %v10353 = vadd.f32 %v10276, %v10332
      %v10354 = vadd.f32 %v10281, %v10332
      %v10355 = vadd.f32 %v10284, %v10332
      %v10356 = vadd.f32 %v10289, %v10332
      %v10357 = vadd.f32 %v10292, %v10332
      %v10358 = vadd.f32 %v10297, %v10332
      %v10359 = vadd.f32 %v10300, %v10332
      %v10360 = vadd.f32 %v10305, %v10332
      %v10361 = vadd.f32 %v10308, %v10332
      %v10362 = vadd.f32 %v10313, %v10332
      %v10363 = vadd.f32 %v10316, %v10332
      %v10364 = vadd.f32 %v10321, %v10332
      %v10365 = vadd.f32 %v10324, %v10332
      %v10366 = vmax.f32 %v10334, 0.0
      %v10367 = vmax.f32 %v10335, 0.0
      %v10368 = vmax.f32 %v10336, 0.0
      %v10369 = vmax.f32 %v10337, 0.0
      %v10370 = vmax.f32 %v10338, 0.0
      %v10371 = vmax.f32 %v10339, 0.0
      %v10372 = vmax.f32 %v10340, 0.0
      %v10373 = vmax.f32 %v10341, 0.0
      %v10374 = vmax.f32 %v10342, 0.0
      %v10375 = vmax.f32 %v10343, 0.0
      %v10376 = vmax.f32 %v10344, 0.0
      %v10377 = vmax.f32 %v10345, 0.0
      %v10378 = vmax.f32 %v10346, 0.0
      %v10379 = vmax.f32 %v10347, 0.0
      %v10380 = vmax.f32 %v10348, 0.0
      %v10381 = vmax.f32 %v10349, 0.0
      %v10382 = vmax.f32 %v10350, 0.0
      %v10383 = vmax.f32 %v10351, 0.0
      %v10384 = vmax.f32 %v10352, 0.0
      %v10385 = vmax.f32 %v10353, 0.0
      %v10386 = vmax.f32 %v10354, 0.0
      %v10387 = vmax.f32 %v10355, 0.0
      %v10388 = vmax.f32 %v10356, 0.0
      %v10389 = vmax.f32 %v10357, 0.0
      %v10390 = vmax.f32 %v10358, 0.0
      %v10391 = vmax.f32 %v10359, 0.0
      %v10392 = vmax.f32 %v10360, 0.0
      %v10393 = vmax.f32 %v10361, 0.0
      %v10394 = vmax.f32 %v10362, 0.0
      %v10395 = vmax.f32 %v10363, 0.0
      %v10396 = vmax.f32 %v10364, 0.0
      %v10397 = vmax.f32 %v10365, 0.0
      %v10398 = vpack.c.bf16 %v10367, %v10366
      %v10399 = vpack.c.bf16 %v10369, %v10368
      %v10400 = vpack.c.bf16 %v10371, %v10370
      %v10401 = vpack.c.bf16 %v10373, %v10372
      %v10402 = vpack.c.bf16 %v10375, %v10374
      %v10403 = vpack.c.bf16 %v10377, %v10376
      %v10404 = vpack.c.bf16 %v10379, %v10378
      %v10405 = vpack.c.bf16 %v10381, %v10380
      %v10406 = vpack.c.bf16 %v10383, %v10382
      %v10407 = vpack.c.bf16 %v10385, %v10384
      %v10408 = vpack.c.bf16 %v10387, %v10386
      %v10409 = vpack.c.bf16 %v10389, %v10388
      %v10410 = vpack.c.bf16 %v10391, %v10390
      %v10411 = vpack.c.bf16 %v10393, %v10392
      %v10412 = vpack.c.bf16 %v10395, %v10394
      %v10413 = vpack.c.bf16 %v10397, %v10396
      %v10414 = vld [vmem:[%s19] sm:$0xf]
      %v10415 = vld [vmem:[#allocation9] sm:$0x1]
      %v10417 = vlaneseq
      %v10418 = vshrl.u32 %v10417, 7
      %v10419 = vsub.s32 0, %v10418
      %v10420 = vrot.slane %v10415, %v10419
      %v10423 = vsel %vm716, %v10398, 0
      %v10426 = vsel %vm716, %v10399, 0
      %v10429 = vsel %vm716, %v10400, 0
      %v10432 = vsel %vm716, %v10401, 0
      %v10435 = vsel %vm716, %v10402, 0
      %v10438 = vsel %vm716, %v10403, 0
      %v10441 = vsel %vm716, %v10404, 0
      %v10444 = vsel %vm716, %v10405, 0
      %v10447 = vsel %vm716, %v10406, 0
      %v10450 = vsel %vm716, %v10407, 0
      %v10453 = vsel %vm716, %v10408, 0
      %v10456 = vsel %vm716, %v10409, 0
      %v10459 = vsel %vm716, %v10410, 0
      %v10462 = vsel %vm716, %v10411, 0
      %v10465 = vsel %vm716, %v10412, 0
      %v10468 = vsel %vm716, %v10413, 0
      %v10471 = vsel %vm2359, %v10414, 0
      %10473 = vmatprep.subr.bf16.mxu0 0
      %10474 = vmatpush1.bf16.msra.mxu0 %v10471
      %10475 = vmatprep.subr.bf16.mxu0 0
      %10476 = vmatpush1.bf16.msra.mxu0 0
      %10477 = vmatprep.subr.bf16.mxu0 0
      %10478 = vmatpush1.bf16.msra.mxu0 0
      %10479 = vmatprep.subr.bf16.mxu0 0
      %10480 = vmatpush1.bf16.msra.mxu0 0
      %10481 = vmatprep.subr.bf16.mxu0 0
      %10482 = vmatpush1.bf16.msra.mxu0 0
      %10483 = vmatprep.subr.bf16.mxu0 0
      %10484 = vmatpush1.bf16.msra.mxu0 0
      %10485 = vmatprep.subr.bf16.mxu0 0
      %10486 = vmatpush1.bf16.msra.mxu0 0
      %10487 = vmatprep.subr.bf16.mxu0 0
      %10488 = vmatpush1.bf16.msra.mxu0 0
      %10489 = vmatprep.subr.bf16.mxu0 0
      %10490 = vmatpush1.bf16.msra.mxu0 0
      %10491 = vmatprep.subr.bf16.mxu0 0
      %10492 = vmatpush1.bf16.msra.mxu0 0
      %10493 = vmatprep.subr.bf16.mxu0 0
      %10494 = vmatpush1.bf16.msra.mxu0 0
      %10495 = vmatprep.subr.bf16.mxu0 0
      %10496 = vmatpush1.bf16.msra.mxu0 0
      %10497 = vmatprep.subr.bf16.mxu0 0
      %10498 = vmatpush1.bf16.msra.mxu0 0
      %10499 = vmatprep.subr.bf16.mxu0 0
      %10500 = vmatpush1.bf16.msra.mxu0 0
      %10501 = vmatprep.subr.bf16.mxu0 0
      %10502 = vmatpush1.bf16.msra.mxu0 0
      %10503 = vmatprep.subr.bf16.mxu0 0
      %10504 = vmatpush1.bf16.msra.mxu0 0
      %10505 = vmatprep.mubr.bf16.mxu0 0
      %10506 = vmatmul.mubr.bf16.gmra.mrb[0].mxu0 %v10423
      %v10507 = vpop.f32.mrb[0].mxu0
      %v10508 = vadd.f32 %v10420, %v10507
      %v10509 = vpop.f32.mrb[0].mxu0
      %v10510 = vpop.f32.mrb[0].mxu0
      %v10511 = vadd.f32 %v10420, %v10510
      %v10512 = vpop.f32.mrb[0].mxu0
      %10513 = vmatprep.mubr.bf16.mxu0 0
      %10514 = vmatmul.mubr.bf16.gmra.mrb[0].mxu0 %v10426
      %v10515 = vpop.f32.mrb[0].mxu0
      %v10516 = vadd.f32 %v10420, %v10515
      %v10517 = vpop.f32.mrb[0].mxu0
      %v10518 = vpop.f32.mrb[0].mxu0
      %v10519 = vadd.f32 %v10420, %v10518
      %v10520 = vpop.f32.mrb[0].mxu0
      %10521 = vmatprep.mubr.bf16.mxu0 0
      %10522 = vmatmul.mubr.bf16.gmra.mrb[0].mxu0 %v10429
      %v10523 = vpop.f32.mrb[0].mxu0
      %v10524 = vadd.f32 %v10420, %v10523
      %v10525 = vpop.f32.mrb[0].mxu0
      %v10526 = vpop.f32.mrb[0].mxu0
      %v10527 = vadd.f32 %v10420, %v10526
      %v10528 = vpop.f32.mrb[0].mxu0
      %10529 = vmatprep.mubr.bf16.mxu0 0
      %10530 = vmatmul.mubr.bf16.gmra.mrb[0].mxu0 %v10432
      %v10531 = vpop.f32.mrb[0].mxu0
      %v10532 = vadd.f32 %v10420, %v10531
      %v10533 = vpop.f32.mrb[0].mxu0
      %v10534 = vpop.f32.mrb[0].mxu0
      %v10535 = vadd.f32 %v10420, %v10534
      %v10536 = vpop.f32.mrb[0].mxu0
      %10537 = vmatprep.mubr.bf16.mxu0 0
      %10538 = vmatmul.mubr.bf16.gmra.mrb[0].mxu0 %v10435
      %v10539 = vpop.f32.mrb[0].mxu0
      %v10540 = vadd.f32 %v10420, %v10539
      %v10541 = vpop.f32.mrb[0].mxu0
      %v10542 = vpop.f32.mrb[0].mxu0
      %v10543 = vadd.f32 %v10420, %v10542
      %v10544 = vpop.f32.mrb[0].mxu0
      %10545 = vmatprep.mubr.bf16.mxu0 0
      %10546 = vmatmul.mubr.bf16.gmra.mrb[0].mxu0 %v10438
      %v10547 = vpop.f32.mrb[0].mxu0
      %v10548 = vadd.f32 %v10420, %v10547
      %v10549 = vpop.f32.mrb[0].mxu0
      %v10550 = vpop.f32.mrb[0].mxu0
      %v10551 = vadd.f32 %v10420, %v10550
      %v10552 = vpop.f32.mrb[0].mxu0
      %10553 = vmatprep.mubr.bf16.mxu0 0
      %10554 = vmatmul.mubr.bf16.gmra.mrb[0].mxu0 %v10441
      %v10555 = vpop.f32.mrb[0].mxu0
      %v10556 = vadd.f32 %v10420, %v10555
      %v10557 = vpop.f32.mrb[0].mxu0
      %v10558 = vpop.f32.mrb[0].mxu0
      %v10559 = vadd.f32 %v10420, %v10558
      %v10560 = vpop.f32.mrb[0].mxu0
      %10561 = vmatprep.mubr.bf16.mxu0 0
      %10562 = vmatmul.mubr.bf16.gmra.mrb[0].mxu0 %v10444
      %v10563 = vpop.f32.mrb[0].mxu0
      %v10564 = vadd.f32 %v10420, %v10563
      %v10565 = vpop.f32.mrb[0].mxu0
      %v10566 = vpop.f32.mrb[0].mxu0
      %v10567 = vadd.f32 %v10420, %v10566
      %v10568 = vpop.f32.mrb[0].mxu0
      %10569 = vmatprep.mubr.bf16.mxu0 0
      %10570 = vmatmul.mubr.bf16.gmra.mrb[0].mxu0 %v10447
      %v10571 = vpop.f32.mrb[0].mxu0
      %v10572 = vadd.f32 %v10420, %v10571
      %v10573 = vpop.f32.mrb[0].mxu0
      %v10574 = vpop.f32.mrb[0].mxu0
      %v10575 = vadd.f32 %v10420, %v10574
      %v10576 = vpop.f32.mrb[0].mxu0
      %10577 = vmatprep.mubr.bf16.mxu0 0
      %10578 = vmatmul.mubr.bf16.gmra.mrb[0].mxu0 %v10450
      %v10579 = vpop.f32.mrb[0].mxu0
      %v10580 = vadd.f32 %v10420, %v10579
      %v10581 = vpop.f32.mrb[0].mxu0
      %v10582 = vpop.f32.mrb[0].mxu0
      %v10583 = vadd.f32 %v10420, %v10582
      %v10584 = vpop.f32.mrb[0].mxu0
      %10585 = vmatprep.mubr.bf16.mxu0 0
      %10586 = vmatmul.mubr.bf16.gmra.mrb[0].mxu0 %v10453
      %v10587 = vpop.f32.mrb[0].mxu0
      %v10588 = vadd.f32 %v10420, %v10587
      %v10589 = vpop.f32.mrb[0].mxu0
      %v10590 = vpop.f32.mrb[0].mxu0
      %v10591 = vadd.f32 %v10420, %v10590
      %v10592 = vpop.f32.mrb[0].mxu0
      %10593 = vmatprep.mubr.bf16.mxu0 0
      %10594 = vmatmul.mubr.bf16.gmra.mrb[0].mxu0 %v10456
      %v10595 = vpop.f32.mrb[0].mxu0
      %v10596 = vadd.f32 %v10420, %v10595
      %v10597 = vpop.f32.mrb[0].mxu0
      %v10598 = vpop.f32.mrb[0].mxu0
      %v10599 = vadd.f32 %v10420, %v10598
      %v10600 = vpop.f32.mrb[0].mxu0
      %10601 = vmatprep.mubr.bf16.mxu0 0
      %10602 = vmatmul.mubr.bf16.gmra.mrb[0].mxu0 %v10459
      %v10603 = vpop.f32.mrb[0].mxu0
      %v10604 = vadd.f32 %v10420, %v10603
      %v10605 = vpop.f32.mrb[0].mxu0
      %v10606 = vpop.f32.mrb[0].mxu0
      %v10607 = vadd.f32 %v10420, %v10606
      %v10608 = vpop.f32.mrb[0].mxu0
      %10609 = vmatprep.mubr.bf16.mxu0 0
      %10610 = vmatmul.mubr.bf16.gmra.mrb[0].mxu0 %v10462
      %v10611 = vpop.f32.mrb[0].mxu0
      %v10612 = vadd.f32 %v10420, %v10611
      %v10613 = vpop.f32.mrb[0].mxu0
      %v10614 = vpop.f32.mrb[0].mxu0
      %v10615 = vadd.f32 %v10420, %v10614
      %v10616 = vpop.f32.mrb[0].mxu0
      %10617 = vmatprep.mubr.bf16.mxu0 0
      %10618 = vmatmul.mubr.bf16.gmra.mrb[0].mxu0 %v10465
      %v10619 = vpop.f32.mrb[0].mxu0
      %v10620 = vadd.f32 %v10420, %v10619
      %v10621 = vpop.f32.mrb[0].mxu0
      %v10622 = vpop.f32.mrb[0].mxu0
      %v10623 = vadd.f32 %v10420, %v10622
      %v10624 = vpop.f32.mrb[0].mxu0
      %10625 = vmatprep.mubr.bf16.mxu0 0
      %10626 = vmatmul.mubr.bf16.gmra.mrb[0].mxu0 %v10468
      %v10627 = vpop.f32.mrb[0].mxu0
      %v10628 = vadd.f32 %v10420, %v10627
      %v10629 = vpop.f32.mrb[0].mxu0
      %v10630 = vpop.f32.mrb[0].mxu0
      %v10631 = vadd.f32 %v10420, %v10630
      %v10632 = vpop.f32.mrb[0].mxu0
      %10633 = vdwg.mxu0
      %10634 = vst.msk [vmem:[%s658] sm:$0xff] %vm660, %v10508
      %10635 = vst.msk [vmem:[%s658 + $0x8] sm:$0xff] %vm660, %v10511
      %10636 = vst.msk [vmem:[%s658 + $0x10] sm:$0xff] %vm660, %v10516
      %10637 = vst.msk [vmem:[%s658 + $0x18] sm:$0xff] %vm660, %v10519
      %10638 = vst.msk [vmem:[%s658 + $0x20] sm:$0xff] %vm660, %v10524
      %10639 = vst.msk [vmem:[%s658 + $0x28] sm:$0xff] %vm660, %v10527
      %10640 = vst.msk [vmem:[%s658 + $0x30] sm:$0xff] %vm660, %v10532
      %10641 = vst.msk [vmem:[%s658 + $0x38] sm:$0xff] %vm660, %v10535
      %10642 = vst.msk [vmem:[%s658 + $0x40] sm:$0xff] %vm660, %v10540
      %10643 = vst.msk [vmem:[%s658 + $0x48] sm:$0xff] %vm660, %v10543
      %10644 = vst.msk [vmem:[%s658 + $0x50] sm:$0xff] %vm660, %v10548
      %10645 = vst.msk [vmem:[%s658 + $0x58] sm:$0xff] %vm660, %v10551
      %10646 = vst.msk [vmem:[%s658 + $0x60] sm:$0xff] %vm660, %v10556
      %10647 = vst.msk [vmem:[%s658 + $0x68] sm:$0xff] %vm660, %v10559
      %10648 = vst.msk [vmem:[%s658 + $0x70] sm:$0xff] %vm660, %v10564
      %10649 = vst.msk [vmem:[%s658 + $0x78] sm:$0xff] %vm660, %v10567
      %10650 = vst.msk [vmem:[%s658 + $0x80] sm:$0xff] %vm660, %v10572
      %10651 = vst.msk [vmem:[%s658 + $0x88] sm:$0xff] %vm660, %v10575
      %10652 = vst.msk [vmem:[%s658 + $0x90] sm:$0xff] %vm660, %v10580
      %10653 = vst.msk [vmem:[%s658 + $0x98] sm:$0xff] %vm660, %v10583
      %10654 = vst.msk [vmem:[%s658 + $0xa0] sm:$0xff] %vm660, %v10588
      %10655 = vst.msk [vmem:[%s658 + $0xa8] sm:$0xff] %vm660, %v10591
      %10656 = vst.msk [vmem:[%s658 + $0xb0] sm:$0xff] %vm660, %v10596
      %10657 = vst.msk [vmem:[%s658 + $0xb8] sm:$0xff] %vm660, %v10599
      %10658 = vst.msk [vmem:[%s658 + $0xc0] sm:$0xff] %vm660, %v10604
      %10659 = vst.msk [vmem:[%s658 + $0xc8] sm:$0xff] %vm660, %v10607
      %10660 = vst.msk [vmem:[%s658 + $0xd0] sm:$0xff] %vm660, %v10612
      %10661 = vst.msk [vmem:[%s658 + $0xd8] sm:$0xff] %vm660, %v10615
      %10662 = vst.msk [vmem:[%s658 + $0xe0] sm:$0xff] %vm660, %v10620
      %10663 = vst.msk [vmem:[%s658 + $0xe8] sm:$0xff] %vm660, %v10623
      %10664 = vst.msk [vmem:[%s658 + $0xf0] sm:$0xff] %vm660, %v10628
      %10665 = vst.msk [vmem:[%s658 + $0xf8] sm:$0xff] %vm660, %v10631
      %p10666 = scmp.lt.s32.totalorder %s34, 1
      %s10667 = scalar_select %p10666, %s34, 1
      %s10668 = smul.addr %s10667, 32
      %s10669 = smul.addr %s10668, 8
      %s10670 = scalar_lea.vmem %s21, %s10669
      // Predicated region
      $region105: #{model_forward.1} parent=103 // pred_check
        %p10671 = pneg %p498
      $region106: #{model_forward.1} parent=103 // pred_check_branch
        %10673 = sbr.rel (%p10671) target = $region108
      $region107: #{model_forward.1} parent=103 // pred_region
        _
      $region108: #{model_forward.1} parent=103 // pred_fallthru
        _
    $region104: #{model_forward.1} parent=5 // pred_fallthru
      _
    %p10674 = scmp.le.s32.totalorder 2, %s29
    // Predicated region
    $region109: #{model_forward.1} parent=5 // pred_check
      %p10675 = pneg %p10674
    $region110: #{model_forward.1} parent=5 // pred_check_branch
      %10677 = sbr.rel (%p10675) target = $region112
    $region111: #{model_forward.1} parent=5 // pred_region
      %s10678 = ssub.s32 %s29, 2
      // Predicated region
      $region113: #{model_forward.1} parent=111 // pred_check
        %p10679 = pneg %p504
      $region114: #{model_forward.1} parent=111 // pred_check_branch
        %10681 = sbr.rel (%p10679) target = $region116
      $region115: #{model_forward.1} parent=111 // pred_region
        %p10682 = scmp.lt.s32.totalorder %s35, 1
        %s10683 = scalar_select %p10682, %s35, 1
        %s10684 = smul.addr %s10683, 32
        %s10685 = smul.addr %s10684, 8
        %s10686 = scalar_lea.vmem %s21, %s10685
      $region116: #{model_forward.1} parent=111 // pred_fallthru
        _
    $region112: #{model_forward.1} parent=5 // pred_fallthru
      _
  $region6: #{model_forward.1} parent=0 // loop_footer
    %s33 = sadd.s32 1, %s29
  $region7: #{model_forward.1} parent=0 // loop_footer_branch
    %28 = sbr.rel target = $region3
  $region8: #{model_forward.1} parent=0 // loop_exit
    _

</llo_original>
